<compile_context>
chip_gen: v7x
topology: tpu7x:2x2x1
jax: 0.10.0
libtpu: 0.0.40
codegen_flags: <defaults>
</compile_context>

<pallas_src>
import jax
import jax.numpy as jnp
from jax.experimental import pallas as pl
from jax.experimental.pallas import tpu as pltpu


# ----------------------------------------------------------------------------
# Layout constants.  Per image, activations are (channels, flattened spatial)
# with spatial (h, w) stored at lane h*STRIDE + w.  Lane lengths are padded so
# every shifted tap / pool window read stays in-bounds; the padding / "margin"
# lanes only ever hold finite garbage that is never selected into a valid
# output (verified by the index bookkeeping in the comments below).
# ----------------------------------------------------------------------------
TAPS = [(di, dj) for di in range(3) for dj in range(3)]   # t = di*3 + dj

W_A = 28            # row stride for the 28x28 / conv1 / conv2 stage
W_B = 12            # row stride after pool1 (12x12 stage)

LX  = 896           # input lanes   (28*28 = 784 valid, zero padded)
L1  = 736           # conv1 out     (stride 28, valid 26x26); >= 58 + 672
L2  = 672           # conv2 out     (stride 28, valid 24x24); >= 29 + 640
LM1 = 640           # pool1 window-max length (max base lane 22*28+22 = 638)
LP1 = 160           # pool1 out     (stride 12, valid 12x12 = 144); >= 26 + 128
L3  = 128           # conv3 out     (stride 12, valid 10x10); >= 26 + 96
L4  = 96            # conv4 out     (stride 12, valid 8x8);   >= 13 + 80
LM2 = 80            # pool2 window-max length (max base lane 6*12+6 = 78)
LP2 = 16            # pool2 out     (4x4, compact -> PyTorch (C,H,W) order)


# ----------------------------------------------------------------------------
# Pallas kernels
# ----------------------------------------------------------------------------
def conv_stack_kernel(x_ref, w1_ref, b1_ref, w2_ref, b2_ref, w3_ref, b3_ref,
                      w4_ref, b4_ref, s1_ref, s2_ref, o_ref,
                      h1_ref, h2_ref, p1_ref, h3_ref, h4_ref):
    """conv1..conv4 (+ folded BN + ReLU) and both 2x2 max-pools for ONE image."""
    f32 = jnp.float32

    # ---- conv1 (Cin=1): broadcast multiply-accumulate on the VPU -----------
    acc = jnp.zeros((32, L1), f32)
    for t, (di, dj) in enumerate(TAPS):
        off = di * W_A + dj
        acc = acc + w1_ref[t].astype(f32) * x_ref[:, off:off + L1].astype(f32)
    h1_ref[...] = jnp.maximum(acc + b1_ref[...], 0.0).astype(jnp.bfloat16)

    # ---- conv2: per-tap implicit GEMM, f32 accumulation ---------------------
    acc = jnp.zeros((32, L2), f32)
    for t, (di, dj) in enumerate(TAPS):
        off = di * W_A + dj
        acc = acc + jnp.dot(w2_ref[t], h1_ref[:, off:off + L2],
                            preferred_element_type=f32)
    h2_ref[...] = jnp.maximum(acc + b2_ref[...], 0.0).astype(jnp.bfloat16)

    # ---- pool1: 2x2 window max (shifted slices) + lane-compaction matmul ----
    m = jnp.maximum(
        jnp.maximum(h2_ref[:, 0:LM1], h2_ref[:, 1:1 + LM1]),
        jnp.maximum(h2_ref[:, W_A:W_A + LM1], h2_ref[:, W_A + 1:W_A + 1 + LM1]))
    p1_ref[...] = jnp.dot(m, s1_ref[...],
                          preferred_element_type=f32).astype(jnp.bfloat16)

    # ---- conv3 ---------------------------------------------------------------
    acc = jnp.zeros((64, L3), f32)
    for t, (di, dj) in enumerate(TAPS):
        off = di * W_B + dj
        acc = acc + jnp.dot(w3_ref[t], p1_ref[:, off:off + L3],
                            preferred_element_type=f32)
    h3_ref[...] = jnp.maximum(acc + b3_ref[...], 0.0).astype(jnp.bfloat16)

    # ---- conv4 ---------------------------------------------------------------
    acc = jnp.zeros((64, L4), f32)
    for t, (di, dj) in enumerate(TAPS):
        off = di * W_B + dj
        acc = acc + jnp.dot(w4_ref[t], h3_ref[:, off:off + L4],
                            preferred_element_type=f32)
    h4_ref[...] = jnp.maximum(acc + b4_ref[...], 0.0).astype(jnp.bfloat16)

    # ---- pool2 -> (64, 16), already in PyTorch (C, H, W) flatten order ------
    m = jnp.maximum(
        jnp.maximum(h4_ref[:, 0:LM2], h4_ref[:, 1:1 + LM2]),
        jnp.maximum(h4_ref[:, W_B:W_B + LM2], h4_ref[:, W_B + 1:W_B + 1 + LM2]))
    o_ref[...] = jnp.dot(m, s2_ref[...],
                         preferred_element_type=f32).astype(o_ref.dtype)


def fc_stack_kernel(x_ref, w1_ref, b1_ref, w2_ref, b2_ref, w3_ref, b3_ref,
                    o_ref):
    """Fused fc1 -> relu -> fc2 -> relu -> fc3 (BN folded, weights resident)."""
    f32 = jnp.float32
    h = jnp.dot(x_ref[...], w1_ref[...], preferred_element_type=f32)
    h = jnp.maximum(h + b1_ref[...], 0.0).astype(jnp.bfloat16)
    h = jnp.dot(h, w2_ref[...], preferred_element_type=f32)
    h = jnp.maximum(h + b2_ref[...], 0.0).astype(jnp.bfloat16)
    h = jnp.dot(h, w3_ref[...], preferred_element_type=f32)
    h = h + b3_ref[...]
    o_ref[...] = h[:, :10].astype(o_ref.dtype)   # fc3 was lane-padded to 128


# ----------------------------------------------------------------------------
# Wrappers
# ----------------------------------------------------------------------------
def conv_stack(x, q):
    """x: (N, 1, LX) bf16 -> (N, 64, 16) bf16, one image per grid step."""
    n = x.shape[0]

    def rep2(shape):
        return pl.BlockSpec(shape, lambda b: (0, 0))

    def rep3(shape):
        return pl.BlockSpec(shape, lambda b: (0, 0, 0))

    return pl.pallas_call(
        conv_stack_kernel,
        out_shape=jax.ShapeDtypeStruct((n, 64, LP2), jnp.bfloat16),
        grid=(n,),
        in_specs=[
            pl.BlockSpec((None, 1, LX), lambda b: (b, 0, 0)),
            rep3((9, 32, 1)),  rep2((32, 1)),
            rep3((9, 32, 32)), rep2((32, 1)),
            rep3((9, 64, 32)), rep2((64, 1)),
            rep3((9, 64, 64)), rep2((64, 1)),
            rep2((LM1, LP1)),
            rep2((LM2, LP2)),
        ],
        out_specs=pl.BlockSpec((None, 64, LP2), lambda b: (b, 0, 0)),
        scratch_shapes=[
            pltpu.VMEM((32, L1), jnp.bfloat16),   # conv1 activations
            pltpu.VMEM((32, L2), jnp.bfloat16),   # conv2 activations
            pltpu.VMEM((32, LP1), jnp.bfloat16),  # pool1 output
            pltpu.VMEM((64, L3), jnp.bfloat16),   # conv3 activations
            pltpu.VMEM((64, L4), jnp.bfloat16),   # conv4 activations
        ],
        compiler_params=pltpu.CompilerParams(
            dimension_semantics=("parallel",)),   # v7x: one image per core
    )(x, q["c1_w"], q["c1_b"], q["c2_w"], q["c2_b"],
      q["c3_w"], q["c3_b"], q["c4_w"], q["c4_b"], q["s1"], q["s2"])


def fc_stack(x, q):
    """x: (N, 1024) bf16 -> (N, 10) f32, one fused kernel, full-dim blocks."""
    n, k = x.shape
    n1, n2, n3 = q["f1_w"].shape[1], q["f2_w"].shape[1], q["f3_w"].shape[1]

    def rep(shape):
        return pl.BlockSpec(shape, lambda i: (0, 0))

    return pl.pallas_call(
        fc_stack_kernel,
        out_shape=jax.ShapeDtypeStruct((n, 10), jnp.float32),
        grid=(1,),
        in_specs=[
            rep((n, k)),
            rep((k, n1)), rep((1, n1)),
            rep((n1, n2)), rep((1, n2)),
            rep((n2, n3)), rep((1, n3)),
        ],
        out_specs=rep((n, 10)),
    )(x, q["f1_w"], q["f1_b"], q["f2_w"], q["f2_b"], q["f3_w"], q["f3_b"])


# ----------------------------------------------------------------------------
# Parameter init (deterministic, xavier_uniform like nn.init.xavier_uniform_)
# ----------------------------------------------------------------------------
def xavier_uniform(key, shape, fan_in, fan_out):
    bound = (6.0 / (fan_in + fan_out)) ** 0.5
    return jax.random.uniform(key, shape, jnp.float32, -bound, bound)


def bn_eval_affine(channels, eps=1e-5):
    # gamma=1, beta=0, running_mean=0, running_var=1 (module's init)
    scale = jnp.full((channels,), 1.0 / jnp.sqrt(1.0 + eps), jnp.float32)
    shift = jnp.zeros((channels,), jnp.float32)
    return scale, shift


def init_params(key):
    ks = jax.random.split(key, 14)
    p = {}

    def conv_p(kw_, kb_, kh, kwid, cin, cout):
        fan_in, fan_out = cin * kh * kwid, cout * kh * kwid
        w = xavier_uniform(kw_, (kh, kwid, cin, cout), fan_in, fan_out)
        bbound = 1.0 / (fan_in ** 0.5)
        b = jax.random.uniform(kb_, (cout,), jnp.float32, -bbound, bbound)
        return w, b

    def lin_p(kw_, kb_, din, dout):
        w = xavier_uniform(kw_, (din, dout), din, dout)
        bbound = 1.0 / (din ** 0.5)
        b = jax.random.uniform(kb_, (dout,), jnp.float32, -bbound, bbound)
        return w, b

    p["c1_w"], p["c1_b"] = conv_p(ks[0], ks[1], 3, 3, 1, 32)
    p["c2_w"], p["c2_b"] = conv_p(ks[2], ks[3], 3, 3, 32, 32)
    p["c3_w"], p["c3_b"] = conv_p(ks[4], ks[5], 3, 3, 32, 64)
    p["c4_w"], p["c4_b"] = conv_p(ks[6], ks[7], 3, 3, 64, 64)
    p["f1_w"], p["f1_b"] = lin_p(ks[8], ks[9], 64 * 4 * 4, 512)
    p["f2_w"], p["f2_b"] = lin_p(ks[10], ks[11], 512, 256)
    p["f3_w"], p["f3_b"] = lin_p(ks[12], ks[13], 256, 10)

    p["bn1"] = bn_eval_affine(32)
    p["bn2"] = bn_eval_affine(32)
    p["bn3"] = bn_eval_affine(64)
    p["bn4"] = bn_eval_affine(64)
    p["bnf1"] = bn_eval_affine(512)
    p["bnf2"] = bn_eval_affine(256)
    return p


def fold_bn(w, b, scale, shift):
    """Fold eval-mode BatchNorm affine into the preceding layer (per out ch)."""
    return w * scale, b * scale + shift


def _pool_select_matrix(out_hw, in_stride, out_stride, n_rows, n_cols):
    """0/1 matrix S with S[(2i)*in_stride + 2j, i*out_stride + j] = 1."""
    ii, jj = jnp.meshgrid(jnp.arange(out_hw), jnp.arange(out_hw), indexing="ij")
    rows = (2 * ii * in_stride + 2 * jj).ravel()
    cols = (ii * out_stride + jj).ravel()
    s = jnp.zeros((n_rows, n_cols), jnp.float32).at[rows, cols].set(1.0)
    return s.astype(jnp.bfloat16)


def prepare_params(p):
    """BN folding, per-tap (Cout, Cin) weight repacking, bf16 casts, pool mats."""
    q = {}
    for name, bn in (("c1", "bn1"), ("c2", "bn2"), ("c3", "bn3"), ("c4", "bn4")):
        w, b = fold_bn(p[name + "_w"], p[name + "_b"], *p[bn])
        kh, kw, cin, cout = w.shape
        wt = jnp.transpose(w, (0, 1, 3, 2)).reshape(kh * kw, cout, cin)
        q[name + "_w"] = wt.astype(jnp.bfloat16)          # (9, Cout, Cin)
        q[name + "_b"] = b.reshape(cout, 1).astype(jnp.float32)
    w, b = fold_bn(p["f1_w"], p["f1_b"], *p["bnf1"])
    q["f1_w"], q["f1_b"] = w.astype(jnp.bfloat16), b.reshape(1, -1)
    w, b = fold_bn(p["f2_w"], p["f2_b"], *p["bnf2"])
    q["f2_w"], q["f2_b"] = w.astype(jnp.bfloat16), b.reshape(1, -1)
    # final Linear(256, 10): zero-pad the output dim to 128 lanes (sliced in-kernel)
    q["f3_w"] = jnp.pad(p["f3_w"], ((0, 0), (0, 118))).astype(jnp.bfloat16)
    q["f3_b"] = jnp.pad(p["f3_b"], (0, 118)).reshape(1, -1)
    # max-pool lane-compaction (exact 0/1 selection) matrices
    q["s1"] = _pool_select_matrix(12, W_A, W_B, LM1, LP1)
    q["s2"] = _pool_select_matrix(4, W_B, 4, LM2, LP2)
    return q


# ----------------------------------------------------------------------------
# Forward pass (matches net.forward in eval mode)
# ----------------------------------------------------------------------------
def forward(q, x_nchw):
    n = x_nchw.shape[0]
    # NCHW -> per-image (C=1) x (h*28 + w) lane layout, zero-padded to LX lanes.
    x = x_nchw.reshape(n, 1, 28 * 28).astype(jnp.bfloat16)
    x = jnp.pad(x, ((0, 0), (0, 0), (0, LX - 28 * 28)))
    feats = conv_stack(x, q)                 # (n, 64, 16) bf16
    feats = feats.reshape(n, 64 * 16)        # == PyTorch (C, H, W) flatten order
    # fc: Dropout (identity in eval) -> Linear -> BN1d (folded) -> ReLU, x2,
    # then the final Linear — all in one fused Pallas kernel.
    return fc_stack(feats, q)                # (n, 10) float32


if __name__ == "__main__":
    key = jax.random.PRNGKey(0)
    k_param, k_x = jax.random.split(key)
    params = prepare_params(init_params(k_param))

    # MNIST-shaped input (batch=2, 1 channel, 28x28): required so the
    # flattened conv output is 64*4*4 = 1024, matching nn.Linear(1024, 512).
    x = jax.random.normal(k_x, (2, 1, 28, 28), jnp.float32)

    out = jax.jit(forward)(params, x)
    out = jax.block_until_ready(out)
    assert out.shape == (2, 10) and out.dtype == jnp.float32
    print("KERNEL_OK")
</pallas_src>

<mosaic_0001>
module attributes {stable_mosaic.version = 11 : i64} {
  func.func @conv_stack_kernel(%arg0: i32, %arg1: memref<1x1x896xbf16, #tpu.memory_space<vmem>>, %arg2: memref<9x32x1xbf16, #tpu.memory_space<vmem>>, %arg3: memref<32x1xf32, #tpu.memory_space<vmem>>, %arg4: memref<9x32x32xbf16, #tpu.memory_space<vmem>>, %arg5: memref<32x1xf32, #tpu.memory_space<vmem>>, %arg6: memref<9x64x32xbf16, #tpu.memory_space<vmem>>, %arg7: memref<64x1xf32, #tpu.memory_space<vmem>>, %arg8: memref<9x64x64xbf16, #tpu.memory_space<vmem>>, %arg9: memref<64x1xf32, #tpu.memory_space<vmem>>, %arg10: memref<640x160xbf16, #tpu.memory_space<vmem>>, %arg11: memref<80x16xbf16, #tpu.memory_space<vmem>>, %arg12: memref<1x64x16xbf16, #tpu.memory_space<vmem>>, %arg13: memref<32x736xbf16, #tpu.memory_space<vmem>>, %arg14: memref<32x672xbf16, #tpu.memory_space<vmem>>, %arg15: memref<32x160xbf16, #tpu.memory_space<vmem>>, %arg16: memref<64x128xbf16, #tpu.memory_space<vmem>>, %arg17: memref<64x96xbf16, #tpu.memory_space<vmem>>) attributes {dimension_semantics = [#tpu.dimension_semantics<parallel>], iteration_bounds = array<i64: 2>, scalar_prefetch = 0 : i64, scratch_operands = 5 : i64, tpu.core_type = #tpu.core_type<tc>, window_params = [{transform_indices = @transform_0, window_bounds = array<i64: 1, 1, 896>}, {pipeline_mode = #tpu.pipeline_mode<synchronous>, transform_indices = @transform_1, window_bounds = array<i64: 9, 32, 1>}, {pipeline_mode = #tpu.pipeline_mode<synchronous>, transform_indices = @transform_2, window_bounds = array<i64: 32, 1>}, {pipeline_mode = #tpu.pipeline_mode<synchronous>, transform_indices = @transform_3, window_bounds = array<i64: 9, 32, 32>}, {pipeline_mode = #tpu.pipeline_mode<synchronous>, transform_indices = @transform_4, window_bounds = array<i64: 32, 1>}, {pipeline_mode = #tpu.pipeline_mode<synchronous>, transform_indices = @transform_5, window_bounds = array<i64: 9, 64, 32>}, {pipeline_mode = #tpu.pipeline_mode<synchronous>, transform_indices = @transform_6, window_bounds = array<i64: 64, 1>}, {pipeline_mode = #tpu.pipeline_mode<synchronous>, transform_indices = @transform_7, window_bounds = array<i64: 9, 64, 64>}, {pipeline_mode = #tpu.pipeline_mode<synchronous>, transform_indices = @transform_8, window_bounds = array<i64: 64, 1>}, {pipeline_mode = #tpu.pipeline_mode<synchronous>, transform_indices = @transform_9, window_bounds = array<i64: 640, 160>}, {pipeline_mode = #tpu.pipeline_mode<synchronous>, transform_indices = @transform_10, window_bounds = array<i64: 80, 16>}, {transform_indices = @transform_11, window_bounds = array<i64: 1, 64, 16>}]} {
    %cst = arith.constant 0.000000e+00 : f32
    %0 = vector.broadcast %cst : f32 to vector<32x736xf32>
    %c0 = arith.constant 0 : index
    %c0_0 = arith.constant 0 : index
    %c0_1 = arith.constant 0 : index
    %1 = vector.load %arg2[%c0, %c0_0, %c0_1] : memref<9x32x1xbf16, #tpu.memory_space<vmem>>, vector<1x32x1xbf16>
    %2 = vector.shape_cast %1 : vector<1x32x1xbf16> to vector<32x1xbf16>
    %3 = arith.extf %2 : vector<32x1xbf16> to vector<32x1xf32>
    %c0_2 = arith.constant 0 : index
    %c0_3 = arith.constant 0 : index
    %c0_4 = arith.constant 0 : index
    %4 = vector.load %arg1[%c0_2, %c0_3, %c0_4] : memref<1x1x896xbf16, #tpu.memory_space<vmem>>, vector<1x1x736xbf16>
    %5 = vector.shape_cast %4 : vector<1x1x736xbf16> to vector<1x736xbf16>
    %6 = arith.extf %5 : vector<1x736xbf16> to vector<1x736xf32>
    %7 = vector.broadcast %3 : vector<32x1xf32> to vector<32x736xf32>
    %8 = vector.broadcast %6 : vector<1x736xf32> to vector<32x736xf32>
    %9 = arith.mulf %7, %8 : vector<32x736xf32>
    %10 = arith.addf %0, %9 : vector<32x736xf32>
    %c1 = arith.constant 1 : index
    %c0_5 = arith.constant 0 : index
    %c0_6 = arith.constant 0 : index
    %11 = vector.load %arg2[%c1, %c0_5, %c0_6] : memref<9x32x1xbf16, #tpu.memory_space<vmem>>, vector<1x32x1xbf16>
    %12 = vector.shape_cast %11 : vector<1x32x1xbf16> to vector<32x1xbf16>
    %13 = arith.extf %12 : vector<32x1xbf16> to vector<32x1xf32>
    %c0_7 = arith.constant 0 : index
    %c0_8 = arith.constant 0 : index
    %c1_9 = arith.constant 1 : index
    %14 = vector.load %arg1[%c0_7, %c0_8, %c1_9] : memref<1x1x896xbf16, #tpu.memory_space<vmem>>, vector<1x1x736xbf16>
    %15 = vector.shape_cast %14 : vector<1x1x736xbf16> to vector<1x736xbf16>
    %16 = arith.extf %15 : vector<1x736xbf16> to vector<1x736xf32>
    %17 = vector.broadcast %13 : vector<32x1xf32> to vector<32x736xf32>
    %18 = vector.broadcast %16 : vector<1x736xf32> to vector<32x736xf32>
    %19 = arith.mulf %17, %18 : vector<32x736xf32>
    %20 = arith.addf %10, %19 : vector<32x736xf32>
    %c2 = arith.constant 2 : index
    %c0_10 = arith.constant 0 : index
    %c0_11 = arith.constant 0 : index
    %21 = vector.load %arg2[%c2, %c0_10, %c0_11] : memref<9x32x1xbf16, #tpu.memory_space<vmem>>, vector<1x32x1xbf16>
    %22 = vector.shape_cast %21 : vector<1x32x1xbf16> to vector<32x1xbf16>
    %23 = arith.extf %22 : vector<32x1xbf16> to vector<32x1xf32>
    %c0_12 = arith.constant 0 : index
    %c0_13 = arith.constant 0 : index
    %c2_14 = arith.constant 2 : index
    %24 = vector.load %arg1[%c0_12, %c0_13, %c2_14] : memref<1x1x896xbf16, #tpu.memory_space<vmem>>, vector<1x1x736xbf16>
    %25 = vector.shape_cast %24 : vector<1x1x736xbf16> to vector<1x736xbf16>
    %26 = arith.extf %25 : vector<1x736xbf16> to vector<1x736xf32>
    %27 = vector.broadcast %23 : vector<32x1xf32> to vector<32x736xf32>
    %28 = vector.broadcast %26 : vector<1x736xf32> to vector<32x736xf32>
    %29 = arith.mulf %27, %28 : vector<32x736xf32>
    %30 = arith.addf %20, %29 : vector<32x736xf32>
    %c3 = arith.constant 3 : index
    %c0_15 = arith.constant 0 : index
    %c0_16 = arith.constant 0 : index
    %31 = vector.load %arg2[%c3, %c0_15, %c0_16] : memref<9x32x1xbf16, #tpu.memory_space<vmem>>, vector<1x32x1xbf16>
    %32 = vector.shape_cast %31 : vector<1x32x1xbf16> to vector<32x1xbf16>
    %33 = arith.extf %32 : vector<32x1xbf16> to vector<32x1xf32>
    %c0_17 = arith.constant 0 : index
    %c0_18 = arith.constant 0 : index
    %c28 = arith.constant 28 : index
    %34 = vector.load %arg1[%c0_17, %c0_18, %c28] : memref<1x1x896xbf16, #tpu.memory_space<vmem>>, vector<1x1x736xbf16>
    %35 = vector.shape_cast %34 : vector<1x1x736xbf16> to vector<1x736xbf16>
    %36 = arith.extf %35 : vector<1x736xbf16> to vector<1x736xf32>
    %37 = vector.broadcast %33 : vector<32x1xf32> to vector<32x736xf32>
    %38 = vector.broadcast %36 : vector<1x736xf32> to vector<32x736xf32>
    %39 = arith.mulf %37, %38 : vector<32x736xf32>
    %40 = arith.addf %30, %39 : vector<32x736xf32>
    %c4 = arith.constant 4 : index
    %c0_19 = arith.constant 0 : index
    %c0_20 = arith.constant 0 : index
    %41 = vector.load %arg2[%c4, %c0_19, %c0_20] : memref<9x32x1xbf16, #tpu.memory_space<vmem>>, vector<1x32x1xbf16>
    %42 = vector.shape_cast %41 : vector<1x32x1xbf16> to vector<32x1xbf16>
    %43 = arith.extf %42 : vector<32x1xbf16> to vector<32x1xf32>
    %c0_21 = arith.constant 0 : index
    %c0_22 = arith.constant 0 : index
    %c29 = arith.constant 29 : index
    %44 = vector.load %arg1[%c0_21, %c0_22, %c29] : memref<1x1x896xbf16, #tpu.memory_space<vmem>>, vector<1x1x736xbf16>
    %45 = vector.shape_cast %44 : vector<1x1x736xbf16> to vector<1x736xbf16>
    %46 = arith.extf %45 : vector<1x736xbf16> to vector<1x736xf32>
    %47 = vector.broadcast %43 : vector<32x1xf32> to vector<32x736xf32>
    %48 = vector.broadcast %46 : vector<1x736xf32> to vector<32x736xf32>
    %49 = arith.mulf %47, %48 : vector<32x736xf32>
    %50 = arith.addf %40, %49 : vector<32x736xf32>
    %c5 = arith.constant 5 : index
    %c0_23 = arith.constant 0 : index
    %c0_24 = arith.constant 0 : index
    %51 = vector.load %arg2[%c5, %c0_23, %c0_24] : memref<9x32x1xbf16, #tpu.memory_space<vmem>>, vector<1x32x1xbf16>
    %52 = vector.shape_cast %51 : vector<1x32x1xbf16> to vector<32x1xbf16>
    %53 = arith.extf %52 : vector<32x1xbf16> to vector<32x1xf32>
    %c0_25 = arith.constant 0 : index
    %c0_26 = arith.constant 0 : index
    %c30 = arith.constant 30 : index
    %54 = vector.load %arg1[%c0_25, %c0_26, %c30] : memref<1x1x896xbf16, #tpu.memory_space<vmem>>, vector<1x1x736xbf16>
    %55 = vector.shape_cast %54 : vector<1x1x736xbf16> to vector<1x736xbf16>
    %56 = arith.extf %55 : vector<1x736xbf16> to vector<1x736xf32>
    %57 = vector.broadcast %53 : vector<32x1xf32> to vector<32x736xf32>
    %58 = vector.broadcast %56 : vector<1x736xf32> to vector<32x736xf32>
    %59 = arith.mulf %57, %58 : vector<32x736xf32>
    %60 = arith.addf %50, %59 : vector<32x736xf32>
    %c6 = arith.constant 6 : index
    %c0_27 = arith.constant 0 : index
    %c0_28 = arith.constant 0 : index
    %61 = vector.load %arg2[%c6, %c0_27, %c0_28] : memref<9x32x1xbf16, #tpu.memory_space<vmem>>, vector<1x32x1xbf16>
    %62 = vector.shape_cast %61 : vector<1x32x1xbf16> to vector<32x1xbf16>
    %63 = arith.extf %62 : vector<32x1xbf16> to vector<32x1xf32>
    %c0_29 = arith.constant 0 : index
    %c0_30 = arith.constant 0 : index
    %c56 = arith.constant 56 : index
    %64 = vector.load %arg1[%c0_29, %c0_30, %c56] : memref<1x1x896xbf16, #tpu.memory_space<vmem>>, vector<1x1x736xbf16>
    %65 = vector.shape_cast %64 : vector<1x1x736xbf16> to vector<1x736xbf16>
    %66 = arith.extf %65 : vector<1x736xbf16> to vector<1x736xf32>
    %67 = vector.broadcast %63 : vector<32x1xf32> to vector<32x736xf32>
    %68 = vector.broadcast %66 : vector<1x736xf32> to vector<32x736xf32>
    %69 = arith.mulf %67, %68 : vector<32x736xf32>
    %70 = arith.addf %60, %69 : vector<32x736xf32>
    %c7 = arith.constant 7 : index
    %c0_31 = arith.constant 0 : index
    %c0_32 = arith.constant 0 : index
    %71 = vector.load %arg2[%c7, %c0_31, %c0_32] : memref<9x32x1xbf16, #tpu.memory_space<vmem>>, vector<1x32x1xbf16>
    %72 = vector.shape_cast %71 : vector<1x32x1xbf16> to vector<32x1xbf16>
    %73 = arith.extf %72 : vector<32x1xbf16> to vector<32x1xf32>
    %c0_33 = arith.constant 0 : index
    %c0_34 = arith.constant 0 : index
    %c57 = arith.constant 57 : index
    %74 = vector.load %arg1[%c0_33, %c0_34, %c57] : memref<1x1x896xbf16, #tpu.memory_space<vmem>>, vector<1x1x736xbf16>
    %75 = vector.shape_cast %74 : vector<1x1x736xbf16> to vector<1x736xbf16>
    %76 = arith.extf %75 : vector<1x736xbf16> to vector<1x736xf32>
    %77 = vector.broadcast %73 : vector<32x1xf32> to vector<32x736xf32>
    %78 = vector.broadcast %76 : vector<1x736xf32> to vector<32x736xf32>
    %79 = arith.mulf %77, %78 : vector<32x736xf32>
    %80 = arith.addf %70, %79 : vector<32x736xf32>
    %c8 = arith.constant 8 : index
    %c0_35 = arith.constant 0 : index
    %c0_36 = arith.constant 0 : index
    %81 = vector.load %arg2[%c8, %c0_35, %c0_36] : memref<9x32x1xbf16, #tpu.memory_space<vmem>>, vector<1x32x1xbf16>
    %82 = vector.shape_cast %81 : vector<1x32x1xbf16> to vector<32x1xbf16>
    %83 = arith.extf %82 : vector<32x1xbf16> to vector<32x1xf32>
    %c0_37 = arith.constant 0 : index
    %c0_38 = arith.constant 0 : index
    %c58 = arith.constant 58 : index
    %84 = vector.load %arg1[%c0_37, %c0_38, %c58] : memref<1x1x896xbf16, #tpu.memory_space<vmem>>, vector<1x1x736xbf16>
    %85 = vector.shape_cast %84 : vector<1x1x736xbf16> to vector<1x736xbf16>
    %86 = arith.extf %85 : vector<1x736xbf16> to vector<1x736xf32>
    %87 = vector.broadcast %83 : vector<32x1xf32> to vector<32x736xf32>
    %88 = vector.broadcast %86 : vector<1x736xf32> to vector<32x736xf32>
    %89 = arith.mulf %87, %88 : vector<32x736xf32>
    %90 = arith.addf %80, %89 : vector<32x736xf32>
    %c0_39 = arith.constant 0 : index
    %c0_40 = arith.constant 0 : index
    %91 = vector.load %arg3[%c0_39, %c0_40] : memref<32x1xf32, #tpu.memory_space<vmem>>, vector<32x1xf32>
    %92 = vector.broadcast %91 : vector<32x1xf32> to vector<32x736xf32>
    %93 = arith.addf %90, %92 : vector<32x736xf32>
    %cst_41 = arith.constant 0.000000e+00 : f32
    %94 = vector.broadcast %cst_41 : f32 to vector<32x736xf32>
    %95 = arith.maximumf %93, %94 : vector<32x736xf32>
    %96 = arith.truncf %95 : vector<32x736xf32> to vector<32x736xbf16>
    %c0_42 = arith.constant 0 : index
    %c0_43 = arith.constant 0 : index
    %97 = vector.load %arg13[%c0_42, %c0_43] : memref<32x736xbf16, #tpu.memory_space<vmem>>, vector<32x736xbf16>
    tpu.vector_store %arg13[%c0_42, %c0_43], %96 {strides = array<i32>} : memref<32x736xbf16, #tpu.memory_space<vmem>>, vector<32x736xbf16>,
    %cst_44 = arith.constant 0.000000e+00 : f32
    %98 = vector.broadcast %cst_44 : f32 to vector<32x672xf32>
    %c0_45 = arith.constant 0 : index
    %c0_46 = arith.constant 0 : index
    %c0_47 = arith.constant 0 : index
    %99 = vector.load %arg4[%c0_45, %c0_46, %c0_47] : memref<9x32x32xbf16, #tpu.memory_space<vmem>>, vector<1x32x32xbf16>
    %100 = vector.shape_cast %99 : vector<1x32x32xbf16> to vector<32x32xbf16>
    %c0_48 = arith.constant 0 : index
    %c0_49 = arith.constant 0 : index
    %101 = vector.load %arg13[%c0_48, %c0_49] : memref<32x736xbf16, #tpu.memory_space<vmem>>, vector<32x672xbf16>
    %cst_50 = arith.constant dense<0.000000e+00> : vector<32x672xf32>
    %102 = tpu.matmul %100, %101, %cst_50 {dimension_numbers = #tpu.dot_dimension_numbers<[1], [0], [0], [1], [0, 0, 1, 1], [], []>} : vector<32x32xbf16>, vector<32x672xbf16>, vector<32x672xf32> -> vector<32x672xf32>
    %103 = arith.addf %98, %102 : vector<32x672xf32>
    %c1_51 = arith.constant 1 : index
    %c0_52 = arith.constant 0 : index
    %c0_53 = arith.constant 0 : index
    %104 = vector.load %arg4[%c1_51, %c0_52, %c0_53] : memref<9x32x32xbf16, #tpu.memory_space<vmem>>, vector<1x32x32xbf16>
    %105 = vector.shape_cast %104 : vector<1x32x32xbf16> to vector<32x32xbf16>
    %c0_54 = arith.constant 0 : index
    %c1_55 = arith.constant 1 : index
    %106 = vector.load %arg13[%c0_54, %c1_55] : memref<32x736xbf16, #tpu.memory_space<vmem>>, vector<32x672xbf16>
    %cst_56 = arith.constant dense<0.000000e+00> : vector<32x672xf32>
    %107 = tpu.matmul %105, %106, %cst_56 {dimension_numbers = #tpu.dot_dimension_numbers<[1], [0], [0], [1], [0, 0, 1, 1], [], []>} : vector<32x32xbf16>, vector<32x672xbf16>, vector<32x672xf32> -> vector<32x672xf32>
    %108 = arith.addf %103, %107 : vector<32x672xf32>
    %c2_57 = arith.constant 2 : index
    %c0_58 = arith.constant 0 : index
    %c0_59 = arith.constant 0 : index
    %109 = vector.load %arg4[%c2_57, %c0_58, %c0_59] : memref<9x32x32xbf16, #tpu.memory_space<vmem>>, vector<1x32x32xbf16>
    %110 = vector.shape_cast %109 : vector<1x32x32xbf16> to vector<32x32xbf16>
    %c0_60 = arith.constant 0 : index
    %c2_61 = arith.constant 2 : index
    %111 = vector.load %arg13[%c0_60, %c2_61] : memref<32x736xbf16, #tpu.memory_space<vmem>>, vector<32x672xbf16>
    %cst_62 = arith.constant dense<0.000000e+00> : vector<32x672xf32>
    %112 = tpu.matmul %110, %111, %cst_62 {dimension_numbers = #tpu.dot_dimension_numbers<[1], [0], [0], [1], [0, 0, 1, 1], [], []>} : vector<32x32xbf16>, vector<32x672xbf16>, vector<32x672xf32> -> vector<32x672xf32>
    %113 = arith.addf %108, %112 : vector<32x672xf32>
    %c3_63 = arith.constant 3 : index
    %c0_64 = arith.constant 0 : index
    %c0_65 = arith.constant 0 : index
    %114 = vector.load %arg4[%c3_63, %c0_64, %c0_65] : memref<9x32x32xbf16, #tpu.memory_space<vmem>>, vector<1x32x32xbf16>
    %115 = vector.shape_cast %114 : vector<1x32x32xbf16> to vector<32x32xbf16>
    %c0_66 = arith.constant 0 : index
    %c28_67 = arith.constant 28 : index
    %116 = vector.load %arg13[%c0_66, %c28_67] : memref<32x736xbf16, #tpu.memory_space<vmem>>, vector<32x672xbf16>
    %cst_68 = arith.constant dense<0.000000e+00> : vector<32x672xf32>
    %117 = tpu.matmul %115, %116, %cst_68 {dimension_numbers = #tpu.dot_dimension_numbers<[1], [0], [0], [1], [0, 0, 1, 1], [], []>} : vector<32x32xbf16>, vector<32x672xbf16>, vector<32x672xf32> -> vector<32x672xf32>
    %118 = arith.addf %113, %117 : vector<32x672xf32>
    %c4_69 = arith.constant 4 : index
    %c0_70 = arith.constant 0 : index
    %c0_71 = arith.constant 0 : index
    %119 = vector.load %arg4[%c4_69, %c0_70, %c0_71] : memref<9x32x32xbf16, #tpu.memory_space<vmem>>, vector<1x32x32xbf16>
    %120 = vector.shape_cast %119 : vector<1x32x32xbf16> to vector<32x32xbf16>
    %c0_72 = arith.constant 0 : index
    %c29_73 = arith.constant 29 : index
    %121 = vector.load %arg13[%c0_72, %c29_73] : memref<32x736xbf16, #tpu.memory_space<vmem>>, vector<32x672xbf16>
    %cst_74 = arith.constant dense<0.000000e+00> : vector<32x672xf32>
    %122 = tpu.matmul %120, %121, %cst_74 {dimension_numbers = #tpu.dot_dimension_numbers<[1], [0], [0], [1], [0, 0, 1, 1], [], []>} : vector<32x32xbf16>, vector<32x672xbf16>, vector<32x672xf32> -> vector<32x672xf32>
    %123 = arith.addf %118, %122 : vector<32x672xf32>
    %c5_75 = arith.constant 5 : index
    %c0_76 = arith.constant 0 : index
    %c0_77 = arith.constant 0 : index
    %124 = vector.load %arg4[%c5_75, %c0_76, %c0_77] : memref<9x32x32xbf16, #tpu.memory_space<vmem>>, vector<1x32x32xbf16>
    %125 = vector.shape_cast %124 : vector<1x32x32xbf16> to vector<32x32xbf16>
    %c0_78 = arith.constant 0 : index
    %c30_79 = arith.constant 30 : index
    %126 = vector.load %arg13[%c0_78, %c30_79] : memref<32x736xbf16, #tpu.memory_space<vmem>>, vector<32x672xbf16>
    %cst_80 = arith.constant dense<0.000000e+00> : vector<32x672xf32>
    %127 = tpu.matmul %125, %126, %cst_80 {dimension_numbers = #tpu.dot_dimension_numbers<[1], [0], [0], [1], [0, 0, 1, 1], [], []>} : vector<32x32xbf16>, vector<32x672xbf16>, vector<32x672xf32> -> vector<32x672xf32>
    %128 = arith.addf %123, %127 : vector<32x672xf32>
    %c6_81 = arith.constant 6 : index
    %c0_82 = arith.constant 0 : index
    %c0_83 = arith.constant 0 : index
    %129 = vector.load %arg4[%c6_81, %c0_82, %c0_83] : memref<9x32x32xbf16, #tpu.memory_space<vmem>>, vector<1x32x32xbf16>
    %130 = vector.shape_cast %129 : vector<1x32x32xbf16> to vector<32x32xbf16>
    %c0_84 = arith.constant 0 : index
    %c56_85 = arith.constant 56 : index
    %131 = vector.load %arg13[%c0_84, %c56_85] : memref<32x736xbf16, #tpu.memory_space<vmem>>, vector<32x672xbf16>
    %cst_86 = arith.constant dense<0.000000e+00> : vector<32x672xf32>
    %132 = tpu.matmul %130, %131, %cst_86 {dimension_numbers = #tpu.dot_dimension_numbers<[1], [0], [0], [1], [0, 0, 1, 1], [], []>} : vector<32x32xbf16>, vector<32x672xbf16>, vector<32x672xf32> -> vector<32x672xf32>
    %133 = arith.addf %128, %132 : vector<32x672xf32>
    %c7_87 = arith.constant 7 : index
    %c0_88 = arith.constant 0 : index
    %c0_89 = arith.constant 0 : index
    %134 = vector.load %arg4[%c7_87, %c0_88, %c0_89] : memref<9x32x32xbf16, #tpu.memory_space<vmem>>, vector<1x32x32xbf16>
    %135 = vector.shape_cast %134 : vector<1x32x32xbf16> to vector<32x32xbf16>
    %c0_90 = arith.constant 0 : index
    %c57_91 = arith.constant 57 : index
    %136 = vector.load %arg13[%c0_90, %c57_91] : memref<32x736xbf16, #tpu.memory_space<vmem>>, vector<32x672xbf16>
    %cst_92 = arith.constant dense<0.000000e+00> : vector<32x672xf32>
    %137 = tpu.matmul %135, %136, %cst_92 {dimension_numbers = #tpu.dot_dimension_numbers<[1], [0], [0], [1], [0, 0, 1, 1], [], []>} : vector<32x32xbf16>, vector<32x672xbf16>, vector<32x672xf32> -> vector<32x672xf32>
    %138 = arith.addf %133, %137 : vector<32x672xf32>
    %c8_93 = arith.constant 8 : index
    %c0_94 = arith.constant 0 : index
    %c0_95 = arith.constant 0 : index
    %139 = vector.load %arg4[%c8_93, %c0_94, %c0_95] : memref<9x32x32xbf16, #tpu.memory_space<vmem>>, vector<1x32x32xbf16>
    %140 = vector.shape_cast %139 : vector<1x32x32xbf16> to vector<32x32xbf16>
    %c0_96 = arith.constant 0 : index
    %c58_97 = arith.constant 58 : index
    %141 = vector.load %arg13[%c0_96, %c58_97] : memref<32x736xbf16, #tpu.memory_space<vmem>>, vector<32x672xbf16>
    %cst_98 = arith.constant dense<0.000000e+00> : vector<32x672xf32>
    %142 = tpu.matmul %140, %141, %cst_98 {dimension_numbers = #tpu.dot_dimension_numbers<[1], [0], [0], [1], [0, 0, 1, 1], [], []>} : vector<32x32xbf16>, vector<32x672xbf16>, vector<32x672xf32> -> vector<32x672xf32>
    %143 = arith.addf %138, %142 : vector<32x672xf32>
    %c0_99 = arith.constant 0 : index
    %c0_100 = arith.constant 0 : index
    %144 = vector.load %arg5[%c0_99, %c0_100] : memref<32x1xf32, #tpu.memory_space<vmem>>, vector<32x1xf32>
    %145 = vector.broadcast %144 : vector<32x1xf32> to vector<32x672xf32>
    %146 = arith.addf %143, %145 : vector<32x672xf32>
    %cst_101 = arith.constant 0.000000e+00 : f32
    %147 = vector.broadcast %cst_101 : f32 to vector<32x672xf32>
    %148 = arith.maximumf %146, %147 : vector<32x672xf32>
    %149 = arith.truncf %148 : vector<32x672xf32> to vector<32x672xbf16>
    %c0_102 = arith.constant 0 : index
    %c0_103 = arith.constant 0 : index
    %150 = vector.load %arg14[%c0_102, %c0_103] : memref<32x672xbf16, #tpu.memory_space<vmem>>, vector<32x672xbf16>
    tpu.vector_store %arg14[%c0_102, %c0_103], %149 {strides = array<i32>} : memref<32x672xbf16, #tpu.memory_space<vmem>>, vector<32x672xbf16>,
    %c0_104 = arith.constant 0 : index
    %c0_105 = arith.constant 0 : index
    %151 = vector.load %arg14[%c0_104, %c0_105] : memref<32x672xbf16, #tpu.memory_space<vmem>>, vector<32x640xbf16>
    %c0_106 = arith.constant 0 : index
    %c1_107 = arith.constant 1 : index
    %152 = vector.load %arg14[%c0_106, %c1_107] : memref<32x672xbf16, #tpu.memory_space<vmem>>, vector<32x640xbf16>
    %153 = arith.maximumf %151, %152 : vector<32x640xbf16>
    %c0_108 = arith.constant 0 : index
    %c28_109 = arith.constant 28 : index
    %154 = vector.load %arg14[%c0_108, %c28_109] : memref<32x672xbf16, #tpu.memory_space<vmem>>, vector<32x640xbf16>
    %c0_110 = arith.constant 0 : index
    %c29_111 = arith.constant 29 : index
    %155 = vector.load %arg14[%c0_110, %c29_111] : memref<32x672xbf16, #tpu.memory_space<vmem>>, vector<32x640xbf16>
    %156 = arith.maximumf %154, %155 : vector<32x640xbf16>
    %157 = arith.maximumf %153, %156 : vector<32x640xbf16>
    %c0_112 = arith.constant 0 : index
    %c0_113 = arith.constant 0 : index
    %158 = vector.load %arg10[%c0_112, %c0_113] : memref<640x160xbf16, #tpu.memory_space<vmem>>, vector<640x160xbf16>
    %cst_114 = arith.constant dense<0.000000e+00> : vector<32x160xf32>
    %159 = tpu.matmul %157, %158, %cst_114 {dimension_numbers = #tpu.dot_dimension_numbers<[1], [0], [0], [1], [0, 0, 1, 1], [], []>} : vector<32x640xbf16>, vector<640x160xbf16>, vector<32x160xf32> -> vector<32x160xf32>
    %160 = arith.truncf %159 : vector<32x160xf32> to vector<32x160xbf16>
    %c0_115 = arith.constant 0 : index
    %c0_116 = arith.constant 0 : index
    %161 = vector.load %arg15[%c0_115, %c0_116] : memref<32x160xbf16, #tpu.memory_space<vmem>>, vector<32x160xbf16>
    tpu.vector_store %arg15[%c0_115, %c0_116], %160 {strides = array<i32>} : memref<32x160xbf16, #tpu.memory_space<vmem>>, vector<32x160xbf16>,
    %cst_117 = arith.constant 0.000000e+00 : f32
    %162 = vector.broadcast %cst_117 : f32 to vector<64x128xf32>
    %c0_118 = arith.constant 0 : index
    %c0_119 = arith.constant 0 : index
    %c0_120 = arith.constant 0 : index
    %163 = vector.load %arg6[%c0_118, %c0_119, %c0_120] : memref<9x64x32xbf16, #tpu.memory_space<vmem>>, vector<1x64x32xbf16>
    %164 = vector.shape_cast %163 : vector<1x64x32xbf16> to vector<64x32xbf16>
    %c0_121 = arith.constant 0 : index
    %c0_122 = arith.constant 0 : index
    %165 = vector.load %arg15[%c0_121, %c0_122] : memref<32x160xbf16, #tpu.memory_space<vmem>>, vector<32x128xbf16>
    %cst_123 = arith.constant dense<0.000000e+00> : vector<64x128xf32>
    %166 = tpu.matmul %164, %165, %cst_123 {dimension_numbers = #tpu.dot_dimension_numbers<[1], [0], [0], [1], [0, 0, 1, 1], [], []>} : vector<64x32xbf16>, vector<32x128xbf16>, vector<64x128xf32> -> vector<64x128xf32>
    %167 = arith.addf %162, %166 : vector<64x128xf32>
    %c1_124 = arith.constant 1 : index
    %c0_125 = arith.constant 0 : index
    %c0_126 = arith.constant 0 : index
    %168 = vector.load %arg6[%c1_124, %c0_125, %c0_126] : memref<9x64x32xbf16, #tpu.memory_space<vmem>>, vector<1x64x32xbf16>
    %169 = vector.shape_cast %168 : vector<1x64x32xbf16> to vector<64x32xbf16>
    %c0_127 = arith.constant 0 : index
    %c1_128 = arith.constant 1 : index
    %170 = vector.load %arg15[%c0_127, %c1_128] : memref<32x160xbf16, #tpu.memory_space<vmem>>, vector<32x128xbf16>
    %cst_129 = arith.constant dense<0.000000e+00> : vector<64x128xf32>
    %171 = tpu.matmul %169, %170, %cst_129 {dimension_numbers = #tpu.dot_dimension_numbers<[1], [0], [0], [1], [0, 0, 1, 1], [], []>} : vector<64x32xbf16>, vector<32x128xbf16>, vector<64x128xf32> -> vector<64x128xf32>
    %172 = arith.addf %167, %171 : vector<64x128xf32>
    %c2_130 = arith.constant 2 : index
    %c0_131 = arith.constant 0 : index
    %c0_132 = arith.constant 0 : index
    %173 = vector.load %arg6[%c2_130, %c0_131, %c0_132] : memref<9x64x32xbf16, #tpu.memory_space<vmem>>, vector<1x64x32xbf16>
    %174 = vector.shape_cast %173 : vector<1x64x32xbf16> to vector<64x32xbf16>
    %c0_133 = arith.constant 0 : index
    %c2_134 = arith.constant 2 : index
    %175 = vector.load %arg15[%c0_133, %c2_134] : memref<32x160xbf16, #tpu.memory_space<vmem>>, vector<32x128xbf16>
    %cst_135 = arith.constant dense<0.000000e+00> : vector<64x128xf32>
    %176 = tpu.matmul %174, %175, %cst_135 {dimension_numbers = #tpu.dot_dimension_numbers<[1], [0], [0], [1], [0, 0, 1, 1], [], []>} : vector<64x32xbf16>, vector<32x128xbf16>, vector<64x128xf32> -> vector<64x128xf32>
    %177 = arith.addf %172, %176 : vector<64x128xf32>
    %c3_136 = arith.constant 3 : index
    %c0_137 = arith.constant 0 : index
    %c0_138 = arith.constant 0 : index
    %178 = vector.load %arg6[%c3_136, %c0_137, %c0_138] : memref<9x64x32xbf16, #tpu.memory_space<vmem>>, vector<1x64x32xbf16>
    %179 = vector.shape_cast %178 : vector<1x64x32xbf16> to vector<64x32xbf16>
    %c0_139 = arith.constant 0 : index
    %c12 = arith.constant 12 : index
    %180 = vector.load %arg15[%c0_139, %c12] : memref<32x160xbf16, #tpu.memory_space<vmem>>, vector<32x128xbf16>
    %cst_140 = arith.constant dense<0.000000e+00> : vector<64x128xf32>
    %181 = tpu.matmul %179, %180, %cst_140 {dimension_numbers = #tpu.dot_dimension_numbers<[1], [0], [0], [1], [0, 0, 1, 1], [], []>} : vector<64x32xbf16>, vector<32x128xbf16>, vector<64x128xf32> -> vector<64x128xf32>
    %182 = arith.addf %177, %181 : vector<64x128xf32>
    %c4_141 = arith.constant 4 : index
    %c0_142 = arith.constant 0 : index
    %c0_143 = arith.constant 0 : index
    %183 = vector.load %arg6[%c4_141, %c0_142, %c0_143] : memref<9x64x32xbf16, #tpu.memory_space<vmem>>, vector<1x64x32xbf16>
    %184 = vector.shape_cast %183 : vector<1x64x32xbf16> to vector<64x32xbf16>
    %c0_144 = arith.constant 0 : index
    %c13 = arith.constant 13 : index
    %185 = vector.load %arg15[%c0_144, %c13] : memref<32x160xbf16, #tpu.memory_space<vmem>>, vector<32x128xbf16>
    %cst_145 = arith.constant dense<0.000000e+00> : vector<64x128xf32>
    %186 = tpu.matmul %184, %185, %cst_145 {dimension_numbers = #tpu.dot_dimension_numbers<[1], [0], [0], [1], [0, 0, 1, 1], [], []>} : vector<64x32xbf16>, vector<32x128xbf16>, vector<64x128xf32> -> vector<64x128xf32>
    %187 = arith.addf %182, %186 : vector<64x128xf32>
    %c5_146 = arith.constant 5 : index
    %c0_147 = arith.constant 0 : index
    %c0_148 = arith.constant 0 : index
    %188 = vector.load %arg6[%c5_146, %c0_147, %c0_148] : memref<9x64x32xbf16, #tpu.memory_space<vmem>>, vector<1x64x32xbf16>
    %189 = vector.shape_cast %188 : vector<1x64x32xbf16> to vector<64x32xbf16>
    %c0_149 = arith.constant 0 : index
    %c14 = arith.constant 14 : index
    %190 = vector.load %arg15[%c0_149, %c14] : memref<32x160xbf16, #tpu.memory_space<vmem>>, vector<32x128xbf16>
    %cst_150 = arith.constant dense<0.000000e+00> : vector<64x128xf32>
    %191 = tpu.matmul %189, %190, %cst_150 {dimension_numbers = #tpu.dot_dimension_numbers<[1], [0], [0], [1], [0, 0, 1, 1], [], []>} : vector<64x32xbf16>, vector<32x128xbf16>, vector<64x128xf32> -> vector<64x128xf32>
    %192 = arith.addf %187, %191 : vector<64x128xf32>
    %c6_151 = arith.constant 6 : index
    %c0_152 = arith.constant 0 : index
    %c0_153 = arith.constant 0 : index
    %193 = vector.load %arg6[%c6_151, %c0_152, %c0_153] : memref<9x64x32xbf16, #tpu.memory_space<vmem>>, vector<1x64x32xbf16>
    %194 = vector.shape_cast %193 : vector<1x64x32xbf16> to vector<64x32xbf16>
    %c0_154 = arith.constant 0 : index
    %c24 = arith.constant 24 : index
    %195 = vector.load %arg15[%c0_154, %c24] : memref<32x160xbf16, #tpu.memory_space<vmem>>, vector<32x128xbf16>
    %cst_155 = arith.constant dense<0.000000e+00> : vector<64x128xf32>
    %196 = tpu.matmul %194, %195, %cst_155 {dimension_numbers = #tpu.dot_dimension_numbers<[1], [0], [0], [1], [0, 0, 1, 1], [], []>} : vector<64x32xbf16>, vector<32x128xbf16>, vector<64x128xf32> -> vector<64x128xf32>
    %197 = arith.addf %192, %196 : vector<64x128xf32>
    %c7_156 = arith.constant 7 : index
    %c0_157 = arith.constant 0 : index
    %c0_158 = arith.constant 0 : index
    %198 = vector.load %arg6[%c7_156, %c0_157, %c0_158] : memref<9x64x32xbf16, #tpu.memory_space<vmem>>, vector<1x64x32xbf16>
    %199 = vector.shape_cast %198 : vector<1x64x32xbf16> to vector<64x32xbf16>
    %c0_159 = arith.constant 0 : index
    %c25 = arith.constant 25 : index
    %200 = vector.load %arg15[%c0_159, %c25] : memref<32x160xbf16, #tpu.memory_space<vmem>>, vector<32x128xbf16>
    %cst_160 = arith.constant dense<0.000000e+00> : vector<64x128xf32>
    %201 = tpu.matmul %199, %200, %cst_160 {dimension_numbers = #tpu.dot_dimension_numbers<[1], [0], [0], [1], [0, 0, 1, 1], [], []>} : vector<64x32xbf16>, vector<32x128xbf16>, vector<64x128xf32> -> vector<64x128xf32>
    %202 = arith.addf %197, %201 : vector<64x128xf32>
    %c8_161 = arith.constant 8 : index
    %c0_162 = arith.constant 0 : index
    %c0_163 = arith.constant 0 : index
    %203 = vector.load %arg6[%c8_161, %c0_162, %c0_163] : memref<9x64x32xbf16, #tpu.memory_space<vmem>>, vector<1x64x32xbf16>
    %204 = vector.shape_cast %203 : vector<1x64x32xbf16> to vector<64x32xbf16>
    %c0_164 = arith.constant 0 : index
    %c26 = arith.constant 26 : index
    %205 = vector.load %arg15[%c0_164, %c26] : memref<32x160xbf16, #tpu.memory_space<vmem>>, vector<32x128xbf16>
    %cst_165 = arith.constant dense<0.000000e+00> : vector<64x128xf32>
    %206 = tpu.matmul %204, %205, %cst_165 {dimension_numbers = #tpu.dot_dimension_numbers<[1], [0], [0], [1], [0, 0, 1, 1], [], []>} : vector<64x32xbf16>, vector<32x128xbf16>, vector<64x128xf32> -> vector<64x128xf32>
    %207 = arith.addf %202, %206 : vector<64x128xf32>
    %c0_166 = arith.constant 0 : index
    %c0_167 = arith.constant 0 : index
    %208 = vector.load %arg7[%c0_166, %c0_167] : memref<64x1xf32, #tpu.memory_space<vmem>>, vector<64x1xf32>
    %209 = vector.broadcast %208 : vector<64x1xf32> to vector<64x128xf32>
    %210 = arith.addf %207, %209 : vector<64x128xf32>
    %cst_168 = arith.constant 0.000000e+00 : f32
    %211 = vector.broadcast %cst_168 : f32 to vector<64x128xf32>
    %212 = arith.maximumf %210, %211 : vector<64x128xf32>
    %213 = arith.truncf %212 : vector<64x128xf32> to vector<64x128xbf16>
    %c0_169 = arith.constant 0 : index
    %c0_170 = arith.constant 0 : index
    %214 = vector.load %arg16[%c0_169, %c0_170] : memref<64x128xbf16, #tpu.memory_space<vmem>>, vector<64x128xbf16>
    tpu.vector_store %arg16[%c0_169, %c0_170], %213 {strides = array<i32>} : memref<64x128xbf16, #tpu.memory_space<vmem>>, vector<64x128xbf16>,
    %cst_171 = arith.constant 0.000000e+00 : f32
    %215 = vector.broadcast %cst_171 : f32 to vector<64x96xf32>
    %c0_172 = arith.constant 0 : index
    %c0_173 = arith.constant 0 : index
    %c0_174 = arith.constant 0 : index
    %216 = vector.load %arg8[%c0_172, %c0_173, %c0_174] : memref<9x64x64xbf16, #tpu.memory_space<vmem>>, vector<1x64x64xbf16>
    %217 = vector.shape_cast %216 : vector<1x64x64xbf16> to vector<64x64xbf16>
    %c0_175 = arith.constant 0 : index
    %c0_176 = arith.constant 0 : index
    %218 = vector.load %arg16[%c0_175, %c0_176] : memref<64x128xbf16, #tpu.memory_space<vmem>>, vector<64x96xbf16>
    %cst_177 = arith.constant dense<0.000000e+00> : vector<64x96xf32>
    %219 = tpu.matmul %217, %218, %cst_177 {dimension_numbers = #tpu.dot_dimension_numbers<[1], [0], [0], [1], [0, 0, 1, 1], [], []>} : vector<64x64xbf16>, vector<64x96xbf16>, vector<64x96xf32> -> vector<64x96xf32>
    %220 = arith.addf %215, %219 : vector<64x96xf32>
    %c1_178 = arith.constant 1 : index
    %c0_179 = arith.constant 0 : index
    %c0_180 = arith.constant 0 : index
    %221 = vector.load %arg8[%c1_178, %c0_179, %c0_180] : memref<9x64x64xbf16, #tpu.memory_space<vmem>>, vector<1x64x64xbf16>
    %222 = vector.shape_cast %221 : vector<1x64x64xbf16> to vector<64x64xbf16>
    %c0_181 = arith.constant 0 : index
    %c1_182 = arith.constant 1 : index
    %223 = vector.load %arg16[%c0_181, %c1_182] : memref<64x128xbf16, #tpu.memory_space<vmem>>, vector<64x96xbf16>
    %cst_183 = arith.constant dense<0.000000e+00> : vector<64x96xf32>
    %224 = tpu.matmul %222, %223, %cst_183 {dimension_numbers = #tpu.dot_dimension_numbers<[1], [0], [0], [1], [0, 0, 1, 1], [], []>} : vector<64x64xbf16>, vector<64x96xbf16>, vector<64x96xf32> -> vector<64x96xf32>
    %225 = arith.addf %220, %224 : vector<64x96xf32>
    %c2_184 = arith.constant 2 : index
    %c0_185 = arith.constant 0 : index
    %c0_186 = arith.constant 0 : index
    %226 = vector.load %arg8[%c2_184, %c0_185, %c0_186] : memref<9x64x64xbf16, #tpu.memory_space<vmem>>, vector<1x64x64xbf16>
    %227 = vector.shape_cast %226 : vector<1x64x64xbf16> to vector<64x64xbf16>
    %c0_187 = arith.constant 0 : index
    %c2_188 = arith.constant 2 : index
    %228 = vector.load %arg16[%c0_187, %c2_188] : memref<64x128xbf16, #tpu.memory_space<vmem>>, vector<64x96xbf16>
    %cst_189 = arith.constant dense<0.000000e+00> : vector<64x96xf32>
    %229 = tpu.matmul %227, %228, %cst_189 {dimension_numbers = #tpu.dot_dimension_numbers<[1], [0], [0], [1], [0, 0, 1, 1], [], []>} : vector<64x64xbf16>, vector<64x96xbf16>, vector<64x96xf32> -> vector<64x96xf32>
    %230 = arith.addf %225, %229 : vector<64x96xf32>
    %c3_190 = arith.constant 3 : index
    %c0_191 = arith.constant 0 : index
    %c0_192 = arith.constant 0 : index
    %231 = vector.load %arg8[%c3_190, %c0_191, %c0_192] : memref<9x64x64xbf16, #tpu.memory_space<vmem>>, vector<1x64x64xbf16>
    %232 = vector.shape_cast %231 : vector<1x64x64xbf16> to vector<64x64xbf16>
    %c0_193 = arith.constant 0 : index
    %c12_194 = arith.constant 12 : index
    %233 = vector.load %arg16[%c0_193, %c12_194] : memref<64x128xbf16, #tpu.memory_space<vmem>>, vector<64x96xbf16>
    %cst_195 = arith.constant dense<0.000000e+00> : vector<64x96xf32>
    %234 = tpu.matmul %232, %233, %cst_195 {dimension_numbers = #tpu.dot_dimension_numbers<[1], [0], [0], [1], [0, 0, 1, 1], [], []>} : vector<64x64xbf16>, vector<64x96xbf16>, vector<64x96xf32> -> vector<64x96xf32>
    %235 = arith.addf %230, %234 : vector<64x96xf32>
    %c4_196 = arith.constant 4 : index
    %c0_197 = arith.constant 0 : index
    %c0_198 = arith.constant 0 : index
    %236 = vector.load %arg8[%c4_196, %c0_197, %c0_198] : memref<9x64x64xbf16, #tpu.memory_space<vmem>>, vector<1x64x64xbf16>
    %237 = vector.shape_cast %236 : vector<1x64x64xbf16> to vector<64x64xbf16>
    %c0_199 = arith.constant 0 : index
    %c13_200 = arith.constant 13 : index
    %238 = vector.load %arg16[%c0_199, %c13_200] : memref<64x128xbf16, #tpu.memory_space<vmem>>, vector<64x96xbf16>
    %cst_201 = arith.constant dense<0.000000e+00> : vector<64x96xf32>
    %239 = tpu.matmul %237, %238, %cst_201 {dimension_numbers = #tpu.dot_dimension_numbers<[1], [0], [0], [1], [0, 0, 1, 1], [], []>} : vector<64x64xbf16>, vector<64x96xbf16>, vector<64x96xf32> -> vector<64x96xf32>
    %240 = arith.addf %235, %239 : vector<64x96xf32>
    %c5_202 = arith.constant 5 : index
    %c0_203 = arith.constant 0 : index
    %c0_204 = arith.constant 0 : index
    %241 = vector.load %arg8[%c5_202, %c0_203, %c0_204] : memref<9x64x64xbf16, #tpu.memory_space<vmem>>, vector<1x64x64xbf16>
    %242 = vector.shape_cast %241 : vector<1x64x64xbf16> to vector<64x64xbf16>
    %c0_205 = arith.constant 0 : index
    %c14_206 = arith.constant 14 : index
    %243 = vector.load %arg16[%c0_205, %c14_206] : memref<64x128xbf16, #tpu.memory_space<vmem>>, vector<64x96xbf16>
    %cst_207 = arith.constant dense<0.000000e+00> : vector<64x96xf32>
    %244 = tpu.matmul %242, %243, %cst_207 {dimension_numbers = #tpu.dot_dimension_numbers<[1], [0], [0], [1], [0, 0, 1, 1], [], []>} : vector<64x64xbf16>, vector<64x96xbf16>, vector<64x96xf32> -> vector<64x96xf32>
    %245 = arith.addf %240, %244 : vector<64x96xf32>
    %c6_208 = arith.constant 6 : index
    %c0_209 = arith.constant 0 : index
    %c0_210 = arith.constant 0 : index
    %246 = vector.load %arg8[%c6_208, %c0_209, %c0_210] : memref<9x64x64xbf16, #tpu.memory_space<vmem>>, vector<1x64x64xbf16>
    %247 = vector.shape_cast %246 : vector<1x64x64xbf16> to vector<64x64xbf16>
    %c0_211 = arith.constant 0 : index
    %c24_212 = arith.constant 24 : index
    %248 = vector.load %arg16[%c0_211, %c24_212] : memref<64x128xbf16, #tpu.memory_space<vmem>>, vector<64x96xbf16>
    %cst_213 = arith.constant dense<0.000000e+00> : vector<64x96xf32>
    %249 = tpu.matmul %247, %248, %cst_213 {dimension_numbers = #tpu.dot_dimension_numbers<[1], [0], [0], [1], [0, 0, 1, 1], [], []>} : vector<64x64xbf16>, vector<64x96xbf16>, vector<64x96xf32> -> vector<64x96xf32>
    %250 = arith.addf %245, %249 : vector<64x96xf32>
    %c7_214 = arith.constant 7 : index
    %c0_215 = arith.constant 0 : index
    %c0_216 = arith.constant 0 : index
    %251 = vector.load %arg8[%c7_214, %c0_215, %c0_216] : memref<9x64x64xbf16, #tpu.memory_space<vmem>>, vector<1x64x64xbf16>
    %252 = vector.shape_cast %251 : vector<1x64x64xbf16> to vector<64x64xbf16>
    %c0_217 = arith.constant 0 : index
    %c25_218 = arith.constant 25 : index
    %253 = vector.load %arg16[%c0_217, %c25_218] : memref<64x128xbf16, #tpu.memory_space<vmem>>, vector<64x96xbf16>
    %cst_219 = arith.constant dense<0.000000e+00> : vector<64x96xf32>
    %254 = tpu.matmul %252, %253, %cst_219 {dimension_numbers = #tpu.dot_dimension_numbers<[1], [0], [0], [1], [0, 0, 1, 1], [], []>} : vector<64x64xbf16>, vector<64x96xbf16>, vector<64x96xf32> -> vector<64x96xf32>
    %255 = arith.addf %250, %254 : vector<64x96xf32>
    %c8_220 = arith.constant 8 : index
    %c0_221 = arith.constant 0 : index
    %c0_222 = arith.constant 0 : index
    %256 = vector.load %arg8[%c8_220, %c0_221, %c0_222] : memref<9x64x64xbf16, #tpu.memory_space<vmem>>, vector<1x64x64xbf16>
    %257 = vector.shape_cast %256 : vector<1x64x64xbf16> to vector<64x64xbf16>
    %c0_223 = arith.constant 0 : index
    %c26_224 = arith.constant 26 : index
    %258 = vector.load %arg16[%c0_223, %c26_224] : memref<64x128xbf16, #tpu.memory_space<vmem>>, vector<64x96xbf16>
    %cst_225 = arith.constant dense<0.000000e+00> : vector<64x96xf32>
    %259 = tpu.matmul %257, %258, %cst_225 {dimension_numbers = #tpu.dot_dimension_numbers<[1], [0], [0], [1], [0, 0, 1, 1], [], []>} : vector<64x64xbf16>, vector<64x96xbf16>, vector<64x96xf32> -> vector<64x96xf32>
    %260 = arith.addf %255, %259 : vector<64x96xf32>
    %c0_226 = arith.constant 0 : index
    %c0_227 = arith.constant 0 : index
    %261 = vector.load %arg9[%c0_226, %c0_227] : memref<64x1xf32, #tpu.memory_space<vmem>>, vector<64x1xf32>
    %262 = vector.broadcast %261 : vector<64x1xf32> to vector<64x96xf32>
    %263 = arith.addf %260, %262 : vector<64x96xf32>
    %cst_228 = arith.constant 0.000000e+00 : f32
    %264 = vector.broadcast %cst_228 : f32 to vector<64x96xf32>
    %265 = arith.maximumf %263, %264 : vector<64x96xf32>
    %266 = arith.truncf %265 : vector<64x96xf32> to vector<64x96xbf16>
    %c0_229 = arith.constant 0 : index
    %c0_230 = arith.constant 0 : index
    %267 = vector.load %arg17[%c0_229, %c0_230] : memref<64x96xbf16, #tpu.memory_space<vmem>>, vector<64x96xbf16>
    tpu.vector_store %arg17[%c0_229, %c0_230], %266 {strides = array<i32>} : memref<64x96xbf16, #tpu.memory_space<vmem>>, vector<64x96xbf16>,
    %c0_231 = arith.constant 0 : index
    %c0_232 = arith.constant 0 : index
    %268 = vector.load %arg17[%c0_231, %c0_232] : memref<64x96xbf16, #tpu.memory_space<vmem>>, vector<64x80xbf16>
    %c0_233 = arith.constant 0 : index
    %c1_234 = arith.constant 1 : index
    %269 = vector.load %arg17[%c0_233, %c1_234] : memref<64x96xbf16, #tpu.memory_space<vmem>>, vector<64x80xbf16>
    %270 = arith.maximumf %268, %269 : vector<64x80xbf16>
    %c0_235 = arith.constant 0 : index
    %c12_236 = arith.constant 12 : index
    %271 = vector.load %arg17[%c0_235, %c12_236] : memref<64x96xbf16, #tpu.memory_space<vmem>>, vector<64x80xbf16>
    %c0_237 = arith.constant 0 : index
    %c13_238 = arith.constant 13 : index
    %272 = vector.load %arg17[%c0_237, %c13_238] : memref<64x96xbf16, #tpu.memory_space<vmem>>, vector<64x80xbf16>
    %273 = arith.maximumf %271, %272 : vector<64x80xbf16>
    %274 = arith.maximumf %270, %273 : vector<64x80xbf16>
    %c0_239 = arith.constant 0 : index
    %c0_240 = arith.constant 0 : index
    %275 = vector.load %arg11[%c0_239, %c0_240] : memref<80x16xbf16, #tpu.memory_space<vmem>>, vector<80x16xbf16>
    %cst_241 = arith.constant dense<0.000000e+00> : vector<64x16xf32>
    %276 = tpu.matmul %274, %275, %cst_241 {dimension_numbers = #tpu.dot_dimension_numbers<[1], [0], [0], [1], [0, 0, 1, 1], [], []>} : vector<64x80xbf16>, vector<80x16xbf16>, vector<64x16xf32> -> vector<64x16xf32>
    %277 = arith.truncf %276 : vector<64x16xf32> to vector<64x16xbf16>
    %c0_242 = arith.constant 0 : index
    %c0_243 = arith.constant 0 : index
    %c0_244 = arith.constant 0 : index
    %278 = vector.load %arg12[%c0_242, %c0_243, %c0_244] : memref<1x64x16xbf16, #tpu.memory_space<vmem>>, vector<1x64x16xbf16>
    %279 = vector.shape_cast %278 : vector<1x64x16xbf16> to vector<64x16xbf16>
    %280 = vector.shape_cast %277 : vector<64x16xbf16> to vector<1x64x16xbf16>
    tpu.vector_store %arg12[%c0_242, %c0_243, %c0_244], %280 {strides = array<i32>} : memref<1x64x16xbf16, #tpu.memory_space<vmem>>, vector<1x64x16xbf16>,
    return
  }
  func.func @transform_0(%arg0: i32) -> (i32, i32, i32) {
    %c0_i32 = arith.constant 0 : i32
    %c0_i32_0 = arith.constant 0 : i32
    %c0_i32_1 = arith.constant 0 : i32
    return %arg0, %c0_i32, %c0_i32_0 : i32, i32, i32
  }
  func.func @transform_1(%arg0: i32) -> (i32, i32, i32) {
    %c0_i32 = arith.constant 0 : i32
    %c0_i32_0 = arith.constant 0 : i32
    %c0_i32_1 = arith.constant 0 : i32
    %c0_i32_2 = arith.constant 0 : i32
    return %c0_i32, %c0_i32_0, %c0_i32_1 : i32, i32, i32
  }
  func.func @transform_2(%arg0: i32) -> (i32, i32) {
    %c0_i32 = arith.constant 0 : i32
    %c0_i32_0 = arith.constant 0 : i32
    %c0_i32_1 = arith.constant 0 : i32
    return %c0_i32, %c0_i32_0 : i32, i32
  }
  func.func @transform_3(%arg0: i32) -> (i32, i32, i32) {
    %c0_i32 = arith.constant 0 : i32
    %c0_i32_0 = arith.constant 0 : i32
    %c0_i32_1 = arith.constant 0 : i32
    %c0_i32_2 = arith.constant 0 : i32
    return %c0_i32, %c0_i32_0, %c0_i32_1 : i32, i32, i32
  }
  func.func @transform_4(%arg0: i32) -> (i32, i32) {
    %c0_i32 = arith.constant 0 : i32
    %c0_i32_0 = arith.constant 0 : i32
    %c0_i32_1 = arith.constant 0 : i32
    return %c0_i32, %c0_i32_0 : i32, i32
  }
  func.func @transform_5(%arg0: i32) -> (i32, i32, i32) {
    %c0_i32 = arith.constant 0 : i32
    %c0_i32_0 = arith.constant 0 : i32
    %c0_i32_1 = arith.constant 0 : i32
    %c0_i32_2 = arith.constant 0 : i32
    return %c0_i32, %c0_i32_0, %c0_i32_1 : i32, i32, i32
  }
  func.func @transform_6(%arg0: i32) -> (i32, i32) {
    %c0_i32 = arith.constant 0 : i32
    %c0_i32_0 = arith.constant 0 : i32
    %c0_i32_1 = arith.constant 0 : i32
    return %c0_i32, %c0_i32_0 : i32, i32
  }
  func.func @transform_7(%arg0: i32) -> (i32, i32, i32) {
    %c0_i32 = arith.constant 0 : i32
    %c0_i32_0 = arith.constant 0 : i32
    %c0_i32_1 = arith.constant 0 : i32
    %c0_i32_2 = arith.constant 0 : i32
    return %c0_i32, %c0_i32_0, %c0_i32_1 : i32, i32, i32
  }
  func.func @transform_8(%arg0: i32) -> (i32, i32) {
    %c0_i32 = arith.constant 0 : i32
    %c0_i32_0 = arith.constant 0 : i32
    %c0_i32_1 = arith.constant 0 : i32
    return %c0_i32, %c0_i32_0 : i32, i32
  }
  func.func @transform_9(%arg0: i32) -> (i32, i32) {
    %c0_i32 = arith.constant 0 : i32
    %c0_i32_0 = arith.constant 0 : i32
    %c0_i32_1 = arith.constant 0 : i32
    return %c0_i32, %c0_i32_0 : i32, i32
  }
  func.func @transform_10(%arg0: i32) -> (i32, i32) {
    %c0_i32 = arith.constant 0 : i32
    %c0_i32_0 = arith.constant 0 : i32
    %c0_i32_1 = arith.constant 0 : i32
    return %c0_i32, %c0_i32_0 : i32, i32
  }
  func.func @transform_11(%arg0: i32) -> (i32, i32, i32) {
    %c0_i32 = arith.constant 0 : i32
    %c0_i32_0 = arith.constant 0 : i32
    %c0_i32_1 = arith.constant 0 : i32
    return %arg0, %c0_i32, %c0_i32_0 : i32, i32, i32
  }
}

module attributes {stable_mosaic.version = 11 : i64} {
  func.func @fc_stack_kernel(%arg0: i32, %arg1: memref<2x1024xbf16, #tpu.memory_space<vmem>>, %arg2: memref<1024x512xbf16, #tpu.memory_space<vmem>>, %arg3: memref<1x512xf32, #tpu.memory_space<vmem>>, %arg4: memref<512x256xbf16, #tpu.memory_space<vmem>>, %arg5: memref<1x256xf32, #tpu.memory_space<vmem>>, %arg6: memref<256x128xbf16, #tpu.memory_space<vmem>>, %arg7: memref<1x128xf32, #tpu.memory_space<vmem>>, %arg8: memref<2x10xf32, #tpu.memory_space<vmem>>) attributes {dimension_semantics = [#tpu.dimension_semantics<arbitrary>], iteration_bounds = array<i64: 1>, scalar_prefetch = 0 : i64, scratch_operands = 0 : i64, tpu.core_type = #tpu.core_type<tc>, window_params = [{pipeline_mode = #tpu.pipeline_mode<synchronous>, transform_indices = @transform_0, window_bounds = array<i64: 2, 1024>}, {pipeline_mode = #tpu.pipeline_mode<synchronous>, transform_indices = @transform_1, window_bounds = array<i64: 1024, 512>}, {pipeline_mode = #tpu.pipeline_mode<synchronous>, transform_indices = @transform_2, window_bounds = array<i64: 1, 512>}, {pipeline_mode = #tpu.pipeline_mode<synchronous>, transform_indices = @transform_3, window_bounds = array<i64: 512, 256>}, {pipeline_mode = #tpu.pipeline_mode<synchronous>, transform_indices = @transform_4, window_bounds = array<i64: 1, 256>}, {pipeline_mode = #tpu.pipeline_mode<synchronous>, transform_indices = @transform_5, window_bounds = array<i64: 256, 128>}, {pipeline_mode = #tpu.pipeline_mode<synchronous>, transform_indices = @transform_6, window_bounds = array<i64: 1, 128>}, {pipeline_mode = #tpu.pipeline_mode<synchronous>, transform_indices = @transform_7, window_bounds = array<i64: 2, 10>}]} {
    %c0 = arith.constant 0 : index
    %c0_0 = arith.constant 0 : index
    %0 = vector.load %arg1[%c0, %c0_0] : memref<2x1024xbf16, #tpu.memory_space<vmem>>, vector<2x1024xbf16>
    %c0_1 = arith.constant 0 : index
    %c0_2 = arith.constant 0 : index
    %1 = vector.load %arg2[%c0_1, %c0_2] : memref<1024x512xbf16, #tpu.memory_space<vmem>>, vector<1024x512xbf16>
    %cst = arith.constant dense<0.000000e+00> : vector<2x512xf32>
    %2 = tpu.matmul %0, %1, %cst {dimension_numbers = #tpu.dot_dimension_numbers<[1], [0], [0], [1], [0, 0, 1, 1], [], []>} : vector<2x1024xbf16>, vector<1024x512xbf16>, vector<2x512xf32> -> vector<2x512xf32>
    %c0_3 = arith.constant 0 : index
    %c0_4 = arith.constant 0 : index
    %3 = vector.load %arg3[%c0_3, %c0_4] : memref<1x512xf32, #tpu.memory_space<vmem>>, vector<1x512xf32>
    %4 = vector.broadcast %3 : vector<1x512xf32> to vector<2x512xf32>
    %5 = arith.addf %2, %4 : vector<2x512xf32>
    %cst_5 = arith.constant 0.000000e+00 : f32
    %6 = vector.broadcast %cst_5 : f32 to vector<2x512xf32>
    %7 = arith.maximumf %5, %6 : vector<2x512xf32>
    %8 = arith.truncf %7 : vector<2x512xf32> to vector<2x512xbf16>
    %c0_6 = arith.constant 0 : index
    %c0_7 = arith.constant 0 : index
    %9 = vector.load %arg4[%c0_6, %c0_7] : memref<512x256xbf16, #tpu.memory_space<vmem>>, vector<512x256xbf16>
    %cst_8 = arith.constant dense<0.000000e+00> : vector<2x256xf32>
    %10 = tpu.matmul %8, %9, %cst_8 {dimension_numbers = #tpu.dot_dimension_numbers<[1], [0], [0], [1], [0, 0, 1, 1], [], []>} : vector<2x512xbf16>, vector<512x256xbf16>, vector<2x256xf32> -> vector<2x256xf32>
    %c0_9 = arith.constant 0 : index
    %c0_10 = arith.constant 0 : index
    %11 = vector.load %arg5[%c0_9, %c0_10] : memref<1x256xf32, #tpu.memory_space<vmem>>, vector<1x256xf32>
    %12 = vector.broadcast %11 : vector<1x256xf32> to vector<2x256xf32>
    %13 = arith.addf %10, %12 : vector<2x256xf32>
    %cst_11 = arith.constant 0.000000e+00 : f32
    %14 = vector.broadcast %cst_11 : f32 to vector<2x256xf32>
    %15 = arith.maximumf %13, %14 : vector<2x256xf32>
    %16 = arith.truncf %15 : vector<2x256xf32> to vector<2x256xbf16>
    %c0_12 = arith.constant 0 : index
    %c0_13 = arith.constant 0 : index
    %17 = vector.load %arg6[%c0_12, %c0_13] : memref<256x128xbf16, #tpu.memory_space<vmem>>, vector<256x128xbf16>
    %cst_14 = arith.constant dense<0.000000e+00> : vector<2x128xf32>
    %18 = tpu.matmul %16, %17, %cst_14 {dimension_numbers = #tpu.dot_dimension_numbers<[1], [0], [0], [1], [0, 0, 1, 1], [], []>} : vector<2x256xbf16>, vector<256x128xbf16>, vector<2x128xf32> -> vector<2x128xf32>
    %c0_15 = arith.constant 0 : index
    %c0_16 = arith.constant 0 : index
    %19 = vector.load %arg7[%c0_15, %c0_16] : memref<1x128xf32, #tpu.memory_space<vmem>>, vector<1x128xf32>
    %20 = vector.broadcast %19 : vector<1x128xf32> to vector<2x128xf32>
    %21 = arith.addf %18, %20 : vector<2x128xf32>
    %22 = vector.extract_strided_slice %21 {offsets = [0, 0], sizes = [2, 10], strides = [1, 1]} : vector<2x128xf32> to vector<2x10xf32>
    %c0_17 = arith.constant 0 : index
    %c0_18 = arith.constant 0 : index
    %23 = vector.load %arg8[%c0_17, %c0_18] : memref<2x10xf32, #tpu.memory_space<vmem>>, vector<2x10xf32>
    tpu.vector_store %arg8[%c0_17, %c0_18], %22 {strides = array<i32>} : memref<2x10xf32, #tpu.memory_space<vmem>>, vector<2x10xf32>,
    return
  }
  func.func @transform_0(%arg0: i32) -> (i32, i32) {
    %c0_i32 = arith.constant 0 : i32
    %c0_i32_0 = arith.constant 0 : i32
    %c0_i32_1 = arith.constant 0 : i32
    return %c0_i32, %c0_i32_0 : i32, i32
  }
  func.func @transform_1(%arg0: i32) -> (i32, i32) {
    %c0_i32 = arith.constant 0 : i32
    %c0_i32_0 = arith.constant 0 : i32
    %c0_i32_1 = arith.constant 0 : i32
    return %c0_i32, %c0_i32_0 : i32, i32
  }
  func.func @transform_2(%arg0: i32) -> (i32, i32) {
    %c0_i32 = arith.constant 0 : i32
    %c0_i32_0 = arith.constant 0 : i32
    %c0_i32_1 = arith.constant 0 : i32
    return %c0_i32, %c0_i32_0 : i32, i32
  }
  func.func @transform_3(%arg0: i32) -> (i32, i32) {
    %c0_i32 = arith.constant 0 : i32
    %c0_i32_0 = arith.constant 0 : i32
    %c0_i32_1 = arith.constant 0 : i32
    return %c0_i32, %c0_i32_0 : i32, i32
  }
  func.func @transform_4(%arg0: i32) -> (i32, i32) {
    %c0_i32 = arith.constant 0 : i32
    %c0_i32_0 = arith.constant 0 : i32
    %c0_i32_1 = arith.constant 0 : i32
    return %c0_i32, %c0_i32_0 : i32, i32
  }
  func.func @transform_5(%arg0: i32) -> (i32, i32) {
    %c0_i32 = arith.constant 0 : i32
    %c0_i32_0 = arith.constant 0 : i32
    %c0_i32_1 = arith.constant 0 : i32
    return %c0_i32, %c0_i32_0 : i32, i32
  }
  func.func @transform_6(%arg0: i32) -> (i32, i32) {
    %c0_i32 = arith.constant 0 : i32
    %c0_i32_0 = arith.constant 0 : i32
    %c0_i32_1 = arith.constant 0 : i32
    return %c0_i32, %c0_i32_0 : i32, i32
  }
  func.func @transform_7(%arg0: i32) -> (i32, i32) {
    %c0_i32 = arith.constant 0 : i32
    %c0_i32_0 = arith.constant 0 : i32
    %c0_i32_1 = arith.constant 0 : i32
    return %c0_i32, %c0_i32_0 : i32, i32
  }
}

</mosaic_0001>

<llo_original>
// kernel: forward.3
$region0: #{forward.3}
  #allocation0 [shape = 'u32[]', space=smem, size = 0x4, offset = 0x4, fixed_abs, tag = 'smem constant byte address 0x4 - core index']
  #allocation1 [shape = 'u32[144,128]{1,0:T(1,128)}', space=vmem, size = 0x12000, scoped, tag = 'internal scratch']
  %s0 = inlined_call_operand.vmem [shape: bf16[2,1024], index: 0, kind: input, shape index: {}]
  %s1 = inlined_call_operand.vmem [shape: bf16[1024,512], index: 1, kind: input, shape index: {}]
  %s2 = inlined_call_operand.vmem [shape: f32[1,512], index: 2, kind: input, shape index: {}]
  %s3 = inlined_call_operand.vmem [shape: bf16[512,256], index: 3, kind: input, shape index: {}]
  %s4 = inlined_call_operand.vmem [shape: f32[1,256], index: 4, kind: input, shape index: {}]
  %s5 = inlined_call_operand.vmem [shape: bf16[256,128], index: 5, kind: input, shape index: {}]
  %s6 = inlined_call_operand.vmem [shape: f32[1,128], index: 6, kind: input, shape index: {}]
  %s7 = inlined_call_operand.hbm [shape: f32[2,10], index: 7, kind: output, shape index: {}]
  %s8 = sld [smem:[#allocation0]]
  $region38: #{forward.3} parent=0
    _
  %s10 = ssub.s32 1, %s8
  %s11 = scalar_select 0, %s10, %s8
  $region1: #{forward.3} parent=0
    #allocation2 [shape = 'u8[1024]{0}', space=vmem, size = 0x400, scoped, tag = 'output window, operand 0, single buffered']
    #allocation3 [shape = 's32[1]{0}', space=sflag, size = 0x4, scoped, tag = 'scoped memory for forward.3']
    %12 = vsyncpa [#allocation3], 0
    // Predicated region
    $region2: #{forward.3} parent=1 // pred_check
      _
    $region3: #{forward.3} parent=1 // pred_check_branch
      %14 = sbr.rel (0) target = $region5
    $region4: #{forward.3} parent=1 // pred_region
      _
    $region5: #{forward.3} parent=1 // pred_fallthru
      _
    // Predicated region
    $region6: #{forward.3} parent=1 // pred_check
      _
    $region7: #{forward.3} parent=1 // pred_check_branch
      %16 = sbr.rel (0) target = $region9
    $region8: #{forward.3} parent=1 // pred_region
      _
    $region9: #{forward.3} parent=1 // pred_fallthru
      _
    // Predicated region
    $region10: #{forward.3} parent=1 // pred_check
      _
    $region11: #{forward.3} parent=1 // pred_check_branch
      %18 = sbr.rel (0) target = $region13
    $region12: #{forward.3} parent=1 // pred_region
      _
    $region13: #{forward.3} parent=1 // pred_fallthru
      _
    // Predicated region
    $region14: #{forward.3} parent=1 // pred_check
      _
    $region15: #{forward.3} parent=1 // pred_check_branch
      %20 = sbr.rel (0) target = $region17
    $region16: #{forward.3} parent=1 // pred_region
      _
    $region17: #{forward.3} parent=1 // pred_fallthru
      _
    // Predicated region
    $region18: #{forward.3} parent=1 // pred_check
      _
    $region19: #{forward.3} parent=1 // pred_check_branch
      %22 = sbr.rel (0) target = $region21
    $region20: #{forward.3} parent=1 // pred_region
      _
    $region21: #{forward.3} parent=1 // pred_fallthru
      _
    // Predicated region
    $region22: #{forward.3} parent=1 // pred_check
      _
    $region23: #{forward.3} parent=1 // pred_check_branch
      %24 = sbr.rel (0) target = $region25
    $region24: #{forward.3} parent=1 // pred_region
      _
    $region25: #{forward.3} parent=1 // pred_fallthru
      _
    // Predicated region
    $region26: #{forward.3} parent=1 // pred_check
      _
    $region27: #{forward.3} parent=1 // pred_check_branch
      %26 = sbr.rel (0) target = $region29
    $region28: #{forward.3} parent=1 // pred_region
      _
    $region29: #{forward.3} parent=1 // pred_fallthru
      _
    %v28 = vld [vmem:[%s0] sm:$0xff]
    %v29 = vld [vmem:[%s1] sm:$0xff]
    %v30 = vld [vmem:[%s1 + $0x8] sm:$0xff]
    %v31 = vld [vmem:[%s1 + $0x10] sm:$0xff]
    %v32 = vld [vmem:[%s1 + $0x18] sm:$0xff]
    %v33 = vld [vmem:[%s1 + $0x20] sm:$0xff]
    %v34 = vld [vmem:[%s1 + $0x28] sm:$0xff]
    %v35 = vld [vmem:[%s1 + $0x30] sm:$0xff]
    %v36 = vld [vmem:[%s1 + $0x38] sm:$0xff]
    %v37 = vld [vmem:[%s1 + $0x40] sm:$0xff]
    %v38 = vld [vmem:[%s1 + $0x48] sm:$0xff]
    %v39 = vld [vmem:[%s1 + $0x50] sm:$0xff]
    %v40 = vld [vmem:[%s1 + $0x58] sm:$0xff]
    %v41 = vld [vmem:[%s1 + $0x60] sm:$0xff]
    %v42 = vld [vmem:[%s1 + $0x68] sm:$0xff]
    %v43 = vld [vmem:[%s1 + $0x70] sm:$0xff]
    %v44 = vld [vmem:[%s1 + $0x78] sm:$0xff]
    %v45 = vld [vmem:[%s1 + $0x80] sm:$0xff]
    %v46 = vld [vmem:[%s1 + $0x88] sm:$0xff]
    %v47 = vld [vmem:[%s1 + $0x90] sm:$0xff]
    %v48 = vld [vmem:[%s1 + $0x98] sm:$0xff]
    %v49 = vld [vmem:[%s1 + $0xa0] sm:$0xff]
    %v50 = vld [vmem:[%s1 + $0xa8] sm:$0xff]
    %v51 = vld [vmem:[%s1 + $0xb0] sm:$0xff]
    %v52 = vld [vmem:[%s1 + $0xb8] sm:$0xff]
    %v53 = vld [vmem:[%s1 + $0xc0] sm:$0xff]
    %v54 = vld [vmem:[%s1 + $0xc8] sm:$0xff]
    %v55 = vld [vmem:[%s1 + $0xd0] sm:$0xff]
    %v56 = vld [vmem:[%s1 + $0xd8] sm:$0xff]
    %v57 = vld [vmem:[%s1 + $0xe0] sm:$0xff]
    %v58 = vld [vmem:[%s1 + $0xe8] sm:$0xff]
    %v59 = vld [vmem:[%s1 + $0xf0] sm:$0xff]
    %v60 = vld [vmem:[%s1 + $0xf8] sm:$0xff]
    %v61 = vld [vmem:[%s1 + $0x100] sm:$0xff]
    %v62 = vld [vmem:[%s1 + $0x108] sm:$0xff]
    %v63 = vld [vmem:[%s1 + $0x110] sm:$0xff]
    %v64 = vld [vmem:[%s1 + $0x118] sm:$0xff]
    %v65 = vld [vmem:[%s1 + $0x120] sm:$0xff]
    %v66 = vld [vmem:[%s1 + $0x128] sm:$0xff]
    %v67 = vld [vmem:[%s1 + $0x130] sm:$0xff]
    %v68 = vld [vmem:[%s1 + $0x138] sm:$0xff]
    %v69 = vld [vmem:[%s1 + $0x140] sm:$0xff]
    %v70 = vld [vmem:[%s1 + $0x148] sm:$0xff]
    %v71 = vld [vmem:[%s1 + $0x150] sm:$0xff]
    %v72 = vld [vmem:[%s1 + $0x158] sm:$0xff]
    %v73 = vld [vmem:[%s1 + $0x160] sm:$0xff]
    %v74 = vld [vmem:[%s1 + $0x168] sm:$0xff]
    %v75 = vld [vmem:[%s1 + $0x170] sm:$0xff]
    %v76 = vld [vmem:[%s1 + $0x178] sm:$0xff]
    %v77 = vld [vmem:[%s1 + $0x180] sm:$0xff]
    %v78 = vld [vmem:[%s1 + $0x188] sm:$0xff]
    %v79 = vld [vmem:[%s1 + $0x190] sm:$0xff]
    %v80 = vld [vmem:[%s1 + $0x198] sm:$0xff]
    %v81 = vld [vmem:[%s1 + $0x1a0] sm:$0xff]
    %v82 = vld [vmem:[%s1 + $0x1a8] sm:$0xff]
    %v83 = vld [vmem:[%s1 + $0x1b0] sm:$0xff]
    %v84 = vld [vmem:[%s1 + $0x1b8] sm:$0xff]
    %v85 = vld [vmem:[%s1 + $0x1c0] sm:$0xff]
    %v86 = vld [vmem:[%s1 + $0x1c8] sm:$0xff]
    %v87 = vld [vmem:[%s1 + $0x1d0] sm:$0xff]
    %v88 = vld [vmem:[%s1 + $0x1d8] sm:$0xff]
    %v89 = vld [vmem:[%s1 + $0x1e0] sm:$0xff]
    %v90 = vld [vmem:[%s1 + $0x1e8] sm:$0xff]
    %v91 = vld [vmem:[%s1 + $0x1f0] sm:$0xff]
    %v92 = vld [vmem:[%s1 + $0x1f8] sm:$0xff]
    %v93 = vld [vmem:[%s1 + $0x200] sm:$0xff]
    %v94 = vld [vmem:[%s1 + $0x208] sm:$0xff]
    %v95 = vld [vmem:[%s1 + $0x210] sm:$0xff]
    %v96 = vld [vmem:[%s1 + $0x218] sm:$0xff]
    %v97 = vld [vmem:[%s1 + $0x220] sm:$0xff]
    %v98 = vld [vmem:[%s1 + $0x228] sm:$0xff]
    %v99 = vld [vmem:[%s1 + $0x230] sm:$0xff]
    %v100 = vld [vmem:[%s1 + $0x238] sm:$0xff]
    %v101 = vld [vmem:[%s1 + $0x240] sm:$0xff]
    %v102 = vld [vmem:[%s1 + $0x248] sm:$0xff]
    %v103 = vld [vmem:[%s1 + $0x250] sm:$0xff]
    %v104 = vld [vmem:[%s1 + $0x258] sm:$0xff]
    %v105 = vld [vmem:[%s1 + $0x260] sm:$0xff]
    %v106 = vld [vmem:[%s1 + $0x268] sm:$0xff]
    %v107 = vld [vmem:[%s1 + $0x270] sm:$0xff]
    %v108 = vld [vmem:[%s1 + $0x278] sm:$0xff]
    %v109 = vld [vmem:[%s1 + $0x280] sm:$0xff]
    %v110 = vld [vmem:[%s1 + $0x288] sm:$0xff]
    %v111 = vld [vmem:[%s1 + $0x290] sm:$0xff]
    %v112 = vld [vmem:[%s1 + $0x298] sm:$0xff]
    %v113 = vld [vmem:[%s1 + $0x2a0] sm:$0xff]
    %v114 = vld [vmem:[%s1 + $0x2a8] sm:$0xff]
    %v115 = vld [vmem:[%s1 + $0x2b0] sm:$0xff]
    %v116 = vld [vmem:[%s1 + $0x2b8] sm:$0xff]
    %v117 = vld [vmem:[%s1 + $0x2c0] sm:$0xff]
    %v118 = vld [vmem:[%s1 + $0x2c8] sm:$0xff]
    %v119 = vld [vmem:[%s1 + $0x2d0] sm:$0xff]
    %v120 = vld [vmem:[%s1 + $0x2d8] sm:$0xff]
    %v121 = vld [vmem:[%s1 + $0x2e0] sm:$0xff]
    %v122 = vld [vmem:[%s1 + $0x2e8] sm:$0xff]
    %v123 = vld [vmem:[%s1 + $0x2f0] sm:$0xff]
    %v124 = vld [vmem:[%s1 + $0x2f8] sm:$0xff]
    %v125 = vld [vmem:[%s1 + $0x300] sm:$0xff]
    %v126 = vld [vmem:[%s1 + $0x308] sm:$0xff]
    %v127 = vld [vmem:[%s1 + $0x310] sm:$0xff]
    %v128 = vld [vmem:[%s1 + $0x318] sm:$0xff]
    %v129 = vld [vmem:[%s1 + $0x320] sm:$0xff]
    %v130 = vld [vmem:[%s1 + $0x328] sm:$0xff]
    %v131 = vld [vmem:[%s1 + $0x330] sm:$0xff]
    %v132 = vld [vmem:[%s1 + $0x338] sm:$0xff]
    %v133 = vld [vmem:[%s1 + $0x340] sm:$0xff]
    %v134 = vld [vmem:[%s1 + $0x348] sm:$0xff]
    %v135 = vld [vmem:[%s1 + $0x350] sm:$0xff]
    %v136 = vld [vmem:[%s1 + $0x358] sm:$0xff]
    %v137 = vld [vmem:[%s1 + $0x360] sm:$0xff]
    %v138 = vld [vmem:[%s1 + $0x368] sm:$0xff]
    %v139 = vld [vmem:[%s1 + $0x370] sm:$0xff]
    %v140 = vld [vmem:[%s1 + $0x378] sm:$0xff]
    %v141 = vld [vmem:[%s1 + $0x380] sm:$0xff]
    %v142 = vld [vmem:[%s1 + $0x388] sm:$0xff]
    %v143 = vld [vmem:[%s1 + $0x390] sm:$0xff]
    %v144 = vld [vmem:[%s1 + $0x398] sm:$0xff]
    %v145 = vld [vmem:[%s1 + $0x3a0] sm:$0xff]
    %v146 = vld [vmem:[%s1 + $0x3a8] sm:$0xff]
    %v147 = vld [vmem:[%s1 + $0x3b0] sm:$0xff]
    %v148 = vld [vmem:[%s1 + $0x3b8] sm:$0xff]
    %v149 = vld [vmem:[%s1 + $0x3c0] sm:$0xff]
    %v150 = vld [vmem:[%s1 + $0x3c8] sm:$0xff]
    %v151 = vld [vmem:[%s1 + $0x3d0] sm:$0xff]
    %v152 = vld [vmem:[%s1 + $0x3d8] sm:$0xff]
    %v153 = vld [vmem:[%s1 + $0x3e0] sm:$0xff]
    %v154 = vld [vmem:[%s1 + $0x3e8] sm:$0xff]
    %v155 = vld [vmem:[%s1 + $0x3f0] sm:$0xff]
    %v156 = vld [vmem:[%s1 + $0x3f8] sm:$0xff]
    %v157 = vld [vmem:[%s1 + $0x400] sm:$0xff]
    %v158 = vld [vmem:[%s1 + $0x408] sm:$0xff]
    %v159 = vld [vmem:[%s1 + $0x410] sm:$0xff]
    %v160 = vld [vmem:[%s1 + $0x418] sm:$0xff]
    %v161 = vld [vmem:[%s1 + $0x420] sm:$0xff]
    %v162 = vld [vmem:[%s1 + $0x428] sm:$0xff]
    %v163 = vld [vmem:[%s1 + $0x430] sm:$0xff]
    %v164 = vld [vmem:[%s1 + $0x438] sm:$0xff]
    %v165 = vld [vmem:[%s1 + $0x440] sm:$0xff]
    %v166 = vld [vmem:[%s1 + $0x448] sm:$0xff]
    %v167 = vld [vmem:[%s1 + $0x450] sm:$0xff]
    %v168 = vld [vmem:[%s1 + $0x458] sm:$0xff]
    %v169 = vld [vmem:[%s1 + $0x460] sm:$0xff]
    %v170 = vld [vmem:[%s1 + $0x468] sm:$0xff]
    %v171 = vld [vmem:[%s1 + $0x470] sm:$0xff]
    %v172 = vld [vmem:[%s1 + $0x478] sm:$0xff]
    %v173 = vld [vmem:[%s1 + $0x480] sm:$0xff]
    %v174 = vld [vmem:[%s1 + $0x488] sm:$0xff]
    %v175 = vld [vmem:[%s1 + $0x490] sm:$0xff]
    %v176 = vld [vmem:[%s1 + $0x498] sm:$0xff]
    %v177 = vld [vmem:[%s1 + $0x4a0] sm:$0xff]
    %v178 = vld [vmem:[%s1 + $0x4a8] sm:$0xff]
    %v179 = vld [vmem:[%s1 + $0x4b0] sm:$0xff]
    %v180 = vld [vmem:[%s1 + $0x4b8] sm:$0xff]
    %v181 = vld [vmem:[%s1 + $0x4c0] sm:$0xff]
    %v182 = vld [vmem:[%s1 + $0x4c8] sm:$0xff]
    %v183 = vld [vmem:[%s1 + $0x4d0] sm:$0xff]
    %v184 = vld [vmem:[%s1 + $0x4d8] sm:$0xff]
    %v185 = vld [vmem:[%s1 + $0x4e0] sm:$0xff]
    %v186 = vld [vmem:[%s1 + $0x4e8] sm:$0xff]
    %v187 = vld [vmem:[%s1 + $0x4f0] sm:$0xff]
    %v188 = vld [vmem:[%s1 + $0x4f8] sm:$0xff]
    %v189 = vld [vmem:[%s1 + $0x500] sm:$0xff]
    %v190 = vld [vmem:[%s1 + $0x508] sm:$0xff]
    %v191 = vld [vmem:[%s1 + $0x510] sm:$0xff]
    %v192 = vld [vmem:[%s1 + $0x518] sm:$0xff]
    %v193 = vld [vmem:[%s1 + $0x520] sm:$0xff]
    %v194 = vld [vmem:[%s1 + $0x528] sm:$0xff]
    %v195 = vld [vmem:[%s1 + $0x530] sm:$0xff]
    %v196 = vld [vmem:[%s1 + $0x538] sm:$0xff]
    %v197 = vld [vmem:[%s1 + $0x540] sm:$0xff]
    %v198 = vld [vmem:[%s1 + $0x548] sm:$0xff]
    %v199 = vld [vmem:[%s1 + $0x550] sm:$0xff]
    %v200 = vld [vmem:[%s1 + $0x558] sm:$0xff]
    %v201 = vld [vmem:[%s1 + $0x560] sm:$0xff]
    %v202 = vld [vmem:[%s1 + $0x568] sm:$0xff]
    %v203 = vld [vmem:[%s1 + $0x570] sm:$0xff]
    %v204 = vld [vmem:[%s1 + $0x578] sm:$0xff]
    %v205 = vld [vmem:[%s1 + $0x580] sm:$0xff]
    %v206 = vld [vmem:[%s1 + $0x588] sm:$0xff]
    %v207 = vld [vmem:[%s1 + $0x590] sm:$0xff]
    %v208 = vld [vmem:[%s1 + $0x598] sm:$0xff]
    %v209 = vld [vmem:[%s1 + $0x5a0] sm:$0xff]
    %v210 = vld [vmem:[%s1 + $0x5a8] sm:$0xff]
    %v211 = vld [vmem:[%s1 + $0x5b0] sm:$0xff]
    %v212 = vld [vmem:[%s1 + $0x5b8] sm:$0xff]
    %v213 = vld [vmem:[%s1 + $0x5c0] sm:$0xff]
    %v214 = vld [vmem:[%s1 + $0x5c8] sm:$0xff]
    %v215 = vld [vmem:[%s1 + $0x5d0] sm:$0xff]
    %v216 = vld [vmem:[%s1 + $0x5d8] sm:$0xff]
    %v217 = vld [vmem:[%s1 + $0x5e0] sm:$0xff]
    %v218 = vld [vmem:[%s1 + $0x5e8] sm:$0xff]
    %v219 = vld [vmem:[%s1 + $0x5f0] sm:$0xff]
    %v220 = vld [vmem:[%s1 + $0x5f8] sm:$0xff]
    %v221 = vld [vmem:[%s1 + $0x600] sm:$0xff]
    %v222 = vld [vmem:[%s1 + $0x608] sm:$0xff]
    %v223 = vld [vmem:[%s1 + $0x610] sm:$0xff]
    %v224 = vld [vmem:[%s1 + $0x618] sm:$0xff]
    %v225 = vld [vmem:[%s1 + $0x620] sm:$0xff]
    %v226 = vld [vmem:[%s1 + $0x628] sm:$0xff]
    %v227 = vld [vmem:[%s1 + $0x630] sm:$0xff]
    %v228 = vld [vmem:[%s1 + $0x638] sm:$0xff]
    %v229 = vld [vmem:[%s1 + $0x640] sm:$0xff]
    %v230 = vld [vmem:[%s1 + $0x648] sm:$0xff]
    %v231 = vld [vmem:[%s1 + $0x650] sm:$0xff]
    %v232 = vld [vmem:[%s1 + $0x658] sm:$0xff]
    %v233 = vld [vmem:[%s1 + $0x660] sm:$0xff]
    %v234 = vld [vmem:[%s1 + $0x668] sm:$0xff]
    %v235 = vld [vmem:[%s1 + $0x670] sm:$0xff]
    %v236 = vld [vmem:[%s1 + $0x678] sm:$0xff]
    %v237 = vld [vmem:[%s1 + $0x680] sm:$0xff]
    %v238 = vld [vmem:[%s1 + $0x688] sm:$0xff]
    %v239 = vld [vmem:[%s1 + $0x690] sm:$0xff]
    %v240 = vld [vmem:[%s1 + $0x698] sm:$0xff]
    %v241 = vld [vmem:[%s1 + $0x6a0] sm:$0xff]
    %v242 = vld [vmem:[%s1 + $0x6a8] sm:$0xff]
    %v243 = vld [vmem:[%s1 + $0x6b0] sm:$0xff]
    %v244 = vld [vmem:[%s1 + $0x6b8] sm:$0xff]
    %v245 = vld [vmem:[%s1 + $0x6c0] sm:$0xff]
    %v246 = vld [vmem:[%s1 + $0x6c8] sm:$0xff]
    %v247 = vld [vmem:[%s1 + $0x6d0] sm:$0xff]
    %v248 = vld [vmem:[%s1 + $0x6d8] sm:$0xff]
    %v249 = vld [vmem:[%s1 + $0x6e0] sm:$0xff]
    %v250 = vld [vmem:[%s1 + $0x6e8] sm:$0xff]
    %v251 = vld [vmem:[%s1 + $0x6f0] sm:$0xff]
    %v252 = vld [vmem:[%s1 + $0x6f8] sm:$0xff]
    %v253 = vld [vmem:[%s1 + $0x700] sm:$0xff]
    %v254 = vld [vmem:[%s1 + $0x708] sm:$0xff]
    %v255 = vld [vmem:[%s1 + $0x710] sm:$0xff]
    %v256 = vld [vmem:[%s1 + $0x718] sm:$0xff]
    %v257 = vld [vmem:[%s1 + $0x720] sm:$0xff]
    %v258 = vld [vmem:[%s1 + $0x728] sm:$0xff]
    %v259 = vld [vmem:[%s1 + $0x730] sm:$0xff]
    %v260 = vld [vmem:[%s1 + $0x738] sm:$0xff]
    %v261 = vld [vmem:[%s1 + $0x740] sm:$0xff]
    %v262 = vld [vmem:[%s1 + $0x748] sm:$0xff]
    %v263 = vld [vmem:[%s1 + $0x750] sm:$0xff]
    %v264 = vld [vmem:[%s1 + $0x758] sm:$0xff]
    %v265 = vld [vmem:[%s1 + $0x760] sm:$0xff]
    %v266 = vld [vmem:[%s1 + $0x768] sm:$0xff]
    %v267 = vld [vmem:[%s1 + $0x770] sm:$0xff]
    %v268 = vld [vmem:[%s1 + $0x778] sm:$0xff]
    %v269 = vld [vmem:[%s1 + $0x780] sm:$0xff]
    %v270 = vld [vmem:[%s1 + $0x788] sm:$0xff]
    %v271 = vld [vmem:[%s1 + $0x790] sm:$0xff]
    %v272 = vld [vmem:[%s1 + $0x798] sm:$0xff]
    %v273 = vld [vmem:[%s1 + $0x7a0] sm:$0xff]
    %v274 = vld [vmem:[%s1 + $0x7a8] sm:$0xff]
    %v275 = vld [vmem:[%s1 + $0x7b0] sm:$0xff]
    %v276 = vld [vmem:[%s1 + $0x7b8] sm:$0xff]
    %v277 = vld [vmem:[%s1 + $0x7c0] sm:$0xff]
    %v278 = vld [vmem:[%s1 + $0x7c8] sm:$0xff]
    %v279 = vld [vmem:[%s1 + $0x7d0] sm:$0xff]
    %v280 = vld [vmem:[%s1 + $0x7d8] sm:$0xff]
    %v281 = vld [vmem:[%s1 + $0x7e0] sm:$0xff]
    %v282 = vld [vmem:[%s1 + $0x7e8] sm:$0xff]
    %v283 = vld [vmem:[%s1 + $0x7f0] sm:$0xff]
    %v284 = vld [vmem:[%s1 + $0x7f8] sm:$0xff]
    %v285 = vld [vmem:[%s2] sm:$0xf]
    %v287 = vlaneseq
    %v288 = vshrl.u32 %v287, 7
    %v289 = vsub.s32 0, %v288
    %v290 = vrot.slane %v285, %v289
    %v291 = vlaneseq
    %v292 = vshrl.u32 %v291, 7
    %v293 = vsub.s32 1, %v292
    %v294 = vrot.slane %v285, %v293
    %v295 = vlaneseq
    %v296 = vshrl.u32 %v295, 7
    %v297 = vsub.s32 2, %v296
    %v298 = vrot.slane %v285, %v297
    %v299 = vlaneseq
    %v300 = vshrl.u32 %v299, 7
    %v301 = vsub.s32 3, %v300
    %v302 = vrot.slane %v285, %v301
    %v308 = vcombine.high %v28, %v28
    %v310 = vunpack.c.l.s4 1966171168
    %v311 = vunpack.c.0.s8 %v310
    %v312 = vlaneseq
    %v313 = vshrl.u32 %v312, 7
    %v314 = vsub.s32 %v311, %v313
    %v315 = vrot.slane %v28, %v314
    %v317 = vunpack.c.l.s4 1966171168
    %v318 = vunpack.c.0.s8 %v317
    %v319 = vlaneseq
    %v320 = vshrl.u32 %v319, 7
    %v321 = vsub.s32 %v318, %v320
    %v322 = vrot.slane %v308, %v321
    %v323 = vcombine.high %v315, %v315
    %v324 = vcombine.high %v322, %v322
    %v326 = vunpack.c.l.s4 1966171168
    %v327 = vunpack.c.0.s8 %v326
    %v328 = vlaneseq
    %v329 = vshrl.u32 %v328, 7
    %v330 = vsub.s32 %v327, %v329
    %v331 = vrot.slane %v315, %v330
    %v333 = vunpack.c.l.s4 1966171168
    %v334 = vunpack.c.0.s8 %v333
    %v335 = vlaneseq
    %v336 = vshrl.u32 %v335, 7
    %v337 = vsub.s32 %v334, %v336
    %v338 = vrot.slane %v322, %v337
    %v340 = vunpack.c.l.s4 1966171168
    %v341 = vunpack.c.0.s8 %v340
    %v342 = vlaneseq
    %v343 = vshrl.u32 %v342, 7
    %v344 = vsub.s32 %v341, %v343
    %v345 = vrot.slane %v323, %v344
    %v347 = vunpack.c.l.s4 1966171168
    %v348 = vunpack.c.0.s8 %v347
    %v349 = vlaneseq
    %v350 = vshrl.u32 %v349, 7
    %v351 = vsub.s32 %v348, %v350
    %v352 = vrot.slane %v324, %v351
    %v353 = vcombine.high %v331, %v331
    %v354 = vcombine.high %v338, %v338
    %v355 = vcombine.high %v345, %v345
    %v356 = vcombine.high %v352, %v352
    %v621 = vunpack.c.l.b16 %v29
    %v622 = vunpack.c.h.b16 %v29
    %v623 = vunpack.c.l.b16 %v30
    %v624 = vunpack.c.h.b16 %v30
    %v625 = vunpack.c.l.b16 %v31
    %v626 = vunpack.c.h.b16 %v31
    %v627 = vunpack.c.l.b16 %v32
    %v628 = vunpack.c.h.b16 %v32
    %v629 = vunpack.c.l.b16 %v33
    %v630 = vunpack.c.h.b16 %v33
    %v631 = vunpack.c.l.b16 %v34
    %v632 = vunpack.c.h.b16 %v34
    %v633 = vunpack.c.l.b16 %v35
    %v634 = vunpack.c.h.b16 %v35
    %v635 = vunpack.c.l.b16 %v36
    %v636 = vunpack.c.h.b16 %v36
    %v637 = vunpack.c.l.b16 %v37
    %v638 = vunpack.c.h.b16 %v37
    %v639 = vunpack.c.l.b16 %v38
    %v640 = vunpack.c.h.b16 %v38
    %v641 = vunpack.c.l.b16 %v39
    %v642 = vunpack.c.h.b16 %v39
    %v643 = vunpack.c.l.b16 %v40
    %v644 = vunpack.c.h.b16 %v40
    %v645 = vunpack.c.l.b16 %v41
    %v646 = vunpack.c.h.b16 %v41
    %v647 = vunpack.c.l.b16 %v42
    %v648 = vunpack.c.h.b16 %v42
    %v649 = vunpack.c.l.b16 %v43
    %v650 = vunpack.c.h.b16 %v43
    %v651 = vunpack.c.l.b16 %v44
    %v652 = vunpack.c.h.b16 %v44
    %v653 = vunpack.c.l.b16 %v45
    %v654 = vunpack.c.h.b16 %v45
    %v655 = vunpack.c.l.b16 %v46
    %v656 = vunpack.c.h.b16 %v46
    %v657 = vunpack.c.l.b16 %v47
    %v658 = vunpack.c.h.b16 %v47
    %v659 = vunpack.c.l.b16 %v48
    %v660 = vunpack.c.h.b16 %v48
    %v661 = vunpack.c.l.b16 %v49
    %v662 = vunpack.c.h.b16 %v49
    %v663 = vunpack.c.l.b16 %v50
    %v664 = vunpack.c.h.b16 %v50
    %v665 = vunpack.c.l.b16 %v51
    %v666 = vunpack.c.h.b16 %v51
    %v667 = vunpack.c.l.b16 %v52
    %v668 = vunpack.c.h.b16 %v52
    %v669 = vunpack.c.l.b16 %v53
    %v670 = vunpack.c.h.b16 %v53
    %v671 = vunpack.c.l.b16 %v54
    %v672 = vunpack.c.h.b16 %v54
    %v673 = vunpack.c.l.b16 %v55
    %v674 = vunpack.c.h.b16 %v55
    %v675 = vunpack.c.l.b16 %v56
    %v676 = vunpack.c.h.b16 %v56
    %v677 = vunpack.c.l.b16 %v57
    %v678 = vunpack.c.h.b16 %v57
    %v679 = vunpack.c.l.b16 %v58
    %v680 = vunpack.c.h.b16 %v58
    %v681 = vunpack.c.l.b16 %v59
    %v682 = vunpack.c.h.b16 %v59
    %v683 = vunpack.c.l.b16 %v60
    %v684 = vunpack.c.h.b16 %v60
    %v685 = vunpack.c.l.b16 %v61
    %v686 = vunpack.c.h.b16 %v61
    %v687 = vunpack.c.l.b16 %v62
    %v688 = vunpack.c.h.b16 %v62
    %v689 = vunpack.c.l.b16 %v63
    %v690 = vunpack.c.h.b16 %v63
    %v691 = vunpack.c.l.b16 %v64
    %v692 = vunpack.c.h.b16 %v64
    %v693 = vunpack.c.l.b16 %v65
    %v694 = vunpack.c.h.b16 %v65
    %v695 = vunpack.c.l.b16 %v66
    %v696 = vunpack.c.h.b16 %v66
    %v697 = vunpack.c.l.b16 %v67
    %v698 = vunpack.c.h.b16 %v67
    %v699 = vunpack.c.l.b16 %v68
    %v700 = vunpack.c.h.b16 %v68
    %v701 = vunpack.c.l.b16 %v69
    %v702 = vunpack.c.h.b16 %v69
    %v703 = vunpack.c.l.b16 %v70
    %v704 = vunpack.c.h.b16 %v70
    %v705 = vunpack.c.l.b16 %v71
    %v706 = vunpack.c.h.b16 %v71
    %v707 = vunpack.c.l.b16 %v72
    %v708 = vunpack.c.h.b16 %v72
    %v709 = vunpack.c.l.b16 %v73
    %v710 = vunpack.c.h.b16 %v73
    %v711 = vunpack.c.l.b16 %v74
    %v712 = vunpack.c.h.b16 %v74
    %v713 = vunpack.c.l.b16 %v75
    %v714 = vunpack.c.h.b16 %v75
    %v715 = vunpack.c.l.b16 %v76
    %v716 = vunpack.c.h.b16 %v76
    %v717 = vunpack.c.l.b16 %v77
    %v718 = vunpack.c.h.b16 %v77
    %v719 = vunpack.c.l.b16 %v78
    %v720 = vunpack.c.h.b16 %v78
    %v721 = vunpack.c.l.b16 %v79
    %v722 = vunpack.c.h.b16 %v79
    %v723 = vunpack.c.l.b16 %v80
    %v724 = vunpack.c.h.b16 %v80
    %v725 = vunpack.c.l.b16 %v81
    %v726 = vunpack.c.h.b16 %v81
    %v727 = vunpack.c.l.b16 %v82
    %v728 = vunpack.c.h.b16 %v82
    %v729 = vunpack.c.l.b16 %v83
    %v730 = vunpack.c.h.b16 %v83
    %v731 = vunpack.c.l.b16 %v84
    %v732 = vunpack.c.h.b16 %v84
    %v733 = vunpack.c.l.b16 %v85
    %v734 = vunpack.c.h.b16 %v85
    %v735 = vunpack.c.l.b16 %v86
    %v736 = vunpack.c.h.b16 %v86
    %v737 = vunpack.c.l.b16 %v87
    %v738 = vunpack.c.h.b16 %v87
    %v739 = vunpack.c.l.b16 %v88
    %v740 = vunpack.c.h.b16 %v88
    %v741 = vunpack.c.l.b16 %v89
    %v742 = vunpack.c.h.b16 %v89
    %v743 = vunpack.c.l.b16 %v90
    %v744 = vunpack.c.h.b16 %v90
    %v745 = vunpack.c.l.b16 %v91
    %v746 = vunpack.c.h.b16 %v91
    %v747 = vunpack.c.l.b16 %v92
    %v748 = vunpack.c.h.b16 %v92
    %v749 = vunpack.c.l.b16 %v93
    %v750 = vunpack.c.h.b16 %v93
    %v751 = vunpack.c.l.b16 %v94
    %v752 = vunpack.c.h.b16 %v94
    %v753 = vunpack.c.l.b16 %v95
    %v754 = vunpack.c.h.b16 %v95
    %v755 = vunpack.c.l.b16 %v96
    %v756 = vunpack.c.h.b16 %v96
    %v757 = vunpack.c.l.b16 %v97
    %v758 = vunpack.c.h.b16 %v97
    %v759 = vunpack.c.l.b16 %v98
    %v760 = vunpack.c.h.b16 %v98
    %v761 = vunpack.c.l.b16 %v99
    %v762 = vunpack.c.h.b16 %v99
    %v763 = vunpack.c.l.b16 %v100
    %v764 = vunpack.c.h.b16 %v100
    %v765 = vunpack.c.l.b16 %v101
    %v766 = vunpack.c.h.b16 %v101
    %v767 = vunpack.c.l.b16 %v102
    %v768 = vunpack.c.h.b16 %v102
    %v769 = vunpack.c.l.b16 %v103
    %v770 = vunpack.c.h.b16 %v103
    %v771 = vunpack.c.l.b16 %v104
    %v772 = vunpack.c.h.b16 %v104
    %v773 = vunpack.c.l.b16 %v105
    %v774 = vunpack.c.h.b16 %v105
    %v775 = vunpack.c.l.b16 %v106
    %v776 = vunpack.c.h.b16 %v106
    %v777 = vunpack.c.l.b16 %v107
    %v778 = vunpack.c.h.b16 %v107
    %v779 = vunpack.c.l.b16 %v108
    %v780 = vunpack.c.h.b16 %v108
    %v781 = vunpack.c.l.b16 %v109
    %v782 = vunpack.c.h.b16 %v109
    %v783 = vunpack.c.l.b16 %v110
    %v784 = vunpack.c.h.b16 %v110
    %v785 = vunpack.c.l.b16 %v111
    %v786 = vunpack.c.h.b16 %v111
    %v787 = vunpack.c.l.b16 %v112
    %v788 = vunpack.c.h.b16 %v112
    %v789 = vunpack.c.l.b16 %v113
    %v790 = vunpack.c.h.b16 %v113
    %v791 = vunpack.c.l.b16 %v114
    %v792 = vunpack.c.h.b16 %v114
    %v793 = vunpack.c.l.b16 %v115
    %v794 = vunpack.c.h.b16 %v115
    %v795 = vunpack.c.l.b16 %v116
    %v796 = vunpack.c.h.b16 %v116
    %v797 = vunpack.c.l.b16 %v117
    %v798 = vunpack.c.h.b16 %v117
    %v799 = vunpack.c.l.b16 %v118
    %v800 = vunpack.c.h.b16 %v118
    %v801 = vunpack.c.l.b16 %v119
    %v802 = vunpack.c.h.b16 %v119
    %v803 = vunpack.c.l.b16 %v120
    %v804 = vunpack.c.h.b16 %v120
    %v805 = vunpack.c.l.b16 %v121
    %v806 = vunpack.c.h.b16 %v121
    %v807 = vunpack.c.l.b16 %v122
    %v808 = vunpack.c.h.b16 %v122
    %v809 = vunpack.c.l.b16 %v123
    %v810 = vunpack.c.h.b16 %v123
    %v811 = vunpack.c.l.b16 %v124
    %v812 = vunpack.c.h.b16 %v124
    %v813 = vunpack.c.l.b16 %v125
    %v814 = vunpack.c.h.b16 %v125
    %v815 = vunpack.c.l.b16 %v126
    %v816 = vunpack.c.h.b16 %v126
    %v817 = vunpack.c.l.b16 %v127
    %v818 = vunpack.c.h.b16 %v127
    %v819 = vunpack.c.l.b16 %v128
    %v820 = vunpack.c.h.b16 %v128
    %v821 = vunpack.c.l.b16 %v129
    %v822 = vunpack.c.h.b16 %v129
    %v823 = vunpack.c.l.b16 %v130
    %v824 = vunpack.c.h.b16 %v130
    %v825 = vunpack.c.l.b16 %v131
    %v826 = vunpack.c.h.b16 %v131
    %v827 = vunpack.c.l.b16 %v132
    %v828 = vunpack.c.h.b16 %v132
    %v829 = vunpack.c.l.b16 %v133
    %v830 = vunpack.c.h.b16 %v133
    %v831 = vunpack.c.l.b16 %v134
    %v832 = vunpack.c.h.b16 %v134
    %v833 = vunpack.c.l.b16 %v135
    %v834 = vunpack.c.h.b16 %v135
    %v835 = vunpack.c.l.b16 %v136
    %v836 = vunpack.c.h.b16 %v136
    %v837 = vunpack.c.l.b16 %v137
    %v838 = vunpack.c.h.b16 %v137
    %v839 = vunpack.c.l.b16 %v138
    %v840 = vunpack.c.h.b16 %v138
    %v841 = vunpack.c.l.b16 %v139
    %v842 = vunpack.c.h.b16 %v139
    %v843 = vunpack.c.l.b16 %v140
    %v844 = vunpack.c.h.b16 %v140
    %v845 = vunpack.c.l.b16 %v141
    %v846 = vunpack.c.h.b16 %v141
    %v847 = vunpack.c.l.b16 %v142
    %v848 = vunpack.c.h.b16 %v142
    %v849 = vunpack.c.l.b16 %v143
    %v850 = vunpack.c.h.b16 %v143
    %v851 = vunpack.c.l.b16 %v144
    %v852 = vunpack.c.h.b16 %v144
    %v853 = vunpack.c.l.b16 %v145
    %v854 = vunpack.c.h.b16 %v145
    %v855 = vunpack.c.l.b16 %v146
    %v856 = vunpack.c.h.b16 %v146
    %v857 = vunpack.c.l.b16 %v147
    %v858 = vunpack.c.h.b16 %v147
    %v859 = vunpack.c.l.b16 %v148
    %v860 = vunpack.c.h.b16 %v148
    %v861 = vunpack.c.l.b16 %v149
    %v862 = vunpack.c.h.b16 %v149
    %v863 = vunpack.c.l.b16 %v150
    %v864 = vunpack.c.h.b16 %v150
    %v865 = vunpack.c.l.b16 %v151
    %v866 = vunpack.c.h.b16 %v151
    %v867 = vunpack.c.l.b16 %v152
    %v868 = vunpack.c.h.b16 %v152
    %v869 = vunpack.c.l.b16 %v153
    %v870 = vunpack.c.h.b16 %v153
    %v871 = vunpack.c.l.b16 %v154
    %v872 = vunpack.c.h.b16 %v154
    %v873 = vunpack.c.l.b16 %v155
    %v874 = vunpack.c.h.b16 %v155
    %v875 = vunpack.c.l.b16 %v156
    %v876 = vunpack.c.h.b16 %v156
    %v877 = vunpack.c.l.b16 %v157
    %v878 = vunpack.c.h.b16 %v157
    %v879 = vunpack.c.l.b16 %v158
    %v880 = vunpack.c.h.b16 %v158
    %v881 = vunpack.c.l.b16 %v159
    %v882 = vunpack.c.h.b16 %v159
    %v883 = vunpack.c.l.b16 %v160
    %v884 = vunpack.c.h.b16 %v160
    %v885 = vunpack.c.l.b16 %v161
    %v886 = vunpack.c.h.b16 %v161
    %v887 = vunpack.c.l.b16 %v162
    %v888 = vunpack.c.h.b16 %v162
    %v889 = vunpack.c.l.b16 %v163
    %v890 = vunpack.c.h.b16 %v163
    %v891 = vunpack.c.l.b16 %v164
    %v892 = vunpack.c.h.b16 %v164
    %v893 = vunpack.c.l.b16 %v165
    %v894 = vunpack.c.h.b16 %v165
    %v895 = vunpack.c.l.b16 %v166
    %v896 = vunpack.c.h.b16 %v166
    %v897 = vunpack.c.l.b16 %v167
    %v898 = vunpack.c.h.b16 %v167
    %v899 = vunpack.c.l.b16 %v168
    %v900 = vunpack.c.h.b16 %v168
    %v901 = vunpack.c.l.b16 %v169
    %v902 = vunpack.c.h.b16 %v169
    %v903 = vunpack.c.l.b16 %v170
    %v904 = vunpack.c.h.b16 %v170
    %v905 = vunpack.c.l.b16 %v171
    %v906 = vunpack.c.h.b16 %v171
    %v907 = vunpack.c.l.b16 %v172
    %v908 = vunpack.c.h.b16 %v172
    %v909 = vunpack.c.l.b16 %v173
    %v910 = vunpack.c.h.b16 %v173
    %v911 = vunpack.c.l.b16 %v174
    %v912 = vunpack.c.h.b16 %v174
    %v913 = vunpack.c.l.b16 %v175
    %v914 = vunpack.c.h.b16 %v175
    %v915 = vunpack.c.l.b16 %v176
    %v916 = vunpack.c.h.b16 %v176
    %v917 = vunpack.c.l.b16 %v177
    %v918 = vunpack.c.h.b16 %v177
    %v919 = vunpack.c.l.b16 %v178
    %v920 = vunpack.c.h.b16 %v178
    %v921 = vunpack.c.l.b16 %v179
    %v922 = vunpack.c.h.b16 %v179
    %v923 = vunpack.c.l.b16 %v180
    %v924 = vunpack.c.h.b16 %v180
    %v925 = vunpack.c.l.b16 %v181
    %v926 = vunpack.c.h.b16 %v181
    %v927 = vunpack.c.l.b16 %v182
    %v928 = vunpack.c.h.b16 %v182
    %v929 = vunpack.c.l.b16 %v183
    %v930 = vunpack.c.h.b16 %v183
    %v931 = vunpack.c.l.b16 %v184
    %v932 = vunpack.c.h.b16 %v184
    %v933 = vunpack.c.l.b16 %v185
    %v934 = vunpack.c.h.b16 %v185
    %v935 = vunpack.c.l.b16 %v186
    %v936 = vunpack.c.h.b16 %v186
    %v937 = vunpack.c.l.b16 %v187
    %v938 = vunpack.c.h.b16 %v187
    %v939 = vunpack.c.l.b16 %v188
    %v940 = vunpack.c.h.b16 %v188
    %v941 = vunpack.c.l.b16 %v189
    %v942 = vunpack.c.h.b16 %v189
    %v943 = vunpack.c.l.b16 %v190
    %v944 = vunpack.c.h.b16 %v190
    %v945 = vunpack.c.l.b16 %v191
    %v946 = vunpack.c.h.b16 %v191
    %v947 = vunpack.c.l.b16 %v192
    %v948 = vunpack.c.h.b16 %v192
    %v949 = vunpack.c.l.b16 %v193
    %v950 = vunpack.c.h.b16 %v193
    %v951 = vunpack.c.l.b16 %v194
    %v952 = vunpack.c.h.b16 %v194
    %v953 = vunpack.c.l.b16 %v195
    %v954 = vunpack.c.h.b16 %v195
    %v955 = vunpack.c.l.b16 %v196
    %v956 = vunpack.c.h.b16 %v196
    %v957 = vunpack.c.l.b16 %v197
    %v958 = vunpack.c.h.b16 %v197
    %v959 = vunpack.c.l.b16 %v198
    %v960 = vunpack.c.h.b16 %v198
    %v961 = vunpack.c.l.b16 %v199
    %v962 = vunpack.c.h.b16 %v199
    %v963 = vunpack.c.l.b16 %v200
    %v964 = vunpack.c.h.b16 %v200
    %v965 = vunpack.c.l.b16 %v201
    %v966 = vunpack.c.h.b16 %v201
    %v967 = vunpack.c.l.b16 %v202
    %v968 = vunpack.c.h.b16 %v202
    %v969 = vunpack.c.l.b16 %v203
    %v970 = vunpack.c.h.b16 %v203
    %v971 = vunpack.c.l.b16 %v204
    %v972 = vunpack.c.h.b16 %v204
    %v973 = vunpack.c.l.b16 %v205
    %v974 = vunpack.c.h.b16 %v205
    %v975 = vunpack.c.l.b16 %v206
    %v976 = vunpack.c.h.b16 %v206
    %v977 = vunpack.c.l.b16 %v207
    %v978 = vunpack.c.h.b16 %v207
    %v979 = vunpack.c.l.b16 %v208
    %v980 = vunpack.c.h.b16 %v208
    %v981 = vunpack.c.l.b16 %v209
    %v982 = vunpack.c.h.b16 %v209
    %v983 = vunpack.c.l.b16 %v210
    %v984 = vunpack.c.h.b16 %v210
    %v985 = vunpack.c.l.b16 %v211
    %v986 = vunpack.c.h.b16 %v211
    %v987 = vunpack.c.l.b16 %v212
    %v988 = vunpack.c.h.b16 %v212
    %v989 = vunpack.c.l.b16 %v213
    %v990 = vunpack.c.h.b16 %v213
    %v991 = vunpack.c.l.b16 %v214
    %v992 = vunpack.c.h.b16 %v214
    %v993 = vunpack.c.l.b16 %v215
    %v994 = vunpack.c.h.b16 %v215
    %v995 = vunpack.c.l.b16 %v216
    %v996 = vunpack.c.h.b16 %v216
    %v997 = vunpack.c.l.b16 %v217
    %v998 = vunpack.c.h.b16 %v217
    %v999 = vunpack.c.l.b16 %v218
    %v1000 = vunpack.c.h.b16 %v218
    %v1001 = vunpack.c.l.b16 %v219
    %v1002 = vunpack.c.h.b16 %v219
    %v1003 = vunpack.c.l.b16 %v220
    %v1004 = vunpack.c.h.b16 %v220
    %v1005 = vunpack.c.l.b16 %v221
    %v1006 = vunpack.c.h.b16 %v221
    %v1007 = vunpack.c.l.b16 %v222
    %v1008 = vunpack.c.h.b16 %v222
    %v1009 = vunpack.c.l.b16 %v223
    %v1010 = vunpack.c.h.b16 %v223
    %v1011 = vunpack.c.l.b16 %v224
    %v1012 = vunpack.c.h.b16 %v224
    %v1013 = vunpack.c.l.b16 %v225
    %v1014 = vunpack.c.h.b16 %v225
    %v1015 = vunpack.c.l.b16 %v226
    %v1016 = vunpack.c.h.b16 %v226
    %v1017 = vunpack.c.l.b16 %v227
    %v1018 = vunpack.c.h.b16 %v227
    %v1019 = vunpack.c.l.b16 %v228
    %v1020 = vunpack.c.h.b16 %v228
    %v1021 = vunpack.c.l.b16 %v229
    %v1022 = vunpack.c.h.b16 %v229
    %v1023 = vunpack.c.l.b16 %v230
    %v1024 = vunpack.c.h.b16 %v230
    %v1025 = vunpack.c.l.b16 %v231
    %v1026 = vunpack.c.h.b16 %v231
    %v1027 = vunpack.c.l.b16 %v232
    %v1028 = vunpack.c.h.b16 %v232
    %v1029 = vunpack.c.l.b16 %v233
    %v1030 = vunpack.c.h.b16 %v233
    %v1031 = vunpack.c.l.b16 %v234
    %v1032 = vunpack.c.h.b16 %v234
    %v1033 = vunpack.c.l.b16 %v235
    %v1034 = vunpack.c.h.b16 %v235
    %v1035 = vunpack.c.l.b16 %v236
    %v1036 = vunpack.c.h.b16 %v236
    %v1037 = vunpack.c.l.b16 %v237
    %v1038 = vunpack.c.h.b16 %v237
    %v1039 = vunpack.c.l.b16 %v238
    %v1040 = vunpack.c.h.b16 %v238
    %v1041 = vunpack.c.l.b16 %v239
    %v1042 = vunpack.c.h.b16 %v239
    %v1043 = vunpack.c.l.b16 %v240
    %v1044 = vunpack.c.h.b16 %v240
    %v1045 = vunpack.c.l.b16 %v241
    %v1046 = vunpack.c.h.b16 %v241
    %v1047 = vunpack.c.l.b16 %v242
    %v1048 = vunpack.c.h.b16 %v242
    %v1049 = vunpack.c.l.b16 %v243
    %v1050 = vunpack.c.h.b16 %v243
    %v1051 = vunpack.c.l.b16 %v244
    %v1052 = vunpack.c.h.b16 %v244
    %v1053 = vunpack.c.l.b16 %v245
    %v1054 = vunpack.c.h.b16 %v245
    %v1055 = vunpack.c.l.b16 %v246
    %v1056 = vunpack.c.h.b16 %v246
    %v1057 = vunpack.c.l.b16 %v247
    %v1058 = vunpack.c.h.b16 %v247
    %v1059 = vunpack.c.l.b16 %v248
    %v1060 = vunpack.c.h.b16 %v248
    %v1061 = vunpack.c.l.b16 %v249
    %v1062 = vunpack.c.h.b16 %v249
    %v1063 = vunpack.c.l.b16 %v250
    %v1064 = vunpack.c.h.b16 %v250
    %v1065 = vunpack.c.l.b16 %v251
    %v1066 = vunpack.c.h.b16 %v251
    %v1067 = vunpack.c.l.b16 %v252
    %v1068 = vunpack.c.h.b16 %v252
    %v1069 = vunpack.c.l.b16 %v253
    %v1070 = vunpack.c.h.b16 %v253
    %v1071 = vunpack.c.l.b16 %v254
    %v1072 = vunpack.c.h.b16 %v254
    %v1073 = vunpack.c.l.b16 %v255
    %v1074 = vunpack.c.h.b16 %v255
    %v1075 = vunpack.c.l.b16 %v256
    %v1076 = vunpack.c.h.b16 %v256
    %v1077 = vunpack.c.l.b16 %v257
    %v1078 = vunpack.c.h.b16 %v257
    %v1079 = vunpack.c.l.b16 %v258
    %v1080 = vunpack.c.h.b16 %v258
    %v1081 = vunpack.c.l.b16 %v259
    %v1082 = vunpack.c.h.b16 %v259
    %v1083 = vunpack.c.l.b16 %v260
    %v1084 = vunpack.c.h.b16 %v260
    %v1085 = vunpack.c.l.b16 %v261
    %v1086 = vunpack.c.h.b16 %v261
    %v1087 = vunpack.c.l.b16 %v262
    %v1088 = vunpack.c.h.b16 %v262
    %v1089 = vunpack.c.l.b16 %v263
    %v1090 = vunpack.c.h.b16 %v263
    %v1091 = vunpack.c.l.b16 %v264
    %v1092 = vunpack.c.h.b16 %v264
    %v1093 = vunpack.c.l.b16 %v265
    %v1094 = vunpack.c.h.b16 %v265
    %v1095 = vunpack.c.l.b16 %v266
    %v1096 = vunpack.c.h.b16 %v266
    %v1097 = vunpack.c.l.b16 %v267
    %v1098 = vunpack.c.h.b16 %v267
    %v1099 = vunpack.c.l.b16 %v268
    %v1100 = vunpack.c.h.b16 %v268
    %v1101 = vunpack.c.l.b16 %v269
    %v1102 = vunpack.c.h.b16 %v269
    %v1103 = vunpack.c.l.b16 %v270
    %v1104 = vunpack.c.h.b16 %v270
    %v1105 = vunpack.c.l.b16 %v271
    %v1106 = vunpack.c.h.b16 %v271
    %v1107 = vunpack.c.l.b16 %v272
    %v1108 = vunpack.c.h.b16 %v272
    %v1109 = vunpack.c.l.b16 %v273
    %v1110 = vunpack.c.h.b16 %v273
    %v1111 = vunpack.c.l.b16 %v274
    %v1112 = vunpack.c.h.b16 %v274
    %v1113 = vunpack.c.l.b16 %v275
    %v1114 = vunpack.c.h.b16 %v275
    %v1115 = vunpack.c.l.b16 %v276
    %v1116 = vunpack.c.h.b16 %v276
    %v1117 = vunpack.c.l.b16 %v277
    %v1118 = vunpack.c.h.b16 %v277
    %v1119 = vunpack.c.l.b16 %v278
    %v1120 = vunpack.c.h.b16 %v278
    %v1121 = vunpack.c.l.b16 %v279
    %v1122 = vunpack.c.h.b16 %v279
    %v1123 = vunpack.c.l.b16 %v280
    %v1124 = vunpack.c.h.b16 %v280
    %v1125 = vunpack.c.l.b16 %v281
    %v1126 = vunpack.c.h.b16 %v281
    %v1127 = vunpack.c.l.b16 %v282
    %v1128 = vunpack.c.h.b16 %v282
    %v1129 = vunpack.c.l.b16 %v283
    %v1130 = vunpack.c.h.b16 %v283
    %v1131 = vunpack.c.l.b16 %v284
    %v1132 = vunpack.c.h.b16 %v284
    %v1133 = vpack.c.b16 %v625, %v621
    %v1134 = vpack.c.b16 %v626, %v622
    %v1135 = vpack.c.b16 %v627, %v623
    %v1136 = vpack.c.b16 %v628, %v624
    %v1137 = vpack.c.b16 %v633, %v629
    %v1138 = vpack.c.b16 %v634, %v630
    %v1139 = vpack.c.b16 %v635, %v631
    %v1140 = vpack.c.b16 %v636, %v632
    %v1141 = vpack.c.b16 %v641, %v637
    %v1142 = vpack.c.b16 %v642, %v638
    %v1143 = vpack.c.b16 %v643, %v639
    %v1144 = vpack.c.b16 %v644, %v640
    %v1145 = vpack.c.b16 %v649, %v645
    %v1146 = vpack.c.b16 %v650, %v646
    %v1147 = vpack.c.b16 %v651, %v647
    %v1148 = vpack.c.b16 %v652, %v648
    %v1149 = vpack.c.b16 %v657, %v653
    %v1150 = vpack.c.b16 %v658, %v654
    %v1151 = vpack.c.b16 %v659, %v655
    %v1152 = vpack.c.b16 %v660, %v656
    %v1153 = vpack.c.b16 %v665, %v661
    %v1154 = vpack.c.b16 %v666, %v662
    %v1155 = vpack.c.b16 %v667, %v663
    %v1156 = vpack.c.b16 %v668, %v664
    %v1157 = vpack.c.b16 %v673, %v669
    %v1158 = vpack.c.b16 %v674, %v670
    %v1159 = vpack.c.b16 %v675, %v671
    %v1160 = vpack.c.b16 %v676, %v672
    %v1161 = vpack.c.b16 %v681, %v677
    %v1162 = vpack.c.b16 %v682, %v678
    %v1163 = vpack.c.b16 %v683, %v679
    %v1164 = vpack.c.b16 %v684, %v680
    %v1165 = vpack.c.b16 %v689, %v685
    %v1166 = vpack.c.b16 %v690, %v686
    %v1167 = vpack.c.b16 %v691, %v687
    %v1168 = vpack.c.b16 %v692, %v688
    %v1169 = vpack.c.b16 %v697, %v693
    %v1170 = vpack.c.b16 %v698, %v694
    %v1171 = vpack.c.b16 %v699, %v695
    %v1172 = vpack.c.b16 %v700, %v696
    %v1173 = vpack.c.b16 %v705, %v701
    %v1174 = vpack.c.b16 %v706, %v702
    %v1175 = vpack.c.b16 %v707, %v703
    %v1176 = vpack.c.b16 %v708, %v704
    %v1177 = vpack.c.b16 %v713, %v709
    %v1178 = vpack.c.b16 %v714, %v710
    %v1179 = vpack.c.b16 %v715, %v711
    %v1180 = vpack.c.b16 %v716, %v712
    %v1181 = vpack.c.b16 %v721, %v717
    %v1182 = vpack.c.b16 %v722, %v718
    %v1183 = vpack.c.b16 %v723, %v719
    %v1184 = vpack.c.b16 %v724, %v720
    %v1185 = vpack.c.b16 %v729, %v725
    %v1186 = vpack.c.b16 %v730, %v726
    %v1187 = vpack.c.b16 %v731, %v727
    %v1188 = vpack.c.b16 %v732, %v728
    %v1189 = vpack.c.b16 %v737, %v733
    %v1190 = vpack.c.b16 %v738, %v734
    %v1191 = vpack.c.b16 %v739, %v735
    %v1192 = vpack.c.b16 %v740, %v736
    %v1193 = vpack.c.b16 %v745, %v741
    %v1194 = vpack.c.b16 %v746, %v742
    %v1195 = vpack.c.b16 %v747, %v743
    %v1196 = vpack.c.b16 %v748, %v744
    %v1197 = vpack.c.b16 %v753, %v749
    %v1198 = vpack.c.b16 %v754, %v750
    %v1199 = vpack.c.b16 %v755, %v751
    %v1200 = vpack.c.b16 %v756, %v752
    %v1201 = vpack.c.b16 %v761, %v757
    %v1202 = vpack.c.b16 %v762, %v758
    %v1203 = vpack.c.b16 %v763, %v759
    %v1204 = vpack.c.b16 %v764, %v760
    %v1205 = vpack.c.b16 %v769, %v765
    %v1206 = vpack.c.b16 %v770, %v766
    %v1207 = vpack.c.b16 %v771, %v767
    %v1208 = vpack.c.b16 %v772, %v768
    %v1209 = vpack.c.b16 %v777, %v773
    %v1210 = vpack.c.b16 %v778, %v774
    %v1211 = vpack.c.b16 %v779, %v775
    %v1212 = vpack.c.b16 %v780, %v776
    %v1213 = vpack.c.b16 %v785, %v781
    %v1214 = vpack.c.b16 %v786, %v782
    %v1215 = vpack.c.b16 %v787, %v783
    %v1216 = vpack.c.b16 %v788, %v784
    %v1217 = vpack.c.b16 %v793, %v789
    %v1218 = vpack.c.b16 %v794, %v790
    %v1219 = vpack.c.b16 %v795, %v791
    %v1220 = vpack.c.b16 %v796, %v792
    %v1221 = vpack.c.b16 %v801, %v797
    %v1222 = vpack.c.b16 %v802, %v798
    %v1223 = vpack.c.b16 %v803, %v799
    %v1224 = vpack.c.b16 %v804, %v800
    %v1225 = vpack.c.b16 %v809, %v805
    %v1226 = vpack.c.b16 %v810, %v806
    %v1227 = vpack.c.b16 %v811, %v807
    %v1228 = vpack.c.b16 %v812, %v808
    %v1229 = vpack.c.b16 %v817, %v813
    %v1230 = vpack.c.b16 %v818, %v814
    %v1231 = vpack.c.b16 %v819, %v815
    %v1232 = vpack.c.b16 %v820, %v816
    %v1233 = vpack.c.b16 %v825, %v821
    %v1234 = vpack.c.b16 %v826, %v822
    %v1235 = vpack.c.b16 %v827, %v823
    %v1236 = vpack.c.b16 %v828, %v824
    %v1237 = vpack.c.b16 %v833, %v829
    %v1238 = vpack.c.b16 %v834, %v830
    %v1239 = vpack.c.b16 %v835, %v831
    %v1240 = vpack.c.b16 %v836, %v832
    %v1241 = vpack.c.b16 %v841, %v837
    %v1242 = vpack.c.b16 %v842, %v838
    %v1243 = vpack.c.b16 %v843, %v839
    %v1244 = vpack.c.b16 %v844, %v840
    %v1245 = vpack.c.b16 %v849, %v845
    %v1246 = vpack.c.b16 %v850, %v846
    %v1247 = vpack.c.b16 %v851, %v847
    %v1248 = vpack.c.b16 %v852, %v848
    %v1249 = vpack.c.b16 %v857, %v853
    %v1250 = vpack.c.b16 %v858, %v854
    %v1251 = vpack.c.b16 %v859, %v855
    %v1252 = vpack.c.b16 %v860, %v856
    %v1253 = vpack.c.b16 %v865, %v861
    %v1254 = vpack.c.b16 %v866, %v862
    %v1255 = vpack.c.b16 %v867, %v863
    %v1256 = vpack.c.b16 %v868, %v864
    %v1257 = vpack.c.b16 %v873, %v869
    %v1258 = vpack.c.b16 %v874, %v870
    %v1259 = vpack.c.b16 %v875, %v871
    %v1260 = vpack.c.b16 %v876, %v872
    %v1261 = vpack.c.b16 %v881, %v877
    %v1262 = vpack.c.b16 %v882, %v878
    %v1263 = vpack.c.b16 %v883, %v879
    %v1264 = vpack.c.b16 %v884, %v880
    %v1265 = vpack.c.b16 %v889, %v885
    %v1266 = vpack.c.b16 %v890, %v886
    %v1267 = vpack.c.b16 %v891, %v887
    %v1268 = vpack.c.b16 %v892, %v888
    %v1269 = vpack.c.b16 %v897, %v893
    %v1270 = vpack.c.b16 %v898, %v894
    %v1271 = vpack.c.b16 %v899, %v895
    %v1272 = vpack.c.b16 %v900, %v896
    %v1273 = vpack.c.b16 %v905, %v901
    %v1274 = vpack.c.b16 %v906, %v902
    %v1275 = vpack.c.b16 %v907, %v903
    %v1276 = vpack.c.b16 %v908, %v904
    %v1277 = vpack.c.b16 %v913, %v909
    %v1278 = vpack.c.b16 %v914, %v910
    %v1279 = vpack.c.b16 %v915, %v911
    %v1280 = vpack.c.b16 %v916, %v912
    %v1281 = vpack.c.b16 %v921, %v917
    %v1282 = vpack.c.b16 %v922, %v918
    %v1283 = vpack.c.b16 %v923, %v919
    %v1284 = vpack.c.b16 %v924, %v920
    %v1285 = vpack.c.b16 %v929, %v925
    %v1286 = vpack.c.b16 %v930, %v926
    %v1287 = vpack.c.b16 %v931, %v927
    %v1288 = vpack.c.b16 %v932, %v928
    %v1289 = vpack.c.b16 %v937, %v933
    %v1290 = vpack.c.b16 %v938, %v934
    %v1291 = vpack.c.b16 %v939, %v935
    %v1292 = vpack.c.b16 %v940, %v936
    %v1293 = vpack.c.b16 %v945, %v941
    %v1294 = vpack.c.b16 %v946, %v942
    %v1295 = vpack.c.b16 %v947, %v943
    %v1296 = vpack.c.b16 %v948, %v944
    %v1297 = vpack.c.b16 %v953, %v949
    %v1298 = vpack.c.b16 %v954, %v950
    %v1299 = vpack.c.b16 %v955, %v951
    %v1300 = vpack.c.b16 %v956, %v952
    %v1301 = vpack.c.b16 %v961, %v957
    %v1302 = vpack.c.b16 %v962, %v958
    %v1303 = vpack.c.b16 %v963, %v959
    %v1304 = vpack.c.b16 %v964, %v960
    %v1305 = vpack.c.b16 %v969, %v965
    %v1306 = vpack.c.b16 %v970, %v966
    %v1307 = vpack.c.b16 %v971, %v967
    %v1308 = vpack.c.b16 %v972, %v968
    %v1309 = vpack.c.b16 %v977, %v973
    %v1310 = vpack.c.b16 %v978, %v974
    %v1311 = vpack.c.b16 %v979, %v975
    %v1312 = vpack.c.b16 %v980, %v976
    %v1313 = vpack.c.b16 %v985, %v981
    %v1314 = vpack.c.b16 %v986, %v982
    %v1315 = vpack.c.b16 %v987, %v983
    %v1316 = vpack.c.b16 %v988, %v984
    %v1317 = vpack.c.b16 %v993, %v989
    %v1318 = vpack.c.b16 %v994, %v990
    %v1319 = vpack.c.b16 %v995, %v991
    %v1320 = vpack.c.b16 %v996, %v992
    %v1321 = vpack.c.b16 %v1001, %v997
    %v1322 = vpack.c.b16 %v1002, %v998
    %v1323 = vpack.c.b16 %v1003, %v999
    %v1324 = vpack.c.b16 %v1004, %v1000
    %v1325 = vpack.c.b16 %v1009, %v1005
    %v1326 = vpack.c.b16 %v1010, %v1006
    %v1327 = vpack.c.b16 %v1011, %v1007
    %v1328 = vpack.c.b16 %v1012, %v1008
    %v1329 = vpack.c.b16 %v1017, %v1013
    %v1330 = vpack.c.b16 %v1018, %v1014
    %v1331 = vpack.c.b16 %v1019, %v1015
    %v1332 = vpack.c.b16 %v1020, %v1016
    %v1333 = vpack.c.b16 %v1025, %v1021
    %v1334 = vpack.c.b16 %v1026, %v1022
    %v1335 = vpack.c.b16 %v1027, %v1023
    %v1336 = vpack.c.b16 %v1028, %v1024
    %v1337 = vpack.c.b16 %v1033, %v1029
    %v1338 = vpack.c.b16 %v1034, %v1030
    %v1339 = vpack.c.b16 %v1035, %v1031
    %v1340 = vpack.c.b16 %v1036, %v1032
    %v1341 = vpack.c.b16 %v1041, %v1037
    %v1342 = vpack.c.b16 %v1042, %v1038
    %v1343 = vpack.c.b16 %v1043, %v1039
    %v1344 = vpack.c.b16 %v1044, %v1040
    %v1345 = vpack.c.b16 %v1049, %v1045
    %v1346 = vpack.c.b16 %v1050, %v1046
    %v1347 = vpack.c.b16 %v1051, %v1047
    %v1348 = vpack.c.b16 %v1052, %v1048
    %v1349 = vpack.c.b16 %v1057, %v1053
    %v1350 = vpack.c.b16 %v1058, %v1054
    %v1351 = vpack.c.b16 %v1059, %v1055
    %v1352 = vpack.c.b16 %v1060, %v1056
    %v1353 = vpack.c.b16 %v1065, %v1061
    %v1354 = vpack.c.b16 %v1066, %v1062
    %v1355 = vpack.c.b16 %v1067, %v1063
    %v1356 = vpack.c.b16 %v1068, %v1064
    %v1357 = vpack.c.b16 %v1073, %v1069
    %v1358 = vpack.c.b16 %v1074, %v1070
    %v1359 = vpack.c.b16 %v1075, %v1071
    %v1360 = vpack.c.b16 %v1076, %v1072
    %v1361 = vpack.c.b16 %v1081, %v1077
    %v1362 = vpack.c.b16 %v1082, %v1078
    %v1363 = vpack.c.b16 %v1083, %v1079
    %v1364 = vpack.c.b16 %v1084, %v1080
    %v1365 = vpack.c.b16 %v1089, %v1085
    %v1366 = vpack.c.b16 %v1090, %v1086
    %v1367 = vpack.c.b16 %v1091, %v1087
    %v1368 = vpack.c.b16 %v1092, %v1088
    %v1369 = vpack.c.b16 %v1097, %v1093
    %v1370 = vpack.c.b16 %v1098, %v1094
    %v1371 = vpack.c.b16 %v1099, %v1095
    %v1372 = vpack.c.b16 %v1100, %v1096
    %v1373 = vpack.c.b16 %v1105, %v1101
    %v1374 = vpack.c.b16 %v1106, %v1102
    %v1375 = vpack.c.b16 %v1107, %v1103
    %v1376 = vpack.c.b16 %v1108, %v1104
    %v1377 = vpack.c.b16 %v1113, %v1109
    %v1378 = vpack.c.b16 %v1114, %v1110
    %v1379 = vpack.c.b16 %v1115, %v1111
    %v1380 = vpack.c.b16 %v1116, %v1112
    %v1381 = vpack.c.b16 %v1121, %v1117
    %v1382 = vpack.c.b16 %v1122, %v1118
    %v1383 = vpack.c.b16 %v1123, %v1119
    %v1384 = vpack.c.b16 %v1124, %v1120
    %v1385 = vpack.c.b16 %v1129, %v1125
    %v1386 = vpack.c.b16 %v1130, %v1126
    %v1387 = vpack.c.b16 %v1131, %v1127
    %v1388 = vpack.c.b16 %v1132, %v1128
    %1645 = vmatprep.subr.bf16.mxu0 %v1134
    %1646 = vmatpush1.bf16.msra.mxu0 %v1133
    %1647 = vmatprep.subr.bf16.mxu0 %v1138
    %1648 = vmatpush1.bf16.msra.mxu0 %v1137
    %1649 = vmatprep.subr.bf16.mxu0 %v1142
    %1650 = vmatpush1.bf16.msra.mxu0 %v1141
    %1651 = vmatprep.subr.bf16.mxu0 %v1146
    %1652 = vmatpush1.bf16.msra.mxu0 %v1145
    %1653 = vmatprep.subr.bf16.mxu0 %v1150
    %1654 = vmatpush1.bf16.msra.mxu0 %v1149
    %1655 = vmatprep.subr.bf16.mxu0 %v1154
    %1656 = vmatpush1.bf16.msra.mxu0 %v1153
    %1657 = vmatprep.subr.bf16.mxu0 %v1158
    %1658 = vmatpush1.bf16.msra.mxu0 %v1157
    %1659 = vmatprep.subr.bf16.mxu0 %v1162
    %1660 = vmatpush1.bf16.msra.mxu0 %v1161
    %1661 = vmatprep.subr.bf16.mxu0 %v1166
    %1662 = vmatpush1.bf16.msra.mxu0 %v1165
    %1663 = vmatprep.subr.bf16.mxu0 %v1170
    %1664 = vmatpush1.bf16.msra.mxu0 %v1169
    %1665 = vmatprep.subr.bf16.mxu0 %v1174
    %1666 = vmatpush1.bf16.msra.mxu0 %v1173
    %1667 = vmatprep.subr.bf16.mxu0 %v1178
    %1668 = vmatpush1.bf16.msra.mxu0 %v1177
    %1669 = vmatprep.subr.bf16.mxu0 %v1182
    %1670 = vmatpush1.bf16.msra.mxu0 %v1181
    %1671 = vmatprep.subr.bf16.mxu0 %v1186
    %1672 = vmatpush1.bf16.msra.mxu0 %v1185
    %1673 = vmatprep.subr.bf16.mxu0 %v1190
    %1674 = vmatpush1.bf16.msra.mxu0 %v1189
    %1675 = vmatprep.subr.bf16.mxu0 %v1194
    %1676 = vmatpush1.bf16.msra.mxu0 %v1193
    %1677 = vmatprep.mubr.bf16.mxu0 %v345
    %1678 = vmatmul.mubr.bf16.gmra.mrb[0].mxu0 %v331
    %v1679 = vpop.f32.mrb[0].mxu0
    %v1680 = vadd.f32 %v290, %v1679
    %v1681 = vpop.f32.mrb[0].mxu0
    %v1682 = vadd.f32 %v294, %v1681
    %v1683 = vpop.f32.mrb[0].mxu0
    %v1684 = vpop.f32.mrb[0].mxu0
    %1685 = vdwg.mxu0
    %1686 = vmatprep.subr.bf16.mxu0 %v1198
    %1687 = vmatpush1.bf16.msra.mxu0 %v1197
    %1688 = vmatprep.subr.bf16.mxu0 %v1202
    %1689 = vmatpush1.bf16.msra.mxu0 %v1201
    %1690 = vmatprep.subr.bf16.mxu0 %v1206
    %1691 = vmatpush1.bf16.msra.mxu0 %v1205
    %1692 = vmatprep.subr.bf16.mxu0 %v1210
    %1693 = vmatpush1.bf16.msra.mxu0 %v1209
    %1694 = vmatprep.subr.bf16.mxu0 %v1214
    %1695 = vmatpush1.bf16.msra.mxu0 %v1213
    %1696 = vmatprep.subr.bf16.mxu0 %v1218
    %1697 = vmatpush1.bf16.msra.mxu0 %v1217
    %1698 = vmatprep.subr.bf16.mxu0 %v1222
    %1699 = vmatpush1.bf16.msra.mxu0 %v1221
    %1700 = vmatprep.subr.bf16.mxu0 %v1226
    %1701 = vmatpush1.bf16.msra.mxu0 %v1225
    %1702 = vmatprep.subr.bf16.mxu0 %v1230
    %1703 = vmatpush1.bf16.msra.mxu0 %v1229
    %1704 = vmatprep.subr.bf16.mxu0 %v1234
    %1705 = vmatpush1.bf16.msra.mxu0 %v1233
    %1706 = vmatprep.subr.bf16.mxu0 %v1238
    %1707 = vmatpush1.bf16.msra.mxu0 %v1237
    %1708 = vmatprep.subr.bf16.mxu0 %v1242
    %1709 = vmatpush1.bf16.msra.mxu0 %v1241
    %1710 = vmatprep.subr.bf16.mxu0 %v1246
    %1711 = vmatpush1.bf16.msra.mxu0 %v1245
    %1712 = vmatprep.subr.bf16.mxu0 %v1250
    %1713 = vmatpush1.bf16.msra.mxu0 %v1249
    %1714 = vmatprep.subr.bf16.mxu0 %v1254
    %1715 = vmatpush1.bf16.msra.mxu0 %v1253
    %1716 = vmatprep.subr.bf16.mxu0 %v1258
    %1717 = vmatpush1.bf16.msra.mxu0 %v1257
    %1718 = vmatprep.mubr.bf16.mxu0 %v355
    %1719 = vmatmul.mubr.bf16.gmra.mrb[0].mxu0 %v353
    %v1720 = vpop.f32.mrb[0].mxu0
    %v1721 = vadd.f32 %v1680, %v1720
    %v1722 = vpop.f32.mrb[0].mxu0
    %v1723 = vadd.f32 %v1682, %v1722
    %v1724 = vpop.f32.mrb[0].mxu0
    %v1725 = vpop.f32.mrb[0].mxu0
    %1726 = vdwg.mxu0
    %1727 = vmatprep.subr.bf16.mxu0 %v1262
    %1728 = vmatpush1.bf16.msra.mxu0 %v1261
    %1729 = vmatprep.subr.bf16.mxu0 %v1266
    %1730 = vmatpush1.bf16.msra.mxu0 %v1265
    %1731 = vmatprep.subr.bf16.mxu0 %v1270
    %1732 = vmatpush1.bf16.msra.mxu0 %v1269
    %1733 = vmatprep.subr.bf16.mxu0 %v1274
    %1734 = vmatpush1.bf16.msra.mxu0 %v1273
    %1735 = vmatprep.subr.bf16.mxu0 %v1278
    %1736 = vmatpush1.bf16.msra.mxu0 %v1277
    %1737 = vmatprep.subr.bf16.mxu0 %v1282
    %1738 = vmatpush1.bf16.msra.mxu0 %v1281
    %1739 = vmatprep.subr.bf16.mxu0 %v1286
    %1740 = vmatpush1.bf16.msra.mxu0 %v1285
    %1741 = vmatprep.subr.bf16.mxu0 %v1290
    %1742 = vmatpush1.bf16.msra.mxu0 %v1289
    %1743 = vmatprep.subr.bf16.mxu0 %v1294
    %1744 = vmatpush1.bf16.msra.mxu0 %v1293
    %1745 = vmatprep.subr.bf16.mxu0 %v1298
    %1746 = vmatpush1.bf16.msra.mxu0 %v1297
    %1747 = vmatprep.subr.bf16.mxu0 %v1302
    %1748 = vmatpush1.bf16.msra.mxu0 %v1301
    %1749 = vmatprep.subr.bf16.mxu0 %v1306
    %1750 = vmatpush1.bf16.msra.mxu0 %v1305
    %1751 = vmatprep.subr.bf16.mxu0 %v1310
    %1752 = vmatpush1.bf16.msra.mxu0 %v1309
    %1753 = vmatprep.subr.bf16.mxu0 %v1314
    %1754 = vmatpush1.bf16.msra.mxu0 %v1313
    %1755 = vmatprep.subr.bf16.mxu0 %v1318
    %1756 = vmatpush1.bf16.msra.mxu0 %v1317
    %1757 = vmatprep.subr.bf16.mxu0 %v1322
    %1758 = vmatpush1.bf16.msra.mxu0 %v1321
    %1759 = vmatprep.mubr.bf16.mxu0 %v352
    %1760 = vmatmul.mubr.bf16.gmra.mrb[0].mxu0 %v338
    %v1761 = vpop.f32.mrb[0].mxu0
    %v1762 = vadd.f32 %v1721, %v1761
    %v1763 = vpop.f32.mrb[0].mxu0
    %v1764 = vadd.f32 %v1723, %v1763
    %v1765 = vpop.f32.mrb[0].mxu0
    %v1766 = vpop.f32.mrb[0].mxu0
    %1767 = vdwg.mxu0
    %1768 = vmatprep.subr.bf16.mxu0 %v1326
    %1769 = vmatpush1.bf16.msra.mxu0 %v1325
    %1770 = vmatprep.subr.bf16.mxu0 %v1330
    %1771 = vmatpush1.bf16.msra.mxu0 %v1329
    %1772 = vmatprep.subr.bf16.mxu0 %v1334
    %1773 = vmatpush1.bf16.msra.mxu0 %v1333
    %1774 = vmatprep.subr.bf16.mxu0 %v1338
    %1775 = vmatpush1.bf16.msra.mxu0 %v1337
    %1776 = vmatprep.subr.bf16.mxu0 %v1342
    %1777 = vmatpush1.bf16.msra.mxu0 %v1341
    %1778 = vmatprep.subr.bf16.mxu0 %v1346
    %1779 = vmatpush1.bf16.msra.mxu0 %v1345
    %1780 = vmatprep.subr.bf16.mxu0 %v1350
    %1781 = vmatpush1.bf16.msra.mxu0 %v1349
    %1782 = vmatprep.subr.bf16.mxu0 %v1354
    %1783 = vmatpush1.bf16.msra.mxu0 %v1353
    %1784 = vmatprep.subr.bf16.mxu0 %v1358
    %1785 = vmatpush1.bf16.msra.mxu0 %v1357
    %1786 = vmatprep.subr.bf16.mxu0 %v1362
    %1787 = vmatpush1.bf16.msra.mxu0 %v1361
    %1788 = vmatprep.subr.bf16.mxu0 %v1366
    %1789 = vmatpush1.bf16.msra.mxu0 %v1365
    %1790 = vmatprep.subr.bf16.mxu0 %v1370
    %1791 = vmatpush1.bf16.msra.mxu0 %v1369
    %1792 = vmatprep.subr.bf16.mxu0 %v1374
    %1793 = vmatpush1.bf16.msra.mxu0 %v1373
    %1794 = vmatprep.subr.bf16.mxu0 %v1378
    %1795 = vmatpush1.bf16.msra.mxu0 %v1377
    %1796 = vmatprep.subr.bf16.mxu0 %v1382
    %1797 = vmatpush1.bf16.msra.mxu0 %v1381
    %1798 = vmatprep.subr.bf16.mxu0 %v1386
    %1799 = vmatpush1.bf16.msra.mxu0 %v1385
    %1800 = vmatprep.mubr.bf16.mxu0 %v356
    %1801 = vmatmul.mubr.bf16.gmra.mrb[0].mxu0 %v354
    %v1802 = vpop.f32.mrb[0].mxu0
    %v1803 = vadd.f32 %v1762, %v1802
    %v1804 = vpop.f32.mrb[0].mxu0
    %v1805 = vadd.f32 %v1764, %v1804
    %v1806 = vpop.f32.mrb[0].mxu0
    %v1807 = vpop.f32.mrb[0].mxu0
    %1808 = vdwg.mxu0
    %1809 = vmatprep.subr.bf16.mxu0 %v1136
    %1810 = vmatpush1.bf16.msra.mxu0 %v1135
    %1811 = vmatprep.subr.bf16.mxu0 %v1140
    %1812 = vmatpush1.bf16.msra.mxu0 %v1139
    %1813 = vmatprep.subr.bf16.mxu0 %v1144
    %1814 = vmatpush1.bf16.msra.mxu0 %v1143
    %1815 = vmatprep.subr.bf16.mxu0 %v1148
    %1816 = vmatpush1.bf16.msra.mxu0 %v1147
    %1817 = vmatprep.subr.bf16.mxu0 %v1152
    %1818 = vmatpush1.bf16.msra.mxu0 %v1151
    %1819 = vmatprep.subr.bf16.mxu0 %v1156
    %1820 = vmatpush1.bf16.msra.mxu0 %v1155
    %1821 = vmatprep.subr.bf16.mxu0 %v1160
    %1822 = vmatpush1.bf16.msra.mxu0 %v1159
    %1823 = vmatprep.subr.bf16.mxu0 %v1164
    %1824 = vmatpush1.bf16.msra.mxu0 %v1163
    %1825 = vmatprep.subr.bf16.mxu0 %v1168
    %1826 = vmatpush1.bf16.msra.mxu0 %v1167
    %1827 = vmatprep.subr.bf16.mxu0 %v1172
    %1828 = vmatpush1.bf16.msra.mxu0 %v1171
    %1829 = vmatprep.subr.bf16.mxu0 %v1176
    %1830 = vmatpush1.bf16.msra.mxu0 %v1175
    %1831 = vmatprep.subr.bf16.mxu0 %v1180
    %1832 = vmatpush1.bf16.msra.mxu0 %v1179
    %1833 = vmatprep.subr.bf16.mxu0 %v1184
    %1834 = vmatpush1.bf16.msra.mxu0 %v1183
    %1835 = vmatprep.subr.bf16.mxu0 %v1188
    %1836 = vmatpush1.bf16.msra.mxu0 %v1187
    %1837 = vmatprep.subr.bf16.mxu0 %v1192
    %1838 = vmatpush1.bf16.msra.mxu0 %v1191
    %1839 = vmatprep.subr.bf16.mxu0 %v1196
    %1840 = vmatpush1.bf16.msra.mxu0 %v1195
    %1841 = vmatprep.mubr.bf16.mxu0 %v345
    %1842 = vmatmul.mubr.bf16.gmra.mrb[0].mxu0 %v331
    %v1843 = vpop.f32.mrb[0].mxu0
    %v1844 = vadd.f32 %v298, %v1843
    %v1845 = vpop.f32.mrb[0].mxu0
    %v1846 = vadd.f32 %v302, %v1845
    %v1847 = vpop.f32.mrb[0].mxu0
    %v1848 = vpop.f32.mrb[0].mxu0
    %1849 = vdwg.mxu0
    %1850 = vmatprep.subr.bf16.mxu0 %v1200
    %1851 = vmatpush1.bf16.msra.mxu0 %v1199
    %1852 = vmatprep.subr.bf16.mxu0 %v1204
    %1853 = vmatpush1.bf16.msra.mxu0 %v1203
    %1854 = vmatprep.subr.bf16.mxu0 %v1208
    %1855 = vmatpush1.bf16.msra.mxu0 %v1207
    %1856 = vmatprep.subr.bf16.mxu0 %v1212
    %1857 = vmatpush1.bf16.msra.mxu0 %v1211
    %1858 = vmatprep.subr.bf16.mxu0 %v1216
    %1859 = vmatpush1.bf16.msra.mxu0 %v1215
    %1860 = vmatprep.subr.bf16.mxu0 %v1220
    %1861 = vmatpush1.bf16.msra.mxu0 %v1219
    %1862 = vmatprep.subr.bf16.mxu0 %v1224
    %1863 = vmatpush1.bf16.msra.mxu0 %v1223
    %1864 = vmatprep.subr.bf16.mxu0 %v1228
    %1865 = vmatpush1.bf16.msra.mxu0 %v1227
    %1866 = vmatprep.subr.bf16.mxu0 %v1232
    %1867 = vmatpush1.bf16.msra.mxu0 %v1231
    %1868 = vmatprep.subr.bf16.mxu0 %v1236
    %1869 = vmatpush1.bf16.msra.mxu0 %v1235
    %1870 = vmatprep.subr.bf16.mxu0 %v1240
    %1871 = vmatpush1.bf16.msra.mxu0 %v1239
    %1872 = vmatprep.subr.bf16.mxu0 %v1244
    %1873 = vmatpush1.bf16.msra.mxu0 %v1243
    %1874 = vmatprep.subr.bf16.mxu0 %v1248
    %1875 = vmatpush1.bf16.msra.mxu0 %v1247
    %1876 = vmatprep.subr.bf16.mxu0 %v1252
    %1877 = vmatpush1.bf16.msra.mxu0 %v1251
    %1878 = vmatprep.subr.bf16.mxu0 %v1256
    %1879 = vmatpush1.bf16.msra.mxu0 %v1255
    %1880 = vmatprep.subr.bf16.mxu0 %v1260
    %1881 = vmatpush1.bf16.msra.mxu0 %v1259
    %1882 = vmatprep.mubr.bf16.mxu0 %v355
    %1883 = vmatmul.mubr.bf16.gmra.mrb[0].mxu0 %v353
    %v1884 = vpop.f32.mrb[0].mxu0
    %v1885 = vadd.f32 %v1844, %v1884
    %v1886 = vpop.f32.mrb[0].mxu0
    %v1887 = vadd.f32 %v1846, %v1886
    %v1888 = vpop.f32.mrb[0].mxu0
    %v1889 = vpop.f32.mrb[0].mxu0
    %1890 = vdwg.mxu0
    %1891 = vmatprep.subr.bf16.mxu0 %v1264
    %1892 = vmatpush1.bf16.msra.mxu0 %v1263
    %1893 = vmatprep.subr.bf16.mxu0 %v1268
    %1894 = vmatpush1.bf16.msra.mxu0 %v1267
    %1895 = vmatprep.subr.bf16.mxu0 %v1272
    %1896 = vmatpush1.bf16.msra.mxu0 %v1271
    %1897 = vmatprep.subr.bf16.mxu0 %v1276
    %1898 = vmatpush1.bf16.msra.mxu0 %v1275
    %1899 = vmatprep.subr.bf16.mxu0 %v1280
    %1900 = vmatpush1.bf16.msra.mxu0 %v1279
    %1901 = vmatprep.subr.bf16.mxu0 %v1284
    %1902 = vmatpush1.bf16.msra.mxu0 %v1283
    %1903 = vmatprep.subr.bf16.mxu0 %v1288
    %1904 = vmatpush1.bf16.msra.mxu0 %v1287
    %1905 = vmatprep.subr.bf16.mxu0 %v1292
    %1906 = vmatpush1.bf16.msra.mxu0 %v1291
    %1907 = vmatprep.subr.bf16.mxu0 %v1296
    %1908 = vmatpush1.bf16.msra.mxu0 %v1295
    %1909 = vmatprep.subr.bf16.mxu0 %v1300
    %1910 = vmatpush1.bf16.msra.mxu0 %v1299
    %1911 = vmatprep.subr.bf16.mxu0 %v1304
    %1912 = vmatpush1.bf16.msra.mxu0 %v1303
    %1913 = vmatprep.subr.bf16.mxu0 %v1308
    %1914 = vmatpush1.bf16.msra.mxu0 %v1307
    %1915 = vmatprep.subr.bf16.mxu0 %v1312
    %1916 = vmatpush1.bf16.msra.mxu0 %v1311
    %1917 = vmatprep.subr.bf16.mxu0 %v1316
    %1918 = vmatpush1.bf16.msra.mxu0 %v1315
    %1919 = vmatprep.subr.bf16.mxu0 %v1320
    %1920 = vmatpush1.bf16.msra.mxu0 %v1319
    %1921 = vmatprep.subr.bf16.mxu0 %v1324
    %1922 = vmatpush1.bf16.msra.mxu0 %v1323
    %1923 = vmatprep.mubr.bf16.mxu0 %v352
    %1924 = vmatmul.mubr.bf16.gmra.mrb[0].mxu0 %v338
    %v1925 = vpop.f32.mrb[0].mxu0
    %v1926 = vadd.f32 %v1885, %v1925
    %v1927 = vpop.f32.mrb[0].mxu0
    %v1928 = vadd.f32 %v1887, %v1927
    %v1929 = vpop.f32.mrb[0].mxu0
    %v1930 = vpop.f32.mrb[0].mxu0
    %1931 = vdwg.mxu0
    %1932 = vmatprep.subr.bf16.mxu0 %v1328
    %1933 = vmatpush1.bf16.msra.mxu0 %v1327
    %1934 = vmatprep.subr.bf16.mxu0 %v1332
    %1935 = vmatpush1.bf16.msra.mxu0 %v1331
    %1936 = vmatprep.subr.bf16.mxu0 %v1336
    %1937 = vmatpush1.bf16.msra.mxu0 %v1335
    %1938 = vmatprep.subr.bf16.mxu0 %v1340
    %1939 = vmatpush1.bf16.msra.mxu0 %v1339
    %1940 = vmatprep.subr.bf16.mxu0 %v1344
    %1941 = vmatpush1.bf16.msra.mxu0 %v1343
    %1942 = vmatprep.subr.bf16.mxu0 %v1348
    %1943 = vmatpush1.bf16.msra.mxu0 %v1347
    %1944 = vmatprep.subr.bf16.mxu0 %v1352
    %1945 = vmatpush1.bf16.msra.mxu0 %v1351
    %1946 = vmatprep.subr.bf16.mxu0 %v1356
    %1947 = vmatpush1.bf16.msra.mxu0 %v1355
    %1948 = vmatprep.subr.bf16.mxu0 %v1360
    %1949 = vmatpush1.bf16.msra.mxu0 %v1359
    %1950 = vmatprep.subr.bf16.mxu0 %v1364
    %1951 = vmatpush1.bf16.msra.mxu0 %v1363
    %1952 = vmatprep.subr.bf16.mxu0 %v1368
    %1953 = vmatpush1.bf16.msra.mxu0 %v1367
    %1954 = vmatprep.subr.bf16.mxu0 %v1372
    %1955 = vmatpush1.bf16.msra.mxu0 %v1371
    %1956 = vmatprep.subr.bf16.mxu0 %v1376
    %1957 = vmatpush1.bf16.msra.mxu0 %v1375
    %1958 = vmatprep.subr.bf16.mxu0 %v1380
    %1959 = vmatpush1.bf16.msra.mxu0 %v1379
    %1960 = vmatprep.subr.bf16.mxu0 %v1384
    %1961 = vmatpush1.bf16.msra.mxu0 %v1383
    %1962 = vmatprep.subr.bf16.mxu0 %v1388
    %1963 = vmatpush1.bf16.msra.mxu0 %v1387
    %1964 = vmatprep.mubr.bf16.mxu0 %v356
    %1965 = vmatmul.mubr.bf16.gmra.mrb[0].mxu0 %v354
    %v1966 = vpop.f32.mrb[0].mxu0
    %v1967 = vadd.f32 %v1926, %v1966
    %v1968 = vpop.f32.mrb[0].mxu0
    %v1969 = vadd.f32 %v1928, %v1968
    %v1970 = vpop.f32.mrb[0].mxu0
    %v1971 = vpop.f32.mrb[0].mxu0
    %1972 = vdwg.mxu0
    %v1973 = vmax.f32 %v1803, 0.0
    %v1974 = vmax.f32 %v1805, 0.0
    %v1975 = vmax.f32 %v1967, 0.0
    %v1976 = vmax.f32 %v1969, 0.0
    %v1977 = vpack.c.bf16 %v1973, %v1973
    %v1978 = vpack.c.bf16 %v1974, %v1974
    %v1979 = vpack.c.bf16 %v1975, %v1975
    %v1980 = vpack.c.bf16 %v1976, %v1976
    %v1981 = vld [vmem:[%s3] sm:$0xff]
    %v1982 = vld [vmem:[%s3 + $0x8] sm:$0xff]
    %v1983 = vld [vmem:[%s3 + $0x10] sm:$0xff]
    %v1984 = vld [vmem:[%s3 + $0x18] sm:$0xff]
    %v1985 = vld [vmem:[%s3 + $0x20] sm:$0xff]
    %v1986 = vld [vmem:[%s3 + $0x28] sm:$0xff]
    %v1987 = vld [vmem:[%s3 + $0x30] sm:$0xff]
    %v1988 = vld [vmem:[%s3 + $0x38] sm:$0xff]
    %v1989 = vld [vmem:[%s3 + $0x40] sm:$0xff]
    %v1990 = vld [vmem:[%s3 + $0x48] sm:$0xff]
    %v1991 = vld [vmem:[%s3 + $0x50] sm:$0xff]
    %v1992 = vld [vmem:[%s3 + $0x58] sm:$0xff]
    %v1993 = vld [vmem:[%s3 + $0x60] sm:$0xff]
    %v1994 = vld [vmem:[%s3 + $0x68] sm:$0xff]
    %v1995 = vld [vmem:[%s3 + $0x70] sm:$0xff]
    %v1996 = vld [vmem:[%s3 + $0x78] sm:$0xff]
    %v1997 = vld [vmem:[%s3 + $0x80] sm:$0xff]
    %v1998 = vld [vmem:[%s3 + $0x88] sm:$0xff]
    %v1999 = vld [vmem:[%s3 + $0x90] sm:$0xff]
    %v2000 = vld [vmem:[%s3 + $0x98] sm:$0xff]
    %v2001 = vld [vmem:[%s3 + $0xa0] sm:$0xff]
    %v2002 = vld [vmem:[%s3 + $0xa8] sm:$0xff]
    %v2003 = vld [vmem:[%s3 + $0xb0] sm:$0xff]
    %v2004 = vld [vmem:[%s3 + $0xb8] sm:$0xff]
    %v2005 = vld [vmem:[%s3 + $0xc0] sm:$0xff]
    %v2006 = vld [vmem:[%s3 + $0xc8] sm:$0xff]
    %v2007 = vld [vmem:[%s3 + $0xd0] sm:$0xff]
    %v2008 = vld [vmem:[%s3 + $0xd8] sm:$0xff]
    %v2009 = vld [vmem:[%s3 + $0xe0] sm:$0xff]
    %v2010 = vld [vmem:[%s3 + $0xe8] sm:$0xff]
    %v2011 = vld [vmem:[%s3 + $0xf0] sm:$0xff]
    %v2012 = vld [vmem:[%s3 + $0xf8] sm:$0xff]
    %v2013 = vld [vmem:[%s3 + $0x100] sm:$0xff]
    %v2014 = vld [vmem:[%s3 + $0x108] sm:$0xff]
    %v2015 = vld [vmem:[%s3 + $0x110] sm:$0xff]
    %v2016 = vld [vmem:[%s3 + $0x118] sm:$0xff]
    %v2017 = vld [vmem:[%s3 + $0x120] sm:$0xff]
    %v2018 = vld [vmem:[%s3 + $0x128] sm:$0xff]
    %v2019 = vld [vmem:[%s3 + $0x130] sm:$0xff]
    %v2020 = vld [vmem:[%s3 + $0x138] sm:$0xff]
    %v2021 = vld [vmem:[%s3 + $0x140] sm:$0xff]
    %v2022 = vld [vmem:[%s3 + $0x148] sm:$0xff]
    %v2023 = vld [vmem:[%s3 + $0x150] sm:$0xff]
    %v2024 = vld [vmem:[%s3 + $0x158] sm:$0xff]
    %v2025 = vld [vmem:[%s3 + $0x160] sm:$0xff]
    %v2026 = vld [vmem:[%s3 + $0x168] sm:$0xff]
    %v2027 = vld [vmem:[%s3 + $0x170] sm:$0xff]
    %v2028 = vld [vmem:[%s3 + $0x178] sm:$0xff]
    %v2029 = vld [vmem:[%s3 + $0x180] sm:$0xff]
    %v2030 = vld [vmem:[%s3 + $0x188] sm:$0xff]
    %v2031 = vld [vmem:[%s3 + $0x190] sm:$0xff]
    %v2032 = vld [vmem:[%s3 + $0x198] sm:$0xff]
    %v2033 = vld [vmem:[%s3 + $0x1a0] sm:$0xff]
    %v2034 = vld [vmem:[%s3 + $0x1a8] sm:$0xff]
    %v2035 = vld [vmem:[%s3 + $0x1b0] sm:$0xff]
    %v2036 = vld [vmem:[%s3 + $0x1b8] sm:$0xff]
    %v2037 = vld [vmem:[%s3 + $0x1c0] sm:$0xff]
    %v2038 = vld [vmem:[%s3 + $0x1c8] sm:$0xff]
    %v2039 = vld [vmem:[%s3 + $0x1d0] sm:$0xff]
    %v2040 = vld [vmem:[%s3 + $0x1d8] sm:$0xff]
    %v2041 = vld [vmem:[%s3 + $0x1e0] sm:$0xff]
    %v2042 = vld [vmem:[%s3 + $0x1e8] sm:$0xff]
    %v2043 = vld [vmem:[%s3 + $0x1f0] sm:$0xff]
    %v2044 = vld [vmem:[%s3 + $0x1f8] sm:$0xff]
    %v2045 = vld [vmem:[%s4] sm:$0x3]
    %v2047 = vlaneseq
    %v2048 = vshrl.u32 %v2047, 7
    %v2049 = vsub.s32 0, %v2048
    %v2050 = vrot.slane %v2045, %v2049
    %v2051 = vlaneseq
    %v2052 = vshrl.u32 %v2051, 7
    %v2053 = vsub.s32 1, %v2052
    %v2054 = vrot.slane %v2045, %v2053
    %v2121 = vunpack.c.l.b16 %v1981
    %v2122 = vunpack.c.h.b16 %v1981
    %v2123 = vunpack.c.l.b16 %v1982
    %v2124 = vunpack.c.h.b16 %v1982
    %v2125 = vunpack.c.l.b16 %v1983
    %v2126 = vunpack.c.h.b16 %v1983
    %v2127 = vunpack.c.l.b16 %v1984
    %v2128 = vunpack.c.h.b16 %v1984
    %v2129 = vunpack.c.l.b16 %v1985
    %v2130 = vunpack.c.h.b16 %v1985
    %v2131 = vunpack.c.l.b16 %v1986
    %v2132 = vunpack.c.h.b16 %v1986
    %v2133 = vunpack.c.l.b16 %v1987
    %v2134 = vunpack.c.h.b16 %v1987
    %v2135 = vunpack.c.l.b16 %v1988
    %v2136 = vunpack.c.h.b16 %v1988
    %v2137 = vunpack.c.l.b16 %v1989
    %v2138 = vunpack.c.h.b16 %v1989
    %v2139 = vunpack.c.l.b16 %v1990
    %v2140 = vunpack.c.h.b16 %v1990
    %v2141 = vunpack.c.l.b16 %v1991
    %v2142 = vunpack.c.h.b16 %v1991
    %v2143 = vunpack.c.l.b16 %v1992
    %v2144 = vunpack.c.h.b16 %v1992
    %v2145 = vunpack.c.l.b16 %v1993
    %v2146 = vunpack.c.h.b16 %v1993
    %v2147 = vunpack.c.l.b16 %v1994
    %v2148 = vunpack.c.h.b16 %v1994
    %v2149 = vunpack.c.l.b16 %v1995
    %v2150 = vunpack.c.h.b16 %v1995
    %v2151 = vunpack.c.l.b16 %v1996
    %v2152 = vunpack.c.h.b16 %v1996
    %v2153 = vunpack.c.l.b16 %v1997
    %v2154 = vunpack.c.h.b16 %v1997
    %v2155 = vunpack.c.l.b16 %v1998
    %v2156 = vunpack.c.h.b16 %v1998
    %v2157 = vunpack.c.l.b16 %v1999
    %v2158 = vunpack.c.h.b16 %v1999
    %v2159 = vunpack.c.l.b16 %v2000
    %v2160 = vunpack.c.h.b16 %v2000
    %v2161 = vunpack.c.l.b16 %v2001
    %v2162 = vunpack.c.h.b16 %v2001
    %v2163 = vunpack.c.l.b16 %v2002
    %v2164 = vunpack.c.h.b16 %v2002
    %v2165 = vunpack.c.l.b16 %v2003
    %v2166 = vunpack.c.h.b16 %v2003
    %v2167 = vunpack.c.l.b16 %v2004
    %v2168 = vunpack.c.h.b16 %v2004
    %v2169 = vunpack.c.l.b16 %v2005
    %v2170 = vunpack.c.h.b16 %v2005
    %v2171 = vunpack.c.l.b16 %v2006
    %v2172 = vunpack.c.h.b16 %v2006
    %v2173 = vunpack.c.l.b16 %v2007
    %v2174 = vunpack.c.h.b16 %v2007
    %v2175 = vunpack.c.l.b16 %v2008
    %v2176 = vunpack.c.h.b16 %v2008
    %v2177 = vunpack.c.l.b16 %v2009
    %v2178 = vunpack.c.h.b16 %v2009
    %v2179 = vunpack.c.l.b16 %v2010
    %v2180 = vunpack.c.h.b16 %v2010
    %v2181 = vunpack.c.l.b16 %v2011
    %v2182 = vunpack.c.h.b16 %v2011
    %v2183 = vunpack.c.l.b16 %v2012
    %v2184 = vunpack.c.h.b16 %v2012
    %v2185 = vunpack.c.l.b16 %v2013
    %v2186 = vunpack.c.h.b16 %v2013
    %v2187 = vunpack.c.l.b16 %v2014
    %v2188 = vunpack.c.h.b16 %v2014
    %v2189 = vunpack.c.l.b16 %v2015
    %v2190 = vunpack.c.h.b16 %v2015
    %v2191 = vunpack.c.l.b16 %v2016
    %v2192 = vunpack.c.h.b16 %v2016
    %v2193 = vunpack.c.l.b16 %v2017
    %v2194 = vunpack.c.h.b16 %v2017
    %v2195 = vunpack.c.l.b16 %v2018
    %v2196 = vunpack.c.h.b16 %v2018
    %v2197 = vunpack.c.l.b16 %v2019
    %v2198 = vunpack.c.h.b16 %v2019
    %v2199 = vunpack.c.l.b16 %v2020
    %v2200 = vunpack.c.h.b16 %v2020
    %v2201 = vunpack.c.l.b16 %v2021
    %v2202 = vunpack.c.h.b16 %v2021
    %v2203 = vunpack.c.l.b16 %v2022
    %v2204 = vunpack.c.h.b16 %v2022
    %v2205 = vunpack.c.l.b16 %v2023
    %v2206 = vunpack.c.h.b16 %v2023
    %v2207 = vunpack.c.l.b16 %v2024
    %v2208 = vunpack.c.h.b16 %v2024
    %v2209 = vunpack.c.l.b16 %v2025
    %v2210 = vunpack.c.h.b16 %v2025
    %v2211 = vunpack.c.l.b16 %v2026
    %v2212 = vunpack.c.h.b16 %v2026
    %v2213 = vunpack.c.l.b16 %v2027
    %v2214 = vunpack.c.h.b16 %v2027
    %v2215 = vunpack.c.l.b16 %v2028
    %v2216 = vunpack.c.h.b16 %v2028
    %v2217 = vunpack.c.l.b16 %v2029
    %v2218 = vunpack.c.h.b16 %v2029
    %v2219 = vunpack.c.l.b16 %v2030
    %v2220 = vunpack.c.h.b16 %v2030
    %v2221 = vunpack.c.l.b16 %v2031
    %v2222 = vunpack.c.h.b16 %v2031
    %v2223 = vunpack.c.l.b16 %v2032
    %v2224 = vunpack.c.h.b16 %v2032
    %v2225 = vunpack.c.l.b16 %v2033
    %v2226 = vunpack.c.h.b16 %v2033
    %v2227 = vunpack.c.l.b16 %v2034
    %v2228 = vunpack.c.h.b16 %v2034
    %v2229 = vunpack.c.l.b16 %v2035
    %v2230 = vunpack.c.h.b16 %v2035
    %v2231 = vunpack.c.l.b16 %v2036
    %v2232 = vunpack.c.h.b16 %v2036
    %v2233 = vunpack.c.l.b16 %v2037
    %v2234 = vunpack.c.h.b16 %v2037
    %v2235 = vunpack.c.l.b16 %v2038
    %v2236 = vunpack.c.h.b16 %v2038
    %v2237 = vunpack.c.l.b16 %v2039
    %v2238 = vunpack.c.h.b16 %v2039
    %v2239 = vunpack.c.l.b16 %v2040
    %v2240 = vunpack.c.h.b16 %v2040
    %v2241 = vunpack.c.l.b16 %v2041
    %v2242 = vunpack.c.h.b16 %v2041
    %v2243 = vunpack.c.l.b16 %v2042
    %v2244 = vunpack.c.h.b16 %v2042
    %v2245 = vunpack.c.l.b16 %v2043
    %v2246 = vunpack.c.h.b16 %v2043
    %v2247 = vunpack.c.l.b16 %v2044
    %v2248 = vunpack.c.h.b16 %v2044
    %v2249 = vpack.c.b16 %v2123, %v2121
    %v2250 = vpack.c.b16 %v2124, %v2122
    %v2251 = vpack.c.b16 %v2127, %v2125
    %v2252 = vpack.c.b16 %v2128, %v2126
    %v2253 = vpack.c.b16 %v2131, %v2129
    %v2254 = vpack.c.b16 %v2132, %v2130
    %v2255 = vpack.c.b16 %v2135, %v2133
    %v2256 = vpack.c.b16 %v2136, %v2134
    %v2257 = vpack.c.b16 %v2139, %v2137
    %v2258 = vpack.c.b16 %v2140, %v2138
    %v2259 = vpack.c.b16 %v2143, %v2141
    %v2260 = vpack.c.b16 %v2144, %v2142
    %v2261 = vpack.c.b16 %v2147, %v2145
    %v2262 = vpack.c.b16 %v2148, %v2146
    %v2263 = vpack.c.b16 %v2151, %v2149
    %v2264 = vpack.c.b16 %v2152, %v2150
    %v2265 = vpack.c.b16 %v2155, %v2153
    %v2266 = vpack.c.b16 %v2156, %v2154
    %v2267 = vpack.c.b16 %v2159, %v2157
    %v2268 = vpack.c.b16 %v2160, %v2158
    %v2269 = vpack.c.b16 %v2163, %v2161
    %v2270 = vpack.c.b16 %v2164, %v2162
    %v2271 = vpack.c.b16 %v2167, %v2165
    %v2272 = vpack.c.b16 %v2168, %v2166
    %v2273 = vpack.c.b16 %v2171, %v2169
    %v2274 = vpack.c.b16 %v2172, %v2170
    %v2275 = vpack.c.b16 %v2175, %v2173
    %v2276 = vpack.c.b16 %v2176, %v2174
    %v2277 = vpack.c.b16 %v2179, %v2177
    %v2278 = vpack.c.b16 %v2180, %v2178
    %v2279 = vpack.c.b16 %v2183, %v2181
    %v2280 = vpack.c.b16 %v2184, %v2182
    %v2281 = vpack.c.b16 %v2187, %v2185
    %v2282 = vpack.c.b16 %v2188, %v2186
    %v2283 = vpack.c.b16 %v2191, %v2189
    %v2284 = vpack.c.b16 %v2192, %v2190
    %v2285 = vpack.c.b16 %v2195, %v2193
    %v2286 = vpack.c.b16 %v2196, %v2194
    %v2287 = vpack.c.b16 %v2199, %v2197
    %v2288 = vpack.c.b16 %v2200, %v2198
    %v2289 = vpack.c.b16 %v2203, %v2201
    %v2290 = vpack.c.b16 %v2204, %v2202
    %v2291 = vpack.c.b16 %v2207, %v2205
    %v2292 = vpack.c.b16 %v2208, %v2206
    %v2293 = vpack.c.b16 %v2211, %v2209
    %v2294 = vpack.c.b16 %v2212, %v2210
    %v2295 = vpack.c.b16 %v2215, %v2213
    %v2296 = vpack.c.b16 %v2216, %v2214
    %v2297 = vpack.c.b16 %v2219, %v2217
    %v2298 = vpack.c.b16 %v2220, %v2218
    %v2299 = vpack.c.b16 %v2223, %v2221
    %v2300 = vpack.c.b16 %v2224, %v2222
    %v2301 = vpack.c.b16 %v2227, %v2225
    %v2302 = vpack.c.b16 %v2228, %v2226
    %v2303 = vpack.c.b16 %v2231, %v2229
    %v2304 = vpack.c.b16 %v2232, %v2230
    %v2305 = vpack.c.b16 %v2235, %v2233
    %v2306 = vpack.c.b16 %v2236, %v2234
    %v2307 = vpack.c.b16 %v2239, %v2237
    %v2308 = vpack.c.b16 %v2240, %v2238
    %v2309 = vpack.c.b16 %v2243, %v2241
    %v2310 = vpack.c.b16 %v2244, %v2242
    %v2311 = vpack.c.b16 %v2247, %v2245
    %v2312 = vpack.c.b16 %v2248, %v2246
    %2377 = vmatprep.subr.bf16.mxu0 %v2250
    %2378 = vmatpush1.bf16.msra.mxu0 %v2249
    %2379 = vmatprep.subr.bf16.mxu0 %v2252
    %2380 = vmatpush1.bf16.msra.mxu0 %v2251
    %2381 = vmatprep.subr.bf16.mxu0 %v2254
    %2382 = vmatpush1.bf16.msra.mxu0 %v2253
    %2383 = vmatprep.subr.bf16.mxu0 %v2256
    %2384 = vmatpush1.bf16.msra.mxu0 %v2255
    %2385 = vmatprep.subr.bf16.mxu0 %v2258
    %2386 = vmatpush1.bf16.msra.mxu0 %v2257
    %2387 = vmatprep.subr.bf16.mxu0 %v2260
    %2388 = vmatpush1.bf16.msra.mxu0 %v2259
    %2389 = vmatprep.subr.bf16.mxu0 %v2262
    %2390 = vmatpush1.bf16.msra.mxu0 %v2261
    %2391 = vmatprep.subr.bf16.mxu0 %v2264
    %2392 = vmatpush1.bf16.msra.mxu0 %v2263
    %2393 = vmatprep.subr.bf16.mxu0 %v2266
    %2394 = vmatpush1.bf16.msra.mxu0 %v2265
    %2395 = vmatprep.subr.bf16.mxu0 %v2268
    %2396 = vmatpush1.bf16.msra.mxu0 %v2267
    %2397 = vmatprep.subr.bf16.mxu0 %v2270
    %2398 = vmatpush1.bf16.msra.mxu0 %v2269
    %2399 = vmatprep.subr.bf16.mxu0 %v2272
    %2400 = vmatpush1.bf16.msra.mxu0 %v2271
    %2401 = vmatprep.subr.bf16.mxu0 %v2274
    %2402 = vmatpush1.bf16.msra.mxu0 %v2273
    %2403 = vmatprep.subr.bf16.mxu0 %v2276
    %2404 = vmatpush1.bf16.msra.mxu0 %v2275
    %2405 = vmatprep.subr.bf16.mxu0 %v2278
    %2406 = vmatpush1.bf16.msra.mxu0 %v2277
    %2407 = vmatprep.subr.bf16.mxu0 %v2280
    %2408 = vmatpush1.bf16.msra.mxu0 %v2279
    %2409 = vmatprep.mubr.bf16.mxu0 %v1978
    %2410 = vmatmul.mubr.bf16.gmra.mrb[0].mxu0 %v1977
    %v2411 = vpop.f32.mrb[0].mxu0
    %v2412 = vadd.f32 %v2050, %v2411
    %v2413 = vpop.f32.mrb[0].mxu0
    %v2414 = vadd.f32 %v2054, %v2413
    %v2415 = vpop.f32.mrb[0].mxu0
    %v2416 = vpop.f32.mrb[0].mxu0
    %2417 = vdwg.mxu0
    %2418 = vmatprep.subr.bf16.mxu0 %v2282
    %2419 = vmatpush1.bf16.msra.mxu0 %v2281
    %2420 = vmatprep.subr.bf16.mxu0 %v2284
    %2421 = vmatpush1.bf16.msra.mxu0 %v2283
    %2422 = vmatprep.subr.bf16.mxu0 %v2286
    %2423 = vmatpush1.bf16.msra.mxu0 %v2285
    %2424 = vmatprep.subr.bf16.mxu0 %v2288
    %2425 = vmatpush1.bf16.msra.mxu0 %v2287
    %2426 = vmatprep.subr.bf16.mxu0 %v2290
    %2427 = vmatpush1.bf16.msra.mxu0 %v2289
    %2428 = vmatprep.subr.bf16.mxu0 %v2292
    %2429 = vmatpush1.bf16.msra.mxu0 %v2291
    %2430 = vmatprep.subr.bf16.mxu0 %v2294
    %2431 = vmatpush1.bf16.msra.mxu0 %v2293
    %2432 = vmatprep.subr.bf16.mxu0 %v2296
    %2433 = vmatpush1.bf16.msra.mxu0 %v2295
    %2434 = vmatprep.subr.bf16.mxu0 %v2298
    %2435 = vmatpush1.bf16.msra.mxu0 %v2297
    %2436 = vmatprep.subr.bf16.mxu0 %v2300
    %2437 = vmatpush1.bf16.msra.mxu0 %v2299
    %2438 = vmatprep.subr.bf16.mxu0 %v2302
    %2439 = vmatpush1.bf16.msra.mxu0 %v2301
    %2440 = vmatprep.subr.bf16.mxu0 %v2304
    %2441 = vmatpush1.bf16.msra.mxu0 %v2303
    %2442 = vmatprep.subr.bf16.mxu0 %v2306
    %2443 = vmatpush1.bf16.msra.mxu0 %v2305
    %2444 = vmatprep.subr.bf16.mxu0 %v2308
    %2445 = vmatpush1.bf16.msra.mxu0 %v2307
    %2446 = vmatprep.subr.bf16.mxu0 %v2310
    %2447 = vmatpush1.bf16.msra.mxu0 %v2309
    %2448 = vmatprep.subr.bf16.mxu0 %v2312
    %2449 = vmatpush1.bf16.msra.mxu0 %v2311
    %2450 = vmatprep.mubr.bf16.mxu0 %v1980
    %2451 = vmatmul.mubr.bf16.gmra.mrb[0].mxu0 %v1979
    %v2452 = vpop.f32.mrb[0].mxu0
    %v2453 = vadd.f32 %v2412, %v2452
    %v2454 = vpop.f32.mrb[0].mxu0
    %v2455 = vadd.f32 %v2414, %v2454
    %v2456 = vpop.f32.mrb[0].mxu0
    %v2457 = vpop.f32.mrb[0].mxu0
    %2458 = vdwg.mxu0
    %v2459 = vmax.f32 %v2453, 0.0
    %v2460 = vmax.f32 %v2455, 0.0
    %v2461 = vpack.c.bf16 %v2459, %v2459
    %v2462 = vpack.c.bf16 %v2460, %v2460
    %v2463 = vld [vmem:[%s5] sm:$0xf]
    %v2464 = vld [vmem:[%s5 + $0x4] sm:$0xf]
    %v2465 = vld [vmem:[%s5 + $0x8] sm:$0xf]
    %v2466 = vld [vmem:[%s5 + $0xc] sm:$0xf]
    %v2467 = vld [vmem:[%s5 + $0x10] sm:$0xf]
    %v2468 = vld [vmem:[%s5 + $0x14] sm:$0xf]
    %v2469 = vld [vmem:[%s5 + $0x18] sm:$0xf]
    %v2470 = vld [vmem:[%s5 + $0x1c] sm:$0xf]
    %v2471 = vld [vmem:[%s5 + $0x20] sm:$0xf]
    %v2472 = vld [vmem:[%s5 + $0x24] sm:$0xf]
    %v2473 = vld [vmem:[%s5 + $0x28] sm:$0xf]
    %v2474 = vld [vmem:[%s5 + $0x2c] sm:$0xf]
    %v2475 = vld [vmem:[%s5 + $0x30] sm:$0xf]
    %v2476 = vld [vmem:[%s5 + $0x34] sm:$0xf]
    %v2477 = vld [vmem:[%s5 + $0x38] sm:$0xf]
    %v2478 = vld [vmem:[%s5 + $0x3c] sm:$0xf]
    %v2479 = vld [vmem:[%s5 + $0x40] sm:$0xf]
    %v2480 = vld [vmem:[%s5 + $0x44] sm:$0xf]
    %v2481 = vld [vmem:[%s5 + $0x48] sm:$0xf]
    %v2482 = vld [vmem:[%s5 + $0x4c] sm:$0xf]
    %v2483 = vld [vmem:[%s5 + $0x50] sm:$0xf]
    %v2484 = vld [vmem:[%s5 + $0x54] sm:$0xf]
    %v2485 = vld [vmem:[%s5 + $0x58] sm:$0xf]
    %v2486 = vld [vmem:[%s5 + $0x5c] sm:$0xf]
    %v2487 = vld [vmem:[%s5 + $0x60] sm:$0xf]
    %v2488 = vld [vmem:[%s5 + $0x64] sm:$0xf]
    %v2489 = vld [vmem:[%s5 + $0x68] sm:$0xf]
    %v2490 = vld [vmem:[%s5 + $0x6c] sm:$0xf]
    %v2491 = vld [vmem:[%s5 + $0x70] sm:$0xf]
    %v2492 = vld [vmem:[%s5 + $0x74] sm:$0xf]
    %v2493 = vld [vmem:[%s5 + $0x78] sm:$0xf]
    %v2494 = vld [vmem:[%s5 + $0x7c] sm:$0xf]
    %v2495 = vld [vmem:[%s6] sm:$0x1]
    %v2497 = vlaneseq
    %v2498 = vshrl.u32 %v2497, 7
    %v2499 = vsub.s32 0, %v2498
    %v2500 = vrot.slane %v2495, %v2499
    %v2534 = vunpack.c.l.b16 %v2463
    %v2535 = vunpack.c.l.b16 %v2464
    %v2536 = vunpack.c.l.b16 %v2465
    %v2537 = vunpack.c.l.b16 %v2466
    %v2538 = vunpack.c.l.b16 %v2467
    %v2539 = vunpack.c.l.b16 %v2468
    %v2540 = vunpack.c.l.b16 %v2469
    %v2541 = vunpack.c.l.b16 %v2470
    %v2542 = vunpack.c.l.b16 %v2471
    %v2543 = vunpack.c.l.b16 %v2472
    %v2544 = vunpack.c.l.b16 %v2473
    %v2545 = vunpack.c.l.b16 %v2474
    %v2546 = vunpack.c.l.b16 %v2475
    %v2547 = vunpack.c.l.b16 %v2476
    %v2548 = vunpack.c.l.b16 %v2477
    %v2549 = vunpack.c.l.b16 %v2478
    %v2550 = vunpack.c.l.b16 %v2479
    %v2551 = vunpack.c.l.b16 %v2480
    %v2552 = vunpack.c.l.b16 %v2481
    %v2553 = vunpack.c.l.b16 %v2482
    %v2554 = vunpack.c.l.b16 %v2483
    %v2555 = vunpack.c.l.b16 %v2484
    %v2556 = vunpack.c.l.b16 %v2485
    %v2557 = vunpack.c.l.b16 %v2486
    %v2558 = vunpack.c.l.b16 %v2487
    %v2559 = vunpack.c.l.b16 %v2488
    %v2560 = vunpack.c.l.b16 %v2489
    %v2561 = vunpack.c.l.b16 %v2490
    %v2562 = vunpack.c.l.b16 %v2491
    %v2563 = vunpack.c.l.b16 %v2492
    %v2564 = vunpack.c.l.b16 %v2493
    %v2565 = vunpack.c.l.b16 %v2494
    %v2566 = vpack.c.b16 %v2535, %v2534
    %v2567 = vpack.c.b16 %v2537, %v2536
    %v2568 = vpack.c.b16 %v2539, %v2538
    %v2569 = vpack.c.b16 %v2541, %v2540
    %v2570 = vpack.c.b16 %v2543, %v2542
    %v2571 = vpack.c.b16 %v2545, %v2544
    %v2572 = vpack.c.b16 %v2547, %v2546
    %v2573 = vpack.c.b16 %v2549, %v2548
    %v2574 = vpack.c.b16 %v2551, %v2550
    %v2575 = vpack.c.b16 %v2553, %v2552
    %v2576 = vpack.c.b16 %v2555, %v2554
    %v2577 = vpack.c.b16 %v2557, %v2556
    %v2578 = vpack.c.b16 %v2559, %v2558
    %v2579 = vpack.c.b16 %v2561, %v2560
    %v2580 = vpack.c.b16 %v2563, %v2562
    %v2581 = vpack.c.b16 %v2565, %v2564
    %2598 = vmatprep.subr.bf16.mxu0 0
    %2599 = vmatpush1.bf16.msra.mxu0 %v2566
    %2600 = vmatprep.subr.bf16.mxu0 0
    %2601 = vmatpush1.bf16.msra.mxu0 %v2567
    %2602 = vmatprep.subr.bf16.mxu0 0
    %2603 = vmatpush1.bf16.msra.mxu0 %v2568
    %2604 = vmatprep.subr.bf16.mxu0 0
    %2605 = vmatpush1.bf16.msra.mxu0 %v2569
    %2606 = vmatprep.subr.bf16.mxu0 0
    %2607 = vmatpush1.bf16.msra.mxu0 %v2570
    %2608 = vmatprep.subr.bf16.mxu0 0
    %2609 = vmatpush1.bf16.msra.mxu0 %v2571
    %2610 = vmatprep.subr.bf16.mxu0 0
    %2611 = vmatpush1.bf16.msra.mxu0 %v2572
    %2612 = vmatprep.subr.bf16.mxu0 0
    %2613 = vmatpush1.bf16.msra.mxu0 %v2573
    %2614 = vmatprep.subr.bf16.mxu0 0
    %2615 = vmatpush1.bf16.msra.mxu0 %v2574
    %2616 = vmatprep.subr.bf16.mxu0 0
    %2617 = vmatpush1.bf16.msra.mxu0 %v2575
    %2618 = vmatprep.subr.bf16.mxu0 0
    %2619 = vmatpush1.bf16.msra.mxu0 %v2576
    %2620 = vmatprep.subr.bf16.mxu0 0
    %2621 = vmatpush1.bf16.msra.mxu0 %v2577
    %2622 = vmatprep.subr.bf16.mxu0 0
    %2623 = vmatpush1.bf16.msra.mxu0 %v2578
    %2624 = vmatprep.subr.bf16.mxu0 0
    %2625 = vmatpush1.bf16.msra.mxu0 %v2579
    %2626 = vmatprep.subr.bf16.mxu0 0
    %2627 = vmatpush1.bf16.msra.mxu0 %v2580
    %2628 = vmatprep.subr.bf16.mxu0 0
    %2629 = vmatpush1.bf16.msra.mxu0 %v2581
    %2630 = vmatprep.mubr.bf16.mxu0 %v2462
    %2631 = vmatmul.mubr.bf16.gmra.mrb[0].mxu0 %v2461
    %v2632 = vpop.f32.mrb[0].mxu0
    %v2633 = vadd.f32 %v2500, %v2632
    %v2634 = vpop.f32.mrb[0].mxu0
    %v2635 = vpop.f32.mrb[0].mxu0
    %v2636 = vpop.f32.mrb[0].mxu0
    %2637 = vdwg.mxu0
    %vm2638 = vcmask 74752
    %2639 = vst.msk [vmem:[#allocation2] sm:$0x3] %vm2638, %v2633
    // Predicated region
    $region30: #{forward.3} parent=1 // pred_check
      _
    $region31: #{forward.3} parent=1 // pred_check_branch
      %2641 = sbr.rel (0) target = $region33
    $region32: #{forward.3} parent=1 // pred_region
      %s2643 = ssub.s32 32, 32
      %2644 = vsyncadd [#allocation3], %s2643
      %s2646 = sshll.u32 [#allocation2], 4
      %s2647 = int_to_ptr.vmem [resolvable:$true] %s2646
      %2649 = dma.vmem_to_hbm [thread:$0]  %s2647, 32, %s7, [#allocation3]
    $region33: #{forward.3} parent=1 // pred_fallthru
      _
    // Predicated region
    $region34: #{forward.3} parent=1 // pred_check
      _
    $region35: #{forward.3} parent=1 // pred_check_branch
      %2651 = sbr.rel (0) target = $region37
    $region36: #{forward.3} parent=1 // pred_region
      %2652 = dma.done [#allocation3], 32
    $region37: #{forward.3} parent=1 // pred_fallthru
      _
    %2653 = vsyncpa [#allocation3], 1

// kernel: forward.2
$region0: #{forward.2}
  #allocation0 [shape = 'u32[]', space=smem, size = 0x4, offset = 0x4, fixed_abs, tag = 'smem constant byte address 0x4 - core index']
  #allocation1 [shape = 'u32[144,128]{1,0:T(1,128)}', space=vmem, size = 0x12000, scoped, tag = 'internal scratch']
  #allocation2 [shape = 'bf16[32,736]{1,0:T(16,128)(2,1)}', space=vmem, size = 0xc000, scoped, tag = 'scratch operand']
  #allocation3 [shape = 'bf16[32,672]{1,0:T(16,128)(2,1)}', space=vmem, size = 0xc000, scoped, tag = 'scratch operand']
  #allocation4 [shape = 'bf16[32,160]{1,0:T(16,128)(2,1)}', space=vmem, size = 0x4000, scoped, tag = 'scratch operand']
  #allocation5 [shape = 'bf16[64,128]{1,0:T(16,128)(2,1)}', space=vmem, size = 0x4000, scoped, tag = 'scratch operand']
  #allocation6 [shape = 'bf16[64,96]{1,0:T(16,128)(2,1)}', space=vmem, size = 0x4000, scoped, tag = 'scratch operand']
  %s0 = inlined_call_operand.vmem [shape: bf16[2,1,896], index: 0, kind: input, shape index: {}]
  %s1 = inlined_call_operand.vmem [shape: bf16[9,32,1], index: 1, kind: input, shape index: {}]
  %s2 = inlined_call_operand.vmem [shape: f32[32,1], index: 2, kind: input, shape index: {}]
  %s3 = inlined_call_operand.hbm [shape: bf16[9,32,32], index: 3, kind: input, shape index: {}]
  %s4 = inlined_call_operand.vmem [shape: f32[32,1], index: 4, kind: input, shape index: {}]
  %s5 = inlined_call_operand.vmem [shape: bf16[9,64,32], index: 5, kind: input, shape index: {}]
  %s6 = inlined_call_operand.vmem [shape: f32[64,1], index: 6, kind: input, shape index: {}]
  %s7 = inlined_call_operand.hbm [shape: bf16[9,64,64], index: 7, kind: input, shape index: {}]
  %s8 = inlined_call_operand.vmem [shape: f32[64,1], index: 8, kind: input, shape index: {}]
  %s9 = inlined_call_operand.vmem [shape: bf16[640,160], index: 9, kind: input, shape index: {}]
  %s10 = inlined_call_operand.vmem [shape: bf16[80,16], index: 10, kind: input, shape index: {}]
  %s11 = inlined_call_operand.vmem [shape: bf16[2,64,16], index: 11, kind: output, shape index: {}]
  %s12 = sld [smem:[#allocation0]]
  $region85: #{forward.2} parent=0
    _
  %s14 = ssub.s32 1, %s12
  %s15 = scalar_select 0, %s14, %s12
  $region1: #{forward.2} parent=0
    #allocation7 [shape = 'u8[73728]{0}', space=vmem, size = 0x12000, scoped, tag = 'input window, operand 3, single buffered']
    #allocation8 [shape = 's32[2]{0}', space=sflag, size = 0x8, scoped, tag = 'scoped memory for forward.2']
    #allocation9 [shape = 'u8[147456]{0}', space=vmem, size = 0x24000, scoped, tag = 'input window, operand 7, single buffered']
    #allocation10 [shape = 's32[1]{0}', space=sflag, size = 0x4, scoped, tag = 'scoped memory for forward.2']
    %16 = vsyncpa [#allocation8], 0
    %17 = vsyncpa [#allocation10], 0
    loop: start=0, step=1, limit=4
    $region2: #{forward.2} parent=1 // loop_pre_header
      _
    $region3: #{forward.2} parent=1 // loop_header
      %s19 = sphi 0, %s23
      %p20 = scmp.ge.s32.totalorder %s19, 4
      %s29 = sphi 0, %s31
      %s32 = sphi 0, %s29
      %s33 = sphi 0, %s32
      %s49 = sphi 0, %s33
      %s53 = sphi 0, %s53
      %s55 = sphi 0, %s53
      %s56 = sphi 0, %s55
      %s70 = sphi 0, %s56
      %s74 = sphi 0, %s74
      %s76 = sphi 0, %s74
      %s77 = sphi 0, %s76
      %s91 = sphi 0, %s77
      %s95 = sphi 0, %s95
      %s97 = sphi 0, %s95
      %s98 = sphi 0, %s97
      %s112 = sphi 0, %s98
      %s116 = sphi 0, %s116
      %s118 = sphi 0, %s116
      %s119 = sphi 0, %s118
      %s133 = sphi 0, %s119
      %s137 = sphi 0, %s137
      %s139 = sphi 0, %s137
      %s140 = sphi 0, %s139
      %s154 = sphi 0, %s140
      %s158 = sphi 0, %s158
      %s160 = sphi 0, %s158
      %s161 = sphi 0, %s160
      %s175 = sphi 0, %s161
      %s179 = sphi 0, %s179
      %s181 = sphi 0, %s179
      %s182 = sphi 0, %s181
      %s196 = sphi 0, %s182
      %s200 = sphi 0, %s200
      %s202 = sphi 0, %s200
      %s203 = sphi 0, %s202
      %s217 = sphi 0, %s203
      %s221 = sphi 0, %s221
      %s223 = sphi 0, %s221
      %s224 = sphi 0, %s223
      %s238 = sphi 0, %s224
      %s242 = sphi 0, %s242
      %s244 = sphi 0, %s242
      %s245 = sphi 0, %s244
      %s259 = sphi 0, %s245
      %s265 = sphi 0, %s267
      %s268 = sphi 0, %s265
      %s269 = sphi 0, %s268
      %s285 = sphi 0, %s269
    $region4: #{forward.2} parent=1 // loop_header_branch
      %22 = sbr.rel (%p20) target = $region8
    $region5: #{forward.2} parent=1 // loop_body
      %s24 = ssub.s32 %s19, 1
      %s25 = ssub.s32 %s19, 2
      %s26 = sadd.s32 %s19, 1
      %s27 = ssub.s32 %s19, %s26
      %p28 = scmp.eq.s32.totalorder %s27, 0
      %s30 = sadd.s32 %s29, 1
      %s31 = scalar_select %p28, %s29, %s30
      %p34 = pneg %p28
      %p35 = scmp.eq.s32.totalorder %s19, 1
      %p36 = por %p34, %p35
      %p37 = scmp.ne.s32.totalorder %s29, %s32
      %p38 = scmp.eq.s32.totalorder %s19, 0
      %p39 = por %p37, %p38
      %p40 = scmp.ne.s32.totalorder %s29, %s32
      %p41 = scmp.eq.s32.totalorder %s24, 1
      %p42 = por %p40, %p41
      %p43 = scmp.ne.s32.totalorder %s32, %s33
      %p44 = scmp.eq.s32.totalorder %s24, 0
      %p45 = por %p43, %p44
      %p46 = scmp.ne.s32.totalorder %s32, %s33
      %p47 = scmp.eq.s32.totalorder %s25, 1
      %p48 = por %p46, %p47
      %p50 = scmp.ne.s32.totalorder %s33, %s49
      %p51 = scmp.eq.s32.totalorder %s25, 0
      %p52 = por %p50, %p51
      %s54 = sadd.s32 %s53, 1
      %p57 = scmp.eq.s32.totalorder %s19, 1
      %p58 = scmp.ne.s32.totalorder %s53, %s55
      %p59 = scmp.eq.s32.totalorder %s19, 0
      %p60 = por %p58, %p59
      %p61 = scmp.ne.s32.totalorder %s53, %s55
      %p62 = scmp.eq.s32.totalorder %s24, 1
      %p63 = por %p61, %p62
      %p64 = scmp.ne.s32.totalorder %s55, %s56
      %p65 = scmp.eq.s32.totalorder %s24, 0
      %p66 = por %p64, %p65
      %p67 = scmp.ne.s32.totalorder %s55, %s56
      %p68 = scmp.eq.s32.totalorder %s25, 1
      %p69 = por %p67, %p68
      %p71 = scmp.ne.s32.totalorder %s56, %s70
      %p72 = scmp.eq.s32.totalorder %s25, 0
      %p73 = por %p71, %p72
      %s75 = sadd.s32 %s74, 1
      %p78 = scmp.eq.s32.totalorder %s19, 1
      %p79 = scmp.ne.s32.totalorder %s74, %s76
      %p80 = scmp.eq.s32.totalorder %s19, 0
      %p81 = por %p79, %p80
      %p82 = scmp.ne.s32.totalorder %s74, %s76
      %p83 = scmp.eq.s32.totalorder %s24, 1
      %p84 = por %p82, %p83
      %p85 = scmp.ne.s32.totalorder %s76, %s77
      %p86 = scmp.eq.s32.totalorder %s24, 0
      %p87 = por %p85, %p86
      %p88 = scmp.ne.s32.totalorder %s76, %s77
      %p89 = scmp.eq.s32.totalorder %s25, 1
      %p90 = por %p88, %p89
      %p92 = scmp.ne.s32.totalorder %s77, %s91
      %p93 = scmp.eq.s32.totalorder %s25, 0
      %p94 = por %p92, %p93
      %s96 = sadd.s32 %s95, 1
      %p99 = scmp.eq.s32.totalorder %s19, 1
      %p100 = scmp.ne.s32.totalorder %s95, %s97
      %p101 = scmp.eq.s32.totalorder %s19, 0
      %p102 = por %p100, %p101
      %p103 = scmp.ne.s32.totalorder %s95, %s97
      %p104 = scmp.eq.s32.totalorder %s24, 1
      %p105 = por %p103, %p104
      %p106 = scmp.ne.s32.totalorder %s97, %s98
      %p107 = scmp.eq.s32.totalorder %s24, 0
      %p108 = por %p106, %p107
      %p109 = scmp.ne.s32.totalorder %s97, %s98
      %p110 = scmp.eq.s32.totalorder %s25, 1
      %p111 = por %p109, %p110
      %p113 = scmp.ne.s32.totalorder %s98, %s112
      %p114 = scmp.eq.s32.totalorder %s25, 0
      %p115 = por %p113, %p114
      %s117 = sadd.s32 %s116, 1
      %p120 = scmp.eq.s32.totalorder %s19, 1
      %p121 = scmp.ne.s32.totalorder %s116, %s118
      %p122 = scmp.eq.s32.totalorder %s19, 0
      %p123 = por %p121, %p122
      %p124 = scmp.ne.s32.totalorder %s116, %s118
      %p125 = scmp.eq.s32.totalorder %s24, 1
      %p126 = por %p124, %p125
      %p127 = scmp.ne.s32.totalorder %s118, %s119
      %p128 = scmp.eq.s32.totalorder %s24, 0
      %p129 = por %p127, %p128
      %p130 = scmp.ne.s32.totalorder %s118, %s119
      %p131 = scmp.eq.s32.totalorder %s25, 1
      %p132 = por %p130, %p131
      %p134 = scmp.ne.s32.totalorder %s119, %s133
      %p135 = scmp.eq.s32.totalorder %s25, 0
      %p136 = por %p134, %p135
      %s138 = sadd.s32 %s137, 1
      %p141 = scmp.eq.s32.totalorder %s19, 1
      %p142 = scmp.ne.s32.totalorder %s137, %s139
      %p143 = scmp.eq.s32.totalorder %s19, 0
      %p144 = por %p142, %p143
      %p145 = scmp.ne.s32.totalorder %s137, %s139
      %p146 = scmp.eq.s32.totalorder %s24, 1
      %p147 = por %p145, %p146
      %p148 = scmp.ne.s32.totalorder %s139, %s140
      %p149 = scmp.eq.s32.totalorder %s24, 0
      %p150 = por %p148, %p149
      %p151 = scmp.ne.s32.totalorder %s139, %s140
      %p152 = scmp.eq.s32.totalorder %s25, 1
      %p153 = por %p151, %p152
      %p155 = scmp.ne.s32.totalorder %s140, %s154
      %p156 = scmp.eq.s32.totalorder %s25, 0
      %p157 = por %p155, %p156
      %s159 = sadd.s32 %s158, 1
      %p162 = scmp.eq.s32.totalorder %s19, 1
      %p163 = scmp.ne.s32.totalorder %s158, %s160
      %p164 = scmp.eq.s32.totalorder %s19, 0
      %p165 = por %p163, %p164
      %p166 = scmp.ne.s32.totalorder %s158, %s160
      %p167 = scmp.eq.s32.totalorder %s24, 1
      %p168 = por %p166, %p167
      %p169 = scmp.ne.s32.totalorder %s160, %s161
      %p170 = scmp.eq.s32.totalorder %s24, 0
      %p171 = por %p169, %p170
      %p172 = scmp.ne.s32.totalorder %s160, %s161
      %p173 = scmp.eq.s32.totalorder %s25, 1
      %p174 = por %p172, %p173
      %p176 = scmp.ne.s32.totalorder %s161, %s175
      %p177 = scmp.eq.s32.totalorder %s25, 0
      %p178 = por %p176, %p177
      %s180 = sadd.s32 %s179, 1
      %p183 = scmp.eq.s32.totalorder %s19, 1
      %p184 = scmp.ne.s32.totalorder %s179, %s181
      %p185 = scmp.eq.s32.totalorder %s19, 0
      %p186 = por %p184, %p185
      %p187 = scmp.ne.s32.totalorder %s179, %s181
      %p188 = scmp.eq.s32.totalorder %s24, 1
      %p189 = por %p187, %p188
      %p190 = scmp.ne.s32.totalorder %s181, %s182
      %p191 = scmp.eq.s32.totalorder %s24, 0
      %p192 = por %p190, %p191
      %p193 = scmp.ne.s32.totalorder %s181, %s182
      %p194 = scmp.eq.s32.totalorder %s25, 1
      %p195 = por %p193, %p194
      %p197 = scmp.ne.s32.totalorder %s182, %s196
      %p198 = scmp.eq.s32.totalorder %s25, 0
      %p199 = por %p197, %p198
      %s201 = sadd.s32 %s200, 1
      %p204 = scmp.eq.s32.totalorder %s19, 1
      %p205 = scmp.ne.s32.totalorder %s200, %s202
      %p206 = scmp.eq.s32.totalorder %s19, 0
      %p207 = por %p205, %p206
      %p208 = scmp.ne.s32.totalorder %s200, %s202
      %p209 = scmp.eq.s32.totalorder %s24, 1
      %p210 = por %p208, %p209
      %p211 = scmp.ne.s32.totalorder %s202, %s203
      %p212 = scmp.eq.s32.totalorder %s24, 0
      %p213 = por %p211, %p212
      %p214 = scmp.ne.s32.totalorder %s202, %s203
      %p215 = scmp.eq.s32.totalorder %s25, 1
      %p216 = por %p214, %p215
      %p218 = scmp.ne.s32.totalorder %s203, %s217
      %p219 = scmp.eq.s32.totalorder %s25, 0
      %p220 = por %p218, %p219
      %s222 = sadd.s32 %s221, 1
      %p225 = scmp.eq.s32.totalorder %s19, 1
      %p226 = scmp.ne.s32.totalorder %s221, %s223
      %p227 = scmp.eq.s32.totalorder %s19, 0
      %p228 = por %p226, %p227
      %p229 = scmp.ne.s32.totalorder %s221, %s223
      %p230 = scmp.eq.s32.totalorder %s24, 1
      %p231 = por %p229, %p230
      %p232 = scmp.ne.s32.totalorder %s223, %s224
      %p233 = scmp.eq.s32.totalorder %s24, 0
      %p234 = por %p232, %p233
      %p235 = scmp.ne.s32.totalorder %s223, %s224
      %p236 = scmp.eq.s32.totalorder %s25, 1
      %p237 = por %p235, %p236
      %p239 = scmp.ne.s32.totalorder %s224, %s238
      %p240 = scmp.eq.s32.totalorder %s25, 0
      %p241 = por %p239, %p240
      %s243 = sadd.s32 %s242, 1
      %p246 = scmp.eq.s32.totalorder %s19, 1
      %p247 = scmp.ne.s32.totalorder %s242, %s244
      %p248 = scmp.eq.s32.totalorder %s19, 0
      %p249 = por %p247, %p248
      %p250 = scmp.ne.s32.totalorder %s242, %s244
      %p251 = scmp.eq.s32.totalorder %s24, 1
      %p252 = por %p250, %p251
      %p253 = scmp.ne.s32.totalorder %s244, %s245
      %p254 = scmp.eq.s32.totalorder %s24, 0
      %p255 = por %p253, %p254
      %p256 = scmp.ne.s32.totalorder %s244, %s245
      %p257 = scmp.eq.s32.totalorder %s25, 1
      %p258 = por %p256, %p257
      %p260 = scmp.ne.s32.totalorder %s245, %s259
      %p261 = scmp.eq.s32.totalorder %s25, 0
      %p262 = por %p260, %p261
      %s263 = ssub.s32 %s19, %s26
      %p264 = scmp.eq.s32.totalorder %s263, 0
      %s266 = sadd.s32 %s265, 1
      %s267 = scalar_select %p264, %s265, %s266
      %p270 = pneg %p264
      %p271 = scmp.eq.s32.totalorder %s19, 1
      %p272 = por %p270, %p271
      %p273 = scmp.ne.s32.totalorder %s265, %s268
      %p274 = scmp.eq.s32.totalorder %s19, 0
      %p275 = por %p273, %p274
      %p276 = scmp.ne.s32.totalorder %s265, %s268
      %p277 = scmp.eq.s32.totalorder %s24, 1
      %p278 = por %p276, %p277
      %p279 = scmp.ne.s32.totalorder %s268, %s269
      %p280 = scmp.eq.s32.totalorder %s24, 0
      %p281 = por %p279, %p280
      %p282 = scmp.ne.s32.totalorder %s268, %s269
      %p283 = scmp.eq.s32.totalorder %s25, 1
      %p284 = por %p282, %p283
      %p286 = scmp.ne.s32.totalorder %s269, %s285
      %p287 = scmp.eq.s32.totalorder %s25, 0
      %p288 = por %p286, %p287
      %p289 = scmp.le.s32.totalorder 1, %s19
      %p290 = scmp.lt.s32.totalorder %s19, 3
      %p291 = pnand %p289, %p290
      %p292 = pneg %p291
      // Predicated region
      $region9: #{forward.2} parent=5 // pred_check
        _
      $region10: #{forward.2} parent=5 // pred_check_branch
        %294 = sbr.rel (%p291) target = $region12
      $region11: #{forward.2} parent=5 // pred_region
        %s295 = ssub.s32 %s19, 1
        // Predicated region
        $region13: #{forward.2} parent=11 // pred_check
          %p296 = pneg %p66
        $region14: #{forward.2} parent=11 // pred_check_branch
          %298 = sbr.rel (%p296) target = $region16
        $region15: #{forward.2} parent=11 // pred_region
          _
        $region16: #{forward.2} parent=11 // pred_fallthru
          _
        // Predicated region
        $region17: #{forward.2} parent=11 // pred_check
          %p299 = pneg %p87
        $region18: #{forward.2} parent=11 // pred_check_branch
          %301 = sbr.rel (%p299) target = $region20
        $region19: #{forward.2} parent=11 // pred_region
          _
        $region20: #{forward.2} parent=11 // pred_fallthru
          _
        // Predicated region
        $region21: #{forward.2} parent=11 // pred_check
          %p302 = pneg %p108
        $region22: #{forward.2} parent=11 // pred_check_branch
          %304 = sbr.rel (%p302) target = $region24
        $region23: #{forward.2} parent=11 // pred_region
          %s306 = ssub.s32 2304, 2304
          %307 = vsyncadd [#allocation8], %s306
          %s308 = sshll.u32 [#allocation7], 4
          %s309 = int_to_ptr.vmem [resolvable:$true] %s308
          %314 = dma.hbm_to_vmem [thread:$0]  %s3, 2304, %s309, [#allocation8], 64, 64, 4
        $region24: #{forward.2} parent=11 // pred_fallthru
          _
        // Predicated region
        $region25: #{forward.2} parent=11 // pred_check
          %p315 = pneg %p129
        $region26: #{forward.2} parent=11 // pred_check_branch
          %317 = sbr.rel (%p315) target = $region28
        $region27: #{forward.2} parent=11 // pred_region
          _
        $region28: #{forward.2} parent=11 // pred_fallthru
          _
        // Predicated region
        $region29: #{forward.2} parent=11 // pred_check
          %p318 = pneg %p150
        $region30: #{forward.2} parent=11 // pred_check_branch
          %320 = sbr.rel (%p318) target = $region32
        $region31: #{forward.2} parent=11 // pred_region
          _
        $region32: #{forward.2} parent=11 // pred_fallthru
          _
        // Predicated region
        $region33: #{forward.2} parent=11 // pred_check
          %p321 = pneg %p171
        $region34: #{forward.2} parent=11 // pred_check_branch
          %323 = sbr.rel (%p321) target = $region36
        $region35: #{forward.2} parent=11 // pred_region
          _
        $region36: #{forward.2} parent=11 // pred_fallthru
          _
        // Predicated region
        $region37: #{forward.2} parent=11 // pred_check
          %p324 = pneg %p192
        $region38: #{forward.2} parent=11 // pred_check_branch
          %326 = sbr.rel (%p324) target = $region40
        $region39: #{forward.2} parent=11 // pred_region
          %s328 = ssub.s32 4608, 4608
          %329 = vsyncadd [#allocation10], %s328
          %s330 = sshll.u32 [#allocation9], 4
          %s331 = int_to_ptr.vmem [resolvable:$true] %s330
          %336 = dma.hbm_to_vmem [thread:$0]  %s7, 4608, %s331, [#allocation10], 64, 64, 4
        $region40: #{forward.2} parent=11 // pred_fallthru
          _
        // Predicated region
        $region41: #{forward.2} parent=11 // pred_check
          %p337 = pneg %p213
        $region42: #{forward.2} parent=11 // pred_check_branch
          %339 = sbr.rel (%p337) target = $region44
        $region43: #{forward.2} parent=11 // pred_region
          _
        $region44: #{forward.2} parent=11 // pred_fallthru
          _
        // Predicated region
        $region45: #{forward.2} parent=11 // pred_check
          %p340 = pneg %p234
        $region46: #{forward.2} parent=11 // pred_check_branch
          %342 = sbr.rel (%p340) target = $region48
        $region47: #{forward.2} parent=11 // pred_region
          _
        $region48: #{forward.2} parent=11 // pred_fallthru
          _
        // Predicated region
        $region49: #{forward.2} parent=11 // pred_check
          %p343 = pneg %p255
        $region50: #{forward.2} parent=11 // pred_check_branch
          %345 = sbr.rel (%p343) target = $region52
        $region51: #{forward.2} parent=11 // pred_region
          _
        $region52: #{forward.2} parent=11 // pred_fallthru
          _
      $region12: #{forward.2} parent=5 // pred_fallthru
        _
      %p346 = scmp.lt.s32.totalorder %s19, 2
      // Predicated region
      $region53: #{forward.2} parent=5 // pred_check
        %p347 = pneg %p346
      $region54: #{forward.2} parent=5 // pred_check_branch
        %349 = sbr.rel (%p347) target = $region56
      $region55: #{forward.2} parent=5 // pred_region
        // Predicated region
        $region57: #{forward.2} parent=55 // pred_check
          %p350 = pneg %p39
        $region58: #{forward.2} parent=55 // pred_check_branch
          %352 = sbr.rel (%p350) target = $region60
        $region59: #{forward.2} parent=55 // pred_region
          %p353 = scmp.lt.s32.totalorder %s19, 1
          %s354 = scalar_select %p353, %s19, 1
          %s355 = smul.addr %s354, 7
          %s356 = scalar_lea.vmem %s0, %s355
        $region60: #{forward.2} parent=55 // pred_fallthru
          _
      $region56: #{forward.2} parent=5 // pred_fallthru
        _
      %p357 = scmp.le.s32.totalorder 1, %s19
      %p358 = scmp.lt.s32.totalorder %s19, 3
      %p359 = pnand %p357, %p358
      %p360 = pneg %p359
      // Predicated region
      $region61: #{forward.2} parent=5 // pred_check
        _
      $region62: #{forward.2} parent=5 // pred_check_branch
        %362 = sbr.rel (%p359) target = $region64
      $region63: #{forward.2} parent=5 // pred_region
        %s363 = ssub.s32 %s19, 1
        // Predicated region
        $region65: #{forward.2} parent=63 // pred_check
          %p364 = pneg %p108
        $region66: #{forward.2} parent=63 // pred_check_branch
          %366 = sbr.rel (%p364) target = $region68
        $region67: #{forward.2} parent=63 // pred_region
          %367 = dma.done [#allocation8], 2304
        $region68: #{forward.2} parent=63 // pred_fallthru
          _
        // Predicated region
        $region69: #{forward.2} parent=63 // pred_check
          %p368 = pneg %p192
        $region70: #{forward.2} parent=63 // pred_check_branch
          %370 = sbr.rel (%p368) target = $region72
        $region71: #{forward.2} parent=63 // pred_region
          %371 = dma.done [#allocation10], 4608
        $region72: #{forward.2} parent=63 // pred_fallthru
          _
        %p372 = scmp.lt.s32.totalorder %s24, 1
        %s373 = scalar_select %p372, %s24, 1
        %s374 = smul.addr %s373, 7
        %s375 = scalar_lea.vmem %s0, %s374
        %p376 = pneg %p45
        %p377 = pneg %p42
        %p378 = pneg %p66
        %p379 = pneg %p63
        %p380 = pneg %p87
        %p381 = pneg %p84
        %p382 = pneg %p108
        %p383 = pneg %p105
        %p384 = pneg %p129
        %p385 = pneg %p126
        %p386 = pneg %p150
        %p387 = pneg %p147
        %p388 = pneg %p171
        %p389 = pneg %p168
        %p390 = pneg %p192
        %p391 = pneg %p189
        %p392 = pneg %p213
        %p393 = pneg %p210
        %p394 = pneg %p234
        %p395 = pneg %p231
        %p396 = pneg %p255
        %p397 = pneg %p252
        %p398 = pneg %p281
        %p399 = pneg %p278
        %p400 = scmp.lt.s32.totalorder %s24, 1
        %s401 = scalar_select %p400, %s24, 1
        %s402 = smul.addr %s401, 8
        %s403 = smul.addr %s402, 4
        %s404 = scalar_lea.vmem %s11, %s403
        %p405 = scmp.lt.s32.totalorder %s24, 1
        %s406 = scalar_select %p405, %s24, 1
        %s407 = smul.addr %s406, 7
        %s408 = scalar_lea.vmem %s0, %s407
        %p409 = scmp.lt.s32.totalorder %s24, 1
        %s410 = scalar_select %p409, %s24, 1
        %s411 = smul.addr %s410, 8
        %s412 = smul.addr %s411, 4
        %s413 = scalar_lea.vmem %s11, %s412
        %v415 = vld [vmem:[%s1] sm:$0xf]
        %v416 = vld [vmem:[%s1 + $0x4] sm:$0xf]
        %v417 = vld [vmem:[%s1 + $0x8] sm:$0xf]
        %v418 = vld [vmem:[%s1 + $0xc] sm:$0xf]
        %v419 = vunpack.c.l.bf16 %v415
        %v420 = vunpack.c.l.bf16 %v416
        %v421 = vunpack.c.l.bf16 %v417
        %v422 = vunpack.c.l.bf16 %v418
        %v423 = vld [vmem:[%s408] sm:$0x3f]
        %v424 = vunpack.c.l.bf16 %v423
        %v425 = vunpack.c.h.bf16 %v423
        %427 = vset.pattern.permute.xlu0 0
        %428 = vperm.xlu0 %427, %v419
        %v429 = vpop.permute.xlu0 %428
        %432 = vset.pattern.permute.xlu0 0
        %433 = vperm.xlu0 %432, %v420
        %v434 = vpop.permute.xlu0 %433
        %437 = vset.pattern.permute.xlu0 0
        %438 = vperm.xlu0 %437, %v421
        %v439 = vpop.permute.xlu0 %438
        %442 = vset.pattern.permute.xlu0 0
        %443 = vperm.xlu0 %442, %v422
        %v444 = vpop.permute.xlu0 %443
        %v448 = vlaneseq
        %v449 = vshrl.u32 %v448, 7
        %v450 = vsub.s32 0, %v449
        %v451 = vrot.slane %v424, %v450
        %v452 = vlaneseq
        %v453 = vshrl.u32 %v452, 7
        %v454 = vsub.s32 2, %v453
        %v455 = vrot.slane %v424, %v454
        %v456 = vlaneseq
        %v457 = vshrl.u32 %v456, 7
        %v458 = vsub.s32 4, %v457
        %v459 = vrot.slane %v424, %v458
        %v460 = vlaneseq
        %v461 = vshrl.u32 %v460, 7
        %v462 = vsub.s32 6, %v461
        %v463 = vrot.slane %v424, %v462
        %v464 = vlaneseq
        %v465 = vshrl.u32 %v464, 7
        %v466 = vsub.s32 0, %v465
        %v467 = vrot.slane %v425, %v466
        %v468 = vlaneseq
        %v469 = vshrl.u32 %v468, 7
        %v470 = vsub.s32 2, %v469
        %v471 = vrot.slane %v425, %v470
        %v478 = vlaneseq
        %v479 = vshrl.u32 %v478, 7
        %v480 = vsub.s32 0, %v479
        %v481 = vrot.slane %v451, %v480
        %v482 = vlaneseq
        %v483 = vshrl.u32 %v482, 7
        %v484 = vsub.s32 0, %v483
        %v485 = vrot.slane %v455, %v484
        %v486 = vlaneseq
        %v487 = vshrl.u32 %v486, 7
        %v488 = vsub.s32 0, %v487
        %v489 = vrot.slane %v459, %v488
        %v490 = vlaneseq
        %v491 = vshrl.u32 %v490, 7
        %v492 = vsub.s32 0, %v491
        %v493 = vrot.slane %v463, %v492
        %v494 = vlaneseq
        %v495 = vshrl.u32 %v494, 7
        %v496 = vsub.s32 0, %v495
        %v497 = vrot.slane %v467, %v496
        %v498 = vlaneseq
        %v499 = vshrl.u32 %v498, 7
        %v500 = vsub.s32 0, %v499
        %v501 = vrot.slane %v471, %v500
        %v502 = vmul.f32 %v429, %v481
        %v503 = vmul.f32 %v429, %v485
        %v504 = vmul.f32 %v429, %v489
        %v505 = vmul.f32 %v429, %v493
        %v506 = vmul.f32 %v429, %v497
        %v507 = vmul.f32 %v429, %v501
        %v508 = vmul.f32 %v434, %v481
        %v509 = vmul.f32 %v434, %v485
        %v510 = vmul.f32 %v434, %v489
        %v511 = vmul.f32 %v434, %v493
        %v512 = vmul.f32 %v434, %v497
        %v513 = vmul.f32 %v434, %v501
        %v514 = vmul.f32 %v439, %v481
        %v515 = vmul.f32 %v439, %v485
        %v516 = vmul.f32 %v439, %v489
        %v517 = vmul.f32 %v439, %v493
        %v518 = vmul.f32 %v439, %v497
        %v519 = vmul.f32 %v439, %v501
        %v520 = vmul.f32 %v444, %v481
        %v521 = vmul.f32 %v444, %v485
        %v522 = vmul.f32 %v444, %v489
        %v523 = vmul.f32 %v444, %v493
        %v524 = vmul.f32 %v444, %v497
        %v525 = vmul.f32 %v444, %v501
        %v526 = vadd.f32 %v502, 0.0
        %v527 = vadd.f32 %v503, 0.0
        %v528 = vadd.f32 %v504, 0.0
        %v529 = vadd.f32 %v505, 0.0
        %v530 = vadd.f32 %v506, 0.0
        %v531 = vadd.f32 %v507, 0.0
        %v532 = vadd.f32 %v508, 0.0
        %v533 = vadd.f32 %v509, 0.0
        %v534 = vadd.f32 %v510, 0.0
        %v535 = vadd.f32 %v511, 0.0
        %v536 = vadd.f32 %v512, 0.0
        %v537 = vadd.f32 %v513, 0.0
        %v538 = vadd.f32 %v514, 0.0
        %v539 = vadd.f32 %v515, 0.0
        %v540 = vadd.f32 %v516, 0.0
        %v541 = vadd.f32 %v517, 0.0
        %v542 = vadd.f32 %v518, 0.0
        %v543 = vadd.f32 %v519, 0.0
        %v544 = vadd.f32 %v520, 0.0
        %v545 = vadd.f32 %v521, 0.0
        %v546 = vadd.f32 %v522, 0.0
        %v547 = vadd.f32 %v523, 0.0
        %v548 = vadd.f32 %v524, 0.0
        %v549 = vadd.f32 %v525, 0.0
        %s550 = scalar_lea.vmem %s1, 16
        %v551 = vld [vmem:[%s550] sm:$0xf]
        %v552 = vld [vmem:[%s550 + $0x4] sm:$0xf]
        %v553 = vld [vmem:[%s550 + $0x8] sm:$0xf]
        %v554 = vld [vmem:[%s550 + $0xc] sm:$0xf]
        %v555 = vunpack.c.l.bf16 %v551
        %v556 = vunpack.c.l.bf16 %v552
        %v557 = vunpack.c.l.bf16 %v553
        %v558 = vunpack.c.l.bf16 %v554
        %560 = vset.pattern.permute.xlu0 0
        %561 = vperm.xlu0 %560, %v555
        %v562 = vpop.permute.xlu0 %561
        %565 = vset.pattern.permute.xlu0 0
        %566 = vperm.xlu0 %565, %v556
        %v567 = vpop.permute.xlu0 %566
        %570 = vset.pattern.permute.xlu0 0
        %571 = vperm.xlu0 %570, %v557
        %v572 = vpop.permute.xlu0 %571
        %575 = vset.pattern.permute.xlu0 0
        %576 = vperm.xlu0 %575, %v558
        %v577 = vpop.permute.xlu0 %576
        %v579 = vmul.f32 %v562, %v481
        %v580 = vmul.f32 %v562, %v485
        %v581 = vmul.f32 %v562, %v489
        %v582 = vmul.f32 %v562, %v493
        %v583 = vmul.f32 %v562, %v497
        %v584 = vmul.f32 %v562, %v501
        %v585 = vmul.f32 %v567, %v481
        %v586 = vmul.f32 %v567, %v485
        %v587 = vmul.f32 %v567, %v489
        %v588 = vmul.f32 %v567, %v493
        %v589 = vmul.f32 %v567, %v497
        %v590 = vmul.f32 %v567, %v501
        %v591 = vmul.f32 %v572, %v481
        %v592 = vmul.f32 %v572, %v485
        %v593 = vmul.f32 %v572, %v489
        %v594 = vmul.f32 %v572, %v493
        %v595 = vmul.f32 %v572, %v497
        %v596 = vmul.f32 %v572, %v501
        %v597 = vmul.f32 %v577, %v481
        %v598 = vmul.f32 %v577, %v485
        %v599 = vmul.f32 %v577, %v489
        %v600 = vmul.f32 %v577, %v493
        %v601 = vmul.f32 %v577, %v497
        %v602 = vmul.f32 %v577, %v501
        %627 = vrot.lane.b32.xlu0 %v579, 127
        %v628 = vpop.permute.xlu0 %627
        %629 = vrot.lane.b32.xlu0 %v580, 127
        %v630 = vpop.permute.xlu0 %629
        %631 = vrot.lane.b32.xlu0 %v581, 127
        %v632 = vpop.permute.xlu0 %631
        %633 = vrot.lane.b32.xlu0 %v582, 127
        %v634 = vpop.permute.xlu0 %633
        %635 = vrot.lane.b32.xlu0 %v583, 127
        %v636 = vpop.permute.xlu0 %635
        %637 = vrot.lane.b32.xlu0 %v584, 127
        %v638 = vpop.permute.xlu0 %637
        %639 = vrot.lane.b32.xlu0 %v585, 127
        %v640 = vpop.permute.xlu0 %639
        %641 = vrot.lane.b32.xlu0 %v586, 127
        %v642 = vpop.permute.xlu0 %641
        %643 = vrot.lane.b32.xlu0 %v587, 127
        %v644 = vpop.permute.xlu0 %643
        %645 = vrot.lane.b32.xlu0 %v588, 127
        %v646 = vpop.permute.xlu0 %645
        %647 = vrot.lane.b32.xlu0 %v589, 127
        %v648 = vpop.permute.xlu0 %647
        %649 = vrot.lane.b32.xlu0 %v590, 127
        %v650 = vpop.permute.xlu0 %649
        %651 = vrot.lane.b32.xlu0 %v591, 127
        %v652 = vpop.permute.xlu0 %651
        %653 = vrot.lane.b32.xlu0 %v592, 127
        %v654 = vpop.permute.xlu0 %653
        %655 = vrot.lane.b32.xlu0 %v593, 127
        %v656 = vpop.permute.xlu0 %655
        %657 = vrot.lane.b32.xlu0 %v594, 127
        %v658 = vpop.permute.xlu0 %657
        %659 = vrot.lane.b32.xlu0 %v595, 127
        %v660 = vpop.permute.xlu0 %659
        %661 = vrot.lane.b32.xlu0 %v596, 127
        %v662 = vpop.permute.xlu0 %661
        %663 = vrot.lane.b32.xlu0 %v597, 127
        %v664 = vpop.permute.xlu0 %663
        %665 = vrot.lane.b32.xlu0 %v598, 127
        %v666 = vpop.permute.xlu0 %665
        %667 = vrot.lane.b32.xlu0 %v599, 127
        %v668 = vpop.permute.xlu0 %667
        %669 = vrot.lane.b32.xlu0 %v600, 127
        %v670 = vpop.permute.xlu0 %669
        %671 = vrot.lane.b32.xlu0 %v601, 127
        %v672 = vpop.permute.xlu0 %671
        %673 = vrot.lane.b32.xlu0 %v602, 127
        %v674 = vpop.permute.xlu0 %673
        %vm675 = vcmask 1039360
        %v676 = vsel %vm675, %v628, %v630
        %v677 = vsel %vm675, %v630, %v632
        %v678 = vsel %vm675, %v632, %v634
        %v679 = vsel %vm675, %v634, %v636
        %v680 = vsel %vm675, %v636, %v638
        %v681 = vsel %vm675, %v640, %v642
        %v682 = vsel %vm675, %v642, %v644
        %v683 = vsel %vm675, %v644, %v646
        %v684 = vsel %vm675, %v646, %v648
        %v685 = vsel %vm675, %v648, %v650
        %v686 = vsel %vm675, %v652, %v654
        %v687 = vsel %vm675, %v654, %v656
        %v688 = vsel %vm675, %v656, %v658
        %v689 = vsel %vm675, %v658, %v660
        %v690 = vsel %vm675, %v660, %v662
        %v691 = vsel %vm675, %v664, %v666
        %v692 = vsel %vm675, %v666, %v668
        %v693 = vsel %vm675, %v668, %v670
        %v694 = vsel %vm675, %v670, %v672
        %v695 = vsel %vm675, %v672, %v674
        %v720 = vadd.f32 %v526, %v676
        %v721 = vadd.f32 %v527, %v677
        %v722 = vadd.f32 %v528, %v678
        %v723 = vadd.f32 %v529, %v679
        %v724 = vadd.f32 %v530, %v680
        %v725 = vadd.f32 %v531, %v638
        %v726 = vadd.f32 %v532, %v681
        %v727 = vadd.f32 %v533, %v682
        %v728 = vadd.f32 %v534, %v683
        %v729 = vadd.f32 %v535, %v684
        %v730 = vadd.f32 %v536, %v685
        %v731 = vadd.f32 %v537, %v650
        %v732 = vadd.f32 %v538, %v686
        %v733 = vadd.f32 %v539, %v687
        %v734 = vadd.f32 %v540, %v688
        %v735 = vadd.f32 %v541, %v689
        %v736 = vadd.f32 %v542, %v690
        %v737 = vadd.f32 %v543, %v662
        %v738 = vadd.f32 %v544, %v691
        %v739 = vadd.f32 %v545, %v692
        %v740 = vadd.f32 %v546, %v693
        %v741 = vadd.f32 %v547, %v694
        %v742 = vadd.f32 %v548, %v695
        %v743 = vadd.f32 %v549, %v674
        %s744 = scalar_lea.vmem %s1, 32
        %v745 = vld [vmem:[%s744] sm:$0xf]
        %v746 = vld [vmem:[%s744 + $0x4] sm:$0xf]
        %v747 = vld [vmem:[%s744 + $0x8] sm:$0xf]
        %v748 = vld [vmem:[%s744 + $0xc] sm:$0xf]
        %v749 = vunpack.c.l.bf16 %v745
        %v750 = vunpack.c.l.bf16 %v746
        %v751 = vunpack.c.l.bf16 %v747
        %v752 = vunpack.c.l.bf16 %v748
        %754 = vset.pattern.permute.xlu0 0
        %755 = vperm.xlu0 %754, %v749
        %v756 = vpop.permute.xlu0 %755
        %759 = vset.pattern.permute.xlu0 0
        %760 = vperm.xlu0 %759, %v750
        %v761 = vpop.permute.xlu0 %760
        %764 = vset.pattern.permute.xlu0 0
        %765 = vperm.xlu0 %764, %v751
        %v766 = vpop.permute.xlu0 %765
        %769 = vset.pattern.permute.xlu0 0
        %770 = vperm.xlu0 %769, %v752
        %v771 = vpop.permute.xlu0 %770
        %v773 = vmul.f32 %v756, %v481
        %v774 = vmul.f32 %v756, %v485
        %v775 = vmul.f32 %v756, %v489
        %v776 = vmul.f32 %v756, %v493
        %v777 = vmul.f32 %v756, %v497
        %v778 = vmul.f32 %v756, %v501
        %v779 = vmul.f32 %v761, %v481
        %v780 = vmul.f32 %v761, %v485
        %v781 = vmul.f32 %v761, %v489
        %v782 = vmul.f32 %v761, %v493
        %v783 = vmul.f32 %v761, %v497
        %v784 = vmul.f32 %v761, %v501
        %v785 = vmul.f32 %v766, %v481
        %v786 = vmul.f32 %v766, %v485
        %v787 = vmul.f32 %v766, %v489
        %v788 = vmul.f32 %v766, %v493
        %v789 = vmul.f32 %v766, %v497
        %v790 = vmul.f32 %v766, %v501
        %v791 = vmul.f32 %v771, %v481
        %v792 = vmul.f32 %v771, %v485
        %v793 = vmul.f32 %v771, %v489
        %v794 = vmul.f32 %v771, %v493
        %v795 = vmul.f32 %v771, %v497
        %v796 = vmul.f32 %v771, %v501
        %821 = vrot.lane.b32.xlu0 %v773, 126
        %v822 = vpop.permute.xlu0 %821
        %823 = vrot.lane.b32.xlu0 %v774, 126
        %v824 = vpop.permute.xlu0 %823
        %825 = vrot.lane.b32.xlu0 %v775, 126
        %v826 = vpop.permute.xlu0 %825
        %827 = vrot.lane.b32.xlu0 %v776, 126
        %v828 = vpop.permute.xlu0 %827
        %829 = vrot.lane.b32.xlu0 %v777, 126
        %v830 = vpop.permute.xlu0 %829
        %831 = vrot.lane.b32.xlu0 %v778, 126
        %v832 = vpop.permute.xlu0 %831
        %833 = vrot.lane.b32.xlu0 %v779, 126
        %v834 = vpop.permute.xlu0 %833
        %835 = vrot.lane.b32.xlu0 %v780, 126
        %v836 = vpop.permute.xlu0 %835
        %837 = vrot.lane.b32.xlu0 %v781, 126
        %v838 = vpop.permute.xlu0 %837
        %839 = vrot.lane.b32.xlu0 %v782, 126
        %v840 = vpop.permute.xlu0 %839
        %841 = vrot.lane.b32.xlu0 %v783, 126
        %v842 = vpop.permute.xlu0 %841
        %843 = vrot.lane.b32.xlu0 %v784, 126
        %v844 = vpop.permute.xlu0 %843
        %845 = vrot.lane.b32.xlu0 %v785, 126
        %v846 = vpop.permute.xlu0 %845
        %847 = vrot.lane.b32.xlu0 %v786, 126
        %v848 = vpop.permute.xlu0 %847
        %849 = vrot.lane.b32.xlu0 %v787, 126
        %v850 = vpop.permute.xlu0 %849
        %851 = vrot.lane.b32.xlu0 %v788, 126
        %v852 = vpop.permute.xlu0 %851
        %853 = vrot.lane.b32.xlu0 %v789, 126
        %v854 = vpop.permute.xlu0 %853
        %855 = vrot.lane.b32.xlu0 %v790, 126
        %v856 = vpop.permute.xlu0 %855
        %857 = vrot.lane.b32.xlu0 %v791, 126
        %v858 = vpop.permute.xlu0 %857
        %859 = vrot.lane.b32.xlu0 %v792, 126
        %v860 = vpop.permute.xlu0 %859
        %861 = vrot.lane.b32.xlu0 %v793, 126
        %v862 = vpop.permute.xlu0 %861
        %863 = vrot.lane.b32.xlu0 %v794, 126
        %v864 = vpop.permute.xlu0 %863
        %865 = vrot.lane.b32.xlu0 %v795, 126
        %v866 = vpop.permute.xlu0 %865
        %867 = vrot.lane.b32.xlu0 %v796, 126
        %v868 = vpop.permute.xlu0 %867
        %vm869 = vcmask 1031168
        %v870 = vsel %vm869, %v822, %v824
        %v871 = vsel %vm869, %v824, %v826
        %v872 = vsel %vm869, %v826, %v828
        %v873 = vsel %vm869, %v828, %v830
        %v874 = vsel %vm869, %v830, %v832
        %v875 = vsel %vm869, %v834, %v836
        %v876 = vsel %vm869, %v836, %v838
        %v877 = vsel %vm869, %v838, %v840
        %v878 = vsel %vm869, %v840, %v842
        %v879 = vsel %vm869, %v842, %v844
        %v880 = vsel %vm869, %v846, %v848
        %v881 = vsel %vm869, %v848, %v850
        %v882 = vsel %vm869, %v850, %v852
        %v883 = vsel %vm869, %v852, %v854
        %v884 = vsel %vm869, %v854, %v856
        %v885 = vsel %vm869, %v858, %v860
        %v886 = vsel %vm869, %v860, %v862
        %v887 = vsel %vm869, %v862, %v864
        %v888 = vsel %vm869, %v864, %v866
        %v889 = vsel %vm869, %v866, %v868
        %v914 = vadd.f32 %v720, %v870
        %v915 = vadd.f32 %v721, %v871
        %v916 = vadd.f32 %v722, %v872
        %v917 = vadd.f32 %v723, %v873
        %v918 = vadd.f32 %v724, %v874
        %v919 = vadd.f32 %v725, %v832
        %v920 = vadd.f32 %v726, %v875
        %v921 = vadd.f32 %v727, %v876
        %v922 = vadd.f32 %v728, %v877
        %v923 = vadd.f32 %v729, %v878
        %v924 = vadd.f32 %v730, %v879
        %v925 = vadd.f32 %v731, %v844
        %v926 = vadd.f32 %v732, %v880
        %v927 = vadd.f32 %v733, %v881
        %v928 = vadd.f32 %v734, %v882
        %v929 = vadd.f32 %v735, %v883
        %v930 = vadd.f32 %v736, %v884
        %v931 = vadd.f32 %v737, %v856
        %v932 = vadd.f32 %v738, %v885
        %v933 = vadd.f32 %v739, %v886
        %v934 = vadd.f32 %v740, %v887
        %v935 = vadd.f32 %v741, %v888
        %v936 = vadd.f32 %v742, %v889
        %v937 = vadd.f32 %v743, %v868
        %s938 = scalar_lea.vmem %s1, 48
        %v939 = vld [vmem:[%s938] sm:$0xf]
        %v940 = vld [vmem:[%s938 + $0x4] sm:$0xf]
        %v941 = vld [vmem:[%s938 + $0x8] sm:$0xf]
        %v942 = vld [vmem:[%s938 + $0xc] sm:$0xf]
        %v943 = vunpack.c.l.bf16 %v939
        %v944 = vunpack.c.l.bf16 %v940
        %v945 = vunpack.c.l.bf16 %v941
        %v946 = vunpack.c.l.bf16 %v942
        %948 = vset.pattern.permute.xlu0 0
        %949 = vperm.xlu0 %948, %v943
        %v950 = vpop.permute.xlu0 %949
        %953 = vset.pattern.permute.xlu0 0
        %954 = vperm.xlu0 %953, %v944
        %v955 = vpop.permute.xlu0 %954
        %958 = vset.pattern.permute.xlu0 0
        %959 = vperm.xlu0 %958, %v945
        %v960 = vpop.permute.xlu0 %959
        %963 = vset.pattern.permute.xlu0 0
        %964 = vperm.xlu0 %963, %v946
        %v965 = vpop.permute.xlu0 %964
        %v967 = vmul.f32 %v950, %v481
        %v968 = vmul.f32 %v950, %v485
        %v969 = vmul.f32 %v950, %v489
        %v970 = vmul.f32 %v950, %v493
        %v971 = vmul.f32 %v950, %v497
        %v972 = vmul.f32 %v950, %v501
        %v973 = vmul.f32 %v955, %v481
        %v974 = vmul.f32 %v955, %v485
        %v975 = vmul.f32 %v955, %v489
        %v976 = vmul.f32 %v955, %v493
        %v977 = vmul.f32 %v955, %v497
        %v978 = vmul.f32 %v955, %v501
        %v979 = vmul.f32 %v960, %v481
        %v980 = vmul.f32 %v960, %v485
        %v981 = vmul.f32 %v960, %v489
        %v982 = vmul.f32 %v960, %v493
        %v983 = vmul.f32 %v960, %v497
        %v984 = vmul.f32 %v960, %v501
        %v985 = vmul.f32 %v965, %v481
        %v986 = vmul.f32 %v965, %v485
        %v987 = vmul.f32 %v965, %v489
        %v988 = vmul.f32 %v965, %v493
        %v989 = vmul.f32 %v965, %v497
        %v990 = vmul.f32 %v965, %v501
        %1015 = vrot.lane.b32.xlu0 %v967, 100
        %v1016 = vpop.permute.xlu0 %1015
        %1017 = vrot.lane.b32.xlu0 %v968, 100
        %v1018 = vpop.permute.xlu0 %1017
        %1019 = vrot.lane.b32.xlu0 %v969, 100
        %v1020 = vpop.permute.xlu0 %1019
        %1021 = vrot.lane.b32.xlu0 %v970, 100
        %v1022 = vpop.permute.xlu0 %1021
        %1023 = vrot.lane.b32.xlu0 %v971, 100
        %v1024 = vpop.permute.xlu0 %1023
        %1025 = vrot.lane.b32.xlu0 %v972, 100
        %v1026 = vpop.permute.xlu0 %1025
        %1027 = vrot.lane.b32.xlu0 %v973, 100
        %v1028 = vpop.permute.xlu0 %1027
        %1029 = vrot.lane.b32.xlu0 %v974, 100
        %v1030 = vpop.permute.xlu0 %1029
        %1031 = vrot.lane.b32.xlu0 %v975, 100
        %v1032 = vpop.permute.xlu0 %1031
        %1033 = vrot.lane.b32.xlu0 %v976, 100
        %v1034 = vpop.permute.xlu0 %1033
        %1035 = vrot.lane.b32.xlu0 %v977, 100
        %v1036 = vpop.permute.xlu0 %1035
        %1037 = vrot.lane.b32.xlu0 %v978, 100
        %v1038 = vpop.permute.xlu0 %1037
        %1039 = vrot.lane.b32.xlu0 %v979, 100
        %v1040 = vpop.permute.xlu0 %1039
        %1041 = vrot.lane.b32.xlu0 %v980, 100
        %v1042 = vpop.permute.xlu0 %1041
        %1043 = vrot.lane.b32.xlu0 %v981, 100
        %v1044 = vpop.permute.xlu0 %1043
        %1045 = vrot.lane.b32.xlu0 %v982, 100
        %v1046 = vpop.permute.xlu0 %1045
        %1047 = vrot.lane.b32.xlu0 %v983, 100
        %v1048 = vpop.permute.xlu0 %1047
        %1049 = vrot.lane.b32.xlu0 %v984, 100
        %v1050 = vpop.permute.xlu0 %1049
        %1051 = vrot.lane.b32.xlu0 %v985, 100
        %v1052 = vpop.permute.xlu0 %1051
        %1053 = vrot.lane.b32.xlu0 %v986, 100
        %v1054 = vpop.permute.xlu0 %1053
        %1055 = vrot.lane.b32.xlu0 %v987, 100
        %v1056 = vpop.permute.xlu0 %1055
        %1057 = vrot.lane.b32.xlu0 %v988, 100
        %v1058 = vpop.permute.xlu0 %1057
        %1059 = vrot.lane.b32.xlu0 %v989, 100
        %v1060 = vpop.permute.xlu0 %1059
        %1061 = vrot.lane.b32.xlu0 %v990, 100
        %v1062 = vpop.permute.xlu0 %1061
        %vm1063 = vcmask 818176
        %v1064 = vsel %vm1063, %v1016, %v1018
        %v1065 = vsel %vm1063, %v1018, %v1020
        %v1066 = vsel %vm1063, %v1020, %v1022
        %v1067 = vsel %vm1063, %v1022, %v1024
        %v1068 = vsel %vm1063, %v1024, %v1026
        %v1069 = vsel %vm1063, %v1028, %v1030
        %v1070 = vsel %vm1063, %v1030, %v1032
        %v1071 = vsel %vm1063, %v1032, %v1034
        %v1072 = vsel %vm1063, %v1034, %v1036
        %v1073 = vsel %vm1063, %v1036, %v1038
        %v1074 = vsel %vm1063, %v1040, %v1042
        %v1075 = vsel %vm1063, %v1042, %v1044
        %v1076 = vsel %vm1063, %v1044, %v1046
        %v1077 = vsel %vm1063, %v1046, %v1048
        %v1078 = vsel %vm1063, %v1048, %v1050
        %v1079 = vsel %vm1063, %v1052, %v1054
        %v1080 = vsel %vm1063, %v1054, %v1056
        %v1081 = vsel %vm1063, %v1056, %v1058
        %v1082 = vsel %vm1063, %v1058, %v1060
        %v1083 = vsel %vm1063, %v1060, %v1062
        %v1108 = vadd.f32 %v914, %v1064
        %v1109 = vadd.f32 %v915, %v1065
        %v1110 = vadd.f32 %v916, %v1066
        %v1111 = vadd.f32 %v917, %v1067
        %v1112 = vadd.f32 %v918, %v1068
        %v1113 = vadd.f32 %v919, %v1026
        %v1114 = vadd.f32 %v920, %v1069
        %v1115 = vadd.f32 %v921, %v1070
        %v1116 = vadd.f32 %v922, %v1071
        %v1117 = vadd.f32 %v923, %v1072
        %v1118 = vadd.f32 %v924, %v1073
        %v1119 = vadd.f32 %v925, %v1038
        %v1120 = vadd.f32 %v926, %v1074
        %v1121 = vadd.f32 %v927, %v1075
        %v1122 = vadd.f32 %v928, %v1076
        %v1123 = vadd.f32 %v929, %v1077
        %v1124 = vadd.f32 %v930, %v1078
        %v1125 = vadd.f32 %v931, %v1050
        %v1126 = vadd.f32 %v932, %v1079
        %v1127 = vadd.f32 %v933, %v1080
        %v1128 = vadd.f32 %v934, %v1081
        %v1129 = vadd.f32 %v935, %v1082
        %v1130 = vadd.f32 %v936, %v1083
        %v1131 = vadd.f32 %v937, %v1062
        %s1132 = scalar_lea.vmem %s1, 64
        %v1133 = vld [vmem:[%s1132] sm:$0xf]
        %v1134 = vld [vmem:[%s1132 + $0x4] sm:$0xf]
        %v1135 = vld [vmem:[%s1132 + $0x8] sm:$0xf]
        %v1136 = vld [vmem:[%s1132 + $0xc] sm:$0xf]
        %v1137 = vunpack.c.l.bf16 %v1133
        %v1138 = vunpack.c.l.bf16 %v1134
        %v1139 = vunpack.c.l.bf16 %v1135
        %v1140 = vunpack.c.l.bf16 %v1136
        %1142 = vset.pattern.permute.xlu0 0
        %1143 = vperm.xlu0 %1142, %v1137
        %v1144 = vpop.permute.xlu0 %1143
        %1147 = vset.pattern.permute.xlu0 0
        %1148 = vperm.xlu0 %1147, %v1138
        %v1149 = vpop.permute.xlu0 %1148
        %1152 = vset.pattern.permute.xlu0 0
        %1153 = vperm.xlu0 %1152, %v1139
        %v1154 = vpop.permute.xlu0 %1153
        %1157 = vset.pattern.permute.xlu0 0
        %1158 = vperm.xlu0 %1157, %v1140
        %v1159 = vpop.permute.xlu0 %1158
        %v1161 = vmul.f32 %v1144, %v481
        %v1162 = vmul.f32 %v1144, %v485
        %v1163 = vmul.f32 %v1144, %v489
        %v1164 = vmul.f32 %v1144, %v493
        %v1165 = vmul.f32 %v1144, %v497
        %v1166 = vmul.f32 %v1144, %v501
        %v1167 = vmul.f32 %v1149, %v481
        %v1168 = vmul.f32 %v1149, %v485
        %v1169 = vmul.f32 %v1149, %v489
        %v1170 = vmul.f32 %v1149, %v493
        %v1171 = vmul.f32 %v1149, %v497
        %v1172 = vmul.f32 %v1149, %v501
        %v1173 = vmul.f32 %v1154, %v481
        %v1174 = vmul.f32 %v1154, %v485
        %v1175 = vmul.f32 %v1154, %v489
        %v1176 = vmul.f32 %v1154, %v493
        %v1177 = vmul.f32 %v1154, %v497
        %v1178 = vmul.f32 %v1154, %v501
        %v1179 = vmul.f32 %v1159, %v481
        %v1180 = vmul.f32 %v1159, %v485
        %v1181 = vmul.f32 %v1159, %v489
        %v1182 = vmul.f32 %v1159, %v493
        %v1183 = vmul.f32 %v1159, %v497
        %v1184 = vmul.f32 %v1159, %v501
        %1209 = vrot.lane.b32.xlu0 %v1161, 99
        %v1210 = vpop.permute.xlu0 %1209
        %1211 = vrot.lane.b32.xlu0 %v1162, 99
        %v1212 = vpop.permute.xlu0 %1211
        %1213 = vrot.lane.b32.xlu0 %v1163, 99
        %v1214 = vpop.permute.xlu0 %1213
        %1215 = vrot.lane.b32.xlu0 %v1164, 99
        %v1216 = vpop.permute.xlu0 %1215
        %1217 = vrot.lane.b32.xlu0 %v1165, 99
        %v1218 = vpop.permute.xlu0 %1217
        %1219 = vrot.lane.b32.xlu0 %v1166, 99
        %v1220 = vpop.permute.xlu0 %1219
        %1221 = vrot.lane.b32.xlu0 %v1167, 99
        %v1222 = vpop.permute.xlu0 %1221
        %1223 = vrot.lane.b32.xlu0 %v1168, 99
        %v1224 = vpop.permute.xlu0 %1223
        %1225 = vrot.lane.b32.xlu0 %v1169, 99
        %v1226 = vpop.permute.xlu0 %1225
        %1227 = vrot.lane.b32.xlu0 %v1170, 99
        %v1228 = vpop.permute.xlu0 %1227
        %1229 = vrot.lane.b32.xlu0 %v1171, 99
        %v1230 = vpop.permute.xlu0 %1229
        %1231 = vrot.lane.b32.xlu0 %v1172, 99
        %v1232 = vpop.permute.xlu0 %1231
        %1233 = vrot.lane.b32.xlu0 %v1173, 99
        %v1234 = vpop.permute.xlu0 %1233
        %1235 = vrot.lane.b32.xlu0 %v1174, 99
        %v1236 = vpop.permute.xlu0 %1235
        %1237 = vrot.lane.b32.xlu0 %v1175, 99
        %v1238 = vpop.permute.xlu0 %1237
        %1239 = vrot.lane.b32.xlu0 %v1176, 99
        %v1240 = vpop.permute.xlu0 %1239
        %1241 = vrot.lane.b32.xlu0 %v1177, 99
        %v1242 = vpop.permute.xlu0 %1241
        %1243 = vrot.lane.b32.xlu0 %v1178, 99
        %v1244 = vpop.permute.xlu0 %1243
        %1245 = vrot.lane.b32.xlu0 %v1179, 99
        %v1246 = vpop.permute.xlu0 %1245
        %1247 = vrot.lane.b32.xlu0 %v1180, 99
        %v1248 = vpop.permute.xlu0 %1247
        %1249 = vrot.lane.b32.xlu0 %v1181, 99
        %v1250 = vpop.permute.xlu0 %1249
        %1251 = vrot.lane.b32.xlu0 %v1182, 99
        %v1252 = vpop.permute.xlu0 %1251
        %1253 = vrot.lane.b32.xlu0 %v1183, 99
        %v1254 = vpop.permute.xlu0 %1253
        %1255 = vrot.lane.b32.xlu0 %v1184, 99
        %v1256 = vpop.permute.xlu0 %1255
        %vm1257 = vcmask 809984
        %v1258 = vsel %vm1257, %v1210, %v1212
        %v1259 = vsel %vm1257, %v1212, %v1214
        %v1260 = vsel %vm1257, %v1214, %v1216
        %v1261 = vsel %vm1257, %v1216, %v1218
        %v1262 = vsel %vm1257, %v1218, %v1220
        %v1263 = vsel %vm1257, %v1222, %v1224
        %v1264 = vsel %vm1257, %v1224, %v1226
        %v1265 = vsel %vm1257, %v1226, %v1228
        %v1266 = vsel %vm1257, %v1228, %v1230
        %v1267 = vsel %vm1257, %v1230, %v1232
        %v1268 = vsel %vm1257, %v1234, %v1236
        %v1269 = vsel %vm1257, %v1236, %v1238
        %v1270 = vsel %vm1257, %v1238, %v1240
        %v1271 = vsel %vm1257, %v1240, %v1242
        %v1272 = vsel %vm1257, %v1242, %v1244
        %v1273 = vsel %vm1257, %v1246, %v1248
        %v1274 = vsel %vm1257, %v1248, %v1250
        %v1275 = vsel %vm1257, %v1250, %v1252
        %v1276 = vsel %vm1257, %v1252, %v1254
        %v1277 = vsel %vm1257, %v1254, %v1256
        %v1302 = vadd.f32 %v1108, %v1258
        %v1303 = vadd.f32 %v1109, %v1259
        %v1304 = vadd.f32 %v1110, %v1260
        %v1305 = vadd.f32 %v1111, %v1261
        %v1306 = vadd.f32 %v1112, %v1262
        %v1307 = vadd.f32 %v1113, %v1220
        %v1308 = vadd.f32 %v1114, %v1263
        %v1309 = vadd.f32 %v1115, %v1264
        %v1310 = vadd.f32 %v1116, %v1265
        %v1311 = vadd.f32 %v1117, %v1266
        %v1312 = vadd.f32 %v1118, %v1267
        %v1313 = vadd.f32 %v1119, %v1232
        %v1314 = vadd.f32 %v1120, %v1268
        %v1315 = vadd.f32 %v1121, %v1269
        %v1316 = vadd.f32 %v1122, %v1270
        %v1317 = vadd.f32 %v1123, %v1271
        %v1318 = vadd.f32 %v1124, %v1272
        %v1319 = vadd.f32 %v1125, %v1244
        %v1320 = vadd.f32 %v1126, %v1273
        %v1321 = vadd.f32 %v1127, %v1274
        %v1322 = vadd.f32 %v1128, %v1275
        %v1323 = vadd.f32 %v1129, %v1276
        %v1324 = vadd.f32 %v1130, %v1277
        %v1325 = vadd.f32 %v1131, %v1256
        %s1326 = scalar_lea.vmem %s1, 80
        %v1327 = vld [vmem:[%s1326] sm:$0xf]
        %v1328 = vld [vmem:[%s1326 + $0x4] sm:$0xf]
        %v1329 = vld [vmem:[%s1326 + $0x8] sm:$0xf]
        %v1330 = vld [vmem:[%s1326 + $0xc] sm:$0xf]
        %v1331 = vunpack.c.l.bf16 %v1327
        %v1332 = vunpack.c.l.bf16 %v1328
        %v1333 = vunpack.c.l.bf16 %v1329
        %v1334 = vunpack.c.l.bf16 %v1330
        %1336 = vset.pattern.permute.xlu0 0
        %1337 = vperm.xlu0 %1336, %v1331
        %v1338 = vpop.permute.xlu0 %1337
        %1341 = vset.pattern.permute.xlu0 0
        %1342 = vperm.xlu0 %1341, %v1332
        %v1343 = vpop.permute.xlu0 %1342
        %1346 = vset.pattern.permute.xlu0 0
        %1347 = vperm.xlu0 %1346, %v1333
        %v1348 = vpop.permute.xlu0 %1347
        %1351 = vset.pattern.permute.xlu0 0
        %1352 = vperm.xlu0 %1351, %v1334
        %v1353 = vpop.permute.xlu0 %1352
        %v1355 = vmul.f32 %v1338, %v481
        %v1356 = vmul.f32 %v1338, %v485
        %v1357 = vmul.f32 %v1338, %v489
        %v1358 = vmul.f32 %v1338, %v493
        %v1359 = vmul.f32 %v1338, %v497
        %v1360 = vmul.f32 %v1338, %v501
        %v1361 = vmul.f32 %v1343, %v481
        %v1362 = vmul.f32 %v1343, %v485
        %v1363 = vmul.f32 %v1343, %v489
        %v1364 = vmul.f32 %v1343, %v493
        %v1365 = vmul.f32 %v1343, %v497
        %v1366 = vmul.f32 %v1343, %v501
        %v1367 = vmul.f32 %v1348, %v481
        %v1368 = vmul.f32 %v1348, %v485
        %v1369 = vmul.f32 %v1348, %v489
        %v1370 = vmul.f32 %v1348, %v493
        %v1371 = vmul.f32 %v1348, %v497
        %v1372 = vmul.f32 %v1348, %v501
        %v1373 = vmul.f32 %v1353, %v481
        %v1374 = vmul.f32 %v1353, %v485
        %v1375 = vmul.f32 %v1353, %v489
        %v1376 = vmul.f32 %v1353, %v493
        %v1377 = vmul.f32 %v1353, %v497
        %v1378 = vmul.f32 %v1353, %v501
        %1403 = vrot.lane.b32.xlu0 %v1355, 98
        %v1404 = vpop.permute.xlu0 %1403
        %1405 = vrot.lane.b32.xlu0 %v1356, 98
        %v1406 = vpop.permute.xlu0 %1405
        %1407 = vrot.lane.b32.xlu0 %v1357, 98
        %v1408 = vpop.permute.xlu0 %1407
        %1409 = vrot.lane.b32.xlu0 %v1358, 98
        %v1410 = vpop.permute.xlu0 %1409
        %1411 = vrot.lane.b32.xlu0 %v1359, 98
        %v1412 = vpop.permute.xlu0 %1411
        %1413 = vrot.lane.b32.xlu0 %v1360, 98
        %v1414 = vpop.permute.xlu0 %1413
        %1415 = vrot.lane.b32.xlu0 %v1361, 98
        %v1416 = vpop.permute.xlu0 %1415
        %1417 = vrot.lane.b32.xlu0 %v1362, 98
        %v1418 = vpop.permute.xlu0 %1417
        %1419 = vrot.lane.b32.xlu0 %v1363, 98
        %v1420 = vpop.permute.xlu0 %1419
        %1421 = vrot.lane.b32.xlu0 %v1364, 98
        %v1422 = vpop.permute.xlu0 %1421
        %1423 = vrot.lane.b32.xlu0 %v1365, 98
        %v1424 = vpop.permute.xlu0 %1423
        %1425 = vrot.lane.b32.xlu0 %v1366, 98
        %v1426 = vpop.permute.xlu0 %1425
        %1427 = vrot.lane.b32.xlu0 %v1367, 98
        %v1428 = vpop.permute.xlu0 %1427
        %1429 = vrot.lane.b32.xlu0 %v1368, 98
        %v1430 = vpop.permute.xlu0 %1429
        %1431 = vrot.lane.b32.xlu0 %v1369, 98
        %v1432 = vpop.permute.xlu0 %1431
        %1433 = vrot.lane.b32.xlu0 %v1370, 98
        %v1434 = vpop.permute.xlu0 %1433
        %1435 = vrot.lane.b32.xlu0 %v1371, 98
        %v1436 = vpop.permute.xlu0 %1435
        %1437 = vrot.lane.b32.xlu0 %v1372, 98
        %v1438 = vpop.permute.xlu0 %1437
        %1439 = vrot.lane.b32.xlu0 %v1373, 98
        %v1440 = vpop.permute.xlu0 %1439
        %1441 = vrot.lane.b32.xlu0 %v1374, 98
        %v1442 = vpop.permute.xlu0 %1441
        %1443 = vrot.lane.b32.xlu0 %v1375, 98
        %v1444 = vpop.permute.xlu0 %1443
        %1445 = vrot.lane.b32.xlu0 %v1376, 98
        %v1446 = vpop.permute.xlu0 %1445
        %1447 = vrot.lane.b32.xlu0 %v1377, 98
        %v1448 = vpop.permute.xlu0 %1447
        %1449 = vrot.lane.b32.xlu0 %v1378, 98
        %v1450 = vpop.permute.xlu0 %1449
        %vm1451 = vcmask 801792
        %v1452 = vsel %vm1451, %v1404, %v1406
        %v1453 = vsel %vm1451, %v1406, %v1408
        %v1454 = vsel %vm1451, %v1408, %v1410
        %v1455 = vsel %vm1451, %v1410, %v1412
        %v1456 = vsel %vm1451, %v1412, %v1414
        %v1457 = vsel %vm1451, %v1416, %v1418
        %v1458 = vsel %vm1451, %v1418, %v1420
        %v1459 = vsel %vm1451, %v1420, %v1422
        %v1460 = vsel %vm1451, %v1422, %v1424
        %v1461 = vsel %vm1451, %v1424, %v1426
        %v1462 = vsel %vm1451, %v1428, %v1430
        %v1463 = vsel %vm1451, %v1430, %v1432
        %v1464 = vsel %vm1451, %v1432, %v1434
        %v1465 = vsel %vm1451, %v1434, %v1436
        %v1466 = vsel %vm1451, %v1436, %v1438
        %v1467 = vsel %vm1451, %v1440, %v1442
        %v1468 = vsel %vm1451, %v1442, %v1444
        %v1469 = vsel %vm1451, %v1444, %v1446
        %v1470 = vsel %vm1451, %v1446, %v1448
        %v1471 = vsel %vm1451, %v1448, %v1450
        %v1496 = vadd.f32 %v1302, %v1452
        %v1497 = vadd.f32 %v1303, %v1453
        %v1498 = vadd.f32 %v1304, %v1454
        %v1499 = vadd.f32 %v1305, %v1455
        %v1500 = vadd.f32 %v1306, %v1456
        %v1501 = vadd.f32 %v1307, %v1414
        %v1502 = vadd.f32 %v1308, %v1457
        %v1503 = vadd.f32 %v1309, %v1458
        %v1504 = vadd.f32 %v1310, %v1459
        %v1505 = vadd.f32 %v1311, %v1460
        %v1506 = vadd.f32 %v1312, %v1461
        %v1507 = vadd.f32 %v1313, %v1426
        %v1508 = vadd.f32 %v1314, %v1462
        %v1509 = vadd.f32 %v1315, %v1463
        %v1510 = vadd.f32 %v1316, %v1464
        %v1511 = vadd.f32 %v1317, %v1465
        %v1512 = vadd.f32 %v1318, %v1466
        %v1513 = vadd.f32 %v1319, %v1438
        %v1514 = vadd.f32 %v1320, %v1467
        %v1515 = vadd.f32 %v1321, %v1468
        %v1516 = vadd.f32 %v1322, %v1469
        %v1517 = vadd.f32 %v1323, %v1470
        %v1518 = vadd.f32 %v1324, %v1471
        %v1519 = vadd.f32 %v1325, %v1450
        %s1520 = scalar_lea.vmem %s1, 96
        %v1521 = vld [vmem:[%s1520] sm:$0xf]
        %v1522 = vld [vmem:[%s1520 + $0x4] sm:$0xf]
        %v1523 = vld [vmem:[%s1520 + $0x8] sm:$0xf]
        %v1524 = vld [vmem:[%s1520 + $0xc] sm:$0xf]
        %v1525 = vunpack.c.l.bf16 %v1521
        %v1526 = vunpack.c.l.bf16 %v1522
        %v1527 = vunpack.c.l.bf16 %v1523
        %v1528 = vunpack.c.l.bf16 %v1524
        %v1529 = vld [vmem:[%s408] sm:$0x7f]
        %v1530 = vunpack.c.l.bf16 %v1529
        %v1531 = vunpack.c.h.bf16 %v1529
        %1533 = vset.pattern.permute.xlu0 0
        %1534 = vperm.xlu0 %1533, %v1525
        %v1535 = vpop.permute.xlu0 %1534
        %1538 = vset.pattern.permute.xlu0 0
        %1539 = vperm.xlu0 %1538, %v1526
        %v1540 = vpop.permute.xlu0 %1539
        %1543 = vset.pattern.permute.xlu0 0
        %1544 = vperm.xlu0 %1543, %v1527
        %v1545 = vpop.permute.xlu0 %1544
        %1548 = vset.pattern.permute.xlu0 0
        %1549 = vperm.xlu0 %1548, %v1528
        %v1550 = vpop.permute.xlu0 %1549
        %v1554 = vlaneseq
        %v1555 = vshrl.u32 %v1554, 7
        %v1556 = vsub.s32 0, %v1555
        %v1557 = vrot.slane %v1530, %v1556
        %v1558 = vlaneseq
        %v1559 = vshrl.u32 %v1558, 7
        %v1560 = vsub.s32 2, %v1559
        %v1561 = vrot.slane %v1530, %v1560
        %v1562 = vlaneseq
        %v1563 = vshrl.u32 %v1562, 7
        %v1564 = vsub.s32 4, %v1563
        %v1565 = vrot.slane %v1530, %v1564
        %v1566 = vlaneseq
        %v1567 = vshrl.u32 %v1566, 7
        %v1568 = vsub.s32 6, %v1567
        %v1569 = vrot.slane %v1530, %v1568
        %v1570 = vlaneseq
        %v1571 = vshrl.u32 %v1570, 7
        %v1572 = vsub.s32 0, %v1571
        %v1573 = vrot.slane %v1531, %v1572
        %v1574 = vlaneseq
        %v1575 = vshrl.u32 %v1574, 7
        %v1576 = vsub.s32 2, %v1575
        %v1577 = vrot.slane %v1531, %v1576
        %v1578 = vlaneseq
        %v1579 = vshrl.u32 %v1578, 7
        %v1580 = vsub.s32 4, %v1579
        %v1581 = vrot.slane %v1531, %v1580
        %v1589 = vlaneseq
        %v1590 = vshrl.u32 %v1589, 7
        %v1591 = vsub.s32 0, %v1590
        %v1592 = vrot.slane %v1557, %v1591
        %v1593 = vlaneseq
        %v1594 = vshrl.u32 %v1593, 7
        %v1595 = vsub.s32 0, %v1594
        %v1596 = vrot.slane %v1561, %v1595
        %v1597 = vlaneseq
        %v1598 = vshrl.u32 %v1597, 7
        %v1599 = vsub.s32 0, %v1598
        %v1600 = vrot.slane %v1565, %v1599
        %v1601 = vlaneseq
        %v1602 = vshrl.u32 %v1601, 7
        %v1603 = vsub.s32 0, %v1602
        %v1604 = vrot.slane %v1569, %v1603
        %v1605 = vlaneseq
        %v1606 = vshrl.u32 %v1605, 7
        %v1607 = vsub.s32 0, %v1606
        %v1608 = vrot.slane %v1573, %v1607
        %v1609 = vlaneseq
        %v1610 = vshrl.u32 %v1609, 7
        %v1611 = vsub.s32 0, %v1610
        %v1612 = vrot.slane %v1577, %v1611
        %v1613 = vlaneseq
        %v1614 = vshrl.u32 %v1613, 7
        %v1615 = vsub.s32 0, %v1614
        %v1616 = vrot.slane %v1581, %v1615
        %v1617 = vmul.f32 %v1535, %v1592
        %v1618 = vmul.f32 %v1535, %v1596
        %v1619 = vmul.f32 %v1535, %v1600
        %v1620 = vmul.f32 %v1535, %v1604
        %v1621 = vmul.f32 %v1535, %v1608
        %v1622 = vmul.f32 %v1535, %v1612
        %v1623 = vmul.f32 %v1535, %v1616
        %v1624 = vmul.f32 %v1540, %v1592
        %v1625 = vmul.f32 %v1540, %v1596
        %v1626 = vmul.f32 %v1540, %v1600
        %v1627 = vmul.f32 %v1540, %v1604
        %v1628 = vmul.f32 %v1540, %v1608
        %v1629 = vmul.f32 %v1540, %v1612
        %v1630 = vmul.f32 %v1540, %v1616
        %v1631 = vmul.f32 %v1545, %v1592
        %v1632 = vmul.f32 %v1545, %v1596
        %v1633 = vmul.f32 %v1545, %v1600
        %v1634 = vmul.f32 %v1545, %v1604
        %v1635 = vmul.f32 %v1545, %v1608
        %v1636 = vmul.f32 %v1545, %v1612
        %v1637 = vmul.f32 %v1545, %v1616
        %v1638 = vmul.f32 %v1550, %v1592
        %v1639 = vmul.f32 %v1550, %v1596
        %v1640 = vmul.f32 %v1550, %v1600
        %v1641 = vmul.f32 %v1550, %v1604
        %v1642 = vmul.f32 %v1550, %v1608
        %v1643 = vmul.f32 %v1550, %v1612
        %v1644 = vmul.f32 %v1550, %v1616
        %1673 = vrot.lane.b32.xlu0 %v1617, 72
        %v1674 = vpop.permute.xlu0 %1673
        %1675 = vrot.lane.b32.xlu0 %v1618, 72
        %v1676 = vpop.permute.xlu0 %1675
        %1677 = vrot.lane.b32.xlu0 %v1619, 72
        %v1678 = vpop.permute.xlu0 %1677
        %1679 = vrot.lane.b32.xlu0 %v1620, 72
        %v1680 = vpop.permute.xlu0 %1679
        %1681 = vrot.lane.b32.xlu0 %v1621, 72
        %v1682 = vpop.permute.xlu0 %1681
        %1683 = vrot.lane.b32.xlu0 %v1622, 72
        %v1684 = vpop.permute.xlu0 %1683
        %1685 = vrot.lane.b32.xlu0 %v1623, 72
        %v1686 = vpop.permute.xlu0 %1685
        %1687 = vrot.lane.b32.xlu0 %v1624, 72
        %v1688 = vpop.permute.xlu0 %1687
        %1689 = vrot.lane.b32.xlu0 %v1625, 72
        %v1690 = vpop.permute.xlu0 %1689
        %1691 = vrot.lane.b32.xlu0 %v1626, 72
        %v1692 = vpop.permute.xlu0 %1691
        %1693 = vrot.lane.b32.xlu0 %v1627, 72
        %v1694 = vpop.permute.xlu0 %1693
        %1695 = vrot.lane.b32.xlu0 %v1628, 72
        %v1696 = vpop.permute.xlu0 %1695
        %1697 = vrot.lane.b32.xlu0 %v1629, 72
        %v1698 = vpop.permute.xlu0 %1697
        %1699 = vrot.lane.b32.xlu0 %v1630, 72
        %v1700 = vpop.permute.xlu0 %1699
        %1701 = vrot.lane.b32.xlu0 %v1631, 72
        %v1702 = vpop.permute.xlu0 %1701
        %1703 = vrot.lane.b32.xlu0 %v1632, 72
        %v1704 = vpop.permute.xlu0 %1703
        %1705 = vrot.lane.b32.xlu0 %v1633, 72
        %v1706 = vpop.permute.xlu0 %1705
        %1707 = vrot.lane.b32.xlu0 %v1634, 72
        %v1708 = vpop.permute.xlu0 %1707
        %1709 = vrot.lane.b32.xlu0 %v1635, 72
        %v1710 = vpop.permute.xlu0 %1709
        %1711 = vrot.lane.b32.xlu0 %v1636, 72
        %v1712 = vpop.permute.xlu0 %1711
        %1713 = vrot.lane.b32.xlu0 %v1637, 72
        %v1714 = vpop.permute.xlu0 %1713
        %1715 = vrot.lane.b32.xlu0 %v1638, 72
        %v1716 = vpop.permute.xlu0 %1715
        %1717 = vrot.lane.b32.xlu0 %v1639, 72
        %v1718 = vpop.permute.xlu0 %1717
        %1719 = vrot.lane.b32.xlu0 %v1640, 72
        %v1720 = vpop.permute.xlu0 %1719
        %1721 = vrot.lane.b32.xlu0 %v1641, 72
        %v1722 = vpop.permute.xlu0 %1721
        %1723 = vrot.lane.b32.xlu0 %v1642, 72
        %v1724 = vpop.permute.xlu0 %1723
        %1725 = vrot.lane.b32.xlu0 %v1643, 72
        %v1726 = vpop.permute.xlu0 %1725
        %1727 = vrot.lane.b32.xlu0 %v1644, 72
        %v1728 = vpop.permute.xlu0 %1727
        %vm1729 = vcmask 588800
        %v1730 = vsel %vm1729, %v1674, %v1676
        %v1731 = vsel %vm1729, %v1676, %v1678
        %v1732 = vsel %vm1729, %v1678, %v1680
        %v1733 = vsel %vm1729, %v1680, %v1682
        %v1734 = vsel %vm1729, %v1682, %v1684
        %v1735 = vsel %vm1729, %v1684, %v1686
        %v1736 = vsel %vm1729, %v1688, %v1690
        %v1737 = vsel %vm1729, %v1690, %v1692
        %v1738 = vsel %vm1729, %v1692, %v1694
        %v1739 = vsel %vm1729, %v1694, %v1696
        %v1740 = vsel %vm1729, %v1696, %v1698
        %v1741 = vsel %vm1729, %v1698, %v1700
        %v1742 = vsel %vm1729, %v1702, %v1704
        %v1743 = vsel %vm1729, %v1704, %v1706
        %v1744 = vsel %vm1729, %v1706, %v1708
        %v1745 = vsel %vm1729, %v1708, %v1710
        %v1746 = vsel %vm1729, %v1710, %v1712
        %v1747 = vsel %vm1729, %v1712, %v1714
        %v1748 = vsel %vm1729, %v1716, %v1718
        %v1749 = vsel %vm1729, %v1718, %v1720
        %v1750 = vsel %vm1729, %v1720, %v1722
        %v1751 = vsel %vm1729, %v1722, %v1724
        %v1752 = vsel %vm1729, %v1724, %v1726
        %v1753 = vsel %vm1729, %v1726, %v1728
        %v1778 = vadd.f32 %v1496, %v1730
        %v1779 = vadd.f32 %v1497, %v1731
        %v1780 = vadd.f32 %v1498, %v1732
        %v1781 = vadd.f32 %v1499, %v1733
        %v1782 = vadd.f32 %v1500, %v1734
        %v1783 = vadd.f32 %v1501, %v1735
        %v1784 = vadd.f32 %v1502, %v1736
        %v1785 = vadd.f32 %v1503, %v1737
        %v1786 = vadd.f32 %v1504, %v1738
        %v1787 = vadd.f32 %v1505, %v1739
        %v1788 = vadd.f32 %v1506, %v1740
        %v1789 = vadd.f32 %v1507, %v1741
        %v1790 = vadd.f32 %v1508, %v1742
        %v1791 = vadd.f32 %v1509, %v1743
        %v1792 = vadd.f32 %v1510, %v1744
        %v1793 = vadd.f32 %v1511, %v1745
        %v1794 = vadd.f32 %v1512, %v1746
        %v1795 = vadd.f32 %v1513, %v1747
        %v1796 = vadd.f32 %v1514, %v1748
        %v1797 = vadd.f32 %v1515, %v1749
        %v1798 = vadd.f32 %v1516, %v1750
        %v1799 = vadd.f32 %v1517, %v1751
        %v1800 = vadd.f32 %v1518, %v1752
        %v1801 = vadd.f32 %v1519, %v1753
        %s1802 = scalar_lea.vmem %s1, 112
        %v1803 = vld [vmem:[%s1802] sm:$0xf]
        %v1804 = vld [vmem:[%s1802 + $0x4] sm:$0xf]
        %v1805 = vld [vmem:[%s1802 + $0x8] sm:$0xf]
        %v1806 = vld [vmem:[%s1802 + $0xc] sm:$0xf]
        %v1807 = vunpack.c.l.bf16 %v1803
        %v1808 = vunpack.c.l.bf16 %v1804
        %v1809 = vunpack.c.l.bf16 %v1805
        %v1810 = vunpack.c.l.bf16 %v1806
        %1812 = vset.pattern.permute.xlu0 0
        %1813 = vperm.xlu0 %1812, %v1807
        %v1814 = vpop.permute.xlu0 %1813
        %1817 = vset.pattern.permute.xlu0 0
        %1818 = vperm.xlu0 %1817, %v1808
        %v1819 = vpop.permute.xlu0 %1818
        %1822 = vset.pattern.permute.xlu0 0
        %1823 = vperm.xlu0 %1822, %v1809
        %v1824 = vpop.permute.xlu0 %1823
        %1827 = vset.pattern.permute.xlu0 0
        %1828 = vperm.xlu0 %1827, %v1810
        %v1829 = vpop.permute.xlu0 %1828
        %v1831 = vmul.f32 %v1814, %v1592
        %v1832 = vmul.f32 %v1814, %v1596
        %v1833 = vmul.f32 %v1814, %v1600
        %v1834 = vmul.f32 %v1814, %v1604
        %v1835 = vmul.f32 %v1814, %v1608
        %v1836 = vmul.f32 %v1814, %v1612
        %v1837 = vmul.f32 %v1814, %v1616
        %v1838 = vmul.f32 %v1819, %v1592
        %v1839 = vmul.f32 %v1819, %v1596
        %v1840 = vmul.f32 %v1819, %v1600
        %v1841 = vmul.f32 %v1819, %v1604
        %v1842 = vmul.f32 %v1819, %v1608
        %v1843 = vmul.f32 %v1819, %v1612
        %v1844 = vmul.f32 %v1819, %v1616
        %v1845 = vmul.f32 %v1824, %v1592
        %v1846 = vmul.f32 %v1824, %v1596
        %v1847 = vmul.f32 %v1824, %v1600
        %v1848 = vmul.f32 %v1824, %v1604
        %v1849 = vmul.f32 %v1824, %v1608
        %v1850 = vmul.f32 %v1824, %v1612
        %v1851 = vmul.f32 %v1824, %v1616
        %v1852 = vmul.f32 %v1829, %v1592
        %v1853 = vmul.f32 %v1829, %v1596
        %v1854 = vmul.f32 %v1829, %v1600
        %v1855 = vmul.f32 %v1829, %v1604
        %v1856 = vmul.f32 %v1829, %v1608
        %v1857 = vmul.f32 %v1829, %v1612
        %v1858 = vmul.f32 %v1829, %v1616
        %1887 = vrot.lane.b32.xlu0 %v1831, 71
        %v1888 = vpop.permute.xlu0 %1887
        %1889 = vrot.lane.b32.xlu0 %v1832, 71
        %v1890 = vpop.permute.xlu0 %1889
        %1891 = vrot.lane.b32.xlu0 %v1833, 71
        %v1892 = vpop.permute.xlu0 %1891
        %1893 = vrot.lane.b32.xlu0 %v1834, 71
        %v1894 = vpop.permute.xlu0 %1893
        %1895 = vrot.lane.b32.xlu0 %v1835, 71
        %v1896 = vpop.permute.xlu0 %1895
        %1897 = vrot.lane.b32.xlu0 %v1836, 71
        %v1898 = vpop.permute.xlu0 %1897
        %1899 = vrot.lane.b32.xlu0 %v1837, 71
        %v1900 = vpop.permute.xlu0 %1899
        %1901 = vrot.lane.b32.xlu0 %v1838, 71
        %v1902 = vpop.permute.xlu0 %1901
        %1903 = vrot.lane.b32.xlu0 %v1839, 71
        %v1904 = vpop.permute.xlu0 %1903
        %1905 = vrot.lane.b32.xlu0 %v1840, 71
        %v1906 = vpop.permute.xlu0 %1905
        %1907 = vrot.lane.b32.xlu0 %v1841, 71
        %v1908 = vpop.permute.xlu0 %1907
        %1909 = vrot.lane.b32.xlu0 %v1842, 71
        %v1910 = vpop.permute.xlu0 %1909
        %1911 = vrot.lane.b32.xlu0 %v1843, 71
        %v1912 = vpop.permute.xlu0 %1911
        %1913 = vrot.lane.b32.xlu0 %v1844, 71
        %v1914 = vpop.permute.xlu0 %1913
        %1915 = vrot.lane.b32.xlu0 %v1845, 71
        %v1916 = vpop.permute.xlu0 %1915
        %1917 = vrot.lane.b32.xlu0 %v1846, 71
        %v1918 = vpop.permute.xlu0 %1917
        %1919 = vrot.lane.b32.xlu0 %v1847, 71
        %v1920 = vpop.permute.xlu0 %1919
        %1921 = vrot.lane.b32.xlu0 %v1848, 71
        %v1922 = vpop.permute.xlu0 %1921
        %1923 = vrot.lane.b32.xlu0 %v1849, 71
        %v1924 = vpop.permute.xlu0 %1923
        %1925 = vrot.lane.b32.xlu0 %v1850, 71
        %v1926 = vpop.permute.xlu0 %1925
        %1927 = vrot.lane.b32.xlu0 %v1851, 71
        %v1928 = vpop.permute.xlu0 %1927
        %1929 = vrot.lane.b32.xlu0 %v1852, 71
        %v1930 = vpop.permute.xlu0 %1929
        %1931 = vrot.lane.b32.xlu0 %v1853, 71
        %v1932 = vpop.permute.xlu0 %1931
        %1933 = vrot.lane.b32.xlu0 %v1854, 71
        %v1934 = vpop.permute.xlu0 %1933
        %1935 = vrot.lane.b32.xlu0 %v1855, 71
        %v1936 = vpop.permute.xlu0 %1935
        %1937 = vrot.lane.b32.xlu0 %v1856, 71
        %v1938 = vpop.permute.xlu0 %1937
        %1939 = vrot.lane.b32.xlu0 %v1857, 71
        %v1940 = vpop.permute.xlu0 %1939
        %1941 = vrot.lane.b32.xlu0 %v1858, 71
        %v1942 = vpop.permute.xlu0 %1941
        %vm1943 = vcmask 580608
        %v1944 = vsel %vm1943, %v1888, %v1890
        %v1945 = vsel %vm1943, %v1890, %v1892
        %v1946 = vsel %vm1943, %v1892, %v1894
        %v1947 = vsel %vm1943, %v1894, %v1896
        %v1948 = vsel %vm1943, %v1896, %v1898
        %v1949 = vsel %vm1943, %v1898, %v1900
        %v1950 = vsel %vm1943, %v1902, %v1904
        %v1951 = vsel %vm1943, %v1904, %v1906
        %v1952 = vsel %vm1943, %v1906, %v1908
        %v1953 = vsel %vm1943, %v1908, %v1910
        %v1954 = vsel %vm1943, %v1910, %v1912
        %v1955 = vsel %vm1943, %v1912, %v1914
        %v1956 = vsel %vm1943, %v1916, %v1918
        %v1957 = vsel %vm1943, %v1918, %v1920
        %v1958 = vsel %vm1943, %v1920, %v1922
        %v1959 = vsel %vm1943, %v1922, %v1924
        %v1960 = vsel %vm1943, %v1924, %v1926
        %v1961 = vsel %vm1943, %v1926, %v1928
        %v1962 = vsel %vm1943, %v1930, %v1932
        %v1963 = vsel %vm1943, %v1932, %v1934
        %v1964 = vsel %vm1943, %v1934, %v1936
        %v1965 = vsel %vm1943, %v1936, %v1938
        %v1966 = vsel %vm1943, %v1938, %v1940
        %v1967 = vsel %vm1943, %v1940, %v1942
        %v1992 = vadd.f32 %v1778, %v1944
        %v1993 = vadd.f32 %v1779, %v1945
        %v1994 = vadd.f32 %v1780, %v1946
        %v1995 = vadd.f32 %v1781, %v1947
        %v1996 = vadd.f32 %v1782, %v1948
        %v1997 = vadd.f32 %v1783, %v1949
        %v1998 = vadd.f32 %v1784, %v1950
        %v1999 = vadd.f32 %v1785, %v1951
        %v2000 = vadd.f32 %v1786, %v1952
        %v2001 = vadd.f32 %v1787, %v1953
        %v2002 = vadd.f32 %v1788, %v1954
        %v2003 = vadd.f32 %v1789, %v1955
        %v2004 = vadd.f32 %v1790, %v1956
        %v2005 = vadd.f32 %v1791, %v1957
        %v2006 = vadd.f32 %v1792, %v1958
        %v2007 = vadd.f32 %v1793, %v1959
        %v2008 = vadd.f32 %v1794, %v1960
        %v2009 = vadd.f32 %v1795, %v1961
        %v2010 = vadd.f32 %v1796, %v1962
        %v2011 = vadd.f32 %v1797, %v1963
        %v2012 = vadd.f32 %v1798, %v1964
        %v2013 = vadd.f32 %v1799, %v1965
        %v2014 = vadd.f32 %v1800, %v1966
        %v2015 = vadd.f32 %v1801, %v1967
        %s2016 = scalar_lea.vmem %s1, 128
        %v2017 = vld [vmem:[%s2016] sm:$0xf]
        %v2018 = vld [vmem:[%s2016 + $0x4] sm:$0xf]
        %v2019 = vld [vmem:[%s2016 + $0x8] sm:$0xf]
        %v2020 = vld [vmem:[%s2016 + $0xc] sm:$0xf]
        %v2021 = vunpack.c.l.bf16 %v2017
        %v2022 = vunpack.c.l.bf16 %v2018
        %v2023 = vunpack.c.l.bf16 %v2019
        %v2024 = vunpack.c.l.bf16 %v2020
        %2026 = vset.pattern.permute.xlu0 0
        %2027 = vperm.xlu0 %2026, %v2021
        %v2028 = vpop.permute.xlu0 %2027
        %2031 = vset.pattern.permute.xlu0 0
        %2032 = vperm.xlu0 %2031, %v2022
        %v2033 = vpop.permute.xlu0 %2032
        %2036 = vset.pattern.permute.xlu0 0
        %2037 = vperm.xlu0 %2036, %v2023
        %v2038 = vpop.permute.xlu0 %2037
        %2041 = vset.pattern.permute.xlu0 0
        %2042 = vperm.xlu0 %2041, %v2024
        %v2043 = vpop.permute.xlu0 %2042
        %v2045 = vmul.f32 %v2028, %v1592
        %v2046 = vmul.f32 %v2028, %v1596
        %v2047 = vmul.f32 %v2028, %v1600
        %v2048 = vmul.f32 %v2028, %v1604
        %v2049 = vmul.f32 %v2028, %v1608
        %v2050 = vmul.f32 %v2028, %v1612
        %v2051 = vmul.f32 %v2028, %v1616
        %v2052 = vmul.f32 %v2033, %v1592
        %v2053 = vmul.f32 %v2033, %v1596
        %v2054 = vmul.f32 %v2033, %v1600
        %v2055 = vmul.f32 %v2033, %v1604
        %v2056 = vmul.f32 %v2033, %v1608
        %v2057 = vmul.f32 %v2033, %v1612
        %v2058 = vmul.f32 %v2033, %v1616
        %v2059 = vmul.f32 %v2038, %v1592
        %v2060 = vmul.f32 %v2038, %v1596
        %v2061 = vmul.f32 %v2038, %v1600
        %v2062 = vmul.f32 %v2038, %v1604
        %v2063 = vmul.f32 %v2038, %v1608
        %v2064 = vmul.f32 %v2038, %v1612
        %v2065 = vmul.f32 %v2038, %v1616
        %v2066 = vmul.f32 %v2043, %v1592
        %v2067 = vmul.f32 %v2043, %v1596
        %v2068 = vmul.f32 %v2043, %v1600
        %v2069 = vmul.f32 %v2043, %v1604
        %v2070 = vmul.f32 %v2043, %v1608
        %v2071 = vmul.f32 %v2043, %v1612
        %v2072 = vmul.f32 %v2043, %v1616
        %2101 = vrot.lane.b32.xlu0 %v2045, 70
        %v2102 = vpop.permute.xlu0 %2101
        %2103 = vrot.lane.b32.xlu0 %v2046, 70
        %v2104 = vpop.permute.xlu0 %2103
        %2105 = vrot.lane.b32.xlu0 %v2047, 70
        %v2106 = vpop.permute.xlu0 %2105
        %2107 = vrot.lane.b32.xlu0 %v2048, 70
        %v2108 = vpop.permute.xlu0 %2107
        %2109 = vrot.lane.b32.xlu0 %v2049, 70
        %v2110 = vpop.permute.xlu0 %2109
        %2111 = vrot.lane.b32.xlu0 %v2050, 70
        %v2112 = vpop.permute.xlu0 %2111
        %2113 = vrot.lane.b32.xlu0 %v2051, 70
        %v2114 = vpop.permute.xlu0 %2113
        %2115 = vrot.lane.b32.xlu0 %v2052, 70
        %v2116 = vpop.permute.xlu0 %2115
        %2117 = vrot.lane.b32.xlu0 %v2053, 70
        %v2118 = vpop.permute.xlu0 %2117
        %2119 = vrot.lane.b32.xlu0 %v2054, 70
        %v2120 = vpop.permute.xlu0 %2119
        %2121 = vrot.lane.b32.xlu0 %v2055, 70
        %v2122 = vpop.permute.xlu0 %2121
        %2123 = vrot.lane.b32.xlu0 %v2056, 70
        %v2124 = vpop.permute.xlu0 %2123
        %2125 = vrot.lane.b32.xlu0 %v2057, 70
        %v2126 = vpop.permute.xlu0 %2125
        %2127 = vrot.lane.b32.xlu0 %v2058, 70
        %v2128 = vpop.permute.xlu0 %2127
        %2129 = vrot.lane.b32.xlu0 %v2059, 70
        %v2130 = vpop.permute.xlu0 %2129
        %2131 = vrot.lane.b32.xlu0 %v2060, 70
        %v2132 = vpop.permute.xlu0 %2131
        %2133 = vrot.lane.b32.xlu0 %v2061, 70
        %v2134 = vpop.permute.xlu0 %2133
        %2135 = vrot.lane.b32.xlu0 %v2062, 70
        %v2136 = vpop.permute.xlu0 %2135
        %2137 = vrot.lane.b32.xlu0 %v2063, 70
        %v2138 = vpop.permute.xlu0 %2137
        %2139 = vrot.lane.b32.xlu0 %v2064, 70
        %v2140 = vpop.permute.xlu0 %2139
        %2141 = vrot.lane.b32.xlu0 %v2065, 70
        %v2142 = vpop.permute.xlu0 %2141
        %2143 = vrot.lane.b32.xlu0 %v2066, 70
        %v2144 = vpop.permute.xlu0 %2143
        %2145 = vrot.lane.b32.xlu0 %v2067, 70
        %v2146 = vpop.permute.xlu0 %2145
        %2147 = vrot.lane.b32.xlu0 %v2068, 70
        %v2148 = vpop.permute.xlu0 %2147
        %2149 = vrot.lane.b32.xlu0 %v2069, 70
        %v2150 = vpop.permute.xlu0 %2149
        %2151 = vrot.lane.b32.xlu0 %v2070, 70
        %v2152 = vpop.permute.xlu0 %2151
        %2153 = vrot.lane.b32.xlu0 %v2071, 70
        %v2154 = vpop.permute.xlu0 %2153
        %2155 = vrot.lane.b32.xlu0 %v2072, 70
        %v2156 = vpop.permute.xlu0 %2155
        %vm2157 = vcmask 572416
        %v2158 = vsel %vm2157, %v2102, %v2104
        %v2159 = vsel %vm2157, %v2104, %v2106
        %v2160 = vsel %vm2157, %v2106, %v2108
        %v2161 = vsel %vm2157, %v2108, %v2110
        %v2162 = vsel %vm2157, %v2110, %v2112
        %v2163 = vsel %vm2157, %v2112, %v2114
        %v2164 = vsel %vm2157, %v2116, %v2118
        %v2165 = vsel %vm2157, %v2118, %v2120
        %v2166 = vsel %vm2157, %v2120, %v2122
        %v2167 = vsel %vm2157, %v2122, %v2124
        %v2168 = vsel %vm2157, %v2124, %v2126
        %v2169 = vsel %vm2157, %v2126, %v2128
        %v2170 = vsel %vm2157, %v2130, %v2132
        %v2171 = vsel %vm2157, %v2132, %v2134
        %v2172 = vsel %vm2157, %v2134, %v2136
        %v2173 = vsel %vm2157, %v2136, %v2138
        %v2174 = vsel %vm2157, %v2138, %v2140
        %v2175 = vsel %vm2157, %v2140, %v2142
        %v2176 = vsel %vm2157, %v2144, %v2146
        %v2177 = vsel %vm2157, %v2146, %v2148
        %v2178 = vsel %vm2157, %v2148, %v2150
        %v2179 = vsel %vm2157, %v2150, %v2152
        %v2180 = vsel %vm2157, %v2152, %v2154
        %v2181 = vsel %vm2157, %v2154, %v2156
        %v2206 = vadd.f32 %v1992, %v2158
        %v2207 = vadd.f32 %v1993, %v2159
        %v2208 = vadd.f32 %v1994, %v2160
        %v2209 = vadd.f32 %v1995, %v2161
        %v2210 = vadd.f32 %v1996, %v2162
        %v2211 = vadd.f32 %v1997, %v2163
        %v2212 = vadd.f32 %v1998, %v2164
        %v2213 = vadd.f32 %v1999, %v2165
        %v2214 = vadd.f32 %v2000, %v2166
        %v2215 = vadd.f32 %v2001, %v2167
        %v2216 = vadd.f32 %v2002, %v2168
        %v2217 = vadd.f32 %v2003, %v2169
        %v2218 = vadd.f32 %v2004, %v2170
        %v2219 = vadd.f32 %v2005, %v2171
        %v2220 = vadd.f32 %v2006, %v2172
        %v2221 = vadd.f32 %v2007, %v2173
        %v2222 = vadd.f32 %v2008, %v2174
        %v2223 = vadd.f32 %v2009, %v2175
        %v2224 = vadd.f32 %v2010, %v2176
        %v2225 = vadd.f32 %v2011, %v2177
        %v2226 = vadd.f32 %v2012, %v2178
        %v2227 = vadd.f32 %v2013, %v2179
        %v2228 = vadd.f32 %v2014, %v2180
        %v2229 = vadd.f32 %v2015, %v2181
        %v2230 = vld [vmem:[%s2] sm:$0xff]
        %v2231 = vld [vmem:[%s2 + $0x8] sm:$0xff]
        %v2232 = vld [vmem:[%s2 + $0x10] sm:$0xff]
        %v2233 = vld [vmem:[%s2 + $0x18] sm:$0xff]
        %2235 = vset.pattern.permute.xlu0 0
        %2236 = vperm.xlu0 %2235, %v2230
        %v2237 = vpop.permute.xlu0 %2236
        %2240 = vset.pattern.permute.xlu0 0
        %2241 = vperm.xlu0 %2240, %v2231
        %v2242 = vpop.permute.xlu0 %2241
        %2245 = vset.pattern.permute.xlu0 0
        %2246 = vperm.xlu0 %2245, %v2232
        %v2247 = vpop.permute.xlu0 %2246
        %2250 = vset.pattern.permute.xlu0 0
        %2251 = vperm.xlu0 %2250, %v2233
        %v2252 = vpop.permute.xlu0 %2251
        %v2254 = vadd.f32 %v2206, %v2237
        %v2255 = vadd.f32 %v2207, %v2237
        %v2256 = vadd.f32 %v2208, %v2237
        %v2257 = vadd.f32 %v2209, %v2237
        %v2258 = vadd.f32 %v2210, %v2237
        %v2259 = vadd.f32 %v2211, %v2237
        %v2260 = vadd.f32 %v2212, %v2242
        %v2261 = vadd.f32 %v2213, %v2242
        %v2262 = vadd.f32 %v2214, %v2242
        %v2263 = vadd.f32 %v2215, %v2242
        %v2264 = vadd.f32 %v2216, %v2242
        %v2265 = vadd.f32 %v2217, %v2242
        %v2266 = vadd.f32 %v2218, %v2247
        %v2267 = vadd.f32 %v2219, %v2247
        %v2268 = vadd.f32 %v2220, %v2247
        %v2269 = vadd.f32 %v2221, %v2247
        %v2270 = vadd.f32 %v2222, %v2247
        %v2271 = vadd.f32 %v2223, %v2247
        %v2272 = vadd.f32 %v2224, %v2252
        %v2273 = vadd.f32 %v2225, %v2252
        %v2274 = vadd.f32 %v2226, %v2252
        %v2275 = vadd.f32 %v2227, %v2252
        %v2276 = vadd.f32 %v2228, %v2252
        %v2277 = vadd.f32 %v2229, %v2252
        %v2278 = vmax.f32 %v2254, 0.0
        %v2279 = vmax.f32 %v2255, 0.0
        %v2280 = vmax.f32 %v2256, 0.0
        %v2281 = vmax.f32 %v2257, 0.0
        %v2282 = vmax.f32 %v2258, 0.0
        %v2283 = vmax.f32 %v2259, 0.0
        %v2284 = vmax.f32 %v2260, 0.0
        %v2285 = vmax.f32 %v2261, 0.0
        %v2286 = vmax.f32 %v2262, 0.0
        %v2287 = vmax.f32 %v2263, 0.0
        %v2288 = vmax.f32 %v2264, 0.0
        %v2289 = vmax.f32 %v2265, 0.0
        %v2290 = vmax.f32 %v2266, 0.0
        %v2291 = vmax.f32 %v2267, 0.0
        %v2292 = vmax.f32 %v2268, 0.0
        %v2293 = vmax.f32 %v2269, 0.0
        %v2294 = vmax.f32 %v2270, 0.0
        %v2295 = vmax.f32 %v2271, 0.0
        %v2296 = vmax.f32 %v2272, 0.0
        %v2297 = vmax.f32 %v2273, 0.0
        %v2298 = vmax.f32 %v2274, 0.0
        %v2299 = vmax.f32 %v2275, 0.0
        %v2300 = vmax.f32 %v2276, 0.0
        %v2301 = vmax.f32 %v2277, 0.0
        %v2302 = vpack.c.bf16 %v2284, %v2278
        %v2303 = vpack.c.bf16 %v2285, %v2279
        %v2304 = vpack.c.bf16 %v2286, %v2280
        %v2305 = vpack.c.bf16 %v2287, %v2281
        %v2306 = vpack.c.bf16 %v2288, %v2282
        %v2307 = vpack.c.bf16 %v2289, %v2283
        %v2308 = vpack.c.bf16 %v2296, %v2290
        %v2309 = vpack.c.bf16 %v2297, %v2291
        %v2310 = vpack.c.bf16 %v2298, %v2292
        %v2311 = vpack.c.bf16 %v2299, %v2293
        %v2312 = vpack.c.bf16 %v2300, %v2294
        %v2313 = vpack.c.bf16 %v2301, %v2295
        %2314 = vst [vmem:[#allocation2] sm:$0xff] %v2302
        %2315 = vst [vmem:[#allocation2 + $0x8] sm:$0xff] %v2303
        %2316 = vst [vmem:[#allocation2 + $0x10] sm:$0xff] %v2304
        %2317 = vst [vmem:[#allocation2 + $0x18] sm:$0xff] %v2305
        %2318 = vst [vmem:[#allocation2 + $0x20] sm:$0xff] %v2306
        %vm2319 = vcmask 785408
        %2320 = vst.msk [vmem:[#allocation2 + $0x28] sm:$0xff] %vm2319, %v2307
        %2321 = vst [vmem:[#allocation2 + $0x30] sm:$0xff] %v2308
        %2322 = vst [vmem:[#allocation2 + $0x38] sm:$0xff] %v2309
        %2323 = vst [vmem:[#allocation2 + $0x40] sm:$0xff] %v2310
        %2324 = vst [vmem:[#allocation2 + $0x48] sm:$0xff] %v2311
        %2325 = vst [vmem:[#allocation2 + $0x50] sm:$0xff] %v2312
        %2326 = vst.msk [vmem:[#allocation2 + $0x58] sm:$0xff] %vm2319, %v2313
        %v2327 = vld [vmem:[#allocation7] sm:$0xf]
        %v2328 = vld [vmem:[#allocation7 + $0x4] sm:$0xf]
        %v2329 = vld [vmem:[#allocation7 + $0x8] sm:$0xf]
        %v2330 = vld [vmem:[#allocation7 + $0xc] sm:$0xf]
        %v2331 = vld [vmem:[#allocation2] sm:$0xff]
        %v2332 = vld [vmem:[#allocation2 + $0x8] sm:$0xff]
        %v2333 = vld [vmem:[#allocation2 + $0x10] sm:$0xff]
        %v2334 = vld [vmem:[#allocation2 + $0x18] sm:$0xff]
        %v2335 = vld [vmem:[#allocation2 + $0x20] sm:$0xff]
        %v2336 = vld [vmem:[#allocation2 + $0x28] sm:$0xff]
        %v2337 = vld [vmem:[#allocation2 + $0x30] sm:$0xff]
        %v2338 = vld [vmem:[#allocation2 + $0x38] sm:$0xff]
        %v2339 = vld [vmem:[#allocation2 + $0x40] sm:$0xff]
        %v2340 = vld [vmem:[#allocation2 + $0x48] sm:$0xff]
        %v2341 = vld [vmem:[#allocation2 + $0x50] sm:$0xff]
        %v2342 = vld [vmem:[#allocation2 + $0x58] sm:$0xff]
        %s2343 = scalar_lea.vmem [#allocation7], 16
        %v2344 = vld [vmem:[%s2343] sm:$0xf]
        %v2345 = vld [vmem:[%s2343 + $0x4] sm:$0xf]
        %v2346 = vld [vmem:[%s2343 + $0x8] sm:$0xf]
        %v2347 = vld [vmem:[%s2343 + $0xc] sm:$0xf]
        %v2352 = vunpack.c.l.b16 %v2344
        %v2353 = vunpack.c.l.b16 %v2345
        %v2354 = vunpack.c.l.b16 %v2346
        %v2355 = vunpack.c.l.b16 %v2347
        %v2356 = vpack.c.b16 %v2353, %v2352
        %v2357 = vpack.c.b16 %v2355, %v2354
        %2370 = vrot.lane.b32.xlu0 %v2331, 127
        %v2371 = vpop.permute.xlu0 %2370
        %2372 = vrot.lane.b32.xlu0 %v2332, 127
        %v2373 = vpop.permute.xlu0 %2372
        %2374 = vrot.lane.b32.xlu0 %v2333, 127
        %v2375 = vpop.permute.xlu0 %2374
        %2376 = vrot.lane.b32.xlu0 %v2334, 127
        %v2377 = vpop.permute.xlu0 %2376
        %2378 = vrot.lane.b32.xlu0 %v2335, 127
        %v2379 = vpop.permute.xlu0 %2378
        %2380 = vrot.lane.b32.xlu0 %v2336, 127
        %v2381 = vpop.permute.xlu0 %2380
        %2382 = vrot.lane.b32.xlu0 %v2337, 127
        %v2383 = vpop.permute.xlu0 %2382
        %2384 = vrot.lane.b32.xlu0 %v2338, 127
        %v2385 = vpop.permute.xlu0 %2384
        %2386 = vrot.lane.b32.xlu0 %v2339, 127
        %v2387 = vpop.permute.xlu0 %2386
        %2388 = vrot.lane.b32.xlu0 %v2340, 127
        %v2389 = vpop.permute.xlu0 %2388
        %2390 = vrot.lane.b32.xlu0 %v2341, 127
        %v2391 = vpop.permute.xlu0 %2390
        %2392 = vrot.lane.b32.xlu0 %v2342, 127
        %v2393 = vpop.permute.xlu0 %2392
        %vm2394 = vcmask 1039360
        %v2395 = vsel %vm2394, %v2371, %v2373
        %v2396 = vsel %vm2394, %v2373, %v2375
        %v2397 = vsel %vm2394, %v2375, %v2377
        %v2398 = vsel %vm2394, %v2377, %v2379
        %v2399 = vsel %vm2394, %v2379, %v2381
        %v2400 = vsel %vm2394, %v2383, %v2385
        %v2401 = vsel %vm2394, %v2385, %v2387
        %v2402 = vsel %vm2394, %v2387, %v2389
        %v2403 = vsel %vm2394, %v2389, %v2391
        %v2404 = vsel %vm2394, %v2391, %v2393
        %vm2417 = vcmask 261120
        %v2419 = vsel %vm2417, %v2356, 0
        %v2422 = vsel %vm2417, %v2357, 0
        %2424 = vmatprep.subr.bf16.mxu0 %v2396
        %2425 = vmatpush1.bf16.msra.mxu0 %v2395
        %2426 = vmatprep.subr.bf16.mxu0 %v2401
        %2427 = vmatpush1.bf16.msra.mxu0 %v2400
        %2428 = vmatprep.subr.bf16.mxu0 0
        %2429 = vmatpush1.bf16.msra.mxu0 0
        %2430 = vmatprep.subr.bf16.mxu0 0
        %2431 = vmatpush1.bf16.msra.mxu0 0
        %2432 = vmatprep.subr.bf16.mxu0 0
        %2433 = vmatpush1.bf16.msra.mxu0 0
        %2434 = vmatprep.subr.bf16.mxu0 0
        %2435 = vmatpush1.bf16.msra.mxu0 0
        %2436 = vmatprep.subr.bf16.mxu0 0
        %2437 = vmatpush1.bf16.msra.mxu0 0
        %2438 = vmatprep.subr.bf16.mxu0 0
        %2439 = vmatpush1.bf16.msra.mxu0 0
        %2440 = vmatprep.subr.bf16.mxu0 0
        %2441 = vmatpush1.bf16.msra.mxu0 0
        %2442 = vmatprep.subr.bf16.mxu0 0
        %2443 = vmatpush1.bf16.msra.mxu0 0
        %2444 = vmatprep.subr.bf16.mxu0 0
        %2445 = vmatpush1.bf16.msra.mxu0 0
        %2446 = vmatprep.subr.bf16.mxu0 0
        %2447 = vmatpush1.bf16.msra.mxu0 0
        %2448 = vmatprep.subr.bf16.mxu0 0
        %2449 = vmatpush1.bf16.msra.mxu0 0
        %2450 = vmatprep.subr.bf16.mxu0 0
        %2451 = vmatpush1.bf16.msra.mxu0 0
        %2452 = vmatprep.subr.bf16.mxu0 0
        %2453 = vmatpush1.bf16.msra.mxu0 0
        %2454 = vmatprep.subr.bf16.mxu0 0
        %2455 = vmatpush1.bf16.msra.mxu0 0
        %2456 = vmatprep.mubr.bf16.mxu0 0
        %2457 = vmatmul.mubr.bf16.gmra.mrb[0].mxu0 %v2419
        %v2458 = vpop.f32.mrb[0].mxu0
        %v2459 = vadd.f32 0.0, %v2458
        %v2460 = vpop.f32.mrb[0].mxu0
        %v2461 = vadd.f32 0.0, %v2460
        %v2462 = vpop.f32.mrb[0].mxu0
        %v2463 = vadd.f32 0.0, %v2462
        %v2464 = vpop.f32.mrb[0].mxu0
        %v2465 = vadd.f32 0.0, %v2464
        %2466 = vmatprep.mubr.bf16.mxu0 0
        %2467 = vmatmul.mubr.bf16.gmra.mrb[0].mxu0 %v2422
        %v2468 = vpop.f32.mrb[0].mxu0
        %v2469 = vadd.f32 0.0, %v2468
        %v2470 = vpop.f32.mrb[0].mxu0
        %v2471 = vadd.f32 0.0, %v2470
        %v2472 = vpop.f32.mrb[0].mxu0
        %v2473 = vadd.f32 0.0, %v2472
        %v2474 = vpop.f32.mrb[0].mxu0
        %v2475 = vadd.f32 0.0, %v2474
        %2476 = vdwg.mxu0
        %2477 = vmatprep.subr.bf16.mxu0 %v2398
        %2478 = vmatpush1.bf16.msra.mxu0 %v2397
        %2479 = vmatprep.subr.bf16.mxu0 %v2403
        %2480 = vmatpush1.bf16.msra.mxu0 %v2402
        %2481 = vmatprep.subr.bf16.mxu0 0
        %2482 = vmatpush1.bf16.msra.mxu0 0
        %2483 = vmatprep.subr.bf16.mxu0 0
        %2484 = vmatpush1.bf16.msra.mxu0 0
        %2485 = vmatprep.subr.bf16.mxu0 0
        %2486 = vmatpush1.bf16.msra.mxu0 0
        %2487 = vmatprep.subr.bf16.mxu0 0
        %2488 = vmatpush1.bf16.msra.mxu0 0
        %2489 = vmatprep.subr.bf16.mxu0 0
        %2490 = vmatpush1.bf16.msra.mxu0 0
        %2491 = vmatprep.subr.bf16.mxu0 0
        %2492 = vmatpush1.bf16.msra.mxu0 0
        %2493 = vmatprep.subr.bf16.mxu0 0
        %2494 = vmatpush1.bf16.msra.mxu0 0
        %2495 = vmatprep.subr.bf16.mxu0 0
        %2496 = vmatpush1.bf16.msra.mxu0 0
        %2497 = vmatprep.subr.bf16.mxu0 0
        %2498 = vmatpush1.bf16.msra.mxu0 0
        %2499 = vmatprep.subr.bf16.mxu0 0
        %2500 = vmatpush1.bf16.msra.mxu0 0
        %2501 = vmatprep.subr.bf16.mxu0 0
        %2502 = vmatpush1.bf16.msra.mxu0 0
        %2503 = vmatprep.subr.bf16.mxu0 0
        %2504 = vmatpush1.bf16.msra.mxu0 0
        %2505 = vmatprep.subr.bf16.mxu0 0
        %2506 = vmatpush1.bf16.msra.mxu0 0
        %2507 = vmatprep.subr.bf16.mxu0 0
        %2508 = vmatpush1.bf16.msra.mxu0 0
        %2509 = vmatprep.mubr.bf16.mxu0 0
        %2510 = vmatmul.mubr.bf16.gmra.mrb[0].mxu0 %v2419
        %v2511 = vpop.f32.mrb[0].mxu0
        %v2512 = vadd.f32 0.0, %v2511
        %v2513 = vpop.f32.mrb[0].mxu0
        %v2514 = vadd.f32 0.0, %v2513
        %v2515 = vpop.f32.mrb[0].mxu0
        %v2516 = vadd.f32 0.0, %v2515
        %v2517 = vpop.f32.mrb[0].mxu0
        %v2518 = vadd.f32 0.0, %v2517
        %2519 = vmatprep.mubr.bf16.mxu0 0
        %2520 = vmatmul.mubr.bf16.gmra.mrb[0].mxu0 %v2422
        %v2521 = vpop.f32.mrb[0].mxu0
        %v2522 = vadd.f32 0.0, %v2521
        %v2523 = vpop.f32.mrb[0].mxu0
        %v2524 = vadd.f32 0.0, %v2523
        %v2525 = vpop.f32.mrb[0].mxu0
        %v2526 = vadd.f32 0.0, %v2525
        %v2527 = vpop.f32.mrb[0].mxu0
        %v2528 = vadd.f32 0.0, %v2527
        %2529 = vdwg.mxu0
        %2530 = vmatprep.subr.bf16.mxu0 %v2381
        %2531 = vmatpush1.bf16.msra.mxu0 %v2399
        %2532 = vmatprep.subr.bf16.mxu0 %v2393
        %2533 = vmatpush1.bf16.msra.mxu0 %v2404
        %2534 = vmatprep.subr.bf16.mxu0 0
        %2535 = vmatpush1.bf16.msra.mxu0 0
        %2536 = vmatprep.subr.bf16.mxu0 0
        %2537 = vmatpush1.bf16.msra.mxu0 0
        %2538 = vmatprep.subr.bf16.mxu0 0
        %2539 = vmatpush1.bf16.msra.mxu0 0
        %2540 = vmatprep.subr.bf16.mxu0 0
        %2541 = vmatpush1.bf16.msra.mxu0 0
        %2542 = vmatprep.subr.bf16.mxu0 0
        %2543 = vmatpush1.bf16.msra.mxu0 0
        %2544 = vmatprep.subr.bf16.mxu0 0
        %2545 = vmatpush1.bf16.msra.mxu0 0
        %2546 = vmatprep.subr.bf16.mxu0 0
        %2547 = vmatpush1.bf16.msra.mxu0 0
        %2548 = vmatprep.subr.bf16.mxu0 0
        %2549 = vmatpush1.bf16.msra.mxu0 0
        %2550 = vmatprep.subr.bf16.mxu0 0
        %2551 = vmatpush1.bf16.msra.mxu0 0
        %2552 = vmatprep.subr.bf16.mxu0 0
        %2553 = vmatpush1.bf16.msra.mxu0 0
        %2554 = vmatprep.subr.bf16.mxu0 0
        %2555 = vmatpush1.bf16.msra.mxu0 0
        %2556 = vmatprep.subr.bf16.mxu0 0
        %2557 = vmatpush1.bf16.msra.mxu0 0
        %2558 = vmatprep.subr.bf16.mxu0 0
        %2559 = vmatpush1.bf16.msra.mxu0 0
        %2560 = vmatprep.subr.bf16.mxu0 0
        %2561 = vmatpush1.bf16.msra.mxu0 0
        %2562 = vmatprep.mubr.bf16.mxu0 0
        %2563 = vmatmul.mubr.bf16.gmra.mrb[0].mxu0 %v2419
        %v2564 = vpop.f32.mrb[0].mxu0
        %v2565 = vadd.f32 0.0, %v2564
        %v2566 = vpop.f32.mrb[0].mxu0
        %v2567 = vadd.f32 0.0, %v2566
        %v2568 = vpop.f32.mrb[0].mxu0
        %v2569 = vadd.f32 0.0, %v2568
        %v2570 = vpop.f32.mrb[0].mxu0
        %v2571 = vadd.f32 0.0, %v2570
        %2572 = vmatprep.mubr.bf16.mxu0 0
        %2573 = vmatmul.mubr.bf16.gmra.mrb[0].mxu0 %v2422
        %v2574 = vpop.f32.mrb[0].mxu0
        %v2575 = vadd.f32 0.0, %v2574
        %v2576 = vpop.f32.mrb[0].mxu0
        %v2577 = vadd.f32 0.0, %v2576
        %v2578 = vpop.f32.mrb[0].mxu0
        %v2579 = vadd.f32 0.0, %v2578
        %v2580 = vpop.f32.mrb[0].mxu0
        %v2581 = vadd.f32 0.0, %v2580
        %2582 = vdwg.mxu0
        %v2587 = vunpack.c.l.b16 %v2327
        %v2588 = vunpack.c.l.b16 %v2328
        %v2589 = vunpack.c.l.b16 %v2329
        %v2590 = vunpack.c.l.b16 %v2330
        %v2591 = vpack.c.b16 %v2588, %v2587
        %v2592 = vpack.c.b16 %v2590, %v2589
        %v2594 = vsel %vm2417, %v2591, 0
        %v2597 = vsel %vm2417, %v2592, 0
        %2599 = vmatprep.subr.bf16.mxu0 %v2332
        %2600 = vmatpush1.bf16.msra.mxu0 %v2331
        %2601 = vmatprep.subr.bf16.mxu0 %v2338
        %2602 = vmatpush1.bf16.msra.mxu0 %v2337
        %2603 = vmatprep.subr.bf16.mxu0 0
        %2604 = vmatpush1.bf16.msra.mxu0 0
        %2605 = vmatprep.subr.bf16.mxu0 0
        %2606 = vmatpush1.bf16.msra.mxu0 0
        %2607 = vmatprep.subr.bf16.mxu0 0
        %2608 = vmatpush1.bf16.msra.mxu0 0
        %2609 = vmatprep.subr.bf16.mxu0 0
        %2610 = vmatpush1.bf16.msra.mxu0 0
        %2611 = vmatprep.subr.bf16.mxu0 0
        %2612 = vmatpush1.bf16.msra.mxu0 0
        %2613 = vmatprep.subr.bf16.mxu0 0
        %2614 = vmatpush1.bf16.msra.mxu0 0
        %2615 = vmatprep.subr.bf16.mxu0 0
        %2616 = vmatpush1.bf16.msra.mxu0 0
        %2617 = vmatprep.subr.bf16.mxu0 0
        %2618 = vmatpush1.bf16.msra.mxu0 0
        %2619 = vmatprep.subr.bf16.mxu0 0
        %2620 = vmatpush1.bf16.msra.mxu0 0
        %2621 = vmatprep.subr.bf16.mxu0 0
        %2622 = vmatpush1.bf16.msra.mxu0 0
        %2623 = vmatprep.subr.bf16.mxu0 0
        %2624 = vmatpush1.bf16.msra.mxu0 0
        %2625 = vmatprep.subr.bf16.mxu0 0
        %2626 = vmatpush1.bf16.msra.mxu0 0
        %2627 = vmatprep.subr.bf16.mxu0 0
        %2628 = vmatpush1.bf16.msra.mxu0 0
        %2629 = vmatprep.subr.bf16.mxu0 0
        %2630 = vmatpush1.bf16.msra.mxu0 0
        %2631 = vmatprep.mubr.bf16.mxu0 0
        %2632 = vmatmul.mubr.bf16.gmra.mrb[0].mxu0 %v2594
        %v2633 = vpop.f32.mrb[0].mxu0
        %v2634 = vadd.f32 %v2459, %v2633
        %v2635 = vpop.f32.mrb[0].mxu0
        %v2636 = vadd.f32 %v2461, %v2635
        %v2637 = vpop.f32.mrb[0].mxu0
        %v2638 = vadd.f32 %v2463, %v2637
        %v2639 = vpop.f32.mrb[0].mxu0
        %v2640 = vadd.f32 %v2465, %v2639
        %2641 = vmatprep.mubr.bf16.mxu0 0
        %2642 = vmatmul.mubr.bf16.gmra.mrb[0].mxu0 %v2597
        %v2643 = vpop.f32.mrb[0].mxu0
        %v2644 = vadd.f32 %v2469, %v2643
        %v2645 = vpop.f32.mrb[0].mxu0
        %v2646 = vadd.f32 %v2471, %v2645
        %v2647 = vpop.f32.mrb[0].mxu0
        %v2648 = vadd.f32 %v2473, %v2647
        %v2649 = vpop.f32.mrb[0].mxu0
        %v2650 = vadd.f32 %v2475, %v2649
        %2651 = vdwg.mxu0
        %2652 = vmatprep.subr.bf16.mxu0 %v2334
        %2653 = vmatpush1.bf16.msra.mxu0 %v2333
        %2654 = vmatprep.subr.bf16.mxu0 %v2340
        %2655 = vmatpush1.bf16.msra.mxu0 %v2339
        %2656 = vmatprep.subr.bf16.mxu0 0
        %2657 = vmatpush1.bf16.msra.mxu0 0
        %2658 = vmatprep.subr.bf16.mxu0 0
        %2659 = vmatpush1.bf16.msra.mxu0 0
        %2660 = vmatprep.subr.bf16.mxu0 0
        %2661 = vmatpush1.bf16.msra.mxu0 0
        %2662 = vmatprep.subr.bf16.mxu0 0
        %2663 = vmatpush1.bf16.msra.mxu0 0
        %2664 = vmatprep.subr.bf16.mxu0 0
        %2665 = vmatpush1.bf16.msra.mxu0 0
        %2666 = vmatprep.subr.bf16.mxu0 0
        %2667 = vmatpush1.bf16.msra.mxu0 0
        %2668 = vmatprep.subr.bf16.mxu0 0
        %2669 = vmatpush1.bf16.msra.mxu0 0
        %2670 = vmatprep.subr.bf16.mxu0 0
        %2671 = vmatpush1.bf16.msra.mxu0 0
        %2672 = vmatprep.subr.bf16.mxu0 0
        %2673 = vmatpush1.bf16.msra.mxu0 0
        %2674 = vmatprep.subr.bf16.mxu0 0
        %2675 = vmatpush1.bf16.msra.mxu0 0
        %2676 = vmatprep.subr.bf16.mxu0 0
        %2677 = vmatpush1.bf16.msra.mxu0 0
        %2678 = vmatprep.subr.bf16.mxu0 0
        %2679 = vmatpush1.bf16.msra.mxu0 0
        %2680 = vmatprep.subr.bf16.mxu0 0
        %2681 = vmatpush1.bf16.msra.mxu0 0
        %2682 = vmatprep.subr.bf16.mxu0 0
        %2683 = vmatpush1.bf16.msra.mxu0 0
        %2684 = vmatprep.mubr.bf16.mxu0 0
        %2685 = vmatmul.mubr.bf16.gmra.mrb[0].mxu0 %v2594
        %v2686 = vpop.f32.mrb[0].mxu0
        %v2687 = vadd.f32 %v2512, %v2686
        %v2688 = vpop.f32.mrb[0].mxu0
        %v2689 = vadd.f32 %v2514, %v2688
        %v2690 = vpop.f32.mrb[0].mxu0
        %v2691 = vadd.f32 %v2516, %v2690
        %v2692 = vpop.f32.mrb[0].mxu0
        %v2693 = vadd.f32 %v2518, %v2692
        %2694 = vmatprep.mubr.bf16.mxu0 0
        %2695 = vmatmul.mubr.bf16.gmra.mrb[0].mxu0 %v2597
        %v2696 = vpop.f32.mrb[0].mxu0
        %v2697 = vadd.f32 %v2522, %v2696
        %v2698 = vpop.f32.mrb[0].mxu0
        %v2699 = vadd.f32 %v2524, %v2698
        %v2700 = vpop.f32.mrb[0].mxu0
        %v2701 = vadd.f32 %v2526, %v2700
        %v2702 = vpop.f32.mrb[0].mxu0
        %v2703 = vadd.f32 %v2528, %v2702
        %2704 = vdwg.mxu0
        %2705 = vmatprep.subr.bf16.mxu0 %v2336
        %2706 = vmatpush1.bf16.msra.mxu0 %v2335
        %2707 = vmatprep.subr.bf16.mxu0 %v2342
        %2708 = vmatpush1.bf16.msra.mxu0 %v2341
        %2709 = vmatprep.subr.bf16.mxu0 0
        %2710 = vmatpush1.bf16.msra.mxu0 0
        %2711 = vmatprep.subr.bf16.mxu0 0
        %2712 = vmatpush1.bf16.msra.mxu0 0
        %2713 = vmatprep.subr.bf16.mxu0 0
        %2714 = vmatpush1.bf16.msra.mxu0 0
        %2715 = vmatprep.subr.bf16.mxu0 0
        %2716 = vmatpush1.bf16.msra.mxu0 0
        %2717 = vmatprep.subr.bf16.mxu0 0
        %2718 = vmatpush1.bf16.msra.mxu0 0
        %2719 = vmatprep.subr.bf16.mxu0 0
        %2720 = vmatpush1.bf16.msra.mxu0 0
        %2721 = vmatprep.subr.bf16.mxu0 0
        %2722 = vmatpush1.bf16.msra.mxu0 0
        %2723 = vmatprep.subr.bf16.mxu0 0
        %2724 = vmatpush1.bf16.msra.mxu0 0
        %2725 = vmatprep.subr.bf16.mxu0 0
        %2726 = vmatpush1.bf16.msra.mxu0 0
        %2727 = vmatprep.subr.bf16.mxu0 0
        %2728 = vmatpush1.bf16.msra.mxu0 0
        %2729 = vmatprep.subr.bf16.mxu0 0
        %2730 = vmatpush1.bf16.msra.mxu0 0
        %2731 = vmatprep.subr.bf16.mxu0 0
        %2732 = vmatpush1.bf16.msra.mxu0 0
        %2733 = vmatprep.subr.bf16.mxu0 0
        %2734 = vmatpush1.bf16.msra.mxu0 0
        %2735 = vmatprep.subr.bf16.mxu0 0
        %2736 = vmatpush1.bf16.msra.mxu0 0
        %2737 = vmatprep.mubr.bf16.mxu0 0
        %2738 = vmatmul.mubr.bf16.gmra.mrb[0].mxu0 %v2594
        %v2739 = vpop.f32.mrb[0].mxu0
        %v2740 = vadd.f32 %v2565, %v2739
        %v2741 = vpop.f32.mrb[0].mxu0
        %v2742 = vadd.f32 %v2567, %v2741
        %v2743 = vpop.f32.mrb[0].mxu0
        %v2744 = vadd.f32 %v2569, %v2743
        %v2745 = vpop.f32.mrb[0].mxu0
        %v2746 = vadd.f32 %v2571, %v2745
        %2747 = vmatprep.mubr.bf16.mxu0 0
        %2748 = vmatmul.mubr.bf16.gmra.mrb[0].mxu0 %v2597
        %v2749 = vpop.f32.mrb[0].mxu0
        %v2750 = vadd.f32 %v2575, %v2749
        %v2751 = vpop.f32.mrb[0].mxu0
        %v2752 = vadd.f32 %v2577, %v2751
        %v2753 = vpop.f32.mrb[0].mxu0
        %v2754 = vadd.f32 %v2579, %v2753
        %v2755 = vpop.f32.mrb[0].mxu0
        %v2756 = vadd.f32 %v2581, %v2755
        %2757 = vdwg.mxu0
        %s2758 = scalar_lea.vmem [#allocation7], 32
        %v2759 = vld [vmem:[%s2758] sm:$0xf]
        %v2760 = vld [vmem:[%s2758 + $0x4] sm:$0xf]
        %v2761 = vld [vmem:[%s2758 + $0x8] sm:$0xf]
        %v2762 = vld [vmem:[%s2758 + $0xc] sm:$0xf]
        %v2767 = vunpack.c.l.b16 %v2759
        %v2768 = vunpack.c.l.b16 %v2760
        %v2769 = vunpack.c.l.b16 %v2761
        %v2770 = vunpack.c.l.b16 %v2762
        %v2771 = vpack.c.b16 %v2768, %v2767
        %v2772 = vpack.c.b16 %v2770, %v2769
        %2773 = vrot.lane.b32.xlu0 %v2331, 126
        %v2774 = vpop.permute.xlu0 %2773
        %2775 = vrot.lane.b32.xlu0 %v2332, 126
        %v2776 = vpop.permute.xlu0 %2775
        %2777 = vrot.lane.b32.xlu0 %v2333, 126
        %v2778 = vpop.permute.xlu0 %2777
        %2779 = vrot.lane.b32.xlu0 %v2334, 126
        %v2780 = vpop.permute.xlu0 %2779
        %2781 = vrot.lane.b32.xlu0 %v2335, 126
        %v2782 = vpop.permute.xlu0 %2781
        %2783 = vrot.lane.b32.xlu0 %v2336, 126
        %v2784 = vpop.permute.xlu0 %2783
        %2785 = vrot.lane.b32.xlu0 %v2337, 126
        %v2786 = vpop.permute.xlu0 %2785
        %2787 = vrot.lane.b32.xlu0 %v2338, 126
        %v2788 = vpop.permute.xlu0 %2787
        %2789 = vrot.lane.b32.xlu0 %v2339, 126
        %v2790 = vpop.permute.xlu0 %2789
        %2791 = vrot.lane.b32.xlu0 %v2340, 126
        %v2792 = vpop.permute.xlu0 %2791
        %2793 = vrot.lane.b32.xlu0 %v2341, 126
        %v2794 = vpop.permute.xlu0 %2793
        %2795 = vrot.lane.b32.xlu0 %v2342, 126
        %v2796 = vpop.permute.xlu0 %2795
        %vm2797 = vcmask 1031168
        %v2798 = vsel %vm2797, %v2774, %v2776
        %v2799 = vsel %vm2797, %v2776, %v2778
        %v2800 = vsel %vm2797, %v2778, %v2780
        %v2801 = vsel %vm2797, %v2780, %v2782
        %v2802 = vsel %vm2797, %v2782, %v2784
        %v2803 = vsel %vm2797, %v2786, %v2788
        %v2804 = vsel %vm2797, %v2788, %v2790
        %v2805 = vsel %vm2797, %v2790, %v2792
        %v2806 = vsel %vm2797, %v2792, %v2794
        %v2807 = vsel %vm2797, %v2794, %v2796
        %v2821 = vsel %vm2417, %v2771, 0
        %v2824 = vsel %vm2417, %v2772, 0
        %2826 = vmatprep.subr.bf16.mxu0 %v2799
        %2827 = vmatpush1.bf16.msra.mxu0 %v2798
        %2828 = vmatprep.subr.bf16.mxu0 %v2804
        %2829 = vmatpush1.bf16.msra.mxu0 %v2803
        %2830 = vmatprep.subr.bf16.mxu0 0
        %2831 = vmatpush1.bf16.msra.mxu0 0
        %2832 = vmatprep.subr.bf16.mxu0 0
        %2833 = vmatpush1.bf16.msra.mxu0 0
        %2834 = vmatprep.subr.bf16.mxu0 0
        %2835 = vmatpush1.bf16.msra.mxu0 0
        %2836 = vmatprep.subr.bf16.mxu0 0
        %2837 = vmatpush1.bf16.msra.mxu0 0
        %2838 = vmatprep.subr.bf16.mxu0 0
        %2839 = vmatpush1.bf16.msra.mxu0 0
        %2840 = vmatprep.subr.bf16.mxu0 0
        %2841 = vmatpush1.bf16.msra.mxu0 0
        %2842 = vmatprep.subr.bf16.mxu0 0
        %2843 = vmatpush1.bf16.msra.mxu0 0
        %2844 = vmatprep.subr.bf16.mxu0 0
        %2845 = vmatpush1.bf16.msra.mxu0 0
        %2846 = vmatprep.subr.bf16.mxu0 0
        %2847 = vmatpush1.bf16.msra.mxu0 0
        %2848 = vmatprep.subr.bf16.mxu0 0
        %2849 = vmatpush1.bf16.msra.mxu0 0
        %2850 = vmatprep.subr.bf16.mxu0 0
        %2851 = vmatpush1.bf16.msra.mxu0 0
        %2852 = vmatprep.subr.bf16.mxu0 0
        %2853 = vmatpush1.bf16.msra.mxu0 0
        %2854 = vmatprep.subr.bf16.mxu0 0
        %2855 = vmatpush1.bf16.msra.mxu0 0
        %2856 = vmatprep.subr.bf16.mxu0 0
        %2857 = vmatpush1.bf16.msra.mxu0 0
        %2858 = vmatprep.mubr.bf16.mxu0 0
        %2859 = vmatmul.mubr.bf16.gmra.mrb[0].mxu0 %v2821
        %v2860 = vpop.f32.mrb[0].mxu0
        %v2861 = vadd.f32 0.0, %v2860
        %v2862 = vpop.f32.mrb[0].mxu0
        %v2863 = vadd.f32 0.0, %v2862
        %v2864 = vpop.f32.mrb[0].mxu0
        %v2865 = vadd.f32 0.0, %v2864
        %v2866 = vpop.f32.mrb[0].mxu0
        %v2867 = vadd.f32 0.0, %v2866
        %2868 = vmatprep.mubr.bf16.mxu0 0
        %2869 = vmatmul.mubr.bf16.gmra.mrb[0].mxu0 %v2824
        %v2870 = vpop.f32.mrb[0].mxu0
        %v2871 = vadd.f32 0.0, %v2870
        %v2872 = vpop.f32.mrb[0].mxu0
        %v2873 = vadd.f32 0.0, %v2872
        %v2874 = vpop.f32.mrb[0].mxu0
        %v2875 = vadd.f32 0.0, %v2874
        %v2876 = vpop.f32.mrb[0].mxu0
        %v2877 = vadd.f32 0.0, %v2876
        %2878 = vdwg.mxu0
        %2879 = vmatprep.subr.bf16.mxu0 %v2801
        %2880 = vmatpush1.bf16.msra.mxu0 %v2800
        %2881 = vmatprep.subr.bf16.mxu0 %v2806
        %2882 = vmatpush1.bf16.msra.mxu0 %v2805
        %2883 = vmatprep.subr.bf16.mxu0 0
        %2884 = vmatpush1.bf16.msra.mxu0 0
        %2885 = vmatprep.subr.bf16.mxu0 0
        %2886 = vmatpush1.bf16.msra.mxu0 0
        %2887 = vmatprep.subr.bf16.mxu0 0
        %2888 = vmatpush1.bf16.msra.mxu0 0
        %2889 = vmatprep.subr.bf16.mxu0 0
        %2890 = vmatpush1.bf16.msra.mxu0 0
        %2891 = vmatprep.subr.bf16.mxu0 0
        %2892 = vmatpush1.bf16.msra.mxu0 0
        %2893 = vmatprep.subr.bf16.mxu0 0
        %2894 = vmatpush1.bf16.msra.mxu0 0
        %2895 = vmatprep.subr.bf16.mxu0 0
        %2896 = vmatpush1.bf16.msra.mxu0 0
        %2897 = vmatprep.subr.bf16.mxu0 0
        %2898 = vmatpush1.bf16.msra.mxu0 0
        %2899 = vmatprep.subr.bf16.mxu0 0
        %2900 = vmatpush1.bf16.msra.mxu0 0
        %2901 = vmatprep.subr.bf16.mxu0 0
        %2902 = vmatpush1.bf16.msra.mxu0 0
        %2903 = vmatprep.subr.bf16.mxu0 0
        %2904 = vmatpush1.bf16.msra.mxu0 0
        %2905 = vmatprep.subr.bf16.mxu0 0
        %2906 = vmatpush1.bf16.msra.mxu0 0
        %2907 = vmatprep.subr.bf16.mxu0 0
        %2908 = vmatpush1.bf16.msra.mxu0 0
        %2909 = vmatprep.subr.bf16.mxu0 0
        %2910 = vmatpush1.bf16.msra.mxu0 0
        %2911 = vmatprep.mubr.bf16.mxu0 0
        %2912 = vmatmul.mubr.bf16.gmra.mrb[0].mxu0 %v2821
        %v2913 = vpop.f32.mrb[0].mxu0
        %v2914 = vadd.f32 0.0, %v2913
        %v2915 = vpop.f32.mrb[0].mxu0
        %v2916 = vadd.f32 0.0, %v2915
        %v2917 = vpop.f32.mrb[0].mxu0
        %v2918 = vadd.f32 0.0, %v2917
        %v2919 = vpop.f32.mrb[0].mxu0
        %v2920 = vadd.f32 0.0, %v2919
        %2921 = vmatprep.mubr.bf16.mxu0 0
        %2922 = vmatmul.mubr.bf16.gmra.mrb[0].mxu0 %v2824
        %v2923 = vpop.f32.mrb[0].mxu0
        %v2924 = vadd.f32 0.0, %v2923
        %v2925 = vpop.f32.mrb[0].mxu0
        %v2926 = vadd.f32 0.0, %v2925
        %v2927 = vpop.f32.mrb[0].mxu0
        %v2928 = vadd.f32 0.0, %v2927
        %v2929 = vpop.f32.mrb[0].mxu0
        %v2930 = vadd.f32 0.0, %v2929
        %2931 = vdwg.mxu0
        %2932 = vmatprep.subr.bf16.mxu0 %v2784
        %2933 = vmatpush1.bf16.msra.mxu0 %v2802
        %2934 = vmatprep.subr.bf16.mxu0 %v2796
        %2935 = vmatpush1.bf16.msra.mxu0 %v2807
        %2936 = vmatprep.subr.bf16.mxu0 0
        %2937 = vmatpush1.bf16.msra.mxu0 0
        %2938 = vmatprep.subr.bf16.mxu0 0
        %2939 = vmatpush1.bf16.msra.mxu0 0
        %2940 = vmatprep.subr.bf16.mxu0 0
        %2941 = vmatpush1.bf16.msra.mxu0 0
        %2942 = vmatprep.subr.bf16.mxu0 0
        %2943 = vmatpush1.bf16.msra.mxu0 0
        %2944 = vmatprep.subr.bf16.mxu0 0
        %2945 = vmatpush1.bf16.msra.mxu0 0
        %2946 = vmatprep.subr.bf16.mxu0 0
        %2947 = vmatpush1.bf16.msra.mxu0 0
        %2948 = vmatprep.subr.bf16.mxu0 0
        %2949 = vmatpush1.bf16.msra.mxu0 0
        %2950 = vmatprep.subr.bf16.mxu0 0
        %2951 = vmatpush1.bf16.msra.mxu0 0
        %2952 = vmatprep.subr.bf16.mxu0 0
        %2953 = vmatpush1.bf16.msra.mxu0 0
        %2954 = vmatprep.subr.bf16.mxu0 0
        %2955 = vmatpush1.bf16.msra.mxu0 0
        %2956 = vmatprep.subr.bf16.mxu0 0
        %2957 = vmatpush1.bf16.msra.mxu0 0
        %2958 = vmatprep.subr.bf16.mxu0 0
        %2959 = vmatpush1.bf16.msra.mxu0 0
        %2960 = vmatprep.subr.bf16.mxu0 0
        %2961 = vmatpush1.bf16.msra.mxu0 0
        %2962 = vmatprep.subr.bf16.mxu0 0
        %2963 = vmatpush1.bf16.msra.mxu0 0
        %2964 = vmatprep.mubr.bf16.mxu0 0
        %2965 = vmatmul.mubr.bf16.gmra.mrb[0].mxu0 %v2821
        %v2966 = vpop.f32.mrb[0].mxu0
        %v2967 = vadd.f32 0.0, %v2966
        %v2968 = vpop.f32.mrb[0].mxu0
        %v2969 = vadd.f32 0.0, %v2968
        %v2970 = vpop.f32.mrb[0].mxu0
        %v2971 = vadd.f32 0.0, %v2970
        %v2972 = vpop.f32.mrb[0].mxu0
        %v2973 = vadd.f32 0.0, %v2972
        %2974 = vmatprep.mubr.bf16.mxu0 0
        %2975 = vmatmul.mubr.bf16.gmra.mrb[0].mxu0 %v2824
        %v2976 = vpop.f32.mrb[0].mxu0
        %v2977 = vadd.f32 0.0, %v2976
        %v2978 = vpop.f32.mrb[0].mxu0
        %v2979 = vadd.f32 0.0, %v2978
        %v2980 = vpop.f32.mrb[0].mxu0
        %v2981 = vadd.f32 0.0, %v2980
        %v2982 = vpop.f32.mrb[0].mxu0
        %v2983 = vadd.f32 0.0, %v2982
        %2984 = vdwg.mxu0
        %v2985 = vadd.f32 %v2634, %v2861
        %v2986 = vadd.f32 %v2636, %v2863
        %v2987 = vadd.f32 %v2687, %v2914
        %v2988 = vadd.f32 %v2689, %v2916
        %v2989 = vadd.f32 %v2740, %v2967
        %v2990 = vadd.f32 %v2742, %v2969
        %v2991 = vadd.f32 %v2638, %v2865
        %v2992 = vadd.f32 %v2640, %v2867
        %v2993 = vadd.f32 %v2691, %v2918
        %v2994 = vadd.f32 %v2693, %v2920
        %v2995 = vadd.f32 %v2744, %v2971
        %v2996 = vadd.f32 %v2746, %v2973
        %v2997 = vadd.f32 %v2644, %v2871
        %v2998 = vadd.f32 %v2646, %v2873
        %v2999 = vadd.f32 %v2697, %v2924
        %v3000 = vadd.f32 %v2699, %v2926
        %v3001 = vadd.f32 %v2750, %v2977
        %v3002 = vadd.f32 %v2752, %v2979
        %v3003 = vadd.f32 %v2648, %v2875
        %v3004 = vadd.f32 %v2650, %v2877
        %v3005 = vadd.f32 %v2701, %v2928
        %v3006 = vadd.f32 %v2703, %v2930
        %v3007 = vadd.f32 %v2754, %v2981
        %v3008 = vadd.f32 %v2756, %v2983
        %s3009 = scalar_lea.vmem [#allocation7], 48
        %v3010 = vld [vmem:[%s3009] sm:$0xf]
        %v3011 = vld [vmem:[%s3009 + $0x4] sm:$0xf]
        %v3012 = vld [vmem:[%s3009 + $0x8] sm:$0xf]
        %v3013 = vld [vmem:[%s3009 + $0xc] sm:$0xf]
        %v3018 = vunpack.c.l.b16 %v3010
        %v3019 = vunpack.c.l.b16 %v3011
        %v3020 = vunpack.c.l.b16 %v3012
        %v3021 = vunpack.c.l.b16 %v3013
        %v3022 = vpack.c.b16 %v3019, %v3018
        %v3023 = vpack.c.b16 %v3021, %v3020
        %3024 = vrot.lane.b32.xlu0 %v2331, 100
        %v3025 = vpop.permute.xlu0 %3024
        %3026 = vrot.lane.b32.xlu0 %v2332, 100
        %v3027 = vpop.permute.xlu0 %3026
        %3028 = vrot.lane.b32.xlu0 %v2333, 100
        %v3029 = vpop.permute.xlu0 %3028
        %3030 = vrot.lane.b32.xlu0 %v2334, 100
        %v3031 = vpop.permute.xlu0 %3030
        %3032 = vrot.lane.b32.xlu0 %v2335, 100
        %v3033 = vpop.permute.xlu0 %3032
        %3034 = vrot.lane.b32.xlu0 %v2336, 100
        %v3035 = vpop.permute.xlu0 %3034
        %3036 = vrot.lane.b32.xlu0 %v2337, 100
        %v3037 = vpop.permute.xlu0 %3036
        %3038 = vrot.lane.b32.xlu0 %v2338, 100
        %v3039 = vpop.permute.xlu0 %3038
        %3040 = vrot.lane.b32.xlu0 %v2339, 100
        %v3041 = vpop.permute.xlu0 %3040
        %3042 = vrot.lane.b32.xlu0 %v2340, 100
        %v3043 = vpop.permute.xlu0 %3042
        %3044 = vrot.lane.b32.xlu0 %v2341, 100
        %v3045 = vpop.permute.xlu0 %3044
        %3046 = vrot.lane.b32.xlu0 %v2342, 100
        %v3047 = vpop.permute.xlu0 %3046
        %vm3048 = vcmask 818176
        %v3049 = vsel %vm3048, %v3025, %v3027
        %v3050 = vsel %vm3048, %v3027, %v3029
        %v3051 = vsel %vm3048, %v3029, %v3031
        %v3052 = vsel %vm3048, %v3031, %v3033
        %v3053 = vsel %vm3048, %v3033, %v3035
        %v3054 = vsel %vm3048, %v3037, %v3039
        %v3055 = vsel %vm3048, %v3039, %v3041
        %v3056 = vsel %vm3048, %v3041, %v3043
        %v3057 = vsel %vm3048, %v3043, %v3045
        %v3058 = vsel %vm3048, %v3045, %v3047
        %v3072 = vsel %vm2417, %v3022, 0
        %v3075 = vsel %vm2417, %v3023, 0
        %3077 = vmatprep.subr.bf16.mxu0 %v3050
        %3078 = vmatpush1.bf16.msra.mxu0 %v3049
        %3079 = vmatprep.subr.bf16.mxu0 %v3055
        %3080 = vmatpush1.bf16.msra.mxu0 %v3054
        %3081 = vmatprep.subr.bf16.mxu0 0
        %3082 = vmatpush1.bf16.msra.mxu0 0
        %3083 = vmatprep.subr.bf16.mxu0 0
        %3084 = vmatpush1.bf16.msra.mxu0 0
        %3085 = vmatprep.subr.bf16.mxu0 0
        %3086 = vmatpush1.bf16.msra.mxu0 0
        %3087 = vmatprep.subr.bf16.mxu0 0
        %3088 = vmatpush1.bf16.msra.mxu0 0
        %3089 = vmatprep.subr.bf16.mxu0 0
        %3090 = vmatpush1.bf16.msra.mxu0 0
        %3091 = vmatprep.subr.bf16.mxu0 0
        %3092 = vmatpush1.bf16.msra.mxu0 0
        %3093 = vmatprep.subr.bf16.mxu0 0
        %3094 = vmatpush1.bf16.msra.mxu0 0
        %3095 = vmatprep.subr.bf16.mxu0 0
        %3096 = vmatpush1.bf16.msra.mxu0 0
        %3097 = vmatprep.subr.bf16.mxu0 0
        %3098 = vmatpush1.bf16.msra.mxu0 0
        %3099 = vmatprep.subr.bf16.mxu0 0
        %3100 = vmatpush1.bf16.msra.mxu0 0
        %3101 = vmatprep.subr.bf16.mxu0 0
        %3102 = vmatpush1.bf16.msra.mxu0 0
        %3103 = vmatprep.subr.bf16.mxu0 0
        %3104 = vmatpush1.bf16.msra.mxu0 0
        %3105 = vmatprep.subr.bf16.mxu0 0
        %3106 = vmatpush1.bf16.msra.mxu0 0
        %3107 = vmatprep.subr.bf16.mxu0 0
        %3108 = vmatpush1.bf16.msra.mxu0 0
        %3109 = vmatprep.mubr.bf16.mxu0 0
        %3110 = vmatmul.mubr.bf16.gmra.mrb[0].mxu0 %v3072
        %v3111 = vpop.f32.mrb[0].mxu0
        %v3112 = vadd.f32 0.0, %v3111
        %v3113 = vpop.f32.mrb[0].mxu0
        %v3114 = vadd.f32 0.0, %v3113
        %v3115 = vpop.f32.mrb[0].mxu0
        %v3116 = vadd.f32 0.0, %v3115
        %v3117 = vpop.f32.mrb[0].mxu0
        %v3118 = vadd.f32 0.0, %v3117
        %3119 = vmatprep.mubr.bf16.mxu0 0
        %3120 = vmatmul.mubr.bf16.gmra.mrb[0].mxu0 %v3075
        %v3121 = vpop.f32.mrb[0].mxu0
        %v3122 = vadd.f32 0.0, %v3121
        %v3123 = vpop.f32.mrb[0].mxu0
        %v3124 = vadd.f32 0.0, %v3123
        %v3125 = vpop.f32.mrb[0].mxu0
        %v3126 = vadd.f32 0.0, %v3125
        %v3127 = vpop.f32.mrb[0].mxu0
        %v3128 = vadd.f32 0.0, %v3127
        %3129 = vdwg.mxu0
        %3130 = vmatprep.subr.bf16.mxu0 %v3052
        %3131 = vmatpush1.bf16.msra.mxu0 %v3051
        %3132 = vmatprep.subr.bf16.mxu0 %v3057
        %3133 = vmatpush1.bf16.msra.mxu0 %v3056
        %3134 = vmatprep.subr.bf16.mxu0 0
        %3135 = vmatpush1.bf16.msra.mxu0 0
        %3136 = vmatprep.subr.bf16.mxu0 0
        %3137 = vmatpush1.bf16.msra.mxu0 0
        %3138 = vmatprep.subr.bf16.mxu0 0
        %3139 = vmatpush1.bf16.msra.mxu0 0
        %3140 = vmatprep.subr.bf16.mxu0 0
        %3141 = vmatpush1.bf16.msra.mxu0 0
        %3142 = vmatprep.subr.bf16.mxu0 0
        %3143 = vmatpush1.bf16.msra.mxu0 0
        %3144 = vmatprep.subr.bf16.mxu0 0
        %3145 = vmatpush1.bf16.msra.mxu0 0
        %3146 = vmatprep.subr.bf16.mxu0 0
        %3147 = vmatpush1.bf16.msra.mxu0 0
        %3148 = vmatprep.subr.bf16.mxu0 0
        %3149 = vmatpush1.bf16.msra.mxu0 0
        %3150 = vmatprep.subr.bf16.mxu0 0
        %3151 = vmatpush1.bf16.msra.mxu0 0
        %3152 = vmatprep.subr.bf16.mxu0 0
        %3153 = vmatpush1.bf16.msra.mxu0 0
        %3154 = vmatprep.subr.bf16.mxu0 0
        %3155 = vmatpush1.bf16.msra.mxu0 0
        %3156 = vmatprep.subr.bf16.mxu0 0
        %3157 = vmatpush1.bf16.msra.mxu0 0
        %3158 = vmatprep.subr.bf16.mxu0 0
        %3159 = vmatpush1.bf16.msra.mxu0 0
        %3160 = vmatprep.subr.bf16.mxu0 0
        %3161 = vmatpush1.bf16.msra.mxu0 0
        %3162 = vmatprep.mubr.bf16.mxu0 0
        %3163 = vmatmul.mubr.bf16.gmra.mrb[0].mxu0 %v3072
        %v3164 = vpop.f32.mrb[0].mxu0
        %v3165 = vadd.f32 0.0, %v3164
        %v3166 = vpop.f32.mrb[0].mxu0
        %v3167 = vadd.f32 0.0, %v3166
        %v3168 = vpop.f32.mrb[0].mxu0
        %v3169 = vadd.f32 0.0, %v3168
        %v3170 = vpop.f32.mrb[0].mxu0
        %v3171 = vadd.f32 0.0, %v3170
        %3172 = vmatprep.mubr.bf16.mxu0 0
        %3173 = vmatmul.mubr.bf16.gmra.mrb[0].mxu0 %v3075
        %v3174 = vpop.f32.mrb[0].mxu0
        %v3175 = vadd.f32 0.0, %v3174
        %v3176 = vpop.f32.mrb[0].mxu0
        %v3177 = vadd.f32 0.0, %v3176
        %v3178 = vpop.f32.mrb[0].mxu0
        %v3179 = vadd.f32 0.0, %v3178
        %v3180 = vpop.f32.mrb[0].mxu0
        %v3181 = vadd.f32 0.0, %v3180
        %3182 = vdwg.mxu0
        %3183 = vmatprep.subr.bf16.mxu0 %v3035
        %3184 = vmatpush1.bf16.msra.mxu0 %v3053
        %3185 = vmatprep.subr.bf16.mxu0 %v3047
        %3186 = vmatpush1.bf16.msra.mxu0 %v3058
        %3187 = vmatprep.subr.bf16.mxu0 0
        %3188 = vmatpush1.bf16.msra.mxu0 0
        %3189 = vmatprep.subr.bf16.mxu0 0
        %3190 = vmatpush1.bf16.msra.mxu0 0
        %3191 = vmatprep.subr.bf16.mxu0 0
        %3192 = vmatpush1.bf16.msra.mxu0 0
        %3193 = vmatprep.subr.bf16.mxu0 0
        %3194 = vmatpush1.bf16.msra.mxu0 0
        %3195 = vmatprep.subr.bf16.mxu0 0
        %3196 = vmatpush1.bf16.msra.mxu0 0
        %3197 = vmatprep.subr.bf16.mxu0 0
        %3198 = vmatpush1.bf16.msra.mxu0 0
        %3199 = vmatprep.subr.bf16.mxu0 0
        %3200 = vmatpush1.bf16.msra.mxu0 0
        %3201 = vmatprep.subr.bf16.mxu0 0
        %3202 = vmatpush1.bf16.msra.mxu0 0
        %3203 = vmatprep.subr.bf16.mxu0 0
        %3204 = vmatpush1.bf16.msra.mxu0 0
        %3205 = vmatprep.subr.bf16.mxu0 0
        %3206 = vmatpush1.bf16.msra.mxu0 0
        %3207 = vmatprep.subr.bf16.mxu0 0
        %3208 = vmatpush1.bf16.msra.mxu0 0
        %3209 = vmatprep.subr.bf16.mxu0 0
        %3210 = vmatpush1.bf16.msra.mxu0 0
        %3211 = vmatprep.subr.bf16.mxu0 0
        %3212 = vmatpush1.bf16.msra.mxu0 0
        %3213 = vmatprep.subr.bf16.mxu0 0
        %3214 = vmatpush1.bf16.msra.mxu0 0
        %3215 = vmatprep.mubr.bf16.mxu0 0
        %3216 = vmatmul.mubr.bf16.gmra.mrb[0].mxu0 %v3072
        %v3217 = vpop.f32.mrb[0].mxu0
        %v3218 = vadd.f32 0.0, %v3217
        %v3219 = vpop.f32.mrb[0].mxu0
        %v3220 = vadd.f32 0.0, %v3219
        %v3221 = vpop.f32.mrb[0].mxu0
        %v3222 = vadd.f32 0.0, %v3221
        %v3223 = vpop.f32.mrb[0].mxu0
        %v3224 = vadd.f32 0.0, %v3223
        %3225 = vmatprep.mubr.bf16.mxu0 0
        %3226 = vmatmul.mubr.bf16.gmra.mrb[0].mxu0 %v3075
        %v3227 = vpop.f32.mrb[0].mxu0
        %v3228 = vadd.f32 0.0, %v3227
        %v3229 = vpop.f32.mrb[0].mxu0
        %v3230 = vadd.f32 0.0, %v3229
        %v3231 = vpop.f32.mrb[0].mxu0
        %v3232 = vadd.f32 0.0, %v3231
        %v3233 = vpop.f32.mrb[0].mxu0
        %v3234 = vadd.f32 0.0, %v3233
        %3235 = vdwg.mxu0
        %v3236 = vadd.f32 %v2985, %v3112
        %v3237 = vadd.f32 %v2986, %v3114
        %v3238 = vadd.f32 %v2987, %v3165
        %v3239 = vadd.f32 %v2988, %v3167
        %v3240 = vadd.f32 %v2989, %v3218
        %v3241 = vadd.f32 %v2990, %v3220
        %v3242 = vadd.f32 %v2991, %v3116
        %v3243 = vadd.f32 %v2992, %v3118
        %v3244 = vadd.f32 %v2993, %v3169
        %v3245 = vadd.f32 %v2994, %v3171
        %v3246 = vadd.f32 %v2995, %v3222
        %v3247 = vadd.f32 %v2996, %v3224
        %v3248 = vadd.f32 %v2997, %v3122
        %v3249 = vadd.f32 %v2998, %v3124
        %v3250 = vadd.f32 %v2999, %v3175
        %v3251 = vadd.f32 %v3000, %v3177
        %v3252 = vadd.f32 %v3001, %v3228
        %v3253 = vadd.f32 %v3002, %v3230
        %v3254 = vadd.f32 %v3003, %v3126
        %v3255 = vadd.f32 %v3004, %v3128
        %v3256 = vadd.f32 %v3005, %v3179
        %v3257 = vadd.f32 %v3006, %v3181
        %v3258 = vadd.f32 %v3007, %v3232
        %v3259 = vadd.f32 %v3008, %v3234
        %s3260 = scalar_lea.vmem [#allocation7], 64
        %v3261 = vld [vmem:[%s3260] sm:$0xf]
        %v3262 = vld [vmem:[%s3260 + $0x4] sm:$0xf]
        %v3263 = vld [vmem:[%s3260 + $0x8] sm:$0xf]
        %v3264 = vld [vmem:[%s3260 + $0xc] sm:$0xf]
        %v3269 = vunpack.c.l.b16 %v3261
        %v3270 = vunpack.c.l.b16 %v3262
        %v3271 = vunpack.c.l.b16 %v3263
        %v3272 = vunpack.c.l.b16 %v3264
        %v3273 = vpack.c.b16 %v3270, %v3269
        %v3274 = vpack.c.b16 %v3272, %v3271
        %3275 = vrot.lane.b32.xlu0 %v2331, 99
        %v3276 = vpop.permute.xlu0 %3275
        %3277 = vrot.lane.b32.xlu0 %v2332, 99
        %v3278 = vpop.permute.xlu0 %3277
        %3279 = vrot.lane.b32.xlu0 %v2333, 99
        %v3280 = vpop.permute.xlu0 %3279
        %3281 = vrot.lane.b32.xlu0 %v2334, 99
        %v3282 = vpop.permute.xlu0 %3281
        %3283 = vrot.lane.b32.xlu0 %v2335, 99
        %v3284 = vpop.permute.xlu0 %3283
        %3285 = vrot.lane.b32.xlu0 %v2336, 99
        %v3286 = vpop.permute.xlu0 %3285
        %3287 = vrot.lane.b32.xlu0 %v2337, 99
        %v3288 = vpop.permute.xlu0 %3287
        %3289 = vrot.lane.b32.xlu0 %v2338, 99
        %v3290 = vpop.permute.xlu0 %3289
        %3291 = vrot.lane.b32.xlu0 %v2339, 99
        %v3292 = vpop.permute.xlu0 %3291
        %3293 = vrot.lane.b32.xlu0 %v2340, 99
        %v3294 = vpop.permute.xlu0 %3293
        %3295 = vrot.lane.b32.xlu0 %v2341, 99
        %v3296 = vpop.permute.xlu0 %3295
        %3297 = vrot.lane.b32.xlu0 %v2342, 99
        %v3298 = vpop.permute.xlu0 %3297
        %vm3299 = vcmask 809984
        %v3300 = vsel %vm3299, %v3276, %v3278
        %v3301 = vsel %vm3299, %v3278, %v3280
        %v3302 = vsel %vm3299, %v3280, %v3282
        %v3303 = vsel %vm3299, %v3282, %v3284
        %v3304 = vsel %vm3299, %v3284, %v3286
        %v3305 = vsel %vm3299, %v3288, %v3290
        %v3306 = vsel %vm3299, %v3290, %v3292
        %v3307 = vsel %vm3299, %v3292, %v3294
        %v3308 = vsel %vm3299, %v3294, %v3296
        %v3309 = vsel %vm3299, %v3296, %v3298
        %v3323 = vsel %vm2417, %v3273, 0
        %v3326 = vsel %vm2417, %v3274, 0
        %3328 = vmatprep.subr.bf16.mxu0 %v3301
        %3329 = vmatpush1.bf16.msra.mxu0 %v3300
        %3330 = vmatprep.subr.bf16.mxu0 %v3306
        %3331 = vmatpush1.bf16.msra.mxu0 %v3305
        %3332 = vmatprep.subr.bf16.mxu0 0
        %3333 = vmatpush1.bf16.msra.mxu0 0
        %3334 = vmatprep.subr.bf16.mxu0 0
        %3335 = vmatpush1.bf16.msra.mxu0 0
        %3336 = vmatprep.subr.bf16.mxu0 0
        %3337 = vmatpush1.bf16.msra.mxu0 0
        %3338 = vmatprep.subr.bf16.mxu0 0
        %3339 = vmatpush1.bf16.msra.mxu0 0
        %3340 = vmatprep.subr.bf16.mxu0 0
        %3341 = vmatpush1.bf16.msra.mxu0 0
        %3342 = vmatprep.subr.bf16.mxu0 0
        %3343 = vmatpush1.bf16.msra.mxu0 0
        %3344 = vmatprep.subr.bf16.mxu0 0
        %3345 = vmatpush1.bf16.msra.mxu0 0
        %3346 = vmatprep.subr.bf16.mxu0 0
        %3347 = vmatpush1.bf16.msra.mxu0 0
        %3348 = vmatprep.subr.bf16.mxu0 0
        %3349 = vmatpush1.bf16.msra.mxu0 0
        %3350 = vmatprep.subr.bf16.mxu0 0
        %3351 = vmatpush1.bf16.msra.mxu0 0
        %3352 = vmatprep.subr.bf16.mxu0 0
        %3353 = vmatpush1.bf16.msra.mxu0 0
        %3354 = vmatprep.subr.bf16.mxu0 0
        %3355 = vmatpush1.bf16.msra.mxu0 0
        %3356 = vmatprep.subr.bf16.mxu0 0
        %3357 = vmatpush1.bf16.msra.mxu0 0
        %3358 = vmatprep.subr.bf16.mxu0 0
        %3359 = vmatpush1.bf16.msra.mxu0 0
        %3360 = vmatprep.mubr.bf16.mxu0 0
        %3361 = vmatmul.mubr.bf16.gmra.mrb[0].mxu0 %v3323
        %v3362 = vpop.f32.mrb[0].mxu0
        %v3363 = vadd.f32 0.0, %v3362
        %v3364 = vpop.f32.mrb[0].mxu0
        %v3365 = vadd.f32 0.0, %v3364
        %v3366 = vpop.f32.mrb[0].mxu0
        %v3367 = vadd.f32 0.0, %v3366
        %v3368 = vpop.f32.mrb[0].mxu0
        %v3369 = vadd.f32 0.0, %v3368
        %3370 = vmatprep.mubr.bf16.mxu0 0
        %3371 = vmatmul.mubr.bf16.gmra.mrb[0].mxu0 %v3326
        %v3372 = vpop.f32.mrb[0].mxu0
        %v3373 = vadd.f32 0.0, %v3372
        %v3374 = vpop.f32.mrb[0].mxu0
        %v3375 = vadd.f32 0.0, %v3374
        %v3376 = vpop.f32.mrb[0].mxu0
        %v3377 = vadd.f32 0.0, %v3376
        %v3378 = vpop.f32.mrb[0].mxu0
        %v3379 = vadd.f32 0.0, %v3378
        %3380 = vdwg.mxu0
        %3381 = vmatprep.subr.bf16.mxu0 %v3303
        %3382 = vmatpush1.bf16.msra.mxu0 %v3302
        %3383 = vmatprep.subr.bf16.mxu0 %v3308
        %3384 = vmatpush1.bf16.msra.mxu0 %v3307
        %3385 = vmatprep.subr.bf16.mxu0 0
        %3386 = vmatpush1.bf16.msra.mxu0 0
        %3387 = vmatprep.subr.bf16.mxu0 0
        %3388 = vmatpush1.bf16.msra.mxu0 0
        %3389 = vmatprep.subr.bf16.mxu0 0
        %3390 = vmatpush1.bf16.msra.mxu0 0
        %3391 = vmatprep.subr.bf16.mxu0 0
        %3392 = vmatpush1.bf16.msra.mxu0 0
        %3393 = vmatprep.subr.bf16.mxu0 0
        %3394 = vmatpush1.bf16.msra.mxu0 0
        %3395 = vmatprep.subr.bf16.mxu0 0
        %3396 = vmatpush1.bf16.msra.mxu0 0
        %3397 = vmatprep.subr.bf16.mxu0 0
        %3398 = vmatpush1.bf16.msra.mxu0 0
        %3399 = vmatprep.subr.bf16.mxu0 0
        %3400 = vmatpush1.bf16.msra.mxu0 0
        %3401 = vmatprep.subr.bf16.mxu0 0
        %3402 = vmatpush1.bf16.msra.mxu0 0
        %3403 = vmatprep.subr.bf16.mxu0 0
        %3404 = vmatpush1.bf16.msra.mxu0 0
        %3405 = vmatprep.subr.bf16.mxu0 0
        %3406 = vmatpush1.bf16.msra.mxu0 0
        %3407 = vmatprep.subr.bf16.mxu0 0
        %3408 = vmatpush1.bf16.msra.mxu0 0
        %3409 = vmatprep.subr.bf16.mxu0 0
        %3410 = vmatpush1.bf16.msra.mxu0 0
        %3411 = vmatprep.subr.bf16.mxu0 0
        %3412 = vmatpush1.bf16.msra.mxu0 0
        %3413 = vmatprep.mubr.bf16.mxu0 0
        %3414 = vmatmul.mubr.bf16.gmra.mrb[0].mxu0 %v3323
        %v3415 = vpop.f32.mrb[0].mxu0
        %v3416 = vadd.f32 0.0, %v3415
        %v3417 = vpop.f32.mrb[0].mxu0
        %v3418 = vadd.f32 0.0, %v3417
        %v3419 = vpop.f32.mrb[0].mxu0
        %v3420 = vadd.f32 0.0, %v3419
        %v3421 = vpop.f32.mrb[0].mxu0
        %v3422 = vadd.f32 0.0, %v3421
        %3423 = vmatprep.mubr.bf16.mxu0 0
        %3424 = vmatmul.mubr.bf16.gmra.mrb[0].mxu0 %v3326
        %v3425 = vpop.f32.mrb[0].mxu0
        %v3426 = vadd.f32 0.0, %v3425
        %v3427 = vpop.f32.mrb[0].mxu0
        %v3428 = vadd.f32 0.0, %v3427
        %v3429 = vpop.f32.mrb[0].mxu0
        %v3430 = vadd.f32 0.0, %v3429
        %v3431 = vpop.f32.mrb[0].mxu0
        %v3432 = vadd.f32 0.0, %v3431
        %3433 = vdwg.mxu0
        %3434 = vmatprep.subr.bf16.mxu0 %v3286
        %3435 = vmatpush1.bf16.msra.mxu0 %v3304
        %3436 = vmatprep.subr.bf16.mxu0 %v3298
        %3437 = vmatpush1.bf16.msra.mxu0 %v3309
        %3438 = vmatprep.subr.bf16.mxu0 0
        %3439 = vmatpush1.bf16.msra.mxu0 0
        %3440 = vmatprep.subr.bf16.mxu0 0
        %3441 = vmatpush1.bf16.msra.mxu0 0
        %3442 = vmatprep.subr.bf16.mxu0 0
        %3443 = vmatpush1.bf16.msra.mxu0 0
        %3444 = vmatprep.subr.bf16.mxu0 0
        %3445 = vmatpush1.bf16.msra.mxu0 0
        %3446 = vmatprep.subr.bf16.mxu0 0
        %3447 = vmatpush1.bf16.msra.mxu0 0
        %3448 = vmatprep.subr.bf16.mxu0 0
        %3449 = vmatpush1.bf16.msra.mxu0 0
        %3450 = vmatprep.subr.bf16.mxu0 0
        %3451 = vmatpush1.bf16.msra.mxu0 0
        %3452 = vmatprep.subr.bf16.mxu0 0
        %3453 = vmatpush1.bf16.msra.mxu0 0
        %3454 = vmatprep.subr.bf16.mxu0 0
        %3455 = vmatpush1.bf16.msra.mxu0 0
        %3456 = vmatprep.subr.bf16.mxu0 0
        %3457 = vmatpush1.bf16.msra.mxu0 0
        %3458 = vmatprep.subr.bf16.mxu0 0
        %3459 = vmatpush1.bf16.msra.mxu0 0
        %3460 = vmatprep.subr.bf16.mxu0 0
        %3461 = vmatpush1.bf16.msra.mxu0 0
        %3462 = vmatprep.subr.bf16.mxu0 0
        %3463 = vmatpush1.bf16.msra.mxu0 0
        %3464 = vmatprep.subr.bf16.mxu0 0
        %3465 = vmatpush1.bf16.msra.mxu0 0
        %3466 = vmatprep.mubr.bf16.mxu0 0
        %3467 = vmatmul.mubr.bf16.gmra.mrb[0].mxu0 %v3323
        %v3468 = vpop.f32.mrb[0].mxu0
        %v3469 = vadd.f32 0.0, %v3468
        %v3470 = vpop.f32.mrb[0].mxu0
        %v3471 = vadd.f32 0.0, %v3470
        %v3472 = vpop.f32.mrb[0].mxu0
        %v3473 = vadd.f32 0.0, %v3472
        %v3474 = vpop.f32.mrb[0].mxu0
        %v3475 = vadd.f32 0.0, %v3474
        %3476 = vmatprep.mubr.bf16.mxu0 0
        %3477 = vmatmul.mubr.bf16.gmra.mrb[0].mxu0 %v3326
        %v3478 = vpop.f32.mrb[0].mxu0
        %v3479 = vadd.f32 0.0, %v3478
        %v3480 = vpop.f32.mrb[0].mxu0
        %v3481 = vadd.f32 0.0, %v3480
        %v3482 = vpop.f32.mrb[0].mxu0
        %v3483 = vadd.f32 0.0, %v3482
        %v3484 = vpop.f32.mrb[0].mxu0
        %v3485 = vadd.f32 0.0, %v3484
        %3486 = vdwg.mxu0
        %v3487 = vadd.f32 %v3236, %v3363
        %v3488 = vadd.f32 %v3237, %v3365
        %v3489 = vadd.f32 %v3238, %v3416
        %v3490 = vadd.f32 %v3239, %v3418
        %v3491 = vadd.f32 %v3240, %v3469
        %v3492 = vadd.f32 %v3241, %v3471
        %v3493 = vadd.f32 %v3242, %v3367
        %v3494 = vadd.f32 %v3243, %v3369
        %v3495 = vadd.f32 %v3244, %v3420
        %v3496 = vadd.f32 %v3245, %v3422
        %v3497 = vadd.f32 %v3246, %v3473
        %v3498 = vadd.f32 %v3247, %v3475
        %v3499 = vadd.f32 %v3248, %v3373
        %v3500 = vadd.f32 %v3249, %v3375
        %v3501 = vadd.f32 %v3250, %v3426
        %v3502 = vadd.f32 %v3251, %v3428
        %v3503 = vadd.f32 %v3252, %v3479
        %v3504 = vadd.f32 %v3253, %v3481
        %v3505 = vadd.f32 %v3254, %v3377
        %v3506 = vadd.f32 %v3255, %v3379
        %v3507 = vadd.f32 %v3256, %v3430
        %v3508 = vadd.f32 %v3257, %v3432
        %v3509 = vadd.f32 %v3258, %v3483
        %v3510 = vadd.f32 %v3259, %v3485
        %s3511 = scalar_lea.vmem [#allocation7], 80
        %v3512 = vld [vmem:[%s3511] sm:$0xf]
        %v3513 = vld [vmem:[%s3511 + $0x4] sm:$0xf]
        %v3514 = vld [vmem:[%s3511 + $0x8] sm:$0xf]
        %v3515 = vld [vmem:[%s3511 + $0xc] sm:$0xf]
        %v3520 = vunpack.c.l.b16 %v3512
        %v3521 = vunpack.c.l.b16 %v3513
        %v3522 = vunpack.c.l.b16 %v3514
        %v3523 = vunpack.c.l.b16 %v3515
        %v3524 = vpack.c.b16 %v3521, %v3520
        %v3525 = vpack.c.b16 %v3523, %v3522
        %3526 = vrot.lane.b32.xlu0 %v2331, 98
        %v3527 = vpop.permute.xlu0 %3526
        %3528 = vrot.lane.b32.xlu0 %v2332, 98
        %v3529 = vpop.permute.xlu0 %3528
        %3530 = vrot.lane.b32.xlu0 %v2333, 98
        %v3531 = vpop.permute.xlu0 %3530
        %3532 = vrot.lane.b32.xlu0 %v2334, 98
        %v3533 = vpop.permute.xlu0 %3532
        %3534 = vrot.lane.b32.xlu0 %v2335, 98
        %v3535 = vpop.permute.xlu0 %3534
        %3536 = vrot.lane.b32.xlu0 %v2336, 98
        %v3537 = vpop.permute.xlu0 %3536
        %3538 = vrot.lane.b32.xlu0 %v2337, 98
        %v3539 = vpop.permute.xlu0 %3538
        %3540 = vrot.lane.b32.xlu0 %v2338, 98
        %v3541 = vpop.permute.xlu0 %3540
        %3542 = vrot.lane.b32.xlu0 %v2339, 98
        %v3543 = vpop.permute.xlu0 %3542
        %3544 = vrot.lane.b32.xlu0 %v2340, 98
        %v3545 = vpop.permute.xlu0 %3544
        %3546 = vrot.lane.b32.xlu0 %v2341, 98
        %v3547 = vpop.permute.xlu0 %3546
        %3548 = vrot.lane.b32.xlu0 %v2342, 98
        %v3549 = vpop.permute.xlu0 %3548
        %vm3550 = vcmask 801792
        %v3551 = vsel %vm3550, %v3527, %v3529
        %v3552 = vsel %vm3550, %v3529, %v3531
        %v3553 = vsel %vm3550, %v3531, %v3533
        %v3554 = vsel %vm3550, %v3533, %v3535
        %v3555 = vsel %vm3550, %v3535, %v3537
        %v3556 = vsel %vm3550, %v3539, %v3541
        %v3557 = vsel %vm3550, %v3541, %v3543
        %v3558 = vsel %vm3550, %v3543, %v3545
        %v3559 = vsel %vm3550, %v3545, %v3547
        %v3560 = vsel %vm3550, %v3547, %v3549
        %v3574 = vsel %vm2417, %v3524, 0
        %v3577 = vsel %vm2417, %v3525, 0
        %3579 = vmatprep.subr.bf16.mxu0 %v3552
        %3580 = vmatpush1.bf16.msra.mxu0 %v3551
        %3581 = vmatprep.subr.bf16.mxu0 %v3557
        %3582 = vmatpush1.bf16.msra.mxu0 %v3556
        %3583 = vmatprep.subr.bf16.mxu0 0
        %3584 = vmatpush1.bf16.msra.mxu0 0
        %3585 = vmatprep.subr.bf16.mxu0 0
        %3586 = vmatpush1.bf16.msra.mxu0 0
        %3587 = vmatprep.subr.bf16.mxu0 0
        %3588 = vmatpush1.bf16.msra.mxu0 0
        %3589 = vmatprep.subr.bf16.mxu0 0
        %3590 = vmatpush1.bf16.msra.mxu0 0
        %3591 = vmatprep.subr.bf16.mxu0 0
        %3592 = vmatpush1.bf16.msra.mxu0 0
        %3593 = vmatprep.subr.bf16.mxu0 0
        %3594 = vmatpush1.bf16.msra.mxu0 0
        %3595 = vmatprep.subr.bf16.mxu0 0
        %3596 = vmatpush1.bf16.msra.mxu0 0
        %3597 = vmatprep.subr.bf16.mxu0 0
        %3598 = vmatpush1.bf16.msra.mxu0 0
        %3599 = vmatprep.subr.bf16.mxu0 0
        %3600 = vmatpush1.bf16.msra.mxu0 0
        %3601 = vmatprep.subr.bf16.mxu0 0
        %3602 = vmatpush1.bf16.msra.mxu0 0
        %3603 = vmatprep.subr.bf16.mxu0 0
        %3604 = vmatpush1.bf16.msra.mxu0 0
        %3605 = vmatprep.subr.bf16.mxu0 0
        %3606 = vmatpush1.bf16.msra.mxu0 0
        %3607 = vmatprep.subr.bf16.mxu0 0
        %3608 = vmatpush1.bf16.msra.mxu0 0
        %3609 = vmatprep.subr.bf16.mxu0 0
        %3610 = vmatpush1.bf16.msra.mxu0 0
        %3611 = vmatprep.mubr.bf16.mxu0 0
        %3612 = vmatmul.mubr.bf16.gmra.mrb[0].mxu0 %v3574
        %v3613 = vpop.f32.mrb[0].mxu0
        %v3614 = vadd.f32 0.0, %v3613
        %v3615 = vpop.f32.mrb[0].mxu0
        %v3616 = vadd.f32 0.0, %v3615
        %v3617 = vpop.f32.mrb[0].mxu0
        %v3618 = vadd.f32 0.0, %v3617
        %v3619 = vpop.f32.mrb[0].mxu0
        %v3620 = vadd.f32 0.0, %v3619
        %3621 = vmatprep.mubr.bf16.mxu0 0
        %3622 = vmatmul.mubr.bf16.gmra.mrb[0].mxu0 %v3577
        %v3623 = vpop.f32.mrb[0].mxu0
        %v3624 = vadd.f32 0.0, %v3623
        %v3625 = vpop.f32.mrb[0].mxu0
        %v3626 = vadd.f32 0.0, %v3625
        %v3627 = vpop.f32.mrb[0].mxu0
        %v3628 = vadd.f32 0.0, %v3627
        %v3629 = vpop.f32.mrb[0].mxu0
        %v3630 = vadd.f32 0.0, %v3629
        %3631 = vdwg.mxu0
        %3632 = vmatprep.subr.bf16.mxu0 %v3554
        %3633 = vmatpush1.bf16.msra.mxu0 %v3553
        %3634 = vmatprep.subr.bf16.mxu0 %v3559
        %3635 = vmatpush1.bf16.msra.mxu0 %v3558
        %3636 = vmatprep.subr.bf16.mxu0 0
        %3637 = vmatpush1.bf16.msra.mxu0 0
        %3638 = vmatprep.subr.bf16.mxu0 0
        %3639 = vmatpush1.bf16.msra.mxu0 0
        %3640 = vmatprep.subr.bf16.mxu0 0
        %3641 = vmatpush1.bf16.msra.mxu0 0
        %3642 = vmatprep.subr.bf16.mxu0 0
        %3643 = vmatpush1.bf16.msra.mxu0 0
        %3644 = vmatprep.subr.bf16.mxu0 0
        %3645 = vmatpush1.bf16.msra.mxu0 0
        %3646 = vmatprep.subr.bf16.mxu0 0
        %3647 = vmatpush1.bf16.msra.mxu0 0
        %3648 = vmatprep.subr.bf16.mxu0 0
        %3649 = vmatpush1.bf16.msra.mxu0 0
        %3650 = vmatprep.subr.bf16.mxu0 0
        %3651 = vmatpush1.bf16.msra.mxu0 0
        %3652 = vmatprep.subr.bf16.mxu0 0
        %3653 = vmatpush1.bf16.msra.mxu0 0
        %3654 = vmatprep.subr.bf16.mxu0 0
        %3655 = vmatpush1.bf16.msra.mxu0 0
        %3656 = vmatprep.subr.bf16.mxu0 0
        %3657 = vmatpush1.bf16.msra.mxu0 0
        %3658 = vmatprep.subr.bf16.mxu0 0
        %3659 = vmatpush1.bf16.msra.mxu0 0
        %3660 = vmatprep.subr.bf16.mxu0 0
        %3661 = vmatpush1.bf16.msra.mxu0 0
        %3662 = vmatprep.subr.bf16.mxu0 0
        %3663 = vmatpush1.bf16.msra.mxu0 0
        %3664 = vmatprep.mubr.bf16.mxu0 0
        %3665 = vmatmul.mubr.bf16.gmra.mrb[0].mxu0 %v3574
        %v3666 = vpop.f32.mrb[0].mxu0
        %v3667 = vadd.f32 0.0, %v3666
        %v3668 = vpop.f32.mrb[0].mxu0
        %v3669 = vadd.f32 0.0, %v3668
        %v3670 = vpop.f32.mrb[0].mxu0
        %v3671 = vadd.f32 0.0, %v3670
        %v3672 = vpop.f32.mrb[0].mxu0
        %v3673 = vadd.f32 0.0, %v3672
        %3674 = vmatprep.mubr.bf16.mxu0 0
        %3675 = vmatmul.mubr.bf16.gmra.mrb[0].mxu0 %v3577
        %v3676 = vpop.f32.mrb[0].mxu0
        %v3677 = vadd.f32 0.0, %v3676
        %v3678 = vpop.f32.mrb[0].mxu0
        %v3679 = vadd.f32 0.0, %v3678
        %v3680 = vpop.f32.mrb[0].mxu0
        %v3681 = vadd.f32 0.0, %v3680
        %v3682 = vpop.f32.mrb[0].mxu0
        %v3683 = vadd.f32 0.0, %v3682
        %3684 = vdwg.mxu0
        %3685 = vmatprep.subr.bf16.mxu0 %v3537
        %3686 = vmatpush1.bf16.msra.mxu0 %v3555
        %3687 = vmatprep.subr.bf16.mxu0 %v3549
        %3688 = vmatpush1.bf16.msra.mxu0 %v3560
        %3689 = vmatprep.subr.bf16.mxu0 0
        %3690 = vmatpush1.bf16.msra.mxu0 0
        %3691 = vmatprep.subr.bf16.mxu0 0
        %3692 = vmatpush1.bf16.msra.mxu0 0
        %3693 = vmatprep.subr.bf16.mxu0 0
        %3694 = vmatpush1.bf16.msra.mxu0 0
        %3695 = vmatprep.subr.bf16.mxu0 0
        %3696 = vmatpush1.bf16.msra.mxu0 0
        %3697 = vmatprep.subr.bf16.mxu0 0
        %3698 = vmatpush1.bf16.msra.mxu0 0
        %3699 = vmatprep.subr.bf16.mxu0 0
        %3700 = vmatpush1.bf16.msra.mxu0 0
        %3701 = vmatprep.subr.bf16.mxu0 0
        %3702 = vmatpush1.bf16.msra.mxu0 0
        %3703 = vmatprep.subr.bf16.mxu0 0
        %3704 = vmatpush1.bf16.msra.mxu0 0
        %3705 = vmatprep.subr.bf16.mxu0 0
        %3706 = vmatpush1.bf16.msra.mxu0 0
        %3707 = vmatprep.subr.bf16.mxu0 0
        %3708 = vmatpush1.bf16.msra.mxu0 0
        %3709 = vmatprep.subr.bf16.mxu0 0
        %3710 = vmatpush1.bf16.msra.mxu0 0
        %3711 = vmatprep.subr.bf16.mxu0 0
        %3712 = vmatpush1.bf16.msra.mxu0 0
        %3713 = vmatprep.subr.bf16.mxu0 0
        %3714 = vmatpush1.bf16.msra.mxu0 0
        %3715 = vmatprep.subr.bf16.mxu0 0
        %3716 = vmatpush1.bf16.msra.mxu0 0
        %3717 = vmatprep.mubr.bf16.mxu0 0
        %3718 = vmatmul.mubr.bf16.gmra.mrb[0].mxu0 %v3574
        %v3719 = vpop.f32.mrb[0].mxu0
        %v3720 = vadd.f32 0.0, %v3719
        %v3721 = vpop.f32.mrb[0].mxu0
        %v3722 = vadd.f32 0.0, %v3721
        %v3723 = vpop.f32.mrb[0].mxu0
        %v3724 = vadd.f32 0.0, %v3723
        %v3725 = vpop.f32.mrb[0].mxu0
        %v3726 = vadd.f32 0.0, %v3725
        %3727 = vmatprep.mubr.bf16.mxu0 0
        %3728 = vmatmul.mubr.bf16.gmra.mrb[0].mxu0 %v3577
        %v3729 = vpop.f32.mrb[0].mxu0
        %v3730 = vadd.f32 0.0, %v3729
        %v3731 = vpop.f32.mrb[0].mxu0
        %v3732 = vadd.f32 0.0, %v3731
        %v3733 = vpop.f32.mrb[0].mxu0
        %v3734 = vadd.f32 0.0, %v3733
        %v3735 = vpop.f32.mrb[0].mxu0
        %v3736 = vadd.f32 0.0, %v3735
        %3737 = vdwg.mxu0
        %v3738 = vadd.f32 %v3487, %v3614
        %v3739 = vadd.f32 %v3488, %v3616
        %v3740 = vadd.f32 %v3489, %v3667
        %v3741 = vadd.f32 %v3490, %v3669
        %v3742 = vadd.f32 %v3491, %v3720
        %v3743 = vadd.f32 %v3492, %v3722
        %v3744 = vadd.f32 %v3493, %v3618
        %v3745 = vadd.f32 %v3494, %v3620
        %v3746 = vadd.f32 %v3495, %v3671
        %v3747 = vadd.f32 %v3496, %v3673
        %v3748 = vadd.f32 %v3497, %v3724
        %v3749 = vadd.f32 %v3498, %v3726
        %v3750 = vadd.f32 %v3499, %v3624
        %v3751 = vadd.f32 %v3500, %v3626
        %v3752 = vadd.f32 %v3501, %v3677
        %v3753 = vadd.f32 %v3502, %v3679
        %v3754 = vadd.f32 %v3503, %v3730
        %v3755 = vadd.f32 %v3504, %v3732
        %v3756 = vadd.f32 %v3505, %v3628
        %v3757 = vadd.f32 %v3506, %v3630
        %v3758 = vadd.f32 %v3507, %v3681
        %v3759 = vadd.f32 %v3508, %v3683
        %v3760 = vadd.f32 %v3509, %v3734
        %v3761 = vadd.f32 %v3510, %v3736
        %s3762 = scalar_lea.vmem [#allocation7], 96
        %v3763 = vld [vmem:[%s3762] sm:$0xf]
        %v3764 = vld [vmem:[%s3762 + $0x4] sm:$0xf]
        %v3765 = vld [vmem:[%s3762 + $0x8] sm:$0xf]
        %v3766 = vld [vmem:[%s3762 + $0xc] sm:$0xf]
        %v3771 = vunpack.c.l.b16 %v3763
        %v3772 = vunpack.c.l.b16 %v3764
        %v3773 = vunpack.c.l.b16 %v3765
        %v3774 = vunpack.c.l.b16 %v3766
        %v3775 = vpack.c.b16 %v3772, %v3771
        %v3776 = vpack.c.b16 %v3774, %v3773
        %3777 = vrot.lane.b32.xlu0 %v2331, 72
        %v3778 = vpop.permute.xlu0 %3777
        %3779 = vrot.lane.b32.xlu0 %v2332, 72
        %v3780 = vpop.permute.xlu0 %3779
        %3781 = vrot.lane.b32.xlu0 %v2333, 72
        %v3782 = vpop.permute.xlu0 %3781
        %3783 = vrot.lane.b32.xlu0 %v2334, 72
        %v3784 = vpop.permute.xlu0 %3783
        %3785 = vrot.lane.b32.xlu0 %v2335, 72
        %v3786 = vpop.permute.xlu0 %3785
        %3787 = vrot.lane.b32.xlu0 %v2336, 72
        %v3788 = vpop.permute.xlu0 %3787
        %3789 = vrot.lane.b32.xlu0 %v2337, 72
        %v3790 = vpop.permute.xlu0 %3789
        %3791 = vrot.lane.b32.xlu0 %v2338, 72
        %v3792 = vpop.permute.xlu0 %3791
        %3793 = vrot.lane.b32.xlu0 %v2339, 72
        %v3794 = vpop.permute.xlu0 %3793
        %3795 = vrot.lane.b32.xlu0 %v2340, 72
        %v3796 = vpop.permute.xlu0 %3795
        %3797 = vrot.lane.b32.xlu0 %v2341, 72
        %v3798 = vpop.permute.xlu0 %3797
        %3799 = vrot.lane.b32.xlu0 %v2342, 72
        %v3800 = vpop.permute.xlu0 %3799
        %vm3801 = vcmask 588800
        %v3802 = vsel %vm3801, %v3778, %v3780
        %v3803 = vsel %vm3801, %v3780, %v3782
        %v3804 = vsel %vm3801, %v3782, %v3784
        %v3805 = vsel %vm3801, %v3784, %v3786
        %v3806 = vsel %vm3801, %v3786, %v3788
        %v3807 = vsel %vm3801, %v3790, %v3792
        %v3808 = vsel %vm3801, %v3792, %v3794
        %v3809 = vsel %vm3801, %v3794, %v3796
        %v3810 = vsel %vm3801, %v3796, %v3798
        %v3811 = vsel %vm3801, %v3798, %v3800
        %v3825 = vsel %vm2417, %v3775, 0
        %v3828 = vsel %vm2417, %v3776, 0
        %3830 = vmatprep.subr.bf16.mxu0 %v3803
        %3831 = vmatpush1.bf16.msra.mxu0 %v3802
        %3832 = vmatprep.subr.bf16.mxu0 %v3808
        %3833 = vmatpush1.bf16.msra.mxu0 %v3807
        %3834 = vmatprep.subr.bf16.mxu0 0
        %3835 = vmatpush1.bf16.msra.mxu0 0
        %3836 = vmatprep.subr.bf16.mxu0 0
        %3837 = vmatpush1.bf16.msra.mxu0 0
        %3838 = vmatprep.subr.bf16.mxu0 0
        %3839 = vmatpush1.bf16.msra.mxu0 0
        %3840 = vmatprep.subr.bf16.mxu0 0
        %3841 = vmatpush1.bf16.msra.mxu0 0
        %3842 = vmatprep.subr.bf16.mxu0 0
        %3843 = vmatpush1.bf16.msra.mxu0 0
        %3844 = vmatprep.subr.bf16.mxu0 0
        %3845 = vmatpush1.bf16.msra.mxu0 0
        %3846 = vmatprep.subr.bf16.mxu0 0
        %3847 = vmatpush1.bf16.msra.mxu0 0
        %3848 = vmatprep.subr.bf16.mxu0 0
        %3849 = vmatpush1.bf16.msra.mxu0 0
        %3850 = vmatprep.subr.bf16.mxu0 0
        %3851 = vmatpush1.bf16.msra.mxu0 0
        %3852 = vmatprep.subr.bf16.mxu0 0
        %3853 = vmatpush1.bf16.msra.mxu0 0
        %3854 = vmatprep.subr.bf16.mxu0 0
        %3855 = vmatpush1.bf16.msra.mxu0 0
        %3856 = vmatprep.subr.bf16.mxu0 0
        %3857 = vmatpush1.bf16.msra.mxu0 0
        %3858 = vmatprep.subr.bf16.mxu0 0
        %3859 = vmatpush1.bf16.msra.mxu0 0
        %3860 = vmatprep.subr.bf16.mxu0 0
        %3861 = vmatpush1.bf16.msra.mxu0 0
        %3862 = vmatprep.mubr.bf16.mxu0 0
        %3863 = vmatmul.mubr.bf16.gmra.mrb[0].mxu0 %v3825
        %v3864 = vpop.f32.mrb[0].mxu0
        %v3865 = vadd.f32 0.0, %v3864
        %v3866 = vpop.f32.mrb[0].mxu0
        %v3867 = vadd.f32 0.0, %v3866
        %v3868 = vpop.f32.mrb[0].mxu0
        %v3869 = vadd.f32 0.0, %v3868
        %v3870 = vpop.f32.mrb[0].mxu0
        %v3871 = vadd.f32 0.0, %v3870
        %3872 = vmatprep.mubr.bf16.mxu0 0
        %3873 = vmatmul.mubr.bf16.gmra.mrb[0].mxu0 %v3828
        %v3874 = vpop.f32.mrb[0].mxu0
        %v3875 = vadd.f32 0.0, %v3874
        %v3876 = vpop.f32.mrb[0].mxu0
        %v3877 = vadd.f32 0.0, %v3876
        %v3878 = vpop.f32.mrb[0].mxu0
        %v3879 = vadd.f32 0.0, %v3878
        %v3880 = vpop.f32.mrb[0].mxu0
        %v3881 = vadd.f32 0.0, %v3880
        %3882 = vdwg.mxu0
        %3883 = vmatprep.subr.bf16.mxu0 %v3805
        %3884 = vmatpush1.bf16.msra.mxu0 %v3804
        %3885 = vmatprep.subr.bf16.mxu0 %v3810
        %3886 = vmatpush1.bf16.msra.mxu0 %v3809
        %3887 = vmatprep.subr.bf16.mxu0 0
        %3888 = vmatpush1.bf16.msra.mxu0 0
        %3889 = vmatprep.subr.bf16.mxu0 0
        %3890 = vmatpush1.bf16.msra.mxu0 0
        %3891 = vmatprep.subr.bf16.mxu0 0
        %3892 = vmatpush1.bf16.msra.mxu0 0
        %3893 = vmatprep.subr.bf16.mxu0 0
        %3894 = vmatpush1.bf16.msra.mxu0 0
        %3895 = vmatprep.subr.bf16.mxu0 0
        %3896 = vmatpush1.bf16.msra.mxu0 0
        %3897 = vmatprep.subr.bf16.mxu0 0
        %3898 = vmatpush1.bf16.msra.mxu0 0
        %3899 = vmatprep.subr.bf16.mxu0 0
        %3900 = vmatpush1.bf16.msra.mxu0 0
        %3901 = vmatprep.subr.bf16.mxu0 0
        %3902 = vmatpush1.bf16.msra.mxu0 0
        %3903 = vmatprep.subr.bf16.mxu0 0
        %3904 = vmatpush1.bf16.msra.mxu0 0
        %3905 = vmatprep.subr.bf16.mxu0 0
        %3906 = vmatpush1.bf16.msra.mxu0 0
        %3907 = vmatprep.subr.bf16.mxu0 0
        %3908 = vmatpush1.bf16.msra.mxu0 0
        %3909 = vmatprep.subr.bf16.mxu0 0
        %3910 = vmatpush1.bf16.msra.mxu0 0
        %3911 = vmatprep.subr.bf16.mxu0 0
        %3912 = vmatpush1.bf16.msra.mxu0 0
        %3913 = vmatprep.subr.bf16.mxu0 0
        %3914 = vmatpush1.bf16.msra.mxu0 0
        %3915 = vmatprep.mubr.bf16.mxu0 0
        %3916 = vmatmul.mubr.bf16.gmra.mrb[0].mxu0 %v3825
        %v3917 = vpop.f32.mrb[0].mxu0
        %v3918 = vadd.f32 0.0, %v3917
        %v3919 = vpop.f32.mrb[0].mxu0
        %v3920 = vadd.f32 0.0, %v3919
        %v3921 = vpop.f32.mrb[0].mxu0
        %v3922 = vadd.f32 0.0, %v3921
        %v3923 = vpop.f32.mrb[0].mxu0
        %v3924 = vadd.f32 0.0, %v3923
        %3925 = vmatprep.mubr.bf16.mxu0 0
        %3926 = vmatmul.mubr.bf16.gmra.mrb[0].mxu0 %v3828
        %v3927 = vpop.f32.mrb[0].mxu0
        %v3928 = vadd.f32 0.0, %v3927
        %v3929 = vpop.f32.mrb[0].mxu0
        %v3930 = vadd.f32 0.0, %v3929
        %v3931 = vpop.f32.mrb[0].mxu0
        %v3932 = vadd.f32 0.0, %v3931
        %v3933 = vpop.f32.mrb[0].mxu0
        %v3934 = vadd.f32 0.0, %v3933
        %3935 = vdwg.mxu0
        %3936 = vmatprep.subr.bf16.mxu0 %v3788
        %3937 = vmatpush1.bf16.msra.mxu0 %v3806
        %3938 = vmatprep.subr.bf16.mxu0 %v3800
        %3939 = vmatpush1.bf16.msra.mxu0 %v3811
        %3940 = vmatprep.subr.bf16.mxu0 0
        %3941 = vmatpush1.bf16.msra.mxu0 0
        %3942 = vmatprep.subr.bf16.mxu0 0
        %3943 = vmatpush1.bf16.msra.mxu0 0
        %3944 = vmatprep.subr.bf16.mxu0 0
        %3945 = vmatpush1.bf16.msra.mxu0 0
        %3946 = vmatprep.subr.bf16.mxu0 0
        %3947 = vmatpush1.bf16.msra.mxu0 0
        %3948 = vmatprep.subr.bf16.mxu0 0
        %3949 = vmatpush1.bf16.msra.mxu0 0
        %3950 = vmatprep.subr.bf16.mxu0 0
        %3951 = vmatpush1.bf16.msra.mxu0 0
        %3952 = vmatprep.subr.bf16.mxu0 0
        %3953 = vmatpush1.bf16.msra.mxu0 0
        %3954 = vmatprep.subr.bf16.mxu0 0
        %3955 = vmatpush1.bf16.msra.mxu0 0
        %3956 = vmatprep.subr.bf16.mxu0 0
        %3957 = vmatpush1.bf16.msra.mxu0 0
        %3958 = vmatprep.subr.bf16.mxu0 0
        %3959 = vmatpush1.bf16.msra.mxu0 0
        %3960 = vmatprep.subr.bf16.mxu0 0
        %3961 = vmatpush1.bf16.msra.mxu0 0
        %3962 = vmatprep.subr.bf16.mxu0 0
        %3963 = vmatpush1.bf16.msra.mxu0 0
        %3964 = vmatprep.subr.bf16.mxu0 0
        %3965 = vmatpush1.bf16.msra.mxu0 0
        %3966 = vmatprep.subr.bf16.mxu0 0
        %3967 = vmatpush1.bf16.msra.mxu0 0
        %3968 = vmatprep.mubr.bf16.mxu0 0
        %3969 = vmatmul.mubr.bf16.gmra.mrb[0].mxu0 %v3825
        %v3970 = vpop.f32.mrb[0].mxu0
        %v3971 = vadd.f32 0.0, %v3970
        %v3972 = vpop.f32.mrb[0].mxu0
        %v3973 = vadd.f32 0.0, %v3972
        %v3974 = vpop.f32.mrb[0].mxu0
        %v3975 = vadd.f32 0.0, %v3974
        %v3976 = vpop.f32.mrb[0].mxu0
        %v3977 = vadd.f32 0.0, %v3976
        %3978 = vmatprep.mubr.bf16.mxu0 0
        %3979 = vmatmul.mubr.bf16.gmra.mrb[0].mxu0 %v3828
        %v3980 = vpop.f32.mrb[0].mxu0
        %v3981 = vadd.f32 0.0, %v3980
        %v3982 = vpop.f32.mrb[0].mxu0
        %v3983 = vadd.f32 0.0, %v3982
        %v3984 = vpop.f32.mrb[0].mxu0
        %v3985 = vadd.f32 0.0, %v3984
        %v3986 = vpop.f32.mrb[0].mxu0
        %v3987 = vadd.f32 0.0, %v3986
        %3988 = vdwg.mxu0
        %v3989 = vadd.f32 %v3738, %v3865
        %v3990 = vadd.f32 %v3739, %v3867
        %v3991 = vadd.f32 %v3740, %v3918
        %v3992 = vadd.f32 %v3741, %v3920
        %v3993 = vadd.f32 %v3742, %v3971
        %v3994 = vadd.f32 %v3743, %v3973
        %v3995 = vadd.f32 %v3744, %v3869
        %v3996 = vadd.f32 %v3745, %v3871
        %v3997 = vadd.f32 %v3746, %v3922
        %v3998 = vadd.f32 %v3747, %v3924
        %v3999 = vadd.f32 %v3748, %v3975
        %v4000 = vadd.f32 %v3749, %v3977
        %v4001 = vadd.f32 %v3750, %v3875
        %v4002 = vadd.f32 %v3751, %v3877
        %v4003 = vadd.f32 %v3752, %v3928
        %v4004 = vadd.f32 %v3753, %v3930
        %v4005 = vadd.f32 %v3754, %v3981
        %v4006 = vadd.f32 %v3755, %v3983
        %v4007 = vadd.f32 %v3756, %v3879
        %v4008 = vadd.f32 %v3757, %v3881
        %v4009 = vadd.f32 %v3758, %v3932
        %v4010 = vadd.f32 %v3759, %v3934
        %v4011 = vadd.f32 %v3760, %v3985
        %v4012 = vadd.f32 %v3761, %v3987
        %s4013 = scalar_lea.vmem [#allocation7], 112
        %v4014 = vld [vmem:[%s4013] sm:$0xf]
        %v4015 = vld [vmem:[%s4013 + $0x4] sm:$0xf]
        %v4016 = vld [vmem:[%s4013 + $0x8] sm:$0xf]
        %v4017 = vld [vmem:[%s4013 + $0xc] sm:$0xf]
        %v4022 = vunpack.c.l.b16 %v4014
        %v4023 = vunpack.c.l.b16 %v4015
        %v4024 = vunpack.c.l.b16 %v4016
        %v4025 = vunpack.c.l.b16 %v4017
        %v4026 = vpack.c.b16 %v4023, %v4022
        %v4027 = vpack.c.b16 %v4025, %v4024
        %4028 = vrot.lane.b32.xlu0 %v2331, 71
        %v4029 = vpop.permute.xlu0 %4028
        %4030 = vrot.lane.b32.xlu0 %v2332, 71
        %v4031 = vpop.permute.xlu0 %4030
        %4032 = vrot.lane.b32.xlu0 %v2333, 71
        %v4033 = vpop.permute.xlu0 %4032
        %4034 = vrot.lane.b32.xlu0 %v2334, 71
        %v4035 = vpop.permute.xlu0 %4034
        %4036 = vrot.lane.b32.xlu0 %v2335, 71
        %v4037 = vpop.permute.xlu0 %4036
        %4038 = vrot.lane.b32.xlu0 %v2336, 71
        %v4039 = vpop.permute.xlu0 %4038
        %4040 = vrot.lane.b32.xlu0 %v2337, 71
        %v4041 = vpop.permute.xlu0 %4040
        %4042 = vrot.lane.b32.xlu0 %v2338, 71
        %v4043 = vpop.permute.xlu0 %4042
        %4044 = vrot.lane.b32.xlu0 %v2339, 71
        %v4045 = vpop.permute.xlu0 %4044
        %4046 = vrot.lane.b32.xlu0 %v2340, 71
        %v4047 = vpop.permute.xlu0 %4046
        %4048 = vrot.lane.b32.xlu0 %v2341, 71
        %v4049 = vpop.permute.xlu0 %4048
        %4050 = vrot.lane.b32.xlu0 %v2342, 71
        %v4051 = vpop.permute.xlu0 %4050
        %vm4052 = vcmask 580608
        %v4053 = vsel %vm4052, %v4029, %v4031
        %v4054 = vsel %vm4052, %v4031, %v4033
        %v4055 = vsel %vm4052, %v4033, %v4035
        %v4056 = vsel %vm4052, %v4035, %v4037
        %v4057 = vsel %vm4052, %v4037, %v4039
        %v4058 = vsel %vm4052, %v4041, %v4043
        %v4059 = vsel %vm4052, %v4043, %v4045
        %v4060 = vsel %vm4052, %v4045, %v4047
        %v4061 = vsel %vm4052, %v4047, %v4049
        %v4062 = vsel %vm4052, %v4049, %v4051
        %v4076 = vsel %vm2417, %v4026, 0
        %v4079 = vsel %vm2417, %v4027, 0
        %4081 = vmatprep.subr.bf16.mxu0 %v4054
        %4082 = vmatpush1.bf16.msra.mxu0 %v4053
        %4083 = vmatprep.subr.bf16.mxu0 %v4059
        %4084 = vmatpush1.bf16.msra.mxu0 %v4058
        %4085 = vmatprep.subr.bf16.mxu0 0
        %4086 = vmatpush1.bf16.msra.mxu0 0
        %4087 = vmatprep.subr.bf16.mxu0 0
        %4088 = vmatpush1.bf16.msra.mxu0 0
        %4089 = vmatprep.subr.bf16.mxu0 0
        %4090 = vmatpush1.bf16.msra.mxu0 0
        %4091 = vmatprep.subr.bf16.mxu0 0
        %4092 = vmatpush1.bf16.msra.mxu0 0
        %4093 = vmatprep.subr.bf16.mxu0 0
        %4094 = vmatpush1.bf16.msra.mxu0 0
        %4095 = vmatprep.subr.bf16.mxu0 0
        %4096 = vmatpush1.bf16.msra.mxu0 0
        %4097 = vmatprep.subr.bf16.mxu0 0
        %4098 = vmatpush1.bf16.msra.mxu0 0
        %4099 = vmatprep.subr.bf16.mxu0 0
        %4100 = vmatpush1.bf16.msra.mxu0 0
        %4101 = vmatprep.subr.bf16.mxu0 0
        %4102 = vmatpush1.bf16.msra.mxu0 0
        %4103 = vmatprep.subr.bf16.mxu0 0
        %4104 = vmatpush1.bf16.msra.mxu0 0
        %4105 = vmatprep.subr.bf16.mxu0 0
        %4106 = vmatpush1.bf16.msra.mxu0 0
        %4107 = vmatprep.subr.bf16.mxu0 0
        %4108 = vmatpush1.bf16.msra.mxu0 0
        %4109 = vmatprep.subr.bf16.mxu0 0
        %4110 = vmatpush1.bf16.msra.mxu0 0
        %4111 = vmatprep.subr.bf16.mxu0 0
        %4112 = vmatpush1.bf16.msra.mxu0 0
        %4113 = vmatprep.mubr.bf16.mxu0 0
        %4114 = vmatmul.mubr.bf16.gmra.mrb[0].mxu0 %v4076
        %v4115 = vpop.f32.mrb[0].mxu0
        %v4116 = vadd.f32 0.0, %v4115
        %v4117 = vpop.f32.mrb[0].mxu0
        %v4118 = vadd.f32 0.0, %v4117
        %v4119 = vpop.f32.mrb[0].mxu0
        %v4120 = vadd.f32 0.0, %v4119
        %v4121 = vpop.f32.mrb[0].mxu0
        %v4122 = vadd.f32 0.0, %v4121
        %4123 = vmatprep.mubr.bf16.mxu0 0
        %4124 = vmatmul.mubr.bf16.gmra.mrb[0].mxu0 %v4079
        %v4125 = vpop.f32.mrb[0].mxu0
        %v4126 = vadd.f32 0.0, %v4125
        %v4127 = vpop.f32.mrb[0].mxu0
        %v4128 = vadd.f32 0.0, %v4127
        %v4129 = vpop.f32.mrb[0].mxu0
        %v4130 = vadd.f32 0.0, %v4129
        %v4131 = vpop.f32.mrb[0].mxu0
        %v4132 = vadd.f32 0.0, %v4131
        %4133 = vdwg.mxu0
        %4134 = vmatprep.subr.bf16.mxu0 %v4056
        %4135 = vmatpush1.bf16.msra.mxu0 %v4055
        %4136 = vmatprep.subr.bf16.mxu0 %v4061
        %4137 = vmatpush1.bf16.msra.mxu0 %v4060
        %4138 = vmatprep.subr.bf16.mxu0 0
        %4139 = vmatpush1.bf16.msra.mxu0 0
        %4140 = vmatprep.subr.bf16.mxu0 0
        %4141 = vmatpush1.bf16.msra.mxu0 0
        %4142 = vmatprep.subr.bf16.mxu0 0
        %4143 = vmatpush1.bf16.msra.mxu0 0
        %4144 = vmatprep.subr.bf16.mxu0 0
        %4145 = vmatpush1.bf16.msra.mxu0 0
        %4146 = vmatprep.subr.bf16.mxu0 0
        %4147 = vmatpush1.bf16.msra.mxu0 0
        %4148 = vmatprep.subr.bf16.mxu0 0
        %4149 = vmatpush1.bf16.msra.mxu0 0
        %4150 = vmatprep.subr.bf16.mxu0 0
        %4151 = vmatpush1.bf16.msra.mxu0 0
        %4152 = vmatprep.subr.bf16.mxu0 0
        %4153 = vmatpush1.bf16.msra.mxu0 0
        %4154 = vmatprep.subr.bf16.mxu0 0
        %4155 = vmatpush1.bf16.msra.mxu0 0
        %4156 = vmatprep.subr.bf16.mxu0 0
        %4157 = vmatpush1.bf16.msra.mxu0 0
        %4158 = vmatprep.subr.bf16.mxu0 0
        %4159 = vmatpush1.bf16.msra.mxu0 0
        %4160 = vmatprep.subr.bf16.mxu0 0
        %4161 = vmatpush1.bf16.msra.mxu0 0
        %4162 = vmatprep.subr.bf16.mxu0 0
        %4163 = vmatpush1.bf16.msra.mxu0 0
        %4164 = vmatprep.subr.bf16.mxu0 0
        %4165 = vmatpush1.bf16.msra.mxu0 0
        %4166 = vmatprep.mubr.bf16.mxu0 0
        %4167 = vmatmul.mubr.bf16.gmra.mrb[0].mxu0 %v4076
        %v4168 = vpop.f32.mrb[0].mxu0
        %v4169 = vadd.f32 0.0, %v4168
        %v4170 = vpop.f32.mrb[0].mxu0
        %v4171 = vadd.f32 0.0, %v4170
        %v4172 = vpop.f32.mrb[0].mxu0
        %v4173 = vadd.f32 0.0, %v4172
        %v4174 = vpop.f32.mrb[0].mxu0
        %v4175 = vadd.f32 0.0, %v4174
        %4176 = vmatprep.mubr.bf16.mxu0 0
        %4177 = vmatmul.mubr.bf16.gmra.mrb[0].mxu0 %v4079
        %v4178 = vpop.f32.mrb[0].mxu0
        %v4179 = vadd.f32 0.0, %v4178
        %v4180 = vpop.f32.mrb[0].mxu0
        %v4181 = vadd.f32 0.0, %v4180
        %v4182 = vpop.f32.mrb[0].mxu0
        %v4183 = vadd.f32 0.0, %v4182
        %v4184 = vpop.f32.mrb[0].mxu0
        %v4185 = vadd.f32 0.0, %v4184
        %4186 = vdwg.mxu0
        %4187 = vmatprep.subr.bf16.mxu0 %v4039
        %4188 = vmatpush1.bf16.msra.mxu0 %v4057
        %4189 = vmatprep.subr.bf16.mxu0 %v4051
        %4190 = vmatpush1.bf16.msra.mxu0 %v4062
        %4191 = vmatprep.subr.bf16.mxu0 0
        %4192 = vmatpush1.bf16.msra.mxu0 0
        %4193 = vmatprep.subr.bf16.mxu0 0
        %4194 = vmatpush1.bf16.msra.mxu0 0
        %4195 = vmatprep.subr.bf16.mxu0 0
        %4196 = vmatpush1.bf16.msra.mxu0 0
        %4197 = vmatprep.subr.bf16.mxu0 0
        %4198 = vmatpush1.bf16.msra.mxu0 0
        %4199 = vmatprep.subr.bf16.mxu0 0
        %4200 = vmatpush1.bf16.msra.mxu0 0
        %4201 = vmatprep.subr.bf16.mxu0 0
        %4202 = vmatpush1.bf16.msra.mxu0 0
        %4203 = vmatprep.subr.bf16.mxu0 0
        %4204 = vmatpush1.bf16.msra.mxu0 0
        %4205 = vmatprep.subr.bf16.mxu0 0
        %4206 = vmatpush1.bf16.msra.mxu0 0
        %4207 = vmatprep.subr.bf16.mxu0 0
        %4208 = vmatpush1.bf16.msra.mxu0 0
        %4209 = vmatprep.subr.bf16.mxu0 0
        %4210 = vmatpush1.bf16.msra.mxu0 0
        %4211 = vmatprep.subr.bf16.mxu0 0
        %4212 = vmatpush1.bf16.msra.mxu0 0
        %4213 = vmatprep.subr.bf16.mxu0 0
        %4214 = vmatpush1.bf16.msra.mxu0 0
        %4215 = vmatprep.subr.bf16.mxu0 0
        %4216 = vmatpush1.bf16.msra.mxu0 0
        %4217 = vmatprep.subr.bf16.mxu0 0
        %4218 = vmatpush1.bf16.msra.mxu0 0
        %4219 = vmatprep.mubr.bf16.mxu0 0
        %4220 = vmatmul.mubr.bf16.gmra.mrb[0].mxu0 %v4076
        %v4221 = vpop.f32.mrb[0].mxu0
        %v4222 = vadd.f32 0.0, %v4221
        %v4223 = vpop.f32.mrb[0].mxu0
        %v4224 = vadd.f32 0.0, %v4223
        %v4225 = vpop.f32.mrb[0].mxu0
        %v4226 = vadd.f32 0.0, %v4225
        %v4227 = vpop.f32.mrb[0].mxu0
        %v4228 = vadd.f32 0.0, %v4227
        %4229 = vmatprep.mubr.bf16.mxu0 0
        %4230 = vmatmul.mubr.bf16.gmra.mrb[0].mxu0 %v4079
        %v4231 = vpop.f32.mrb[0].mxu0
        %v4232 = vadd.f32 0.0, %v4231
        %v4233 = vpop.f32.mrb[0].mxu0
        %v4234 = vadd.f32 0.0, %v4233
        %v4235 = vpop.f32.mrb[0].mxu0
        %v4236 = vadd.f32 0.0, %v4235
        %v4237 = vpop.f32.mrb[0].mxu0
        %v4238 = vadd.f32 0.0, %v4237
        %4239 = vdwg.mxu0
        %v4240 = vadd.f32 %v3989, %v4116
        %v4241 = vadd.f32 %v3990, %v4118
        %v4242 = vadd.f32 %v3991, %v4169
        %v4243 = vadd.f32 %v3992, %v4171
        %v4244 = vadd.f32 %v3993, %v4222
        %v4245 = vadd.f32 %v3994, %v4224
        %v4246 = vadd.f32 %v3995, %v4120
        %v4247 = vadd.f32 %v3996, %v4122
        %v4248 = vadd.f32 %v3997, %v4173
        %v4249 = vadd.f32 %v3998, %v4175
        %v4250 = vadd.f32 %v3999, %v4226
        %v4251 = vadd.f32 %v4000, %v4228
        %v4252 = vadd.f32 %v4001, %v4126
        %v4253 = vadd.f32 %v4002, %v4128
        %v4254 = vadd.f32 %v4003, %v4179
        %v4255 = vadd.f32 %v4004, %v4181
        %v4256 = vadd.f32 %v4005, %v4232
        %v4257 = vadd.f32 %v4006, %v4234
        %v4258 = vadd.f32 %v4007, %v4130
        %v4259 = vadd.f32 %v4008, %v4132
        %v4260 = vadd.f32 %v4009, %v4183
        %v4261 = vadd.f32 %v4010, %v4185
        %v4262 = vadd.f32 %v4011, %v4236
        %v4263 = vadd.f32 %v4012, %v4238
        %s4264 = scalar_lea.vmem [#allocation7], 128
        %v4265 = vld [vmem:[%s4264] sm:$0xf]
        %v4266 = vld [vmem:[%s4264 + $0x4] sm:$0xf]
        %v4267 = vld [vmem:[%s4264 + $0x8] sm:$0xf]
        %v4268 = vld [vmem:[%s4264 + $0xc] sm:$0xf]
        %v4273 = vunpack.c.l.b16 %v4265
        %v4274 = vunpack.c.l.b16 %v4266
        %v4275 = vunpack.c.l.b16 %v4267
        %v4276 = vunpack.c.l.b16 %v4268
        %v4277 = vpack.c.b16 %v4274, %v4273
        %v4278 = vpack.c.b16 %v4276, %v4275
        %4279 = vrot.lane.b32.xlu0 %v2331, 70
        %v4280 = vpop.permute.xlu0 %4279
        %4281 = vrot.lane.b32.xlu0 %v2332, 70
        %v4282 = vpop.permute.xlu0 %4281
        %4283 = vrot.lane.b32.xlu0 %v2333, 70
        %v4284 = vpop.permute.xlu0 %4283
        %4285 = vrot.lane.b32.xlu0 %v2334, 70
        %v4286 = vpop.permute.xlu0 %4285
        %4287 = vrot.lane.b32.xlu0 %v2335, 70
        %v4288 = vpop.permute.xlu0 %4287
        %4289 = vrot.lane.b32.xlu0 %v2336, 70
        %v4290 = vpop.permute.xlu0 %4289
        %4291 = vrot.lane.b32.xlu0 %v2337, 70
        %v4292 = vpop.permute.xlu0 %4291
        %4293 = vrot.lane.b32.xlu0 %v2338, 70
        %v4294 = vpop.permute.xlu0 %4293
        %4295 = vrot.lane.b32.xlu0 %v2339, 70
        %v4296 = vpop.permute.xlu0 %4295
        %4297 = vrot.lane.b32.xlu0 %v2340, 70
        %v4298 = vpop.permute.xlu0 %4297
        %4299 = vrot.lane.b32.xlu0 %v2341, 70
        %v4300 = vpop.permute.xlu0 %4299
        %4301 = vrot.lane.b32.xlu0 %v2342, 70
        %v4302 = vpop.permute.xlu0 %4301
        %vm4303 = vcmask 572416
        %v4304 = vsel %vm4303, %v4280, %v4282
        %v4305 = vsel %vm4303, %v4282, %v4284
        %v4306 = vsel %vm4303, %v4284, %v4286
        %v4307 = vsel %vm4303, %v4286, %v4288
        %v4308 = vsel %vm4303, %v4288, %v4290
        %v4309 = vsel %vm4303, %v4292, %v4294
        %v4310 = vsel %vm4303, %v4294, %v4296
        %v4311 = vsel %vm4303, %v4296, %v4298
        %v4312 = vsel %vm4303, %v4298, %v4300
        %v4313 = vsel %vm4303, %v4300, %v4302
        %v4327 = vsel %vm2417, %v4277, 0
        %v4330 = vsel %vm2417, %v4278, 0
        %4332 = vmatprep.subr.bf16.mxu0 %v4305
        %4333 = vmatpush1.bf16.msra.mxu0 %v4304
        %4334 = vmatprep.subr.bf16.mxu0 %v4310
        %4335 = vmatpush1.bf16.msra.mxu0 %v4309
        %4336 = vmatprep.subr.bf16.mxu0 0
        %4337 = vmatpush1.bf16.msra.mxu0 0
        %4338 = vmatprep.subr.bf16.mxu0 0
        %4339 = vmatpush1.bf16.msra.mxu0 0
        %4340 = vmatprep.subr.bf16.mxu0 0
        %4341 = vmatpush1.bf16.msra.mxu0 0
        %4342 = vmatprep.subr.bf16.mxu0 0
        %4343 = vmatpush1.bf16.msra.mxu0 0
        %4344 = vmatprep.subr.bf16.mxu0 0
        %4345 = vmatpush1.bf16.msra.mxu0 0
        %4346 = vmatprep.subr.bf16.mxu0 0
        %4347 = vmatpush1.bf16.msra.mxu0 0
        %4348 = vmatprep.subr.bf16.mxu0 0
        %4349 = vmatpush1.bf16.msra.mxu0 0
        %4350 = vmatprep.subr.bf16.mxu0 0
        %4351 = vmatpush1.bf16.msra.mxu0 0
        %4352 = vmatprep.subr.bf16.mxu0 0
        %4353 = vmatpush1.bf16.msra.mxu0 0
        %4354 = vmatprep.subr.bf16.mxu0 0
        %4355 = vmatpush1.bf16.msra.mxu0 0
        %4356 = vmatprep.subr.bf16.mxu0 0
        %4357 = vmatpush1.bf16.msra.mxu0 0
        %4358 = vmatprep.subr.bf16.mxu0 0
        %4359 = vmatpush1.bf16.msra.mxu0 0
        %4360 = vmatprep.subr.bf16.mxu0 0
        %4361 = vmatpush1.bf16.msra.mxu0 0
        %4362 = vmatprep.subr.bf16.mxu0 0
        %4363 = vmatpush1.bf16.msra.mxu0 0
        %4364 = vmatprep.mubr.bf16.mxu0 0
        %4365 = vmatmul.mubr.bf16.gmra.mrb[0].mxu0 %v4327
        %v4366 = vpop.f32.mrb[0].mxu0
        %v4367 = vadd.f32 0.0, %v4366
        %v4368 = vpop.f32.mrb[0].mxu0
        %v4369 = vadd.f32 0.0, %v4368
        %v4370 = vpop.f32.mrb[0].mxu0
        %v4371 = vadd.f32 0.0, %v4370
        %v4372 = vpop.f32.mrb[0].mxu0
        %v4373 = vadd.f32 0.0, %v4372
        %4374 = vmatprep.mubr.bf16.mxu0 0
        %4375 = vmatmul.mubr.bf16.gmra.mrb[0].mxu0 %v4330
        %v4376 = vpop.f32.mrb[0].mxu0
        %v4377 = vadd.f32 0.0, %v4376
        %v4378 = vpop.f32.mrb[0].mxu0
        %v4379 = vadd.f32 0.0, %v4378
        %v4380 = vpop.f32.mrb[0].mxu0
        %v4381 = vadd.f32 0.0, %v4380
        %v4382 = vpop.f32.mrb[0].mxu0
        %v4383 = vadd.f32 0.0, %v4382
        %4384 = vdwg.mxu0
        %4385 = vmatprep.subr.bf16.mxu0 %v4307
        %4386 = vmatpush1.bf16.msra.mxu0 %v4306
        %4387 = vmatprep.subr.bf16.mxu0 %v4312
        %4388 = vmatpush1.bf16.msra.mxu0 %v4311
        %4389 = vmatprep.subr.bf16.mxu0 0
        %4390 = vmatpush1.bf16.msra.mxu0 0
        %4391 = vmatprep.subr.bf16.mxu0 0
        %4392 = vmatpush1.bf16.msra.mxu0 0
        %4393 = vmatprep.subr.bf16.mxu0 0
        %4394 = vmatpush1.bf16.msra.mxu0 0
        %4395 = vmatprep.subr.bf16.mxu0 0
        %4396 = vmatpush1.bf16.msra.mxu0 0
        %4397 = vmatprep.subr.bf16.mxu0 0
        %4398 = vmatpush1.bf16.msra.mxu0 0
        %4399 = vmatprep.subr.bf16.mxu0 0
        %4400 = vmatpush1.bf16.msra.mxu0 0
        %4401 = vmatprep.subr.bf16.mxu0 0
        %4402 = vmatpush1.bf16.msra.mxu0 0
        %4403 = vmatprep.subr.bf16.mxu0 0
        %4404 = vmatpush1.bf16.msra.mxu0 0
        %4405 = vmatprep.subr.bf16.mxu0 0
        %4406 = vmatpush1.bf16.msra.mxu0 0
        %4407 = vmatprep.subr.bf16.mxu0 0
        %4408 = vmatpush1.bf16.msra.mxu0 0
        %4409 = vmatprep.subr.bf16.mxu0 0
        %4410 = vmatpush1.bf16.msra.mxu0 0
        %4411 = vmatprep.subr.bf16.mxu0 0
        %4412 = vmatpush1.bf16.msra.mxu0 0
        %4413 = vmatprep.subr.bf16.mxu0 0
        %4414 = vmatpush1.bf16.msra.mxu0 0
        %4415 = vmatprep.subr.bf16.mxu0 0
        %4416 = vmatpush1.bf16.msra.mxu0 0
        %4417 = vmatprep.mubr.bf16.mxu0 0
        %4418 = vmatmul.mubr.bf16.gmra.mrb[0].mxu0 %v4327
        %v4419 = vpop.f32.mrb[0].mxu0
        %v4420 = vadd.f32 0.0, %v4419
        %v4421 = vpop.f32.mrb[0].mxu0
        %v4422 = vadd.f32 0.0, %v4421
        %v4423 = vpop.f32.mrb[0].mxu0
        %v4424 = vadd.f32 0.0, %v4423
        %v4425 = vpop.f32.mrb[0].mxu0
        %v4426 = vadd.f32 0.0, %v4425
        %4427 = vmatprep.mubr.bf16.mxu0 0
        %4428 = vmatmul.mubr.bf16.gmra.mrb[0].mxu0 %v4330
        %v4429 = vpop.f32.mrb[0].mxu0
        %v4430 = vadd.f32 0.0, %v4429
        %v4431 = vpop.f32.mrb[0].mxu0
        %v4432 = vadd.f32 0.0, %v4431
        %v4433 = vpop.f32.mrb[0].mxu0
        %v4434 = vadd.f32 0.0, %v4433
        %v4435 = vpop.f32.mrb[0].mxu0
        %v4436 = vadd.f32 0.0, %v4435
        %4437 = vdwg.mxu0
        %4438 = vmatprep.subr.bf16.mxu0 %v4290
        %4439 = vmatpush1.bf16.msra.mxu0 %v4308
        %4440 = vmatprep.subr.bf16.mxu0 %v4302
        %4441 = vmatpush1.bf16.msra.mxu0 %v4313
        %4442 = vmatprep.subr.bf16.mxu0 0
        %4443 = vmatpush1.bf16.msra.mxu0 0
        %4444 = vmatprep.subr.bf16.mxu0 0
        %4445 = vmatpush1.bf16.msra.mxu0 0
        %4446 = vmatprep.subr.bf16.mxu0 0
        %4447 = vmatpush1.bf16.msra.mxu0 0
        %4448 = vmatprep.subr.bf16.mxu0 0
        %4449 = vmatpush1.bf16.msra.mxu0 0
        %4450 = vmatprep.subr.bf16.mxu0 0
        %4451 = vmatpush1.bf16.msra.mxu0 0
        %4452 = vmatprep.subr.bf16.mxu0 0
        %4453 = vmatpush1.bf16.msra.mxu0 0
        %4454 = vmatprep.subr.bf16.mxu0 0
        %4455 = vmatpush1.bf16.msra.mxu0 0
        %4456 = vmatprep.subr.bf16.mxu0 0
        %4457 = vmatpush1.bf16.msra.mxu0 0
        %4458 = vmatprep.subr.bf16.mxu0 0
        %4459 = vmatpush1.bf16.msra.mxu0 0
        %4460 = vmatprep.subr.bf16.mxu0 0
        %4461 = vmatpush1.bf16.msra.mxu0 0
        %4462 = vmatprep.subr.bf16.mxu0 0
        %4463 = vmatpush1.bf16.msra.mxu0 0
        %4464 = vmatprep.subr.bf16.mxu0 0
        %4465 = vmatpush1.bf16.msra.mxu0 0
        %4466 = vmatprep.subr.bf16.mxu0 0
        %4467 = vmatpush1.bf16.msra.mxu0 0
        %4468 = vmatprep.subr.bf16.mxu0 0
        %4469 = vmatpush1.bf16.msra.mxu0 0
        %4470 = vmatprep.mubr.bf16.mxu0 0
        %4471 = vmatmul.mubr.bf16.gmra.mrb[0].mxu0 %v4327
        %v4472 = vpop.f32.mrb[0].mxu0
        %v4473 = vadd.f32 0.0, %v4472
        %v4474 = vpop.f32.mrb[0].mxu0
        %v4475 = vadd.f32 0.0, %v4474
        %v4476 = vpop.f32.mrb[0].mxu0
        %v4477 = vadd.f32 0.0, %v4476
        %v4478 = vpop.f32.mrb[0].mxu0
        %v4479 = vadd.f32 0.0, %v4478
        %4480 = vmatprep.mubr.bf16.mxu0 0
        %4481 = vmatmul.mubr.bf16.gmra.mrb[0].mxu0 %v4330
        %v4482 = vpop.f32.mrb[0].mxu0
        %v4483 = vadd.f32 0.0, %v4482
        %v4484 = vpop.f32.mrb[0].mxu0
        %v4485 = vadd.f32 0.0, %v4484
        %v4486 = vpop.f32.mrb[0].mxu0
        %v4487 = vadd.f32 0.0, %v4486
        %v4488 = vpop.f32.mrb[0].mxu0
        %v4489 = vadd.f32 0.0, %v4488
        %4490 = vdwg.mxu0
        %v4491 = vadd.f32 %v4240, %v4367
        %v4492 = vadd.f32 %v4241, %v4369
        %v4493 = vadd.f32 %v4242, %v4420
        %v4494 = vadd.f32 %v4243, %v4422
        %v4495 = vadd.f32 %v4244, %v4473
        %v4496 = vadd.f32 %v4245, %v4475
        %v4497 = vadd.f32 %v4246, %v4371
        %v4498 = vadd.f32 %v4247, %v4373
        %v4499 = vadd.f32 %v4248, %v4424
        %v4500 = vadd.f32 %v4249, %v4426
        %v4501 = vadd.f32 %v4250, %v4477
        %v4502 = vadd.f32 %v4251, %v4479
        %v4503 = vadd.f32 %v4252, %v4377
        %v4504 = vadd.f32 %v4253, %v4379
        %v4505 = vadd.f32 %v4254, %v4430
        %v4506 = vadd.f32 %v4255, %v4432
        %v4507 = vadd.f32 %v4256, %v4483
        %v4508 = vadd.f32 %v4257, %v4485
        %v4509 = vadd.f32 %v4258, %v4381
        %v4510 = vadd.f32 %v4259, %v4383
        %v4511 = vadd.f32 %v4260, %v4434
        %v4512 = vadd.f32 %v4261, %v4436
        %v4513 = vadd.f32 %v4262, %v4487
        %v4514 = vadd.f32 %v4263, %v4489
        %v4515 = vld [vmem:[%s4] sm:$0xff]
        %v4516 = vld [vmem:[%s4 + $0x8] sm:$0xff]
        %v4517 = vld [vmem:[%s4 + $0x10] sm:$0xff]
        %v4518 = vld [vmem:[%s4 + $0x18] sm:$0xff]
        %4520 = vset.pattern.permute.xlu0 0
        %4521 = vperm.xlu0 %4520, %v4515
        %v4522 = vpop.permute.xlu0 %4521
        %4525 = vset.pattern.permute.xlu0 0
        %4526 = vperm.xlu0 %4525, %v4516
        %v4527 = vpop.permute.xlu0 %4526
        %4530 = vset.pattern.permute.xlu0 0
        %4531 = vperm.xlu0 %4530, %v4517
        %v4532 = vpop.permute.xlu0 %4531
        %4535 = vset.pattern.permute.xlu0 0
        %4536 = vperm.xlu0 %4535, %v4518
        %v4537 = vpop.permute.xlu0 %4536
        %v4539 = vadd.f32 %v4491, %v4522
        %v4540 = vadd.f32 %v4492, %v4522
        %v4541 = vadd.f32 %v4493, %v4522
        %v4542 = vadd.f32 %v4494, %v4522
        %v4543 = vadd.f32 %v4495, %v4522
        %v4544 = vadd.f32 %v4496, %v4522
        %v4545 = vadd.f32 %v4497, %v4527
        %v4546 = vadd.f32 %v4498, %v4527
        %v4547 = vadd.f32 %v4499, %v4527
        %v4548 = vadd.f32 %v4500, %v4527
        %v4549 = vadd.f32 %v4501, %v4527
        %v4550 = vadd.f32 %v4502, %v4527
        %v4551 = vadd.f32 %v4503, %v4532
        %v4552 = vadd.f32 %v4504, %v4532
        %v4553 = vadd.f32 %v4505, %v4532
        %v4554 = vadd.f32 %v4506, %v4532
        %v4555 = vadd.f32 %v4507, %v4532
        %v4556 = vadd.f32 %v4508, %v4532
        %v4557 = vadd.f32 %v4509, %v4537
        %v4558 = vadd.f32 %v4510, %v4537
        %v4559 = vadd.f32 %v4511, %v4537
        %v4560 = vadd.f32 %v4512, %v4537
        %v4561 = vadd.f32 %v4513, %v4537
        %v4562 = vadd.f32 %v4514, %v4537
        %v4563 = vmax.f32 %v4539, 0.0
        %v4564 = vmax.f32 %v4540, 0.0
        %v4565 = vmax.f32 %v4541, 0.0
        %v4566 = vmax.f32 %v4542, 0.0
        %v4567 = vmax.f32 %v4543, 0.0
        %v4568 = vmax.f32 %v4544, 0.0
        %v4569 = vmax.f32 %v4545, 0.0
        %v4570 = vmax.f32 %v4546, 0.0
        %v4571 = vmax.f32 %v4547, 0.0
        %v4572 = vmax.f32 %v4548, 0.0
        %v4573 = vmax.f32 %v4549, 0.0
        %v4574 = vmax.f32 %v4550, 0.0
        %v4575 = vmax.f32 %v4551, 0.0
        %v4576 = vmax.f32 %v4552, 0.0
        %v4577 = vmax.f32 %v4553, 0.0
        %v4578 = vmax.f32 %v4554, 0.0
        %v4579 = vmax.f32 %v4555, 0.0
        %v4580 = vmax.f32 %v4556, 0.0
        %v4581 = vmax.f32 %v4557, 0.0
        %v4582 = vmax.f32 %v4558, 0.0
        %v4583 = vmax.f32 %v4559, 0.0
        %v4584 = vmax.f32 %v4560, 0.0
        %v4585 = vmax.f32 %v4561, 0.0
        %v4586 = vmax.f32 %v4562, 0.0
        %v4587 = vpack.c.bf16 %v4569, %v4563
        %v4588 = vpack.c.bf16 %v4570, %v4564
        %v4589 = vpack.c.bf16 %v4571, %v4565
        %v4590 = vpack.c.bf16 %v4572, %v4566
        %v4591 = vpack.c.bf16 %v4573, %v4567
        %v4592 = vpack.c.bf16 %v4574, %v4568
        %v4593 = vpack.c.bf16 %v4581, %v4575
        %v4594 = vpack.c.bf16 %v4582, %v4576
        %v4595 = vpack.c.bf16 %v4583, %v4577
        %v4596 = vpack.c.bf16 %v4584, %v4578
        %v4597 = vpack.c.bf16 %v4585, %v4579
        %v4598 = vpack.c.bf16 %v4586, %v4580
        %4599 = vst [vmem:[#allocation3] sm:$0xff] %v4587
        %4600 = vst [vmem:[#allocation3 + $0x8] sm:$0xff] %v4588
        %4601 = vst [vmem:[#allocation3 + $0x10] sm:$0xff] %v4589
        %4602 = vst [vmem:[#allocation3 + $0x18] sm:$0xff] %v4590
        %4603 = vst [vmem:[#allocation3 + $0x20] sm:$0xff] %v4591
        %4604 = vst.msk [vmem:[#allocation3 + $0x28] sm:$0xff] %vm2417, %v4592
        %4605 = vst [vmem:[#allocation3 + $0x30] sm:$0xff] %v4593
        %4606 = vst [vmem:[#allocation3 + $0x38] sm:$0xff] %v4594
        %4607 = vst [vmem:[#allocation3 + $0x40] sm:$0xff] %v4595
        %4608 = vst [vmem:[#allocation3 + $0x48] sm:$0xff] %v4596
        %4609 = vst [vmem:[#allocation3 + $0x50] sm:$0xff] %v4597
        %4610 = vst.msk [vmem:[#allocation3 + $0x58] sm:$0xff] %vm2417, %v4598
        %v4611 = vld [vmem:[#allocation3] sm:$0xff]
        %v4612 = vld [vmem:[#allocation3 + $0x8] sm:$0xff]
        %v4613 = vld [vmem:[#allocation3 + $0x10] sm:$0xff]
        %v4614 = vld [vmem:[#allocation3 + $0x18] sm:$0xff]
        %v4615 = vld [vmem:[#allocation3 + $0x20] sm:$0xff]
        %v4616 = vld [vmem:[#allocation3 + $0x30] sm:$0xff]
        %v4617 = vld [vmem:[#allocation3 + $0x38] sm:$0xff]
        %v4618 = vld [vmem:[#allocation3 + $0x40] sm:$0xff]
        %v4619 = vld [vmem:[#allocation3 + $0x48] sm:$0xff]
        %v4620 = vld [vmem:[#allocation3 + $0x50] sm:$0xff]
        %v4621 = vld [vmem:[#allocation3 + $0x28] sm:$0xff]
        %v4622 = vld [vmem:[#allocation3 + $0x58] sm:$0xff]
        %4635 = vrot.lane.b32.xlu0 %v4611, 127
        %v4636 = vpop.permute.xlu0 %4635
        %4637 = vrot.lane.b32.xlu0 %v4612, 127
        %v4638 = vpop.permute.xlu0 %4637
        %4639 = vrot.lane.b32.xlu0 %v4613, 127
        %v4640 = vpop.permute.xlu0 %4639
        %4641 = vrot.lane.b32.xlu0 %v4614, 127
        %v4642 = vpop.permute.xlu0 %4641
        %4643 = vrot.lane.b32.xlu0 %v4615, 127
        %v4644 = vpop.permute.xlu0 %4643
        %4645 = vrot.lane.b32.xlu0 %v4621, 127
        %v4646 = vpop.permute.xlu0 %4645
        %4647 = vrot.lane.b32.xlu0 %v4616, 127
        %v4648 = vpop.permute.xlu0 %4647
        %4649 = vrot.lane.b32.xlu0 %v4617, 127
        %v4650 = vpop.permute.xlu0 %4649
        %4651 = vrot.lane.b32.xlu0 %v4618, 127
        %v4652 = vpop.permute.xlu0 %4651
        %4653 = vrot.lane.b32.xlu0 %v4619, 127
        %v4654 = vpop.permute.xlu0 %4653
        %4655 = vrot.lane.b32.xlu0 %v4620, 127
        %v4656 = vpop.permute.xlu0 %4655
        %4657 = vrot.lane.b32.xlu0 %v4622, 127
        %v4658 = vpop.permute.xlu0 %4657
        %v4659 = vsel %vm2394, %v4636, %v4638
        %v4660 = vsel %vm2394, %v4638, %v4640
        %v4661 = vsel %vm2394, %v4640, %v4642
        %v4662 = vsel %vm2394, %v4642, %v4644
        %v4663 = vsel %vm2394, %v4644, %v4646
        %v4664 = vsel %vm2394, %v4648, %v4650
        %v4665 = vsel %vm2394, %v4650, %v4652
        %v4666 = vsel %vm2394, %v4652, %v4654
        %v4667 = vsel %vm2394, %v4654, %v4656
        %v4668 = vsel %vm2394, %v4656, %v4658
        %v4679 = vmax.bf16 %v4611, %v4659
        %v4680 = vmax.bf16 %v4612, %v4660
        %v4681 = vmax.bf16 %v4613, %v4661
        %v4682 = vmax.bf16 %v4614, %v4662
        %v4683 = vmax.bf16 %v4615, %v4663
        %v4684 = vmax.bf16 %v4616, %v4664
        %v4685 = vmax.bf16 %v4617, %v4665
        %v4686 = vmax.bf16 %v4618, %v4666
        %v4687 = vmax.bf16 %v4619, %v4667
        %v4688 = vmax.bf16 %v4620, %v4668
        %v4691 = vmax.bf16 %v4621, %v4646
        %v4692 = vmax.bf16 %v4622, %v4658
        %4705 = vrot.lane.b32.xlu0 %v4679, 100
        %v4706 = vpop.permute.xlu0 %4705
        %4707 = vrot.lane.b32.xlu0 %v4680, 100
        %v4708 = vpop.permute.xlu0 %4707
        %4709 = vrot.lane.b32.xlu0 %v4681, 100
        %v4710 = vpop.permute.xlu0 %4709
        %4711 = vrot.lane.b32.xlu0 %v4682, 100
        %v4712 = vpop.permute.xlu0 %4711
        %4713 = vrot.lane.b32.xlu0 %v4683, 100
        %v4714 = vpop.permute.xlu0 %4713
        %4715 = vrot.lane.b32.xlu0 %v4691, 100
        %v4716 = vpop.permute.xlu0 %4715
        %4717 = vrot.lane.b32.xlu0 %v4684, 100
        %v4718 = vpop.permute.xlu0 %4717
        %4719 = vrot.lane.b32.xlu0 %v4685, 100
        %v4720 = vpop.permute.xlu0 %4719
        %4721 = vrot.lane.b32.xlu0 %v4686, 100
        %v4722 = vpop.permute.xlu0 %4721
        %4723 = vrot.lane.b32.xlu0 %v4687, 100
        %v4724 = vpop.permute.xlu0 %4723
        %4725 = vrot.lane.b32.xlu0 %v4688, 100
        %v4726 = vpop.permute.xlu0 %4725
        %4727 = vrot.lane.b32.xlu0 %v4692, 100
        %v4728 = vpop.permute.xlu0 %4727
        %v4729 = vsel %vm3048, %v4706, %v4708
        %v4730 = vsel %vm3048, %v4708, %v4710
        %v4731 = vsel %vm3048, %v4710, %v4712
        %v4732 = vsel %vm3048, %v4712, %v4714
        %v4733 = vsel %vm3048, %v4714, %v4716
        %v4734 = vsel %vm3048, %v4718, %v4720
        %v4735 = vsel %vm3048, %v4720, %v4722
        %v4736 = vsel %vm3048, %v4722, %v4724
        %v4737 = vsel %vm3048, %v4724, %v4726
        %v4738 = vsel %vm3048, %v4726, %v4728
        %v4749 = vmax.bf16 %v4679, %v4729
        %v4750 = vmax.bf16 %v4680, %v4730
        %v4751 = vmax.bf16 %v4681, %v4731
        %v4752 = vmax.bf16 %v4682, %v4732
        %v4753 = vmax.bf16 %v4683, %v4733
        %v4754 = vmax.bf16 %v4684, %v4734
        %v4755 = vmax.bf16 %v4685, %v4735
        %v4756 = vmax.bf16 %v4686, %v4736
        %v4757 = vmax.bf16 %v4687, %v4737
        %v4758 = vmax.bf16 %v4688, %v4738
        %v4759 = vld [vmem:[%s9] sm:$0xff]
        %v4760 = vld [vmem:[%s9 + $0x8] sm:$0xff]
        %v4761 = vld [vmem:[%s9 + $0x10] sm:$0xff]
        %v4762 = vld [vmem:[%s9 + $0x18] sm:$0xff]
        %v4763 = vld [vmem:[%s9 + $0x20] sm:$0xff]
        %v4764 = vld [vmem:[%s9 + $0x28] sm:$0xff]
        %v4765 = vld [vmem:[%s9 + $0x30] sm:$0xff]
        %v4766 = vld [vmem:[%s9 + $0x38] sm:$0xff]
        %v4767 = vld [vmem:[%s9 + $0x40] sm:$0xff]
        %v4768 = vld [vmem:[%s9 + $0x48] sm:$0xff]
        %v4769 = vld [vmem:[%s9 + $0x50] sm:$0xff]
        %v4770 = vld [vmem:[%s9 + $0x58] sm:$0xff]
        %v4771 = vld [vmem:[%s9 + $0x60] sm:$0xff]
        %v4772 = vld [vmem:[%s9 + $0x68] sm:$0xff]
        %v4773 = vld [vmem:[%s9 + $0x70] sm:$0xff]
        %v4774 = vld [vmem:[%s9 + $0x78] sm:$0xff]
        %v4775 = vld [vmem:[%s9 + $0x80] sm:$0xff]
        %v4776 = vld [vmem:[%s9 + $0x88] sm:$0xff]
        %v4777 = vld [vmem:[%s9 + $0x90] sm:$0xff]
        %v4778 = vld [vmem:[%s9 + $0x98] sm:$0xff]
        %v4779 = vld [vmem:[%s9 + $0xa0] sm:$0xff]
        %v4780 = vld [vmem:[%s9 + $0xa8] sm:$0xff]
        %v4781 = vld [vmem:[%s9 + $0xb0] sm:$0xff]
        %v4782 = vld [vmem:[%s9 + $0xb8] sm:$0xff]
        %v4783 = vld [vmem:[%s9 + $0xc0] sm:$0xff]
        %v4784 = vld [vmem:[%s9 + $0xc8] sm:$0xff]
        %v4785 = vld [vmem:[%s9 + $0xd0] sm:$0xff]
        %v4786 = vld [vmem:[%s9 + $0xd8] sm:$0xff]
        %v4787 = vld [vmem:[%s9 + $0xe0] sm:$0xff]
        %v4788 = vld [vmem:[%s9 + $0xe8] sm:$0xff]
        %v4789 = vld [vmem:[%s9 + $0xf0] sm:$0xff]
        %v4790 = vld [vmem:[%s9 + $0xf8] sm:$0xff]
        %v4791 = vld [vmem:[%s9 + $0x100] sm:$0xff]
        %v4792 = vld [vmem:[%s9 + $0x108] sm:$0xff]
        %v4793 = vld [vmem:[%s9 + $0x110] sm:$0xff]
        %v4794 = vld [vmem:[%s9 + $0x118] sm:$0xff]
        %v4795 = vld [vmem:[%s9 + $0x120] sm:$0xff]
        %v4796 = vld [vmem:[%s9 + $0x128] sm:$0xff]
        %v4797 = vld [vmem:[%s9 + $0x130] sm:$0xff]
        %v4798 = vld [vmem:[%s9 + $0x138] sm:$0xff]
        %v4799 = vld [vmem:[%s9 + $0x140] sm:$0xff]
        %v4800 = vld [vmem:[%s9 + $0x148] sm:$0xff]
        %v4801 = vld [vmem:[%s9 + $0x150] sm:$0xff]
        %v4802 = vld [vmem:[%s9 + $0x158] sm:$0xff]
        %v4803 = vld [vmem:[%s9 + $0x160] sm:$0xff]
        %v4804 = vld [vmem:[%s9 + $0x168] sm:$0xff]
        %v4805 = vld [vmem:[%s9 + $0x170] sm:$0xff]
        %v4806 = vld [vmem:[%s9 + $0x178] sm:$0xff]
        %v4807 = vld [vmem:[%s9 + $0x180] sm:$0xff]
        %v4808 = vld [vmem:[%s9 + $0x188] sm:$0xff]
        %v4809 = vld [vmem:[%s9 + $0x190] sm:$0xff]
        %v4810 = vld [vmem:[%s9 + $0x198] sm:$0xff]
        %v4811 = vld [vmem:[%s9 + $0x1a0] sm:$0xff]
        %v4812 = vld [vmem:[%s9 + $0x1a8] sm:$0xff]
        %v4813 = vld [vmem:[%s9 + $0x1b0] sm:$0xff]
        %v4814 = vld [vmem:[%s9 + $0x1b8] sm:$0xff]
        %v4815 = vld [vmem:[%s9 + $0x1c0] sm:$0xff]
        %v4816 = vld [vmem:[%s9 + $0x1c8] sm:$0xff]
        %v4817 = vld [vmem:[%s9 + $0x1d0] sm:$0xff]
        %v4818 = vld [vmem:[%s9 + $0x1d8] sm:$0xff]
        %v4819 = vld [vmem:[%s9 + $0x1e0] sm:$0xff]
        %v4820 = vld [vmem:[%s9 + $0x1e8] sm:$0xff]
        %v4821 = vld [vmem:[%s9 + $0x1f0] sm:$0xff]
        %v4822 = vld [vmem:[%s9 + $0x1f8] sm:$0xff]
        %v4823 = vld [vmem:[%s9 + $0x200] sm:$0xff]
        %v4824 = vld [vmem:[%s9 + $0x208] sm:$0xff]
        %v4825 = vld [vmem:[%s9 + $0x210] sm:$0xff]
        %v4826 = vld [vmem:[%s9 + $0x218] sm:$0xff]
        %v4827 = vld [vmem:[%s9 + $0x220] sm:$0xff]
        %v4828 = vld [vmem:[%s9 + $0x228] sm:$0xff]
        %v4829 = vld [vmem:[%s9 + $0x230] sm:$0xff]
        %v4830 = vld [vmem:[%s9 + $0x238] sm:$0xff]
        %v4831 = vld [vmem:[%s9 + $0x240] sm:$0xff]
        %v4832 = vld [vmem:[%s9 + $0x248] sm:$0xff]
        %v4833 = vld [vmem:[%s9 + $0x250] sm:$0xff]
        %v4834 = vld [vmem:[%s9 + $0x258] sm:$0xff]
        %v4835 = vld [vmem:[%s9 + $0x260] sm:$0xff]
        %v4836 = vld [vmem:[%s9 + $0x268] sm:$0xff]
        %v4837 = vld [vmem:[%s9 + $0x270] sm:$0xff]
        %v4838 = vld [vmem:[%s9 + $0x278] sm:$0xff]
        %v4919 = vunpack.c.l.b16 %v4759
        %v4920 = vunpack.c.h.b16 %v4759
        %v4921 = vunpack.c.l.b16 %v4760
        %v4922 = vunpack.c.h.b16 %v4760
        %v4923 = vunpack.c.l.b16 %v4761
        %v4924 = vunpack.c.h.b16 %v4761
        %v4925 = vunpack.c.l.b16 %v4762
        %v4926 = vunpack.c.h.b16 %v4762
        %v4927 = vunpack.c.l.b16 %v4763
        %v4928 = vunpack.c.h.b16 %v4763
        %v4929 = vunpack.c.l.b16 %v4764
        %v4930 = vunpack.c.h.b16 %v4764
        %v4931 = vunpack.c.l.b16 %v4765
        %v4932 = vunpack.c.h.b16 %v4765
        %v4933 = vunpack.c.l.b16 %v4766
        %v4934 = vunpack.c.h.b16 %v4766
        %v4935 = vunpack.c.l.b16 %v4767
        %v4936 = vunpack.c.h.b16 %v4767
        %v4937 = vunpack.c.l.b16 %v4768
        %v4938 = vunpack.c.h.b16 %v4768
        %v4939 = vunpack.c.l.b16 %v4769
        %v4940 = vunpack.c.h.b16 %v4769
        %v4941 = vunpack.c.l.b16 %v4770
        %v4942 = vunpack.c.h.b16 %v4770
        %v4943 = vunpack.c.l.b16 %v4771
        %v4944 = vunpack.c.h.b16 %v4771
        %v4945 = vunpack.c.l.b16 %v4772
        %v4946 = vunpack.c.h.b16 %v4772
        %v4947 = vunpack.c.l.b16 %v4773
        %v4948 = vunpack.c.h.b16 %v4773
        %v4949 = vunpack.c.l.b16 %v4774
        %v4950 = vunpack.c.h.b16 %v4774
        %v4951 = vunpack.c.l.b16 %v4775
        %v4952 = vunpack.c.h.b16 %v4775
        %v4953 = vunpack.c.l.b16 %v4776
        %v4954 = vunpack.c.h.b16 %v4776
        %v4955 = vunpack.c.l.b16 %v4777
        %v4956 = vunpack.c.h.b16 %v4777
        %v4957 = vunpack.c.l.b16 %v4778
        %v4958 = vunpack.c.h.b16 %v4778
        %v4959 = vunpack.c.l.b16 %v4779
        %v4960 = vunpack.c.h.b16 %v4779
        %v4961 = vunpack.c.l.b16 %v4780
        %v4962 = vunpack.c.h.b16 %v4780
        %v4963 = vunpack.c.l.b16 %v4781
        %v4964 = vunpack.c.h.b16 %v4781
        %v4965 = vunpack.c.l.b16 %v4782
        %v4966 = vunpack.c.h.b16 %v4782
        %v4967 = vunpack.c.l.b16 %v4783
        %v4968 = vunpack.c.h.b16 %v4783
        %v4969 = vunpack.c.l.b16 %v4784
        %v4970 = vunpack.c.h.b16 %v4784
        %v4971 = vunpack.c.l.b16 %v4785
        %v4972 = vunpack.c.h.b16 %v4785
        %v4973 = vunpack.c.l.b16 %v4786
        %v4974 = vunpack.c.h.b16 %v4786
        %v4975 = vunpack.c.l.b16 %v4787
        %v4976 = vunpack.c.h.b16 %v4787
        %v4977 = vunpack.c.l.b16 %v4788
        %v4978 = vunpack.c.h.b16 %v4788
        %v4979 = vunpack.c.l.b16 %v4789
        %v4980 = vunpack.c.h.b16 %v4789
        %v4981 = vunpack.c.l.b16 %v4790
        %v4982 = vunpack.c.h.b16 %v4790
        %v4983 = vunpack.c.l.b16 %v4791
        %v4984 = vunpack.c.h.b16 %v4791
        %v4985 = vunpack.c.l.b16 %v4792
        %v4986 = vunpack.c.h.b16 %v4792
        %v4987 = vunpack.c.l.b16 %v4793
        %v4988 = vunpack.c.h.b16 %v4793
        %v4989 = vunpack.c.l.b16 %v4794
        %v4990 = vunpack.c.h.b16 %v4794
        %v4991 = vunpack.c.l.b16 %v4795
        %v4992 = vunpack.c.h.b16 %v4795
        %v4993 = vunpack.c.l.b16 %v4796
        %v4994 = vunpack.c.h.b16 %v4796
        %v4995 = vunpack.c.l.b16 %v4797
        %v4996 = vunpack.c.h.b16 %v4797
        %v4997 = vunpack.c.l.b16 %v4798
        %v4998 = vunpack.c.h.b16 %v4798
        %v4999 = vunpack.c.l.b16 %v4799
        %v5000 = vunpack.c.h.b16 %v4799
        %v5001 = vunpack.c.l.b16 %v4800
        %v5002 = vunpack.c.h.b16 %v4800
        %v5003 = vunpack.c.l.b16 %v4801
        %v5004 = vunpack.c.h.b16 %v4801
        %v5005 = vunpack.c.l.b16 %v4802
        %v5006 = vunpack.c.h.b16 %v4802
        %v5007 = vunpack.c.l.b16 %v4803
        %v5008 = vunpack.c.h.b16 %v4803
        %v5009 = vunpack.c.l.b16 %v4804
        %v5010 = vunpack.c.h.b16 %v4804
        %v5011 = vunpack.c.l.b16 %v4805
        %v5012 = vunpack.c.h.b16 %v4805
        %v5013 = vunpack.c.l.b16 %v4806
        %v5014 = vunpack.c.h.b16 %v4806
        %v5015 = vunpack.c.l.b16 %v4807
        %v5016 = vunpack.c.h.b16 %v4807
        %v5017 = vunpack.c.l.b16 %v4808
        %v5018 = vunpack.c.h.b16 %v4808
        %v5019 = vunpack.c.l.b16 %v4809
        %v5020 = vunpack.c.h.b16 %v4809
        %v5021 = vunpack.c.l.b16 %v4810
        %v5022 = vunpack.c.h.b16 %v4810
        %v5023 = vunpack.c.l.b16 %v4811
        %v5024 = vunpack.c.h.b16 %v4811
        %v5025 = vunpack.c.l.b16 %v4812
        %v5026 = vunpack.c.h.b16 %v4812
        %v5027 = vunpack.c.l.b16 %v4813
        %v5028 = vunpack.c.h.b16 %v4813
        %v5029 = vunpack.c.l.b16 %v4814
        %v5030 = vunpack.c.h.b16 %v4814
        %v5031 = vunpack.c.l.b16 %v4815
        %v5032 = vunpack.c.h.b16 %v4815
        %v5033 = vunpack.c.l.b16 %v4816
        %v5034 = vunpack.c.h.b16 %v4816
        %v5035 = vunpack.c.l.b16 %v4817
        %v5036 = vunpack.c.h.b16 %v4817
        %v5037 = vunpack.c.l.b16 %v4818
        %v5038 = vunpack.c.h.b16 %v4818
        %v5039 = vunpack.c.l.b16 %v4819
        %v5040 = vunpack.c.h.b16 %v4819
        %v5041 = vunpack.c.l.b16 %v4820
        %v5042 = vunpack.c.h.b16 %v4820
        %v5043 = vunpack.c.l.b16 %v4821
        %v5044 = vunpack.c.h.b16 %v4821
        %v5045 = vunpack.c.l.b16 %v4822
        %v5046 = vunpack.c.h.b16 %v4822
        %v5047 = vunpack.c.l.b16 %v4823
        %v5048 = vunpack.c.h.b16 %v4823
        %v5049 = vunpack.c.l.b16 %v4824
        %v5050 = vunpack.c.h.b16 %v4824
        %v5051 = vunpack.c.l.b16 %v4825
        %v5052 = vunpack.c.h.b16 %v4825
        %v5053 = vunpack.c.l.b16 %v4826
        %v5054 = vunpack.c.h.b16 %v4826
        %v5055 = vunpack.c.l.b16 %v4827
        %v5056 = vunpack.c.h.b16 %v4827
        %v5057 = vunpack.c.l.b16 %v4828
        %v5058 = vunpack.c.h.b16 %v4828
        %v5059 = vunpack.c.l.b16 %v4829
        %v5060 = vunpack.c.h.b16 %v4829
        %v5061 = vunpack.c.l.b16 %v4830
        %v5062 = vunpack.c.h.b16 %v4830
        %v5063 = vunpack.c.l.b16 %v4831
        %v5064 = vunpack.c.h.b16 %v4831
        %v5065 = vunpack.c.l.b16 %v4832
        %v5066 = vunpack.c.h.b16 %v4832
        %v5067 = vunpack.c.l.b16 %v4833
        %v5068 = vunpack.c.h.b16 %v4833
        %v5069 = vunpack.c.l.b16 %v4834
        %v5070 = vunpack.c.h.b16 %v4834
        %v5071 = vunpack.c.l.b16 %v4835
        %v5072 = vunpack.c.h.b16 %v4835
        %v5073 = vunpack.c.l.b16 %v4836
        %v5074 = vunpack.c.h.b16 %v4836
        %v5075 = vunpack.c.l.b16 %v4837
        %v5076 = vunpack.c.h.b16 %v4837
        %v5077 = vunpack.c.l.b16 %v4838
        %v5078 = vunpack.c.h.b16 %v4838
        %v5079 = vpack.c.b16 %v4921, %v4919
        %v5080 = vpack.c.b16 %v4922, %v4920
        %v5081 = vpack.c.b16 %v4925, %v4923
        %v5082 = vpack.c.b16 %v4926, %v4924
        %v5083 = vpack.c.b16 %v4929, %v4927
        %v5084 = vpack.c.b16 %v4930, %v4928
        %v5085 = vpack.c.b16 %v4933, %v4931
        %v5086 = vpack.c.b16 %v4934, %v4932
        %v5087 = vpack.c.b16 %v4937, %v4935
        %v5088 = vpack.c.b16 %v4938, %v4936
        %v5089 = vpack.c.b16 %v4941, %v4939
        %v5090 = vpack.c.b16 %v4942, %v4940
        %v5091 = vpack.c.b16 %v4945, %v4943
        %v5092 = vpack.c.b16 %v4946, %v4944
        %v5093 = vpack.c.b16 %v4949, %v4947
        %v5094 = vpack.c.b16 %v4950, %v4948
        %v5095 = vpack.c.b16 %v4953, %v4951
        %v5096 = vpack.c.b16 %v4954, %v4952
        %v5097 = vpack.c.b16 %v4957, %v4955
        %v5098 = vpack.c.b16 %v4958, %v4956
        %v5099 = vpack.c.b16 %v4961, %v4959
        %v5100 = vpack.c.b16 %v4962, %v4960
        %v5101 = vpack.c.b16 %v4965, %v4963
        %v5102 = vpack.c.b16 %v4966, %v4964
        %v5103 = vpack.c.b16 %v4969, %v4967
        %v5104 = vpack.c.b16 %v4970, %v4968
        %v5105 = vpack.c.b16 %v4973, %v4971
        %v5106 = vpack.c.b16 %v4974, %v4972
        %v5107 = vpack.c.b16 %v4977, %v4975
        %v5108 = vpack.c.b16 %v4978, %v4976
        %v5109 = vpack.c.b16 %v4981, %v4979
        %v5110 = vpack.c.b16 %v4982, %v4980
        %v5111 = vpack.c.b16 %v4985, %v4983
        %v5112 = vpack.c.b16 %v4986, %v4984
        %v5113 = vpack.c.b16 %v4989, %v4987
        %v5114 = vpack.c.b16 %v4990, %v4988
        %v5115 = vpack.c.b16 %v4993, %v4991
        %v5116 = vpack.c.b16 %v4994, %v4992
        %v5117 = vpack.c.b16 %v4997, %v4995
        %v5118 = vpack.c.b16 %v4998, %v4996
        %v5119 = vpack.c.b16 %v5001, %v4999
        %v5120 = vpack.c.b16 %v5002, %v5000
        %v5121 = vpack.c.b16 %v5005, %v5003
        %v5122 = vpack.c.b16 %v5006, %v5004
        %v5123 = vpack.c.b16 %v5009, %v5007
        %v5124 = vpack.c.b16 %v5010, %v5008
        %v5125 = vpack.c.b16 %v5013, %v5011
        %v5126 = vpack.c.b16 %v5014, %v5012
        %v5127 = vpack.c.b16 %v5017, %v5015
        %v5128 = vpack.c.b16 %v5018, %v5016
        %v5129 = vpack.c.b16 %v5021, %v5019
        %v5130 = vpack.c.b16 %v5022, %v5020
        %v5131 = vpack.c.b16 %v5025, %v5023
        %v5132 = vpack.c.b16 %v5026, %v5024
        %v5133 = vpack.c.b16 %v5029, %v5027
        %v5134 = vpack.c.b16 %v5030, %v5028
        %v5135 = vpack.c.b16 %v5033, %v5031
        %v5136 = vpack.c.b16 %v5034, %v5032
        %v5137 = vpack.c.b16 %v5037, %v5035
        %v5138 = vpack.c.b16 %v5038, %v5036
        %v5139 = vpack.c.b16 %v5041, %v5039
        %v5140 = vpack.c.b16 %v5042, %v5040
        %v5141 = vpack.c.b16 %v5045, %v5043
        %v5142 = vpack.c.b16 %v5046, %v5044
        %v5143 = vpack.c.b16 %v5049, %v5047
        %v5144 = vpack.c.b16 %v5050, %v5048
        %v5145 = vpack.c.b16 %v5053, %v5051
        %v5146 = vpack.c.b16 %v5054, %v5052
        %v5147 = vpack.c.b16 %v5057, %v5055
        %v5148 = vpack.c.b16 %v5058, %v5056
        %v5149 = vpack.c.b16 %v5061, %v5059
        %v5150 = vpack.c.b16 %v5062, %v5060
        %v5151 = vpack.c.b16 %v5065, %v5063
        %v5152 = vpack.c.b16 %v5066, %v5064
        %v5153 = vpack.c.b16 %v5069, %v5067
        %v5154 = vpack.c.b16 %v5070, %v5068
        %v5155 = vpack.c.b16 %v5073, %v5071
        %v5156 = vpack.c.b16 %v5074, %v5072
        %v5157 = vpack.c.b16 %v5077, %v5075
        %v5158 = vpack.c.b16 %v5078, %v5076
        %5239 = vmatprep.subr.bf16.mxu0 %v5080
        %5240 = vmatpush1.bf16.msra.mxu0 %v5079
        %5241 = vmatprep.subr.bf16.mxu0 %v5082
        %5242 = vmatpush1.bf16.msra.mxu0 %v5081
        %5243 = vmatprep.subr.bf16.mxu0 %v5084
        %5244 = vmatpush1.bf16.msra.mxu0 %v5083
        %5245 = vmatprep.subr.bf16.mxu0 %v5086
        %5246 = vmatpush1.bf16.msra.mxu0 %v5085
        %5247 = vmatprep.subr.bf16.mxu0 %v5088
        %5248 = vmatpush1.bf16.msra.mxu0 %v5087
        %5249 = vmatprep.subr.bf16.mxu0 %v5090
        %5250 = vmatpush1.bf16.msra.mxu0 %v5089
        %5251 = vmatprep.subr.bf16.mxu0 %v5092
        %5252 = vmatpush1.bf16.msra.mxu0 %v5091
        %5253 = vmatprep.subr.bf16.mxu0 %v5094
        %5254 = vmatpush1.bf16.msra.mxu0 %v5093
        %5255 = vmatprep.subr.bf16.mxu0 %v5096
        %5256 = vmatpush1.bf16.msra.mxu0 %v5095
        %5257 = vmatprep.subr.bf16.mxu0 %v5098
        %5258 = vmatpush1.bf16.msra.mxu0 %v5097
        %5259 = vmatprep.subr.bf16.mxu0 %v5100
        %5260 = vmatpush1.bf16.msra.mxu0 %v5099
        %5261 = vmatprep.subr.bf16.mxu0 %v5102
        %5262 = vmatpush1.bf16.msra.mxu0 %v5101
        %5263 = vmatprep.subr.bf16.mxu0 %v5104
        %5264 = vmatpush1.bf16.msra.mxu0 %v5103
        %5265 = vmatprep.subr.bf16.mxu0 %v5106
        %5266 = vmatpush1.bf16.msra.mxu0 %v5105
        %5267 = vmatprep.subr.bf16.mxu0 %v5108
        %5268 = vmatpush1.bf16.msra.mxu0 %v5107
        %5269 = vmatprep.subr.bf16.mxu0 %v5110
        %5270 = vmatpush1.bf16.msra.mxu0 %v5109
        %5271 = vmatprep.mubr.bf16.mxu0 %v4750
        %5272 = vmatmul.mubr.bf16.gmra.mrb[0].mxu0 %v4749
        %v5273 = vpop.f32.mrb[0].mxu0
        %v5274 = vadd.f32 0.0, %v5273
        %v5275 = vpop.f32.mrb[0].mxu0
        %v5276 = vadd.f32 0.0, %v5275
        %v5277 = vpop.f32.mrb[0].mxu0
        %v5278 = vadd.f32 0.0, %v5277
        %v5279 = vpop.f32.mrb[0].mxu0
        %v5280 = vadd.f32 0.0, %v5279
        %5281 = vmatprep.mubr.bf16.mxu0 %v4755
        %5282 = vmatmul.mubr.bf16.gmra.mrb[0].mxu0 %v4754
        %v5283 = vpop.f32.mrb[0].mxu0
        %v5284 = vadd.f32 0.0, %v5283
        %v5285 = vpop.f32.mrb[0].mxu0
        %v5286 = vadd.f32 0.0, %v5285
        %v5287 = vpop.f32.mrb[0].mxu0
        %v5288 = vadd.f32 0.0, %v5287
        %v5289 = vpop.f32.mrb[0].mxu0
        %v5290 = vadd.f32 0.0, %v5289
        %5291 = vdwg.mxu0
        %5292 = vmatprep.subr.bf16.mxu0 %v5112
        %5293 = vmatpush1.bf16.msra.mxu0 %v5111
        %5294 = vmatprep.subr.bf16.mxu0 %v5114
        %5295 = vmatpush1.bf16.msra.mxu0 %v5113
        %5296 = vmatprep.subr.bf16.mxu0 %v5116
        %5297 = vmatpush1.bf16.msra.mxu0 %v5115
        %5298 = vmatprep.subr.bf16.mxu0 %v5118
        %5299 = vmatpush1.bf16.msra.mxu0 %v5117
        %5300 = vmatprep.subr.bf16.mxu0 %v5120
        %5301 = vmatpush1.bf16.msra.mxu0 %v5119
        %5302 = vmatprep.subr.bf16.mxu0 %v5122
        %5303 = vmatpush1.bf16.msra.mxu0 %v5121
        %5304 = vmatprep.subr.bf16.mxu0 %v5124
        %5305 = vmatpush1.bf16.msra.mxu0 %v5123
        %5306 = vmatprep.subr.bf16.mxu0 %v5126
        %5307 = vmatpush1.bf16.msra.mxu0 %v5125
        %5308 = vmatprep.subr.bf16.mxu0 %v5128
        %5309 = vmatpush1.bf16.msra.mxu0 %v5127
        %5310 = vmatprep.subr.bf16.mxu0 %v5130
        %5311 = vmatpush1.bf16.msra.mxu0 %v5129
        %5312 = vmatprep.subr.bf16.mxu0 %v5132
        %5313 = vmatpush1.bf16.msra.mxu0 %v5131
        %5314 = vmatprep.subr.bf16.mxu0 %v5134
        %5315 = vmatpush1.bf16.msra.mxu0 %v5133
        %5316 = vmatprep.subr.bf16.mxu0 %v5136
        %5317 = vmatpush1.bf16.msra.mxu0 %v5135
        %5318 = vmatprep.subr.bf16.mxu0 %v5138
        %5319 = vmatpush1.bf16.msra.mxu0 %v5137
        %5320 = vmatprep.subr.bf16.mxu0 %v5140
        %5321 = vmatpush1.bf16.msra.mxu0 %v5139
        %5322 = vmatprep.subr.bf16.mxu0 %v5142
        %5323 = vmatpush1.bf16.msra.mxu0 %v5141
        %5324 = vmatprep.mubr.bf16.mxu0 %v4752
        %5325 = vmatmul.mubr.bf16.gmra.mrb[0].mxu0 %v4751
        %v5326 = vpop.f32.mrb[0].mxu0
        %v5327 = vadd.f32 %v5274, %v5326
        %v5328 = vpop.f32.mrb[0].mxu0
        %v5329 = vadd.f32 %v5276, %v5328
        %v5330 = vpop.f32.mrb[0].mxu0
        %v5331 = vadd.f32 %v5278, %v5330
        %v5332 = vpop.f32.mrb[0].mxu0
        %v5333 = vadd.f32 %v5280, %v5332
        %5334 = vmatprep.mubr.bf16.mxu0 %v4757
        %5335 = vmatmul.mubr.bf16.gmra.mrb[0].mxu0 %v4756
        %v5336 = vpop.f32.mrb[0].mxu0
        %v5337 = vadd.f32 %v5284, %v5336
        %v5338 = vpop.f32.mrb[0].mxu0
        %v5339 = vadd.f32 %v5286, %v5338
        %v5340 = vpop.f32.mrb[0].mxu0
        %v5341 = vadd.f32 %v5288, %v5340
        %v5342 = vpop.f32.mrb[0].mxu0
        %v5343 = vadd.f32 %v5290, %v5342
        %5344 = vdwg.mxu0
        %5345 = vmatprep.subr.bf16.mxu0 %v5144
        %5346 = vmatpush1.bf16.msra.mxu0 %v5143
        %5347 = vmatprep.subr.bf16.mxu0 %v5146
        %5348 = vmatpush1.bf16.msra.mxu0 %v5145
        %5349 = vmatprep.subr.bf16.mxu0 %v5148
        %5350 = vmatpush1.bf16.msra.mxu0 %v5147
        %5351 = vmatprep.subr.bf16.mxu0 %v5150
        %5352 = vmatpush1.bf16.msra.mxu0 %v5149
        %5353 = vmatprep.subr.bf16.mxu0 %v5152
        %5354 = vmatpush1.bf16.msra.mxu0 %v5151
        %5355 = vmatprep.subr.bf16.mxu0 %v5154
        %5356 = vmatpush1.bf16.msra.mxu0 %v5153
        %5357 = vmatprep.subr.bf16.mxu0 %v5156
        %5358 = vmatpush1.bf16.msra.mxu0 %v5155
        %5359 = vmatprep.subr.bf16.mxu0 %v5158
        %5360 = vmatpush1.bf16.msra.mxu0 %v5157
        %5361 = vmatprep.subr.bf16.mxu0 0
        %5362 = vmatpush1.bf16.msra.mxu0 0
        %5363 = vmatprep.subr.bf16.mxu0 0
        %5364 = vmatpush1.bf16.msra.mxu0 0
        %5365 = vmatprep.subr.bf16.mxu0 0
        %5366 = vmatpush1.bf16.msra.mxu0 0
        %5367 = vmatprep.subr.bf16.mxu0 0
        %5368 = vmatpush1.bf16.msra.mxu0 0
        %5369 = vmatprep.subr.bf16.mxu0 0
        %5370 = vmatpush1.bf16.msra.mxu0 0
        %5371 = vmatprep.subr.bf16.mxu0 0
        %5372 = vmatpush1.bf16.msra.mxu0 0
        %5373 = vmatprep.subr.bf16.mxu0 0
        %5374 = vmatpush1.bf16.msra.mxu0 0
        %5375 = vmatprep.subr.bf16.mxu0 0
        %5376 = vmatpush1.bf16.msra.mxu0 0
        %5377 = vmatprep.mubr.bf16.mxu0 0
        %5378 = vmatmul.mubr.bf16.gmra.mrb[0].mxu0 %v4753
        %v5379 = vpop.f32.mrb[0].mxu0
        %v5380 = vadd.f32 %v5327, %v5379
        %v5381 = vpop.f32.mrb[0].mxu0
        %v5382 = vadd.f32 %v5329, %v5381
        %v5383 = vpop.f32.mrb[0].mxu0
        %v5384 = vadd.f32 %v5331, %v5383
        %v5385 = vpop.f32.mrb[0].mxu0
        %v5386 = vadd.f32 %v5333, %v5385
        %5387 = vmatprep.mubr.bf16.mxu0 0
        %5388 = vmatmul.mubr.bf16.gmra.mrb[0].mxu0 %v4758
        %v5389 = vpop.f32.mrb[0].mxu0
        %v5390 = vadd.f32 %v5337, %v5389
        %v5391 = vpop.f32.mrb[0].mxu0
        %v5392 = vadd.f32 %v5339, %v5391
        %v5393 = vpop.f32.mrb[0].mxu0
        %v5394 = vadd.f32 %v5341, %v5393
        %v5395 = vpop.f32.mrb[0].mxu0
        %v5396 = vadd.f32 %v5343, %v5395
        %5397 = vdwg.mxu0
        %v5398 = vpack.c.bf16 %v5384, %v5380
        %v5399 = vpack.c.bf16 %v5386, %v5382
        %v5400 = vpack.c.bf16 %v5394, %v5390
        %v5401 = vpack.c.bf16 %v5396, %v5392
        %5402 = vst [vmem:[#allocation4] sm:$0xff] %v5398
        %5403 = vst.msk [vmem:[#allocation4 + $0x8] sm:$0xff] %vm2417, %v5399
        %5404 = vst [vmem:[#allocation4 + $0x10] sm:$0xff] %v5400
        %5405 = vst.msk [vmem:[#allocation4 + $0x18] sm:$0xff] %vm2417, %v5401
        %v5406 = vld [vmem:[%s5] sm:$0xf]
        %v5407 = vld [vmem:[%s5 + $0x4] sm:$0xf]
        %v5408 = vld [vmem:[%s5 + $0x8] sm:$0xf]
        %v5409 = vld [vmem:[%s5 + $0xc] sm:$0xf]
        %v5410 = vld [vmem:[%s5 + $0x10] sm:$0xf]
        %v5411 = vld [vmem:[%s5 + $0x14] sm:$0xf]
        %v5412 = vld [vmem:[%s5 + $0x18] sm:$0xf]
        %v5413 = vld [vmem:[%s5 + $0x1c] sm:$0xf]
        %v5414 = vld [vmem:[#allocation4] sm:$0xff]
        %v5415 = vld [vmem:[#allocation4 + $0x10] sm:$0xff]
        %s5416 = scalar_lea.vmem %s5, 32
        %v5417 = vld [vmem:[%s5416] sm:$0xf]
        %v5418 = vld [vmem:[%s5416 + $0x4] sm:$0xf]
        %v5419 = vld [vmem:[%s5416 + $0x8] sm:$0xf]
        %v5420 = vld [vmem:[%s5416 + $0xc] sm:$0xf]
        %v5421 = vld [vmem:[%s5416 + $0x10] sm:$0xf]
        %v5422 = vld [vmem:[%s5416 + $0x14] sm:$0xf]
        %v5423 = vld [vmem:[%s5416 + $0x18] sm:$0xf]
        %v5424 = vld [vmem:[%s5416 + $0x1c] sm:$0xf]
        %v5425 = vld [vmem:[#allocation4 + $0x8] sm:$0xff]
        %v5426 = vld [vmem:[#allocation4 + $0x18] sm:$0xff]
        %v5435 = vunpack.c.l.b16 %v5417
        %v5436 = vunpack.c.l.b16 %v5418
        %v5437 = vunpack.c.l.b16 %v5419
        %v5438 = vunpack.c.l.b16 %v5420
        %v5439 = vunpack.c.l.b16 %v5421
        %v5440 = vunpack.c.l.b16 %v5422
        %v5441 = vunpack.c.l.b16 %v5423
        %v5442 = vunpack.c.l.b16 %v5424
        %v5443 = vpack.c.b16 %v5436, %v5435
        %v5444 = vpack.c.b16 %v5438, %v5437
        %v5445 = vpack.c.b16 %v5440, %v5439
        %v5446 = vpack.c.b16 %v5442, %v5441
        %5451 = vrot.lane.b32.xlu0 %v5414, 127
        %v5452 = vpop.permute.xlu0 %5451
        %5453 = vrot.lane.b32.xlu0 %v5425, 127
        %v5454 = vpop.permute.xlu0 %5453
        %5455 = vrot.lane.b32.xlu0 %v5415, 127
        %v5456 = vpop.permute.xlu0 %5455
        %5457 = vrot.lane.b32.xlu0 %v5426, 127
        %v5458 = vpop.permute.xlu0 %5457
        %v5459 = vsel %vm2394, %v5452, %v5454
        %v5460 = vsel %vm2394, %v5456, %v5458
        %v5464 = vsel %vm2417, %v5443, 0
        %v5467 = vsel %vm2417, %v5444, 0
        %v5470 = vsel %vm2417, %v5445, 0
        %v5473 = vsel %vm2417, %v5446, 0
        %5475 = vmatprep.subr.bf16.mxu0 0
        %5476 = vmatpush1.bf16.msra.mxu0 %v5459
        %5477 = vmatprep.subr.bf16.mxu0 0
        %5478 = vmatpush1.bf16.msra.mxu0 %v5460
        %5479 = vmatprep.subr.bf16.mxu0 0
        %5480 = vmatpush1.bf16.msra.mxu0 0
        %5481 = vmatprep.subr.bf16.mxu0 0
        %5482 = vmatpush1.bf16.msra.mxu0 0
        %5483 = vmatprep.subr.bf16.mxu0 0
        %5484 = vmatpush1.bf16.msra.mxu0 0
        %5485 = vmatprep.subr.bf16.mxu0 0
        %5486 = vmatpush1.bf16.msra.mxu0 0
        %5487 = vmatprep.subr.bf16.mxu0 0
        %5488 = vmatpush1.bf16.msra.mxu0 0
        %5489 = vmatprep.subr.bf16.mxu0 0
        %5490 = vmatpush1.bf16.msra.mxu0 0
        %5491 = vmatprep.subr.bf16.mxu0 0
        %5492 = vmatpush1.bf16.msra.mxu0 0
        %5493 = vmatprep.subr.bf16.mxu0 0
        %5494 = vmatpush1.bf16.msra.mxu0 0
        %5495 = vmatprep.subr.bf16.mxu0 0
        %5496 = vmatpush1.bf16.msra.mxu0 0
        %5497 = vmatprep.subr.bf16.mxu0 0
        %5498 = vmatpush1.bf16.msra.mxu0 0
        %5499 = vmatprep.subr.bf16.mxu0 0
        %5500 = vmatpush1.bf16.msra.mxu0 0
        %5501 = vmatprep.subr.bf16.mxu0 0
        %5502 = vmatpush1.bf16.msra.mxu0 0
        %5503 = vmatprep.subr.bf16.mxu0 0
        %5504 = vmatpush1.bf16.msra.mxu0 0
        %5505 = vmatprep.subr.bf16.mxu0 0
        %5506 = vmatpush1.bf16.msra.mxu0 0
        %5507 = vmatprep.mubr.bf16.mxu0 0
        %5508 = vmatmul.mubr.bf16.gmra.mrb[0].mxu0 %v5464
        %v5509 = vpop.f32.mrb[0].mxu0
        %v5510 = vadd.f32 0.0, %v5509
        %v5511 = vpop.f32.mrb[0].mxu0
        %v5512 = vpop.f32.mrb[0].mxu0
        %v5513 = vadd.f32 0.0, %v5512
        %v5514 = vpop.f32.mrb[0].mxu0
        %5515 = vmatprep.mubr.bf16.mxu0 0
        %5516 = vmatmul.mubr.bf16.gmra.mrb[0].mxu0 %v5467
        %v5517 = vpop.f32.mrb[0].mxu0
        %v5518 = vadd.f32 0.0, %v5517
        %v5519 = vpop.f32.mrb[0].mxu0
        %v5520 = vpop.f32.mrb[0].mxu0
        %v5521 = vadd.f32 0.0, %v5520
        %v5522 = vpop.f32.mrb[0].mxu0
        %5523 = vmatprep.mubr.bf16.mxu0 0
        %5524 = vmatmul.mubr.bf16.gmra.mrb[0].mxu0 %v5470
        %v5525 = vpop.f32.mrb[0].mxu0
        %v5526 = vadd.f32 0.0, %v5525
        %v5527 = vpop.f32.mrb[0].mxu0
        %v5528 = vpop.f32.mrb[0].mxu0
        %v5529 = vadd.f32 0.0, %v5528
        %v5530 = vpop.f32.mrb[0].mxu0
        %5531 = vmatprep.mubr.bf16.mxu0 0
        %5532 = vmatmul.mubr.bf16.gmra.mrb[0].mxu0 %v5473
        %v5533 = vpop.f32.mrb[0].mxu0
        %v5534 = vadd.f32 0.0, %v5533
        %v5535 = vpop.f32.mrb[0].mxu0
        %v5536 = vpop.f32.mrb[0].mxu0
        %v5537 = vadd.f32 0.0, %v5536
        %v5538 = vpop.f32.mrb[0].mxu0
        %5539 = vdwg.mxu0
        %v5548 = vunpack.c.l.b16 %v5406
        %v5549 = vunpack.c.l.b16 %v5407
        %v5550 = vunpack.c.l.b16 %v5408
        %v5551 = vunpack.c.l.b16 %v5409
        %v5552 = vunpack.c.l.b16 %v5410
        %v5553 = vunpack.c.l.b16 %v5411
        %v5554 = vunpack.c.l.b16 %v5412
        %v5555 = vunpack.c.l.b16 %v5413
        %v5556 = vpack.c.b16 %v5549, %v5548
        %v5557 = vpack.c.b16 %v5551, %v5550
        %v5558 = vpack.c.b16 %v5553, %v5552
        %v5559 = vpack.c.b16 %v5555, %v5554
        %v5561 = vsel %vm2417, %v5556, 0
        %v5564 = vsel %vm2417, %v5557, 0
        %v5567 = vsel %vm2417, %v5558, 0
        %v5570 = vsel %vm2417, %v5559, 0
        %5572 = vmatprep.subr.bf16.mxu0 0
        %5573 = vmatpush1.bf16.msra.mxu0 %v5414
        %5574 = vmatprep.subr.bf16.mxu0 0
        %5575 = vmatpush1.bf16.msra.mxu0 %v5415
        %5576 = vmatprep.subr.bf16.mxu0 0
        %5577 = vmatpush1.bf16.msra.mxu0 0
        %5578 = vmatprep.subr.bf16.mxu0 0
        %5579 = vmatpush1.bf16.msra.mxu0 0
        %5580 = vmatprep.subr.bf16.mxu0 0
        %5581 = vmatpush1.bf16.msra.mxu0 0
        %5582 = vmatprep.subr.bf16.mxu0 0
        %5583 = vmatpush1.bf16.msra.mxu0 0
        %5584 = vmatprep.subr.bf16.mxu0 0
        %5585 = vmatpush1.bf16.msra.mxu0 0
        %5586 = vmatprep.subr.bf16.mxu0 0
        %5587 = vmatpush1.bf16.msra.mxu0 0
        %5588 = vmatprep.subr.bf16.mxu0 0
        %5589 = vmatpush1.bf16.msra.mxu0 0
        %5590 = vmatprep.subr.bf16.mxu0 0
        %5591 = vmatpush1.bf16.msra.mxu0 0
        %5592 = vmatprep.subr.bf16.mxu0 0
        %5593 = vmatpush1.bf16.msra.mxu0 0
        %5594 = vmatprep.subr.bf16.mxu0 0
        %5595 = vmatpush1.bf16.msra.mxu0 0
        %5596 = vmatprep.subr.bf16.mxu0 0
        %5597 = vmatpush1.bf16.msra.mxu0 0
        %5598 = vmatprep.subr.bf16.mxu0 0
        %5599 = vmatpush1.bf16.msra.mxu0 0
        %5600 = vmatprep.subr.bf16.mxu0 0
        %5601 = vmatpush1.bf16.msra.mxu0 0
        %5602 = vmatprep.subr.bf16.mxu0 0
        %5603 = vmatpush1.bf16.msra.mxu0 0
        %5604 = vmatprep.mubr.bf16.mxu0 0
        %5605 = vmatmul.mubr.bf16.gmra.mrb[0].mxu0 %v5561
        %v5606 = vpop.f32.mrb[0].mxu0
        %v5607 = vadd.f32 %v5510, %v5606
        %v5608 = vpop.f32.mrb[0].mxu0
        %v5609 = vpop.f32.mrb[0].mxu0
        %v5610 = vadd.f32 %v5513, %v5609
        %v5611 = vpop.f32.mrb[0].mxu0
        %5612 = vmatprep.mubr.bf16.mxu0 0
        %5613 = vmatmul.mubr.bf16.gmra.mrb[0].mxu0 %v5564
        %v5614 = vpop.f32.mrb[0].mxu0
        %v5615 = vadd.f32 %v5518, %v5614
        %v5616 = vpop.f32.mrb[0].mxu0
        %v5617 = vpop.f32.mrb[0].mxu0
        %v5618 = vadd.f32 %v5521, %v5617
        %v5619 = vpop.f32.mrb[0].mxu0
        %5620 = vmatprep.mubr.bf16.mxu0 0
        %5621 = vmatmul.mubr.bf16.gmra.mrb[0].mxu0 %v5567
        %v5622 = vpop.f32.mrb[0].mxu0
        %v5623 = vadd.f32 %v5526, %v5622
        %v5624 = vpop.f32.mrb[0].mxu0
        %v5625 = vpop.f32.mrb[0].mxu0
        %v5626 = vadd.f32 %v5529, %v5625
        %v5627 = vpop.f32.mrb[0].mxu0
        %5628 = vmatprep.mubr.bf16.mxu0 0
        %5629 = vmatmul.mubr.bf16.gmra.mrb[0].mxu0 %v5570
        %v5630 = vpop.f32.mrb[0].mxu0
        %v5631 = vadd.f32 %v5534, %v5630
        %v5632 = vpop.f32.mrb[0].mxu0
        %v5633 = vpop.f32.mrb[0].mxu0
        %v5634 = vadd.f32 %v5537, %v5633
        %v5635 = vpop.f32.mrb[0].mxu0
        %5636 = vdwg.mxu0
        %s5637 = scalar_lea.vmem %s5, 64
        %v5638 = vld [vmem:[%s5637] sm:$0xf]
        %v5639 = vld [vmem:[%s5637 + $0x4] sm:$0xf]
        %v5640 = vld [vmem:[%s5637 + $0x8] sm:$0xf]
        %v5641 = vld [vmem:[%s5637 + $0xc] sm:$0xf]
        %v5642 = vld [vmem:[%s5637 + $0x10] sm:$0xf]
        %v5643 = vld [vmem:[%s5637 + $0x14] sm:$0xf]
        %v5644 = vld [vmem:[%s5637 + $0x18] sm:$0xf]
        %v5645 = vld [vmem:[%s5637 + $0x1c] sm:$0xf]
        %v5654 = vunpack.c.l.b16 %v5638
        %v5655 = vunpack.c.l.b16 %v5639
        %v5656 = vunpack.c.l.b16 %v5640
        %v5657 = vunpack.c.l.b16 %v5641
        %v5658 = vunpack.c.l.b16 %v5642
        %v5659 = vunpack.c.l.b16 %v5643
        %v5660 = vunpack.c.l.b16 %v5644
        %v5661 = vunpack.c.l.b16 %v5645
        %v5662 = vpack.c.b16 %v5655, %v5654
        %v5663 = vpack.c.b16 %v5657, %v5656
        %v5664 = vpack.c.b16 %v5659, %v5658
        %v5665 = vpack.c.b16 %v5661, %v5660
        %5666 = vrot.lane.b32.xlu0 %v5414, 126
        %v5667 = vpop.permute.xlu0 %5666
        %5668 = vrot.lane.b32.xlu0 %v5425, 126
        %v5669 = vpop.permute.xlu0 %5668
        %5670 = vrot.lane.b32.xlu0 %v5415, 126
        %v5671 = vpop.permute.xlu0 %5670
        %5672 = vrot.lane.b32.xlu0 %v5426, 126
        %v5673 = vpop.permute.xlu0 %5672
        %v5674 = vsel %vm2797, %v5667, %v5669
        %v5675 = vsel %vm2797, %v5671, %v5673
        %v5679 = vsel %vm2417, %v5662, 0
        %v5682 = vsel %vm2417, %v5663, 0
        %v5685 = vsel %vm2417, %v5664, 0
        %v5688 = vsel %vm2417, %v5665, 0
        %5690 = vmatprep.subr.bf16.mxu0 0
        %5691 = vmatpush1.bf16.msra.mxu0 %v5674
        %5692 = vmatprep.subr.bf16.mxu0 0
        %5693 = vmatpush1.bf16.msra.mxu0 %v5675
        %5694 = vmatprep.subr.bf16.mxu0 0
        %5695 = vmatpush1.bf16.msra.mxu0 0
        %5696 = vmatprep.subr.bf16.mxu0 0
        %5697 = vmatpush1.bf16.msra.mxu0 0
        %5698 = vmatprep.subr.bf16.mxu0 0
        %5699 = vmatpush1.bf16.msra.mxu0 0
        %5700 = vmatprep.subr.bf16.mxu0 0
        %5701 = vmatpush1.bf16.msra.mxu0 0
        %5702 = vmatprep.subr.bf16.mxu0 0
        %5703 = vmatpush1.bf16.msra.mxu0 0
        %5704 = vmatprep.subr.bf16.mxu0 0
        %5705 = vmatpush1.bf16.msra.mxu0 0
        %5706 = vmatprep.subr.bf16.mxu0 0
        %5707 = vmatpush1.bf16.msra.mxu0 0
        %5708 = vmatprep.subr.bf16.mxu0 0
        %5709 = vmatpush1.bf16.msra.mxu0 0
        %5710 = vmatprep.subr.bf16.mxu0 0
        %5711 = vmatpush1.bf16.msra.mxu0 0
        %5712 = vmatprep.subr.bf16.mxu0 0
        %5713 = vmatpush1.bf16.msra.mxu0 0
        %5714 = vmatprep.subr.bf16.mxu0 0
        %5715 = vmatpush1.bf16.msra.mxu0 0
        %5716 = vmatprep.subr.bf16.mxu0 0
        %5717 = vmatpush1.bf16.msra.mxu0 0
        %5718 = vmatprep.subr.bf16.mxu0 0
        %5719 = vmatpush1.bf16.msra.mxu0 0
        %5720 = vmatprep.subr.bf16.mxu0 0
        %5721 = vmatpush1.bf16.msra.mxu0 0
        %5722 = vmatprep.mubr.bf16.mxu0 0
        %5723 = vmatmul.mubr.bf16.gmra.mrb[0].mxu0 %v5679
        %v5724 = vpop.f32.mrb[0].mxu0
        %v5725 = vadd.f32 0.0, %v5724
        %v5726 = vpop.f32.mrb[0].mxu0
        %v5727 = vpop.f32.mrb[0].mxu0
        %v5728 = vadd.f32 0.0, %v5727
        %v5729 = vpop.f32.mrb[0].mxu0
        %5730 = vmatprep.mubr.bf16.mxu0 0
        %5731 = vmatmul.mubr.bf16.gmra.mrb[0].mxu0 %v5682
        %v5732 = vpop.f32.mrb[0].mxu0
        %v5733 = vadd.f32 0.0, %v5732
        %v5734 = vpop.f32.mrb[0].mxu0
        %v5735 = vpop.f32.mrb[0].mxu0
        %v5736 = vadd.f32 0.0, %v5735
        %v5737 = vpop.f32.mrb[0].mxu0
        %5738 = vmatprep.mubr.bf16.mxu0 0
        %5739 = vmatmul.mubr.bf16.gmra.mrb[0].mxu0 %v5685
        %v5740 = vpop.f32.mrb[0].mxu0
        %v5741 = vadd.f32 0.0, %v5740
        %v5742 = vpop.f32.mrb[0].mxu0
        %v5743 = vpop.f32.mrb[0].mxu0
        %v5744 = vadd.f32 0.0, %v5743
        %v5745 = vpop.f32.mrb[0].mxu0
        %5746 = vmatprep.mubr.bf16.mxu0 0
        %5747 = vmatmul.mubr.bf16.gmra.mrb[0].mxu0 %v5688
        %v5748 = vpop.f32.mrb[0].mxu0
        %v5749 = vadd.f32 0.0, %v5748
        %v5750 = vpop.f32.mrb[0].mxu0
        %v5751 = vpop.f32.mrb[0].mxu0
        %v5752 = vadd.f32 0.0, %v5751
        %v5753 = vpop.f32.mrb[0].mxu0
        %5754 = vdwg.mxu0
        %v5755 = vadd.f32 %v5607, %v5725
        %v5756 = vadd.f32 %v5610, %v5728
        %v5757 = vadd.f32 %v5615, %v5733
        %v5758 = vadd.f32 %v5618, %v5736
        %v5759 = vadd.f32 %v5623, %v5741
        %v5760 = vadd.f32 %v5626, %v5744
        %v5761 = vadd.f32 %v5631, %v5749
        %v5762 = vadd.f32 %v5634, %v5752
        %s5763 = scalar_lea.vmem %s5, 96
        %v5764 = vld [vmem:[%s5763] sm:$0xf]
        %v5765 = vld [vmem:[%s5763 + $0x4] sm:$0xf]
        %v5766 = vld [vmem:[%s5763 + $0x8] sm:$0xf]
        %v5767 = vld [vmem:[%s5763 + $0xc] sm:$0xf]
        %v5768 = vld [vmem:[%s5763 + $0x10] sm:$0xf]
        %v5769 = vld [vmem:[%s5763 + $0x14] sm:$0xf]
        %v5770 = vld [vmem:[%s5763 + $0x18] sm:$0xf]
        %v5771 = vld [vmem:[%s5763 + $0x1c] sm:$0xf]
        %v5780 = vunpack.c.l.b16 %v5764
        %v5781 = vunpack.c.l.b16 %v5765
        %v5782 = vunpack.c.l.b16 %v5766
        %v5783 = vunpack.c.l.b16 %v5767
        %v5784 = vunpack.c.l.b16 %v5768
        %v5785 = vunpack.c.l.b16 %v5769
        %v5786 = vunpack.c.l.b16 %v5770
        %v5787 = vunpack.c.l.b16 %v5771
        %v5788 = vpack.c.b16 %v5781, %v5780
        %v5789 = vpack.c.b16 %v5783, %v5782
        %v5790 = vpack.c.b16 %v5785, %v5784
        %v5791 = vpack.c.b16 %v5787, %v5786
        %5792 = vrot.lane.b32.xlu0 %v5414, 116
        %v5793 = vpop.permute.xlu0 %5792
        %5794 = vrot.lane.b32.xlu0 %v5425, 116
        %v5795 = vpop.permute.xlu0 %5794
        %5796 = vrot.lane.b32.xlu0 %v5415, 116
        %v5797 = vpop.permute.xlu0 %5796
        %5798 = vrot.lane.b32.xlu0 %v5426, 116
        %v5799 = vpop.permute.xlu0 %5798
        %vm5800 = vcmask 949248
        %v5801 = vsel %vm5800, %v5793, %v5795
        %v5802 = vsel %vm5800, %v5797, %v5799
        %v5806 = vsel %vm2417, %v5788, 0
        %v5809 = vsel %vm2417, %v5789, 0
        %v5812 = vsel %vm2417, %v5790, 0
        %v5815 = vsel %vm2417, %v5791, 0
        %5817 = vmatprep.subr.bf16.mxu0 0
        %5818 = vmatpush1.bf16.msra.mxu0 %v5801
        %5819 = vmatprep.subr.bf16.mxu0 0
        %5820 = vmatpush1.bf16.msra.mxu0 %v5802
        %5821 = vmatprep.subr.bf16.mxu0 0
        %5822 = vmatpush1.bf16.msra.mxu0 0
        %5823 = vmatprep.subr.bf16.mxu0 0
        %5824 = vmatpush1.bf16.msra.mxu0 0
        %5825 = vmatprep.subr.bf16.mxu0 0
        %5826 = vmatpush1.bf16.msra.mxu0 0
        %5827 = vmatprep.subr.bf16.mxu0 0
        %5828 = vmatpush1.bf16.msra.mxu0 0
        %5829 = vmatprep.subr.bf16.mxu0 0
        %5830 = vmatpush1.bf16.msra.mxu0 0
        %5831 = vmatprep.subr.bf16.mxu0 0
        %5832 = vmatpush1.bf16.msra.mxu0 0
        %5833 = vmatprep.subr.bf16.mxu0 0
        %5834 = vmatpush1.bf16.msra.mxu0 0
        %5835 = vmatprep.subr.bf16.mxu0 0
        %5836 = vmatpush1.bf16.msra.mxu0 0
        %5837 = vmatprep.subr.bf16.mxu0 0
        %5838 = vmatpush1.bf16.msra.mxu0 0
        %5839 = vmatprep.subr.bf16.mxu0 0
        %5840 = vmatpush1.bf16.msra.mxu0 0
        %5841 = vmatprep.subr.bf16.mxu0 0
        %5842 = vmatpush1.bf16.msra.mxu0 0
        %5843 = vmatprep.subr.bf16.mxu0 0
        %5844 = vmatpush1.bf16.msra.mxu0 0
        %5845 = vmatprep.subr.bf16.mxu0 0
        %5846 = vmatpush1.bf16.msra.mxu0 0
        %5847 = vmatprep.subr.bf16.mxu0 0
        %5848 = vmatpush1.bf16.msra.mxu0 0
        %5849 = vmatprep.mubr.bf16.mxu0 0
        %5850 = vmatmul.mubr.bf16.gmra.mrb[0].mxu0 %v5806
        %v5851 = vpop.f32.mrb[0].mxu0
        %v5852 = vadd.f32 0.0, %v5851
        %v5853 = vpop.f32.mrb[0].mxu0
        %v5854 = vpop.f32.mrb[0].mxu0
        %v5855 = vadd.f32 0.0, %v5854
        %v5856 = vpop.f32.mrb[0].mxu0
        %5857 = vmatprep.mubr.bf16.mxu0 0
        %5858 = vmatmul.mubr.bf16.gmra.mrb[0].mxu0 %v5809
        %v5859 = vpop.f32.mrb[0].mxu0
        %v5860 = vadd.f32 0.0, %v5859
        %v5861 = vpop.f32.mrb[0].mxu0
        %v5862 = vpop.f32.mrb[0].mxu0
        %v5863 = vadd.f32 0.0, %v5862
        %v5864 = vpop.f32.mrb[0].mxu0
        %5865 = vmatprep.mubr.bf16.mxu0 0
        %5866 = vmatmul.mubr.bf16.gmra.mrb[0].mxu0 %v5812
        %v5867 = vpop.f32.mrb[0].mxu0
        %v5868 = vadd.f32 0.0, %v5867
        %v5869 = vpop.f32.mrb[0].mxu0
        %v5870 = vpop.f32.mrb[0].mxu0
        %v5871 = vadd.f32 0.0, %v5870
        %v5872 = vpop.f32.mrb[0].mxu0
        %5873 = vmatprep.mubr.bf16.mxu0 0
        %5874 = vmatmul.mubr.bf16.gmra.mrb[0].mxu0 %v5815
        %v5875 = vpop.f32.mrb[0].mxu0
        %v5876 = vadd.f32 0.0, %v5875
        %v5877 = vpop.f32.mrb[0].mxu0
        %v5878 = vpop.f32.mrb[0].mxu0
        %v5879 = vadd.f32 0.0, %v5878
        %v5880 = vpop.f32.mrb[0].mxu0
        %5881 = vdwg.mxu0
        %v5882 = vadd.f32 %v5755, %v5852
        %v5883 = vadd.f32 %v5756, %v5855
        %v5884 = vadd.f32 %v5757, %v5860
        %v5885 = vadd.f32 %v5758, %v5863
        %v5886 = vadd.f32 %v5759, %v5868
        %v5887 = vadd.f32 %v5760, %v5871
        %v5888 = vadd.f32 %v5761, %v5876
        %v5889 = vadd.f32 %v5762, %v5879
        %s5890 = scalar_lea.vmem %s5, 128
        %v5891 = vld [vmem:[%s5890] sm:$0xf]
        %v5892 = vld [vmem:[%s5890 + $0x4] sm:$0xf]
        %v5893 = vld [vmem:[%s5890 + $0x8] sm:$0xf]
        %v5894 = vld [vmem:[%s5890 + $0xc] sm:$0xf]
        %v5895 = vld [vmem:[%s5890 + $0x10] sm:$0xf]
        %v5896 = vld [vmem:[%s5890 + $0x14] sm:$0xf]
        %v5897 = vld [vmem:[%s5890 + $0x18] sm:$0xf]
        %v5898 = vld [vmem:[%s5890 + $0x1c] sm:$0xf]
        %v5907 = vunpack.c.l.b16 %v5891
        %v5908 = vunpack.c.l.b16 %v5892
        %v5909 = vunpack.c.l.b16 %v5893
        %v5910 = vunpack.c.l.b16 %v5894
        %v5911 = vunpack.c.l.b16 %v5895
        %v5912 = vunpack.c.l.b16 %v5896
        %v5913 = vunpack.c.l.b16 %v5897
        %v5914 = vunpack.c.l.b16 %v5898
        %v5915 = vpack.c.b16 %v5908, %v5907
        %v5916 = vpack.c.b16 %v5910, %v5909
        %v5917 = vpack.c.b16 %v5912, %v5911
        %v5918 = vpack.c.b16 %v5914, %v5913
        %5919 = vrot.lane.b32.xlu0 %v5414, 115
        %v5920 = vpop.permute.xlu0 %5919
        %5921 = vrot.lane.b32.xlu0 %v5425, 115
        %v5922 = vpop.permute.xlu0 %5921
        %5923 = vrot.lane.b32.xlu0 %v5415, 115
        %v5924 = vpop.permute.xlu0 %5923
        %5925 = vrot.lane.b32.xlu0 %v5426, 115
        %v5926 = vpop.permute.xlu0 %5925
        %vm5927 = vcmask 941056
        %v5928 = vsel %vm5927, %v5920, %v5922
        %v5929 = vsel %vm5927, %v5924, %v5926
        %v5933 = vsel %vm2417, %v5915, 0
        %v5936 = vsel %vm2417, %v5916, 0
        %v5939 = vsel %vm2417, %v5917, 0
        %v5942 = vsel %vm2417, %v5918, 0
        %5944 = vmatprep.subr.bf16.mxu0 0
        %5945 = vmatpush1.bf16.msra.mxu0 %v5928
        %5946 = vmatprep.subr.bf16.mxu0 0
        %5947 = vmatpush1.bf16.msra.mxu0 %v5929
        %5948 = vmatprep.subr.bf16.mxu0 0
        %5949 = vmatpush1.bf16.msra.mxu0 0
        %5950 = vmatprep.subr.bf16.mxu0 0
        %5951 = vmatpush1.bf16.msra.mxu0 0
        %5952 = vmatprep.subr.bf16.mxu0 0
        %5953 = vmatpush1.bf16.msra.mxu0 0
        %5954 = vmatprep.subr.bf16.mxu0 0
        %5955 = vmatpush1.bf16.msra.mxu0 0
        %5956 = vmatprep.subr.bf16.mxu0 0
        %5957 = vmatpush1.bf16.msra.mxu0 0
        %5958 = vmatprep.subr.bf16.mxu0 0
        %5959 = vmatpush1.bf16.msra.mxu0 0
        %5960 = vmatprep.subr.bf16.mxu0 0
        %5961 = vmatpush1.bf16.msra.mxu0 0
        %5962 = vmatprep.subr.bf16.mxu0 0
        %5963 = vmatpush1.bf16.msra.mxu0 0
        %5964 = vmatprep.subr.bf16.mxu0 0
        %5965 = vmatpush1.bf16.msra.mxu0 0
        %5966 = vmatprep.subr.bf16.mxu0 0
        %5967 = vmatpush1.bf16.msra.mxu0 0
        %5968 = vmatprep.subr.bf16.mxu0 0
        %5969 = vmatpush1.bf16.msra.mxu0 0
        %5970 = vmatprep.subr.bf16.mxu0 0
        %5971 = vmatpush1.bf16.msra.mxu0 0
        %5972 = vmatprep.subr.bf16.mxu0 0
        %5973 = vmatpush1.bf16.msra.mxu0 0
        %5974 = vmatprep.subr.bf16.mxu0 0
        %5975 = vmatpush1.bf16.msra.mxu0 0
        %5976 = vmatprep.mubr.bf16.mxu0 0
        %5977 = vmatmul.mubr.bf16.gmra.mrb[0].mxu0 %v5933
        %v5978 = vpop.f32.mrb[0].mxu0
        %v5979 = vadd.f32 0.0, %v5978
        %v5980 = vpop.f32.mrb[0].mxu0
        %v5981 = vpop.f32.mrb[0].mxu0
        %v5982 = vadd.f32 0.0, %v5981
        %v5983 = vpop.f32.mrb[0].mxu0
        %5984 = vmatprep.mubr.bf16.mxu0 0
        %5985 = vmatmul.mubr.bf16.gmra.mrb[0].mxu0 %v5936
        %v5986 = vpop.f32.mrb[0].mxu0
        %v5987 = vadd.f32 0.0, %v5986
        %v5988 = vpop.f32.mrb[0].mxu0
        %v5989 = vpop.f32.mrb[0].mxu0
        %v5990 = vadd.f32 0.0, %v5989
        %v5991 = vpop.f32.mrb[0].mxu0
        %5992 = vmatprep.mubr.bf16.mxu0 0
        %5993 = vmatmul.mubr.bf16.gmra.mrb[0].mxu0 %v5939
        %v5994 = vpop.f32.mrb[0].mxu0
        %v5995 = vadd.f32 0.0, %v5994
        %v5996 = vpop.f32.mrb[0].mxu0
        %v5997 = vpop.f32.mrb[0].mxu0
        %v5998 = vadd.f32 0.0, %v5997
        %v5999 = vpop.f32.mrb[0].mxu0
        %6000 = vmatprep.mubr.bf16.mxu0 0
        %6001 = vmatmul.mubr.bf16.gmra.mrb[0].mxu0 %v5942
        %v6002 = vpop.f32.mrb[0].mxu0
        %v6003 = vadd.f32 0.0, %v6002
        %v6004 = vpop.f32.mrb[0].mxu0
        %v6005 = vpop.f32.mrb[0].mxu0
        %v6006 = vadd.f32 0.0, %v6005
        %v6007 = vpop.f32.mrb[0].mxu0
        %6008 = vdwg.mxu0
        %v6009 = vadd.f32 %v5882, %v5979
        %v6010 = vadd.f32 %v5883, %v5982
        %v6011 = vadd.f32 %v5884, %v5987
        %v6012 = vadd.f32 %v5885, %v5990
        %v6013 = vadd.f32 %v5886, %v5995
        %v6014 = vadd.f32 %v5887, %v5998
        %v6015 = vadd.f32 %v5888, %v6003
        %v6016 = vadd.f32 %v5889, %v6006
        %s6017 = scalar_lea.vmem %s5, 160
        %v6018 = vld [vmem:[%s6017] sm:$0xf]
        %v6019 = vld [vmem:[%s6017 + $0x4] sm:$0xf]
        %v6020 = vld [vmem:[%s6017 + $0x8] sm:$0xf]
        %v6021 = vld [vmem:[%s6017 + $0xc] sm:$0xf]
        %v6022 = vld [vmem:[%s6017 + $0x10] sm:$0xf]
        %v6023 = vld [vmem:[%s6017 + $0x14] sm:$0xf]
        %v6024 = vld [vmem:[%s6017 + $0x18] sm:$0xf]
        %v6025 = vld [vmem:[%s6017 + $0x1c] sm:$0xf]
        %v6034 = vunpack.c.l.b16 %v6018
        %v6035 = vunpack.c.l.b16 %v6019
        %v6036 = vunpack.c.l.b16 %v6020
        %v6037 = vunpack.c.l.b16 %v6021
        %v6038 = vunpack.c.l.b16 %v6022
        %v6039 = vunpack.c.l.b16 %v6023
        %v6040 = vunpack.c.l.b16 %v6024
        %v6041 = vunpack.c.l.b16 %v6025
        %v6042 = vpack.c.b16 %v6035, %v6034
        %v6043 = vpack.c.b16 %v6037, %v6036
        %v6044 = vpack.c.b16 %v6039, %v6038
        %v6045 = vpack.c.b16 %v6041, %v6040
        %6046 = vrot.lane.b32.xlu0 %v5414, 114
        %v6047 = vpop.permute.xlu0 %6046
        %6048 = vrot.lane.b32.xlu0 %v5425, 114
        %v6049 = vpop.permute.xlu0 %6048
        %6050 = vrot.lane.b32.xlu0 %v5415, 114
        %v6051 = vpop.permute.xlu0 %6050
        %6052 = vrot.lane.b32.xlu0 %v5426, 114
        %v6053 = vpop.permute.xlu0 %6052
        %vm6054 = vcmask 932864
        %v6055 = vsel %vm6054, %v6047, %v6049
        %v6056 = vsel %vm6054, %v6051, %v6053
        %v6060 = vsel %vm2417, %v6042, 0
        %v6063 = vsel %vm2417, %v6043, 0
        %v6066 = vsel %vm2417, %v6044, 0
        %v6069 = vsel %vm2417, %v6045, 0
        %6071 = vmatprep.subr.bf16.mxu0 0
        %6072 = vmatpush1.bf16.msra.mxu0 %v6055
        %6073 = vmatprep.subr.bf16.mxu0 0
        %6074 = vmatpush1.bf16.msra.mxu0 %v6056
        %6075 = vmatprep.subr.bf16.mxu0 0
        %6076 = vmatpush1.bf16.msra.mxu0 0
        %6077 = vmatprep.subr.bf16.mxu0 0
        %6078 = vmatpush1.bf16.msra.mxu0 0
        %6079 = vmatprep.subr.bf16.mxu0 0
        %6080 = vmatpush1.bf16.msra.mxu0 0
        %6081 = vmatprep.subr.bf16.mxu0 0
        %6082 = vmatpush1.bf16.msra.mxu0 0
        %6083 = vmatprep.subr.bf16.mxu0 0
        %6084 = vmatpush1.bf16.msra.mxu0 0
        %6085 = vmatprep.subr.bf16.mxu0 0
        %6086 = vmatpush1.bf16.msra.mxu0 0
        %6087 = vmatprep.subr.bf16.mxu0 0
        %6088 = vmatpush1.bf16.msra.mxu0 0
        %6089 = vmatprep.subr.bf16.mxu0 0
        %6090 = vmatpush1.bf16.msra.mxu0 0
        %6091 = vmatprep.subr.bf16.mxu0 0
        %6092 = vmatpush1.bf16.msra.mxu0 0
        %6093 = vmatprep.subr.bf16.mxu0 0
        %6094 = vmatpush1.bf16.msra.mxu0 0
        %6095 = vmatprep.subr.bf16.mxu0 0
        %6096 = vmatpush1.bf16.msra.mxu0 0
        %6097 = vmatprep.subr.bf16.mxu0 0
        %6098 = vmatpush1.bf16.msra.mxu0 0
        %6099 = vmatprep.subr.bf16.mxu0 0
        %6100 = vmatpush1.bf16.msra.mxu0 0
        %6101 = vmatprep.subr.bf16.mxu0 0
        %6102 = vmatpush1.bf16.msra.mxu0 0
        %6103 = vmatprep.mubr.bf16.mxu0 0
        %6104 = vmatmul.mubr.bf16.gmra.mrb[0].mxu0 %v6060
        %v6105 = vpop.f32.mrb[0].mxu0
        %v6106 = vadd.f32 0.0, %v6105
        %v6107 = vpop.f32.mrb[0].mxu0
        %v6108 = vpop.f32.mrb[0].mxu0
        %v6109 = vadd.f32 0.0, %v6108
        %v6110 = vpop.f32.mrb[0].mxu0
        %6111 = vmatprep.mubr.bf16.mxu0 0
        %6112 = vmatmul.mubr.bf16.gmra.mrb[0].mxu0 %v6063
        %v6113 = vpop.f32.mrb[0].mxu0
        %v6114 = vadd.f32 0.0, %v6113
        %v6115 = vpop.f32.mrb[0].mxu0
        %v6116 = vpop.f32.mrb[0].mxu0
        %v6117 = vadd.f32 0.0, %v6116
        %v6118 = vpop.f32.mrb[0].mxu0
        %6119 = vmatprep.mubr.bf16.mxu0 0
        %6120 = vmatmul.mubr.bf16.gmra.mrb[0].mxu0 %v6066
        %v6121 = vpop.f32.mrb[0].mxu0
        %v6122 = vadd.f32 0.0, %v6121
        %v6123 = vpop.f32.mrb[0].mxu0
        %v6124 = vpop.f32.mrb[0].mxu0
        %v6125 = vadd.f32 0.0, %v6124
        %v6126 = vpop.f32.mrb[0].mxu0
        %6127 = vmatprep.mubr.bf16.mxu0 0
        %6128 = vmatmul.mubr.bf16.gmra.mrb[0].mxu0 %v6069
        %v6129 = vpop.f32.mrb[0].mxu0
        %v6130 = vadd.f32 0.0, %v6129
        %v6131 = vpop.f32.mrb[0].mxu0
        %v6132 = vpop.f32.mrb[0].mxu0
        %v6133 = vadd.f32 0.0, %v6132
        %v6134 = vpop.f32.mrb[0].mxu0
        %6135 = vdwg.mxu0
        %v6136 = vadd.f32 %v6009, %v6106
        %v6137 = vadd.f32 %v6010, %v6109
        %v6138 = vadd.f32 %v6011, %v6114
        %v6139 = vadd.f32 %v6012, %v6117
        %v6140 = vadd.f32 %v6013, %v6122
        %v6141 = vadd.f32 %v6014, %v6125
        %v6142 = vadd.f32 %v6015, %v6130
        %v6143 = vadd.f32 %v6016, %v6133
        %s6144 = scalar_lea.vmem %s5, 192
        %v6145 = vld [vmem:[%s6144] sm:$0xf]
        %v6146 = vld [vmem:[%s6144 + $0x4] sm:$0xf]
        %v6147 = vld [vmem:[%s6144 + $0x8] sm:$0xf]
        %v6148 = vld [vmem:[%s6144 + $0xc] sm:$0xf]
        %v6149 = vld [vmem:[%s6144 + $0x10] sm:$0xf]
        %v6150 = vld [vmem:[%s6144 + $0x14] sm:$0xf]
        %v6151 = vld [vmem:[%s6144 + $0x18] sm:$0xf]
        %v6152 = vld [vmem:[%s6144 + $0x1c] sm:$0xf]
        %v6161 = vunpack.c.l.b16 %v6145
        %v6162 = vunpack.c.l.b16 %v6146
        %v6163 = vunpack.c.l.b16 %v6147
        %v6164 = vunpack.c.l.b16 %v6148
        %v6165 = vunpack.c.l.b16 %v6149
        %v6166 = vunpack.c.l.b16 %v6150
        %v6167 = vunpack.c.l.b16 %v6151
        %v6168 = vunpack.c.l.b16 %v6152
        %v6169 = vpack.c.b16 %v6162, %v6161
        %v6170 = vpack.c.b16 %v6164, %v6163
        %v6171 = vpack.c.b16 %v6166, %v6165
        %v6172 = vpack.c.b16 %v6168, %v6167
        %6173 = vrot.lane.b32.xlu0 %v5414, 104
        %v6174 = vpop.permute.xlu0 %6173
        %6175 = vrot.lane.b32.xlu0 %v5425, 104
        %v6176 = vpop.permute.xlu0 %6175
        %6177 = vrot.lane.b32.xlu0 %v5415, 104
        %v6178 = vpop.permute.xlu0 %6177
        %6179 = vrot.lane.b32.xlu0 %v5426, 104
        %v6180 = vpop.permute.xlu0 %6179
        %vm6181 = vcmask 850944
        %v6182 = vsel %vm6181, %v6174, %v6176
        %v6183 = vsel %vm6181, %v6178, %v6180
        %v6187 = vsel %vm2417, %v6169, 0
        %v6190 = vsel %vm2417, %v6170, 0
        %v6193 = vsel %vm2417, %v6171, 0
        %v6196 = vsel %vm2417, %v6172, 0
        %6198 = vmatprep.subr.bf16.mxu0 0
        %6199 = vmatpush1.bf16.msra.mxu0 %v6182
        %6200 = vmatprep.subr.bf16.mxu0 0
        %6201 = vmatpush1.bf16.msra.mxu0 %v6183
        %6202 = vmatprep.subr.bf16.mxu0 0
        %6203 = vmatpush1.bf16.msra.mxu0 0
        %6204 = vmatprep.subr.bf16.mxu0 0
        %6205 = vmatpush1.bf16.msra.mxu0 0
        %6206 = vmatprep.subr.bf16.mxu0 0
        %6207 = vmatpush1.bf16.msra.mxu0 0
        %6208 = vmatprep.subr.bf16.mxu0 0
        %6209 = vmatpush1.bf16.msra.mxu0 0
        %6210 = vmatprep.subr.bf16.mxu0 0
        %6211 = vmatpush1.bf16.msra.mxu0 0
        %6212 = vmatprep.subr.bf16.mxu0 0
        %6213 = vmatpush1.bf16.msra.mxu0 0
        %6214 = vmatprep.subr.bf16.mxu0 0
        %6215 = vmatpush1.bf16.msra.mxu0 0
        %6216 = vmatprep.subr.bf16.mxu0 0
        %6217 = vmatpush1.bf16.msra.mxu0 0
        %6218 = vmatprep.subr.bf16.mxu0 0
        %6219 = vmatpush1.bf16.msra.mxu0 0
        %6220 = vmatprep.subr.bf16.mxu0 0
        %6221 = vmatpush1.bf16.msra.mxu0 0
        %6222 = vmatprep.subr.bf16.mxu0 0
        %6223 = vmatpush1.bf16.msra.mxu0 0
        %6224 = vmatprep.subr.bf16.mxu0 0
        %6225 = vmatpush1.bf16.msra.mxu0 0
        %6226 = vmatprep.subr.bf16.mxu0 0
        %6227 = vmatpush1.bf16.msra.mxu0 0
        %6228 = vmatprep.subr.bf16.mxu0 0
        %6229 = vmatpush1.bf16.msra.mxu0 0
        %6230 = vmatprep.mubr.bf16.mxu0 0
        %6231 = vmatmul.mubr.bf16.gmra.mrb[0].mxu0 %v6187
        %v6232 = vpop.f32.mrb[0].mxu0
        %v6233 = vadd.f32 0.0, %v6232
        %v6234 = vpop.f32.mrb[0].mxu0
        %v6235 = vpop.f32.mrb[0].mxu0
        %v6236 = vadd.f32 0.0, %v6235
        %v6237 = vpop.f32.mrb[0].mxu0
        %6238 = vmatprep.mubr.bf16.mxu0 0
        %6239 = vmatmul.mubr.bf16.gmra.mrb[0].mxu0 %v6190
        %v6240 = vpop.f32.mrb[0].mxu0
        %v6241 = vadd.f32 0.0, %v6240
        %v6242 = vpop.f32.mrb[0].mxu0
        %v6243 = vpop.f32.mrb[0].mxu0
        %v6244 = vadd.f32 0.0, %v6243
        %v6245 = vpop.f32.mrb[0].mxu0
        %6246 = vmatprep.mubr.bf16.mxu0 0
        %6247 = vmatmul.mubr.bf16.gmra.mrb[0].mxu0 %v6193
        %v6248 = vpop.f32.mrb[0].mxu0
        %v6249 = vadd.f32 0.0, %v6248
        %v6250 = vpop.f32.mrb[0].mxu0
        %v6251 = vpop.f32.mrb[0].mxu0
        %v6252 = vadd.f32 0.0, %v6251
        %v6253 = vpop.f32.mrb[0].mxu0
        %6254 = vmatprep.mubr.bf16.mxu0 0
        %6255 = vmatmul.mubr.bf16.gmra.mrb[0].mxu0 %v6196
        %v6256 = vpop.f32.mrb[0].mxu0
        %v6257 = vadd.f32 0.0, %v6256
        %v6258 = vpop.f32.mrb[0].mxu0
        %v6259 = vpop.f32.mrb[0].mxu0
        %v6260 = vadd.f32 0.0, %v6259
        %v6261 = vpop.f32.mrb[0].mxu0
        %6262 = vdwg.mxu0
        %v6263 = vadd.f32 %v6136, %v6233
        %v6264 = vadd.f32 %v6137, %v6236
        %v6265 = vadd.f32 %v6138, %v6241
        %v6266 = vadd.f32 %v6139, %v6244
        %v6267 = vadd.f32 %v6140, %v6249
        %v6268 = vadd.f32 %v6141, %v6252
        %v6269 = vadd.f32 %v6142, %v6257
        %v6270 = vadd.f32 %v6143, %v6260
        %s6271 = scalar_lea.vmem %s5, 224
        %v6272 = vld [vmem:[%s6271] sm:$0xf]
        %v6273 = vld [vmem:[%s6271 + $0x4] sm:$0xf]
        %v6274 = vld [vmem:[%s6271 + $0x8] sm:$0xf]
        %v6275 = vld [vmem:[%s6271 + $0xc] sm:$0xf]
        %v6276 = vld [vmem:[%s6271 + $0x10] sm:$0xf]
        %v6277 = vld [vmem:[%s6271 + $0x14] sm:$0xf]
        %v6278 = vld [vmem:[%s6271 + $0x18] sm:$0xf]
        %v6279 = vld [vmem:[%s6271 + $0x1c] sm:$0xf]
        %v6288 = vunpack.c.l.b16 %v6272
        %v6289 = vunpack.c.l.b16 %v6273
        %v6290 = vunpack.c.l.b16 %v6274
        %v6291 = vunpack.c.l.b16 %v6275
        %v6292 = vunpack.c.l.b16 %v6276
        %v6293 = vunpack.c.l.b16 %v6277
        %v6294 = vunpack.c.l.b16 %v6278
        %v6295 = vunpack.c.l.b16 %v6279
        %v6296 = vpack.c.b16 %v6289, %v6288
        %v6297 = vpack.c.b16 %v6291, %v6290
        %v6298 = vpack.c.b16 %v6293, %v6292
        %v6299 = vpack.c.b16 %v6295, %v6294
        %6300 = vrot.lane.b32.xlu0 %v5414, 103
        %v6301 = vpop.permute.xlu0 %6300
        %6302 = vrot.lane.b32.xlu0 %v5425, 103
        %v6303 = vpop.permute.xlu0 %6302
        %6304 = vrot.lane.b32.xlu0 %v5415, 103
        %v6305 = vpop.permute.xlu0 %6304
        %6306 = vrot.lane.b32.xlu0 %v5426, 103
        %v6307 = vpop.permute.xlu0 %6306
        %vm6308 = vcmask 842752
        %v6309 = vsel %vm6308, %v6301, %v6303
        %v6310 = vsel %vm6308, %v6305, %v6307
        %v6314 = vsel %vm2417, %v6296, 0
        %v6317 = vsel %vm2417, %v6297, 0
        %v6320 = vsel %vm2417, %v6298, 0
        %v6323 = vsel %vm2417, %v6299, 0
        %6325 = vmatprep.subr.bf16.mxu0 0
        %6326 = vmatpush1.bf16.msra.mxu0 %v6309
        %6327 = vmatprep.subr.bf16.mxu0 0
        %6328 = vmatpush1.bf16.msra.mxu0 %v6310
        %6329 = vmatprep.subr.bf16.mxu0 0
        %6330 = vmatpush1.bf16.msra.mxu0 0
        %6331 = vmatprep.subr.bf16.mxu0 0
        %6332 = vmatpush1.bf16.msra.mxu0 0
        %6333 = vmatprep.subr.bf16.mxu0 0
        %6334 = vmatpush1.bf16.msra.mxu0 0
        %6335 = vmatprep.subr.bf16.mxu0 0
        %6336 = vmatpush1.bf16.msra.mxu0 0
        %6337 = vmatprep.subr.bf16.mxu0 0
        %6338 = vmatpush1.bf16.msra.mxu0 0
        %6339 = vmatprep.subr.bf16.mxu0 0
        %6340 = vmatpush1.bf16.msra.mxu0 0
        %6341 = vmatprep.subr.bf16.mxu0 0
        %6342 = vmatpush1.bf16.msra.mxu0 0
        %6343 = vmatprep.subr.bf16.mxu0 0
        %6344 = vmatpush1.bf16.msra.mxu0 0
        %6345 = vmatprep.subr.bf16.mxu0 0
        %6346 = vmatpush1.bf16.msra.mxu0 0
        %6347 = vmatprep.subr.bf16.mxu0 0
        %6348 = vmatpush1.bf16.msra.mxu0 0
        %6349 = vmatprep.subr.bf16.mxu0 0
        %6350 = vmatpush1.bf16.msra.mxu0 0
        %6351 = vmatprep.subr.bf16.mxu0 0
        %6352 = vmatpush1.bf16.msra.mxu0 0
        %6353 = vmatprep.subr.bf16.mxu0 0
        %6354 = vmatpush1.bf16.msra.mxu0 0
        %6355 = vmatprep.subr.bf16.mxu0 0
        %6356 = vmatpush1.bf16.msra.mxu0 0
        %6357 = vmatprep.mubr.bf16.mxu0 0
        %6358 = vmatmul.mubr.bf16.gmra.mrb[0].mxu0 %v6314
        %v6359 = vpop.f32.mrb[0].mxu0
        %v6360 = vadd.f32 0.0, %v6359
        %v6361 = vpop.f32.mrb[0].mxu0
        %v6362 = vpop.f32.mrb[0].mxu0
        %v6363 = vadd.f32 0.0, %v6362
        %v6364 = vpop.f32.mrb[0].mxu0
        %6365 = vmatprep.mubr.bf16.mxu0 0
        %6366 = vmatmul.mubr.bf16.gmra.mrb[0].mxu0 %v6317
        %v6367 = vpop.f32.mrb[0].mxu0
        %v6368 = vadd.f32 0.0, %v6367
        %v6369 = vpop.f32.mrb[0].mxu0
        %v6370 = vpop.f32.mrb[0].mxu0
        %v6371 = vadd.f32 0.0, %v6370
        %v6372 = vpop.f32.mrb[0].mxu0
        %6373 = vmatprep.mubr.bf16.mxu0 0
        %6374 = vmatmul.mubr.bf16.gmra.mrb[0].mxu0 %v6320
        %v6375 = vpop.f32.mrb[0].mxu0
        %v6376 = vadd.f32 0.0, %v6375
        %v6377 = vpop.f32.mrb[0].mxu0
        %v6378 = vpop.f32.mrb[0].mxu0
        %v6379 = vadd.f32 0.0, %v6378
        %v6380 = vpop.f32.mrb[0].mxu0
        %6381 = vmatprep.mubr.bf16.mxu0 0
        %6382 = vmatmul.mubr.bf16.gmra.mrb[0].mxu0 %v6323
        %v6383 = vpop.f32.mrb[0].mxu0
        %v6384 = vadd.f32 0.0, %v6383
        %v6385 = vpop.f32.mrb[0].mxu0
        %v6386 = vpop.f32.mrb[0].mxu0
        %v6387 = vadd.f32 0.0, %v6386
        %v6388 = vpop.f32.mrb[0].mxu0
        %6389 = vdwg.mxu0
        %v6390 = vadd.f32 %v6263, %v6360
        %v6391 = vadd.f32 %v6264, %v6363
        %v6392 = vadd.f32 %v6265, %v6368
        %v6393 = vadd.f32 %v6266, %v6371
        %v6394 = vadd.f32 %v6267, %v6376
        %v6395 = vadd.f32 %v6268, %v6379
        %v6396 = vadd.f32 %v6269, %v6384
        %v6397 = vadd.f32 %v6270, %v6387
        %s6398 = scalar_lea.vmem %s5, 256
        %v6399 = vld [vmem:[%s6398] sm:$0xf]
        %v6400 = vld [vmem:[%s6398 + $0x4] sm:$0xf]
        %v6401 = vld [vmem:[%s6398 + $0x8] sm:$0xf]
        %v6402 = vld [vmem:[%s6398 + $0xc] sm:$0xf]
        %v6403 = vld [vmem:[%s6398 + $0x10] sm:$0xf]
        %v6404 = vld [vmem:[%s6398 + $0x14] sm:$0xf]
        %v6405 = vld [vmem:[%s6398 + $0x18] sm:$0xf]
        %v6406 = vld [vmem:[%s6398 + $0x1c] sm:$0xf]
        %v6415 = vunpack.c.l.b16 %v6399
        %v6416 = vunpack.c.l.b16 %v6400
        %v6417 = vunpack.c.l.b16 %v6401
        %v6418 = vunpack.c.l.b16 %v6402
        %v6419 = vunpack.c.l.b16 %v6403
        %v6420 = vunpack.c.l.b16 %v6404
        %v6421 = vunpack.c.l.b16 %v6405
        %v6422 = vunpack.c.l.b16 %v6406
        %v6423 = vpack.c.b16 %v6416, %v6415
        %v6424 = vpack.c.b16 %v6418, %v6417
        %v6425 = vpack.c.b16 %v6420, %v6419
        %v6426 = vpack.c.b16 %v6422, %v6421
        %6427 = vrot.lane.b32.xlu0 %v5414, 102
        %v6428 = vpop.permute.xlu0 %6427
        %6429 = vrot.lane.b32.xlu0 %v5425, 102
        %v6430 = vpop.permute.xlu0 %6429
        %6431 = vrot.lane.b32.xlu0 %v5415, 102
        %v6432 = vpop.permute.xlu0 %6431
        %6433 = vrot.lane.b32.xlu0 %v5426, 102
        %v6434 = vpop.permute.xlu0 %6433
        %vm6435 = vcmask 834560
        %v6436 = vsel %vm6435, %v6428, %v6430
        %v6437 = vsel %vm6435, %v6432, %v6434
        %v6441 = vsel %vm2417, %v6423, 0
        %v6444 = vsel %vm2417, %v6424, 0
        %v6447 = vsel %vm2417, %v6425, 0
        %v6450 = vsel %vm2417, %v6426, 0
        %6452 = vmatprep.subr.bf16.mxu0 0
        %6453 = vmatpush1.bf16.msra.mxu0 %v6436
        %6454 = vmatprep.subr.bf16.mxu0 0
        %6455 = vmatpush1.bf16.msra.mxu0 %v6437
        %6456 = vmatprep.subr.bf16.mxu0 0
        %6457 = vmatpush1.bf16.msra.mxu0 0
        %6458 = vmatprep.subr.bf16.mxu0 0
        %6459 = vmatpush1.bf16.msra.mxu0 0
        %6460 = vmatprep.subr.bf16.mxu0 0
        %6461 = vmatpush1.bf16.msra.mxu0 0
        %6462 = vmatprep.subr.bf16.mxu0 0
        %6463 = vmatpush1.bf16.msra.mxu0 0
        %6464 = vmatprep.subr.bf16.mxu0 0
        %6465 = vmatpush1.bf16.msra.mxu0 0
        %6466 = vmatprep.subr.bf16.mxu0 0
        %6467 = vmatpush1.bf16.msra.mxu0 0
        %6468 = vmatprep.subr.bf16.mxu0 0
        %6469 = vmatpush1.bf16.msra.mxu0 0
        %6470 = vmatprep.subr.bf16.mxu0 0
        %6471 = vmatpush1.bf16.msra.mxu0 0
        %6472 = vmatprep.subr.bf16.mxu0 0
        %6473 = vmatpush1.bf16.msra.mxu0 0
        %6474 = vmatprep.subr.bf16.mxu0 0
        %6475 = vmatpush1.bf16.msra.mxu0 0
        %6476 = vmatprep.subr.bf16.mxu0 0
        %6477 = vmatpush1.bf16.msra.mxu0 0
        %6478 = vmatprep.subr.bf16.mxu0 0
        %6479 = vmatpush1.bf16.msra.mxu0 0
        %6480 = vmatprep.subr.bf16.mxu0 0
        %6481 = vmatpush1.bf16.msra.mxu0 0
        %6482 = vmatprep.subr.bf16.mxu0 0
        %6483 = vmatpush1.bf16.msra.mxu0 0
        %6484 = vmatprep.mubr.bf16.mxu0 0
        %6485 = vmatmul.mubr.bf16.gmra.mrb[0].mxu0 %v6441
        %v6486 = vpop.f32.mrb[0].mxu0
        %v6487 = vadd.f32 0.0, %v6486
        %v6488 = vpop.f32.mrb[0].mxu0
        %v6489 = vpop.f32.mrb[0].mxu0
        %v6490 = vadd.f32 0.0, %v6489
        %v6491 = vpop.f32.mrb[0].mxu0
        %6492 = vmatprep.mubr.bf16.mxu0 0
        %6493 = vmatmul.mubr.bf16.gmra.mrb[0].mxu0 %v6444
        %v6494 = vpop.f32.mrb[0].mxu0
        %v6495 = vadd.f32 0.0, %v6494
        %v6496 = vpop.f32.mrb[0].mxu0
        %v6497 = vpop.f32.mrb[0].mxu0
        %v6498 = vadd.f32 0.0, %v6497
        %v6499 = vpop.f32.mrb[0].mxu0
        %6500 = vmatprep.mubr.bf16.mxu0 0
        %6501 = vmatmul.mubr.bf16.gmra.mrb[0].mxu0 %v6447
        %v6502 = vpop.f32.mrb[0].mxu0
        %v6503 = vadd.f32 0.0, %v6502
        %v6504 = vpop.f32.mrb[0].mxu0
        %v6505 = vpop.f32.mrb[0].mxu0
        %v6506 = vadd.f32 0.0, %v6505
        %v6507 = vpop.f32.mrb[0].mxu0
        %6508 = vmatprep.mubr.bf16.mxu0 0
        %6509 = vmatmul.mubr.bf16.gmra.mrb[0].mxu0 %v6450
        %v6510 = vpop.f32.mrb[0].mxu0
        %v6511 = vadd.f32 0.0, %v6510
        %v6512 = vpop.f32.mrb[0].mxu0
        %v6513 = vpop.f32.mrb[0].mxu0
        %v6514 = vadd.f32 0.0, %v6513
        %v6515 = vpop.f32.mrb[0].mxu0
        %6516 = vdwg.mxu0
        %v6517 = vadd.f32 %v6390, %v6487
        %v6518 = vadd.f32 %v6391, %v6490
        %v6519 = vadd.f32 %v6392, %v6495
        %v6520 = vadd.f32 %v6393, %v6498
        %v6521 = vadd.f32 %v6394, %v6503
        %v6522 = vadd.f32 %v6395, %v6506
        %v6523 = vadd.f32 %v6396, %v6511
        %v6524 = vadd.f32 %v6397, %v6514
        %v6525 = vld [vmem:[%s6] sm:$0xff]
        %v6526 = vld [vmem:[%s6 + $0x8] sm:$0xff]
        %v6527 = vld [vmem:[%s6 + $0x10] sm:$0xff]
        %v6528 = vld [vmem:[%s6 + $0x18] sm:$0xff]
        %v6529 = vld [vmem:[%s6 + $0x20] sm:$0xff]
        %v6530 = vld [vmem:[%s6 + $0x28] sm:$0xff]
        %v6531 = vld [vmem:[%s6 + $0x30] sm:$0xff]
        %v6532 = vld [vmem:[%s6 + $0x38] sm:$0xff]
        %6534 = vset.pattern.permute.xlu0 0
        %6535 = vperm.xlu0 %6534, %v6525
        %v6536 = vpop.permute.xlu0 %6535
        %6539 = vset.pattern.permute.xlu0 0
        %6540 = vperm.xlu0 %6539, %v6526
        %v6541 = vpop.permute.xlu0 %6540
        %6544 = vset.pattern.permute.xlu0 0
        %6545 = vperm.xlu0 %6544, %v6527
        %v6546 = vpop.permute.xlu0 %6545
        %6549 = vset.pattern.permute.xlu0 0
        %6550 = vperm.xlu0 %6549, %v6528
        %v6551 = vpop.permute.xlu0 %6550
        %6554 = vset.pattern.permute.xlu0 0
        %6555 = vperm.xlu0 %6554, %v6529
        %v6556 = vpop.permute.xlu0 %6555
        %6559 = vset.pattern.permute.xlu0 0
        %6560 = vperm.xlu0 %6559, %v6530
        %v6561 = vpop.permute.xlu0 %6560
        %6564 = vset.pattern.permute.xlu0 0
        %6565 = vperm.xlu0 %6564, %v6531
        %v6566 = vpop.permute.xlu0 %6565
        %6569 = vset.pattern.permute.xlu0 0
        %6570 = vperm.xlu0 %6569, %v6532
        %v6571 = vpop.permute.xlu0 %6570
        %v6573 = vadd.f32 %v6517, %v6536
        %v6574 = vadd.f32 %v6518, %v6541
        %v6575 = vadd.f32 %v6519, %v6546
        %v6576 = vadd.f32 %v6520, %v6551
        %v6577 = vadd.f32 %v6521, %v6556
        %v6578 = vadd.f32 %v6522, %v6561
        %v6579 = vadd.f32 %v6523, %v6566
        %v6580 = vadd.f32 %v6524, %v6571
        %v6581 = vmax.f32 %v6573, 0.0
        %v6582 = vmax.f32 %v6574, 0.0
        %v6583 = vmax.f32 %v6575, 0.0
        %v6584 = vmax.f32 %v6576, 0.0
        %v6585 = vmax.f32 %v6577, 0.0
        %v6586 = vmax.f32 %v6578, 0.0
        %v6587 = vmax.f32 %v6579, 0.0
        %v6588 = vmax.f32 %v6580, 0.0
        %v6589 = vpack.c.bf16 %v6582, %v6581
        %v6590 = vpack.c.bf16 %v6584, %v6583
        %v6591 = vpack.c.bf16 %v6586, %v6585
        %v6592 = vpack.c.bf16 %v6588, %v6587
        %6593 = vst [vmem:[#allocation5] sm:$0xff] %v6589
        %6594 = vst [vmem:[#allocation5 + $0x8] sm:$0xff] %v6590
        %6595 = vst [vmem:[#allocation5 + $0x10] sm:$0xff] %v6591
        %6596 = vst [vmem:[#allocation5 + $0x18] sm:$0xff] %v6592
        %v6597 = vld [vmem:[#allocation9] sm:$0xf]
        %v6598 = vld [vmem:[#allocation9 + $0x4] sm:$0xf]
        %v6599 = vld [vmem:[#allocation9 + $0x8] sm:$0xf]
        %v6600 = vld [vmem:[#allocation9 + $0xc] sm:$0xf]
        %v6601 = vld [vmem:[#allocation9 + $0x10] sm:$0xf]
        %v6602 = vld [vmem:[#allocation9 + $0x14] sm:$0xf]
        %v6603 = vld [vmem:[#allocation9 + $0x18] sm:$0xf]
        %v6604 = vld [vmem:[#allocation9 + $0x1c] sm:$0xf]
        %v6605 = vld [vmem:[#allocation5] sm:$0xff]
        %v6606 = vld [vmem:[#allocation5 + $0x8] sm:$0xff]
        %v6607 = vld [vmem:[#allocation5 + $0x10] sm:$0xff]
        %v6608 = vld [vmem:[#allocation5 + $0x18] sm:$0xff]
        %s6609 = scalar_lea.vmem [#allocation9], 32
        %v6610 = vld [vmem:[%s6609] sm:$0xf]
        %v6611 = vld [vmem:[%s6609 + $0x4] sm:$0xf]
        %v6612 = vld [vmem:[%s6609 + $0x8] sm:$0xf]
        %v6613 = vld [vmem:[%s6609 + $0xc] sm:$0xf]
        %v6614 = vld [vmem:[%s6609 + $0x10] sm:$0xf]
        %v6615 = vld [vmem:[%s6609 + $0x14] sm:$0xf]
        %v6616 = vld [vmem:[%s6609 + $0x18] sm:$0xf]
        %v6617 = vld [vmem:[%s6609 + $0x1c] sm:$0xf]
        %v6626 = vunpack.c.l.b16 %v6610
        %v6627 = vunpack.c.l.b16 %v6611
        %v6628 = vunpack.c.l.b16 %v6612
        %v6629 = vunpack.c.l.b16 %v6613
        %v6630 = vunpack.c.l.b16 %v6614
        %v6631 = vunpack.c.l.b16 %v6615
        %v6632 = vunpack.c.l.b16 %v6616
        %v6633 = vunpack.c.l.b16 %v6617
        %v6634 = vpack.c.b16 %v6627, %v6626
        %v6635 = vpack.c.b16 %v6629, %v6628
        %v6636 = vpack.c.b16 %v6631, %v6630
        %v6637 = vpack.c.b16 %v6633, %v6632
        %6642 = vrot.lane.b32.xlu0 %v6605, 127
        %v6643 = vpop.permute.xlu0 %6642
        %6644 = vrot.lane.b32.xlu0 %v6606, 127
        %v6645 = vpop.permute.xlu0 %6644
        %6646 = vrot.lane.b32.xlu0 %v6607, 127
        %v6647 = vpop.permute.xlu0 %6646
        %6648 = vrot.lane.b32.xlu0 %v6608, 127
        %v6649 = vpop.permute.xlu0 %6648
        %vm6654 = vcmask 523264
        %v6656 = vsel %vm6654, %v6634, 0
        %v6659 = vsel %vm6654, %v6635, 0
        %v6662 = vsel %vm6654, %v6636, 0
        %v6665 = vsel %vm6654, %v6637, 0
        %6667 = vmatprep.subr.bf16.mxu0 0
        %6668 = vmatpush1.bf16.msra.mxu0 %v6643
        %6669 = vmatprep.subr.bf16.mxu0 0
        %6670 = vmatpush1.bf16.msra.mxu0 %v6645
        %6671 = vmatprep.subr.bf16.mxu0 0
        %6672 = vmatpush1.bf16.msra.mxu0 %v6647
        %6673 = vmatprep.subr.bf16.mxu0 0
        %6674 = vmatpush1.bf16.msra.mxu0 %v6649
        %6675 = vmatprep.subr.bf16.mxu0 0
        %6676 = vmatpush1.bf16.msra.mxu0 0
        %6677 = vmatprep.subr.bf16.mxu0 0
        %6678 = vmatpush1.bf16.msra.mxu0 0
        %6679 = vmatprep.subr.bf16.mxu0 0
        %6680 = vmatpush1.bf16.msra.mxu0 0
        %6681 = vmatprep.subr.bf16.mxu0 0
        %6682 = vmatpush1.bf16.msra.mxu0 0
        %6683 = vmatprep.subr.bf16.mxu0 0
        %6684 = vmatpush1.bf16.msra.mxu0 0
        %6685 = vmatprep.subr.bf16.mxu0 0
        %6686 = vmatpush1.bf16.msra.mxu0 0
        %6687 = vmatprep.subr.bf16.mxu0 0
        %6688 = vmatpush1.bf16.msra.mxu0 0
        %6689 = vmatprep.subr.bf16.mxu0 0
        %6690 = vmatpush1.bf16.msra.mxu0 0
        %6691 = vmatprep.subr.bf16.mxu0 0
        %6692 = vmatpush1.bf16.msra.mxu0 0
        %6693 = vmatprep.subr.bf16.mxu0 0
        %6694 = vmatpush1.bf16.msra.mxu0 0
        %6695 = vmatprep.subr.bf16.mxu0 0
        %6696 = vmatpush1.bf16.msra.mxu0 0
        %6697 = vmatprep.subr.bf16.mxu0 0
        %6698 = vmatpush1.bf16.msra.mxu0 0
        %6699 = vmatprep.mubr.bf16.mxu0 0
        %6700 = vmatmul.mubr.bf16.gmra.mrb[0].mxu0 %v6656
        %v6701 = vpop.f32.mrb[0].mxu0
        %v6702 = vadd.f32 0.0, %v6701
        %v6703 = vpop.f32.mrb[0].mxu0
        %v6704 = vpop.f32.mrb[0].mxu0
        %v6705 = vadd.f32 0.0, %v6704
        %v6706 = vpop.f32.mrb[0].mxu0
        %6707 = vmatprep.mubr.bf16.mxu0 0
        %6708 = vmatmul.mubr.bf16.gmra.mrb[0].mxu0 %v6659
        %v6709 = vpop.f32.mrb[0].mxu0
        %v6710 = vadd.f32 0.0, %v6709
        %v6711 = vpop.f32.mrb[0].mxu0
        %v6712 = vpop.f32.mrb[0].mxu0
        %v6713 = vadd.f32 0.0, %v6712
        %v6714 = vpop.f32.mrb[0].mxu0
        %6715 = vmatprep.mubr.bf16.mxu0 0
        %6716 = vmatmul.mubr.bf16.gmra.mrb[0].mxu0 %v6662
        %v6717 = vpop.f32.mrb[0].mxu0
        %v6718 = vadd.f32 0.0, %v6717
        %v6719 = vpop.f32.mrb[0].mxu0
        %v6720 = vpop.f32.mrb[0].mxu0
        %v6721 = vadd.f32 0.0, %v6720
        %v6722 = vpop.f32.mrb[0].mxu0
        %6723 = vmatprep.mubr.bf16.mxu0 0
        %6724 = vmatmul.mubr.bf16.gmra.mrb[0].mxu0 %v6665
        %v6725 = vpop.f32.mrb[0].mxu0
        %v6726 = vadd.f32 0.0, %v6725
        %v6727 = vpop.f32.mrb[0].mxu0
        %v6728 = vpop.f32.mrb[0].mxu0
        %v6729 = vadd.f32 0.0, %v6728
        %v6730 = vpop.f32.mrb[0].mxu0
        %6731 = vdwg.mxu0
        %v6740 = vunpack.c.l.b16 %v6597
        %v6741 = vunpack.c.l.b16 %v6598
        %v6742 = vunpack.c.l.b16 %v6599
        %v6743 = vunpack.c.l.b16 %v6600
        %v6744 = vunpack.c.l.b16 %v6601
        %v6745 = vunpack.c.l.b16 %v6602
        %v6746 = vunpack.c.l.b16 %v6603
        %v6747 = vunpack.c.l.b16 %v6604
        %v6748 = vpack.c.b16 %v6741, %v6740
        %v6749 = vpack.c.b16 %v6743, %v6742
        %v6750 = vpack.c.b16 %v6745, %v6744
        %v6751 = vpack.c.b16 %v6747, %v6746
        %v6753 = vsel %vm6654, %v6748, 0
        %v6756 = vsel %vm6654, %v6749, 0
        %v6759 = vsel %vm6654, %v6750, 0
        %v6762 = vsel %vm6654, %v6751, 0
        %6764 = vmatprep.subr.bf16.mxu0 0
        %6765 = vmatpush1.bf16.msra.mxu0 %v6605
        %6766 = vmatprep.subr.bf16.mxu0 0
        %6767 = vmatpush1.bf16.msra.mxu0 %v6606
        %6768 = vmatprep.subr.bf16.mxu0 0
        %6769 = vmatpush1.bf16.msra.mxu0 %v6607
        %6770 = vmatprep.subr.bf16.mxu0 0
        %6771 = vmatpush1.bf16.msra.mxu0 %v6608
        %6772 = vmatprep.subr.bf16.mxu0 0
        %6773 = vmatpush1.bf16.msra.mxu0 0
        %6774 = vmatprep.subr.bf16.mxu0 0
        %6775 = vmatpush1.bf16.msra.mxu0 0
        %6776 = vmatprep.subr.bf16.mxu0 0
        %6777 = vmatpush1.bf16.msra.mxu0 0
        %6778 = vmatprep.subr.bf16.mxu0 0
        %6779 = vmatpush1.bf16.msra.mxu0 0
        %6780 = vmatprep.subr.bf16.mxu0 0
        %6781 = vmatpush1.bf16.msra.mxu0 0
        %6782 = vmatprep.subr.bf16.mxu0 0
        %6783 = vmatpush1.bf16.msra.mxu0 0
        %6784 = vmatprep.subr.bf16.mxu0 0
        %6785 = vmatpush1.bf16.msra.mxu0 0
        %6786 = vmatprep.subr.bf16.mxu0 0
        %6787 = vmatpush1.bf16.msra.mxu0 0
        %6788 = vmatprep.subr.bf16.mxu0 0
        %6789 = vmatpush1.bf16.msra.mxu0 0
        %6790 = vmatprep.subr.bf16.mxu0 0
        %6791 = vmatpush1.bf16.msra.mxu0 0
        %6792 = vmatprep.subr.bf16.mxu0 0
        %6793 = vmatpush1.bf16.msra.mxu0 0
        %6794 = vmatprep.subr.bf16.mxu0 0
        %6795 = vmatpush1.bf16.msra.mxu0 0
        %6796 = vmatprep.mubr.bf16.mxu0 0
        %6797 = vmatmul.mubr.bf16.gmra.mrb[0].mxu0 %v6753
        %v6798 = vpop.f32.mrb[0].mxu0
        %v6799 = vadd.f32 %v6702, %v6798
        %v6800 = vpop.f32.mrb[0].mxu0
        %v6801 = vpop.f32.mrb[0].mxu0
        %v6802 = vadd.f32 %v6705, %v6801
        %v6803 = vpop.f32.mrb[0].mxu0
        %6804 = vmatprep.mubr.bf16.mxu0 0
        %6805 = vmatmul.mubr.bf16.gmra.mrb[0].mxu0 %v6756
        %v6806 = vpop.f32.mrb[0].mxu0
        %v6807 = vadd.f32 %v6710, %v6806
        %v6808 = vpop.f32.mrb[0].mxu0
        %v6809 = vpop.f32.mrb[0].mxu0
        %v6810 = vadd.f32 %v6713, %v6809
        %v6811 = vpop.f32.mrb[0].mxu0
        %6812 = vmatprep.mubr.bf16.mxu0 0
        %6813 = vmatmul.mubr.bf16.gmra.mrb[0].mxu0 %v6759
        %v6814 = vpop.f32.mrb[0].mxu0
        %v6815 = vadd.f32 %v6718, %v6814
        %v6816 = vpop.f32.mrb[0].mxu0
        %v6817 = vpop.f32.mrb[0].mxu0
        %v6818 = vadd.f32 %v6721, %v6817
        %v6819 = vpop.f32.mrb[0].mxu0
        %6820 = vmatprep.mubr.bf16.mxu0 0
        %6821 = vmatmul.mubr.bf16.gmra.mrb[0].mxu0 %v6762
        %v6822 = vpop.f32.mrb[0].mxu0
        %v6823 = vadd.f32 %v6726, %v6822
        %v6824 = vpop.f32.mrb[0].mxu0
        %v6825 = vpop.f32.mrb[0].mxu0
        %v6826 = vadd.f32 %v6729, %v6825
        %v6827 = vpop.f32.mrb[0].mxu0
        %6828 = vdwg.mxu0
        %s6829 = scalar_lea.vmem [#allocation9], 64
        %v6830 = vld [vmem:[%s6829] sm:$0xf]
        %v6831 = vld [vmem:[%s6829 + $0x4] sm:$0xf]
        %v6832 = vld [vmem:[%s6829 + $0x8] sm:$0xf]
        %v6833 = vld [vmem:[%s6829 + $0xc] sm:$0xf]
        %v6834 = vld [vmem:[%s6829 + $0x10] sm:$0xf]
        %v6835 = vld [vmem:[%s6829 + $0x14] sm:$0xf]
        %v6836 = vld [vmem:[%s6829 + $0x18] sm:$0xf]
        %v6837 = vld [vmem:[%s6829 + $0x1c] sm:$0xf]
        %v6846 = vunpack.c.l.b16 %v6830
        %v6847 = vunpack.c.l.b16 %v6831
        %v6848 = vunpack.c.l.b16 %v6832
        %v6849 = vunpack.c.l.b16 %v6833
        %v6850 = vunpack.c.l.b16 %v6834
        %v6851 = vunpack.c.l.b16 %v6835
        %v6852 = vunpack.c.l.b16 %v6836
        %v6853 = vunpack.c.l.b16 %v6837
        %v6854 = vpack.c.b16 %v6847, %v6846
        %v6855 = vpack.c.b16 %v6849, %v6848
        %v6856 = vpack.c.b16 %v6851, %v6850
        %v6857 = vpack.c.b16 %v6853, %v6852
        %6858 = vrot.lane.b32.xlu0 %v6605, 126
        %v6859 = vpop.permute.xlu0 %6858
        %6860 = vrot.lane.b32.xlu0 %v6606, 126
        %v6861 = vpop.permute.xlu0 %6860
        %6862 = vrot.lane.b32.xlu0 %v6607, 126
        %v6863 = vpop.permute.xlu0 %6862
        %6864 = vrot.lane.b32.xlu0 %v6608, 126
        %v6865 = vpop.permute.xlu0 %6864
        %v6871 = vsel %vm6654, %v6854, 0
        %v6874 = vsel %vm6654, %v6855, 0
        %v6877 = vsel %vm6654, %v6856, 0
        %v6880 = vsel %vm6654, %v6857, 0
        %6882 = vmatprep.subr.bf16.mxu0 0
        %6883 = vmatpush1.bf16.msra.mxu0 %v6859
        %6884 = vmatprep.subr.bf16.mxu0 0
        %6885 = vmatpush1.bf16.msra.mxu0 %v6861
        %6886 = vmatprep.subr.bf16.mxu0 0
        %6887 = vmatpush1.bf16.msra.mxu0 %v6863
        %6888 = vmatprep.subr.bf16.mxu0 0
        %6889 = vmatpush1.bf16.msra.mxu0 %v6865
        %6890 = vmatprep.subr.bf16.mxu0 0
        %6891 = vmatpush1.bf16.msra.mxu0 0
        %6892 = vmatprep.subr.bf16.mxu0 0
        %6893 = vmatpush1.bf16.msra.mxu0 0
        %6894 = vmatprep.subr.bf16.mxu0 0
        %6895 = vmatpush1.bf16.msra.mxu0 0
        %6896 = vmatprep.subr.bf16.mxu0 0
        %6897 = vmatpush1.bf16.msra.mxu0 0
        %6898 = vmatprep.subr.bf16.mxu0 0
        %6899 = vmatpush1.bf16.msra.mxu0 0
        %6900 = vmatprep.subr.bf16.mxu0 0
        %6901 = vmatpush1.bf16.msra.mxu0 0
        %6902 = vmatprep.subr.bf16.mxu0 0
        %6903 = vmatpush1.bf16.msra.mxu0 0
        %6904 = vmatprep.subr.bf16.mxu0 0
        %6905 = vmatpush1.bf16.msra.mxu0 0
        %6906 = vmatprep.subr.bf16.mxu0 0
        %6907 = vmatpush1.bf16.msra.mxu0 0
        %6908 = vmatprep.subr.bf16.mxu0 0
        %6909 = vmatpush1.bf16.msra.mxu0 0
        %6910 = vmatprep.subr.bf16.mxu0 0
        %6911 = vmatpush1.bf16.msra.mxu0 0
        %6912 = vmatprep.subr.bf16.mxu0 0
        %6913 = vmatpush1.bf16.msra.mxu0 0
        %6914 = vmatprep.mubr.bf16.mxu0 0
        %6915 = vmatmul.mubr.bf16.gmra.mrb[0].mxu0 %v6871
        %v6916 = vpop.f32.mrb[0].mxu0
        %v6917 = vadd.f32 0.0, %v6916
        %v6918 = vpop.f32.mrb[0].mxu0
        %v6919 = vpop.f32.mrb[0].mxu0
        %v6920 = vadd.f32 0.0, %v6919
        %v6921 = vpop.f32.mrb[0].mxu0
        %6922 = vmatprep.mubr.bf16.mxu0 0
        %6923 = vmatmul.mubr.bf16.gmra.mrb[0].mxu0 %v6874
        %v6924 = vpop.f32.mrb[0].mxu0
        %v6925 = vadd.f32 0.0, %v6924
        %v6926 = vpop.f32.mrb[0].mxu0
        %v6927 = vpop.f32.mrb[0].mxu0
        %v6928 = vadd.f32 0.0, %v6927
        %v6929 = vpop.f32.mrb[0].mxu0
        %6930 = vmatprep.mubr.bf16.mxu0 0
        %6931 = vmatmul.mubr.bf16.gmra.mrb[0].mxu0 %v6877
        %v6932 = vpop.f32.mrb[0].mxu0
        %v6933 = vadd.f32 0.0, %v6932
        %v6934 = vpop.f32.mrb[0].mxu0
        %v6935 = vpop.f32.mrb[0].mxu0
        %v6936 = vadd.f32 0.0, %v6935
        %v6937 = vpop.f32.mrb[0].mxu0
        %6938 = vmatprep.mubr.bf16.mxu0 0
        %6939 = vmatmul.mubr.bf16.gmra.mrb[0].mxu0 %v6880
        %v6940 = vpop.f32.mrb[0].mxu0
        %v6941 = vadd.f32 0.0, %v6940
        %v6942 = vpop.f32.mrb[0].mxu0
        %v6943 = vpop.f32.mrb[0].mxu0
        %v6944 = vadd.f32 0.0, %v6943
        %v6945 = vpop.f32.mrb[0].mxu0
        %6946 = vdwg.mxu0
        %v6947 = vadd.f32 %v6799, %v6917
        %v6948 = vadd.f32 %v6802, %v6920
        %v6949 = vadd.f32 %v6807, %v6925
        %v6950 = vadd.f32 %v6810, %v6928
        %v6951 = vadd.f32 %v6815, %v6933
        %v6952 = vadd.f32 %v6818, %v6936
        %v6953 = vadd.f32 %v6823, %v6941
        %v6954 = vadd.f32 %v6826, %v6944
        %s6955 = scalar_lea.vmem [#allocation9], 96
        %v6956 = vld [vmem:[%s6955] sm:$0xf]
        %v6957 = vld [vmem:[%s6955 + $0x4] sm:$0xf]
        %v6958 = vld [vmem:[%s6955 + $0x8] sm:$0xf]
        %v6959 = vld [vmem:[%s6955 + $0xc] sm:$0xf]
        %v6960 = vld [vmem:[%s6955 + $0x10] sm:$0xf]
        %v6961 = vld [vmem:[%s6955 + $0x14] sm:$0xf]
        %v6962 = vld [vmem:[%s6955 + $0x18] sm:$0xf]
        %v6963 = vld [vmem:[%s6955 + $0x1c] sm:$0xf]
        %v6972 = vunpack.c.l.b16 %v6956
        %v6973 = vunpack.c.l.b16 %v6957
        %v6974 = vunpack.c.l.b16 %v6958
        %v6975 = vunpack.c.l.b16 %v6959
        %v6976 = vunpack.c.l.b16 %v6960
        %v6977 = vunpack.c.l.b16 %v6961
        %v6978 = vunpack.c.l.b16 %v6962
        %v6979 = vunpack.c.l.b16 %v6963
        %v6980 = vpack.c.b16 %v6973, %v6972
        %v6981 = vpack.c.b16 %v6975, %v6974
        %v6982 = vpack.c.b16 %v6977, %v6976
        %v6983 = vpack.c.b16 %v6979, %v6978
        %6984 = vrot.lane.b32.xlu0 %v6605, 116
        %v6985 = vpop.permute.xlu0 %6984
        %6986 = vrot.lane.b32.xlu0 %v6606, 116
        %v6987 = vpop.permute.xlu0 %6986
        %6988 = vrot.lane.b32.xlu0 %v6607, 116
        %v6989 = vpop.permute.xlu0 %6988
        %6990 = vrot.lane.b32.xlu0 %v6608, 116
        %v6991 = vpop.permute.xlu0 %6990
        %v6997 = vsel %vm6654, %v6980, 0
        %v7000 = vsel %vm6654, %v6981, 0
        %v7003 = vsel %vm6654, %v6982, 0
        %v7006 = vsel %vm6654, %v6983, 0
        %7008 = vmatprep.subr.bf16.mxu0 0
        %7009 = vmatpush1.bf16.msra.mxu0 %v6985
        %7010 = vmatprep.subr.bf16.mxu0 0
        %7011 = vmatpush1.bf16.msra.mxu0 %v6987
        %7012 = vmatprep.subr.bf16.mxu0 0
        %7013 = vmatpush1.bf16.msra.mxu0 %v6989
        %7014 = vmatprep.subr.bf16.mxu0 0
        %7015 = vmatpush1.bf16.msra.mxu0 %v6991
        %7016 = vmatprep.subr.bf16.mxu0 0
        %7017 = vmatpush1.bf16.msra.mxu0 0
        %7018 = vmatprep.subr.bf16.mxu0 0
        %7019 = vmatpush1.bf16.msra.mxu0 0
        %7020 = vmatprep.subr.bf16.mxu0 0
        %7021 = vmatpush1.bf16.msra.mxu0 0
        %7022 = vmatprep.subr.bf16.mxu0 0
        %7023 = vmatpush1.bf16.msra.mxu0 0
        %7024 = vmatprep.subr.bf16.mxu0 0
        %7025 = vmatpush1.bf16.msra.mxu0 0
        %7026 = vmatprep.subr.bf16.mxu0 0
        %7027 = vmatpush1.bf16.msra.mxu0 0
        %7028 = vmatprep.subr.bf16.mxu0 0
        %7029 = vmatpush1.bf16.msra.mxu0 0
        %7030 = vmatprep.subr.bf16.mxu0 0
        %7031 = vmatpush1.bf16.msra.mxu0 0
        %7032 = vmatprep.subr.bf16.mxu0 0
        %7033 = vmatpush1.bf16.msra.mxu0 0
        %7034 = vmatprep.subr.bf16.mxu0 0
        %7035 = vmatpush1.bf16.msra.mxu0 0
        %7036 = vmatprep.subr.bf16.mxu0 0
        %7037 = vmatpush1.bf16.msra.mxu0 0
        %7038 = vmatprep.subr.bf16.mxu0 0
        %7039 = vmatpush1.bf16.msra.mxu0 0
        %7040 = vmatprep.mubr.bf16.mxu0 0
        %7041 = vmatmul.mubr.bf16.gmra.mrb[0].mxu0 %v6997
        %v7042 = vpop.f32.mrb[0].mxu0
        %v7043 = vadd.f32 0.0, %v7042
        %v7044 = vpop.f32.mrb[0].mxu0
        %v7045 = vpop.f32.mrb[0].mxu0
        %v7046 = vadd.f32 0.0, %v7045
        %v7047 = vpop.f32.mrb[0].mxu0
        %7048 = vmatprep.mubr.bf16.mxu0 0
        %7049 = vmatmul.mubr.bf16.gmra.mrb[0].mxu0 %v7000
        %v7050 = vpop.f32.mrb[0].mxu0
        %v7051 = vadd.f32 0.0, %v7050
        %v7052 = vpop.f32.mrb[0].mxu0
        %v7053 = vpop.f32.mrb[0].mxu0
        %v7054 = vadd.f32 0.0, %v7053
        %v7055 = vpop.f32.mrb[0].mxu0
        %7056 = vmatprep.mubr.bf16.mxu0 0
        %7057 = vmatmul.mubr.bf16.gmra.mrb[0].mxu0 %v7003
        %v7058 = vpop.f32.mrb[0].mxu0
        %v7059 = vadd.f32 0.0, %v7058
        %v7060 = vpop.f32.mrb[0].mxu0
        %v7061 = vpop.f32.mrb[0].mxu0
        %v7062 = vadd.f32 0.0, %v7061
        %v7063 = vpop.f32.mrb[0].mxu0
        %7064 = vmatprep.mubr.bf16.mxu0 0
        %7065 = vmatmul.mubr.bf16.gmra.mrb[0].mxu0 %v7006
        %v7066 = vpop.f32.mrb[0].mxu0
        %v7067 = vadd.f32 0.0, %v7066
        %v7068 = vpop.f32.mrb[0].mxu0
        %v7069 = vpop.f32.mrb[0].mxu0
        %v7070 = vadd.f32 0.0, %v7069
        %v7071 = vpop.f32.mrb[0].mxu0
        %7072 = vdwg.mxu0
        %v7073 = vadd.f32 %v6947, %v7043
        %v7074 = vadd.f32 %v6948, %v7046
        %v7075 = vadd.f32 %v6949, %v7051
        %v7076 = vadd.f32 %v6950, %v7054
        %v7077 = vadd.f32 %v6951, %v7059
        %v7078 = vadd.f32 %v6952, %v7062
        %v7079 = vadd.f32 %v6953, %v7067
        %v7080 = vadd.f32 %v6954, %v7070
        %s7081 = scalar_lea.vmem [#allocation9], 128
        %v7082 = vld [vmem:[%s7081] sm:$0xf]
        %v7083 = vld [vmem:[%s7081 + $0x4] sm:$0xf]
        %v7084 = vld [vmem:[%s7081 + $0x8] sm:$0xf]
        %v7085 = vld [vmem:[%s7081 + $0xc] sm:$0xf]
        %v7086 = vld [vmem:[%s7081 + $0x10] sm:$0xf]
        %v7087 = vld [vmem:[%s7081 + $0x14] sm:$0xf]
        %v7088 = vld [vmem:[%s7081 + $0x18] sm:$0xf]
        %v7089 = vld [vmem:[%s7081 + $0x1c] sm:$0xf]
        %v7098 = vunpack.c.l.b16 %v7082
        %v7099 = vunpack.c.l.b16 %v7083
        %v7100 = vunpack.c.l.b16 %v7084
        %v7101 = vunpack.c.l.b16 %v7085
        %v7102 = vunpack.c.l.b16 %v7086
        %v7103 = vunpack.c.l.b16 %v7087
        %v7104 = vunpack.c.l.b16 %v7088
        %v7105 = vunpack.c.l.b16 %v7089
        %v7106 = vpack.c.b16 %v7099, %v7098
        %v7107 = vpack.c.b16 %v7101, %v7100
        %v7108 = vpack.c.b16 %v7103, %v7102
        %v7109 = vpack.c.b16 %v7105, %v7104
        %7110 = vrot.lane.b32.xlu0 %v6605, 115
        %v7111 = vpop.permute.xlu0 %7110
        %7112 = vrot.lane.b32.xlu0 %v6606, 115
        %v7113 = vpop.permute.xlu0 %7112
        %7114 = vrot.lane.b32.xlu0 %v6607, 115
        %v7115 = vpop.permute.xlu0 %7114
        %7116 = vrot.lane.b32.xlu0 %v6608, 115
        %v7117 = vpop.permute.xlu0 %7116
        %v7123 = vsel %vm6654, %v7106, 0
        %v7126 = vsel %vm6654, %v7107, 0
        %v7129 = vsel %vm6654, %v7108, 0
        %v7132 = vsel %vm6654, %v7109, 0
        %7134 = vmatprep.subr.bf16.mxu0 0
        %7135 = vmatpush1.bf16.msra.mxu0 %v7111
        %7136 = vmatprep.subr.bf16.mxu0 0
        %7137 = vmatpush1.bf16.msra.mxu0 %v7113
        %7138 = vmatprep.subr.bf16.mxu0 0
        %7139 = vmatpush1.bf16.msra.mxu0 %v7115
        %7140 = vmatprep.subr.bf16.mxu0 0
        %7141 = vmatpush1.bf16.msra.mxu0 %v7117
        %7142 = vmatprep.subr.bf16.mxu0 0
        %7143 = vmatpush1.bf16.msra.mxu0 0
        %7144 = vmatprep.subr.bf16.mxu0 0
        %7145 = vmatpush1.bf16.msra.mxu0 0
        %7146 = vmatprep.subr.bf16.mxu0 0
        %7147 = vmatpush1.bf16.msra.mxu0 0
        %7148 = vmatprep.subr.bf16.mxu0 0
        %7149 = vmatpush1.bf16.msra.mxu0 0
        %7150 = vmatprep.subr.bf16.mxu0 0
        %7151 = vmatpush1.bf16.msra.mxu0 0
        %7152 = vmatprep.subr.bf16.mxu0 0
        %7153 = vmatpush1.bf16.msra.mxu0 0
        %7154 = vmatprep.subr.bf16.mxu0 0
        %7155 = vmatpush1.bf16.msra.mxu0 0
        %7156 = vmatprep.subr.bf16.mxu0 0
        %7157 = vmatpush1.bf16.msra.mxu0 0
        %7158 = vmatprep.subr.bf16.mxu0 0
        %7159 = vmatpush1.bf16.msra.mxu0 0
        %7160 = vmatprep.subr.bf16.mxu0 0
        %7161 = vmatpush1.bf16.msra.mxu0 0
        %7162 = vmatprep.subr.bf16.mxu0 0
        %7163 = vmatpush1.bf16.msra.mxu0 0
        %7164 = vmatprep.subr.bf16.mxu0 0
        %7165 = vmatpush1.bf16.msra.mxu0 0
        %7166 = vmatprep.mubr.bf16.mxu0 0
        %7167 = vmatmul.mubr.bf16.gmra.mrb[0].mxu0 %v7123
        %v7168 = vpop.f32.mrb[0].mxu0
        %v7169 = vadd.f32 0.0, %v7168
        %v7170 = vpop.f32.mrb[0].mxu0
        %v7171 = vpop.f32.mrb[0].mxu0
        %v7172 = vadd.f32 0.0, %v7171
        %v7173 = vpop.f32.mrb[0].mxu0
        %7174 = vmatprep.mubr.bf16.mxu0 0
        %7175 = vmatmul.mubr.bf16.gmra.mrb[0].mxu0 %v7126
        %v7176 = vpop.f32.mrb[0].mxu0
        %v7177 = vadd.f32 0.0, %v7176
        %v7178 = vpop.f32.mrb[0].mxu0
        %v7179 = vpop.f32.mrb[0].mxu0
        %v7180 = vadd.f32 0.0, %v7179
        %v7181 = vpop.f32.mrb[0].mxu0
        %7182 = vmatprep.mubr.bf16.mxu0 0
        %7183 = vmatmul.mubr.bf16.gmra.mrb[0].mxu0 %v7129
        %v7184 = vpop.f32.mrb[0].mxu0
        %v7185 = vadd.f32 0.0, %v7184
        %v7186 = vpop.f32.mrb[0].mxu0
        %v7187 = vpop.f32.mrb[0].mxu0
        %v7188 = vadd.f32 0.0, %v7187
        %v7189 = vpop.f32.mrb[0].mxu0
        %7190 = vmatprep.mubr.bf16.mxu0 0
        %7191 = vmatmul.mubr.bf16.gmra.mrb[0].mxu0 %v7132
        %v7192 = vpop.f32.mrb[0].mxu0
        %v7193 = vadd.f32 0.0, %v7192
        %v7194 = vpop.f32.mrb[0].mxu0
        %v7195 = vpop.f32.mrb[0].mxu0
        %v7196 = vadd.f32 0.0, %v7195
        %v7197 = vpop.f32.mrb[0].mxu0
        %7198 = vdwg.mxu0
        %v7199 = vadd.f32 %v7073, %v7169
        %v7200 = vadd.f32 %v7074, %v7172
        %v7201 = vadd.f32 %v7075, %v7177
        %v7202 = vadd.f32 %v7076, %v7180
        %v7203 = vadd.f32 %v7077, %v7185
        %v7204 = vadd.f32 %v7078, %v7188
        %v7205 = vadd.f32 %v7079, %v7193
        %v7206 = vadd.f32 %v7080, %v7196
        %s7207 = scalar_lea.vmem [#allocation9], 160
        %v7208 = vld [vmem:[%s7207] sm:$0xf]
        %v7209 = vld [vmem:[%s7207 + $0x4] sm:$0xf]
        %v7210 = vld [vmem:[%s7207 + $0x8] sm:$0xf]
        %v7211 = vld [vmem:[%s7207 + $0xc] sm:$0xf]
        %v7212 = vld [vmem:[%s7207 + $0x10] sm:$0xf]
        %v7213 = vld [vmem:[%s7207 + $0x14] sm:$0xf]
        %v7214 = vld [vmem:[%s7207 + $0x18] sm:$0xf]
        %v7215 = vld [vmem:[%s7207 + $0x1c] sm:$0xf]
        %v7224 = vunpack.c.l.b16 %v7208
        %v7225 = vunpack.c.l.b16 %v7209
        %v7226 = vunpack.c.l.b16 %v7210
        %v7227 = vunpack.c.l.b16 %v7211
        %v7228 = vunpack.c.l.b16 %v7212
        %v7229 = vunpack.c.l.b16 %v7213
        %v7230 = vunpack.c.l.b16 %v7214
        %v7231 = vunpack.c.l.b16 %v7215
        %v7232 = vpack.c.b16 %v7225, %v7224
        %v7233 = vpack.c.b16 %v7227, %v7226
        %v7234 = vpack.c.b16 %v7229, %v7228
        %v7235 = vpack.c.b16 %v7231, %v7230
        %7236 = vrot.lane.b32.xlu0 %v6605, 114
        %v7237 = vpop.permute.xlu0 %7236
        %7238 = vrot.lane.b32.xlu0 %v6606, 114
        %v7239 = vpop.permute.xlu0 %7238
        %7240 = vrot.lane.b32.xlu0 %v6607, 114
        %v7241 = vpop.permute.xlu0 %7240
        %7242 = vrot.lane.b32.xlu0 %v6608, 114
        %v7243 = vpop.permute.xlu0 %7242
        %v7249 = vsel %vm6654, %v7232, 0
        %v7252 = vsel %vm6654, %v7233, 0
        %v7255 = vsel %vm6654, %v7234, 0
        %v7258 = vsel %vm6654, %v7235, 0
        %7260 = vmatprep.subr.bf16.mxu0 0
        %7261 = vmatpush1.bf16.msra.mxu0 %v7237
        %7262 = vmatprep.subr.bf16.mxu0 0
        %7263 = vmatpush1.bf16.msra.mxu0 %v7239
        %7264 = vmatprep.subr.bf16.mxu0 0
        %7265 = vmatpush1.bf16.msra.mxu0 %v7241
        %7266 = vmatprep.subr.bf16.mxu0 0
        %7267 = vmatpush1.bf16.msra.mxu0 %v7243
        %7268 = vmatprep.subr.bf16.mxu0 0
        %7269 = vmatpush1.bf16.msra.mxu0 0
        %7270 = vmatprep.subr.bf16.mxu0 0
        %7271 = vmatpush1.bf16.msra.mxu0 0
        %7272 = vmatprep.subr.bf16.mxu0 0
        %7273 = vmatpush1.bf16.msra.mxu0 0
        %7274 = vmatprep.subr.bf16.mxu0 0
        %7275 = vmatpush1.bf16.msra.mxu0 0
        %7276 = vmatprep.subr.bf16.mxu0 0
        %7277 = vmatpush1.bf16.msra.mxu0 0
        %7278 = vmatprep.subr.bf16.mxu0 0
        %7279 = vmatpush1.bf16.msra.mxu0 0
        %7280 = vmatprep.subr.bf16.mxu0 0
        %7281 = vmatpush1.bf16.msra.mxu0 0
        %7282 = vmatprep.subr.bf16.mxu0 0
        %7283 = vmatpush1.bf16.msra.mxu0 0
        %7284 = vmatprep.subr.bf16.mxu0 0
        %7285 = vmatpush1.bf16.msra.mxu0 0
        %7286 = vmatprep.subr.bf16.mxu0 0
        %7287 = vmatpush1.bf16.msra.mxu0 0
        %7288 = vmatprep.subr.bf16.mxu0 0
        %7289 = vmatpush1.bf16.msra.mxu0 0
        %7290 = vmatprep.subr.bf16.mxu0 0
        %7291 = vmatpush1.bf16.msra.mxu0 0
        %7292 = vmatprep.mubr.bf16.mxu0 0
        %7293 = vmatmul.mubr.bf16.gmra.mrb[0].mxu0 %v7249
        %v7294 = vpop.f32.mrb[0].mxu0
        %v7295 = vadd.f32 0.0, %v7294
        %v7296 = vpop.f32.mrb[0].mxu0
        %v7297 = vpop.f32.mrb[0].mxu0
        %v7298 = vadd.f32 0.0, %v7297
        %v7299 = vpop.f32.mrb[0].mxu0
        %7300 = vmatprep.mubr.bf16.mxu0 0
        %7301 = vmatmul.mubr.bf16.gmra.mrb[0].mxu0 %v7252
        %v7302 = vpop.f32.mrb[0].mxu0
        %v7303 = vadd.f32 0.0, %v7302
        %v7304 = vpop.f32.mrb[0].mxu0
        %v7305 = vpop.f32.mrb[0].mxu0
        %v7306 = vadd.f32 0.0, %v7305
        %v7307 = vpop.f32.mrb[0].mxu0
        %7308 = vmatprep.mubr.bf16.mxu0 0
        %7309 = vmatmul.mubr.bf16.gmra.mrb[0].mxu0 %v7255
        %v7310 = vpop.f32.mrb[0].mxu0
        %v7311 = vadd.f32 0.0, %v7310
        %v7312 = vpop.f32.mrb[0].mxu0
        %v7313 = vpop.f32.mrb[0].mxu0
        %v7314 = vadd.f32 0.0, %v7313
        %v7315 = vpop.f32.mrb[0].mxu0
        %7316 = vmatprep.mubr.bf16.mxu0 0
        %7317 = vmatmul.mubr.bf16.gmra.mrb[0].mxu0 %v7258
        %v7318 = vpop.f32.mrb[0].mxu0
        %v7319 = vadd.f32 0.0, %v7318
        %v7320 = vpop.f32.mrb[0].mxu0
        %v7321 = vpop.f32.mrb[0].mxu0
        %v7322 = vadd.f32 0.0, %v7321
        %v7323 = vpop.f32.mrb[0].mxu0
        %7324 = vdwg.mxu0
        %v7325 = vadd.f32 %v7199, %v7295
        %v7326 = vadd.f32 %v7200, %v7298
        %v7327 = vadd.f32 %v7201, %v7303
        %v7328 = vadd.f32 %v7202, %v7306
        %v7329 = vadd.f32 %v7203, %v7311
        %v7330 = vadd.f32 %v7204, %v7314
        %v7331 = vadd.f32 %v7205, %v7319
        %v7332 = vadd.f32 %v7206, %v7322
        %s7333 = scalar_lea.vmem [#allocation9], 192
        %v7334 = vld [vmem:[%s7333] sm:$0xf]
        %v7335 = vld [vmem:[%s7333 + $0x4] sm:$0xf]
        %v7336 = vld [vmem:[%s7333 + $0x8] sm:$0xf]
        %v7337 = vld [vmem:[%s7333 + $0xc] sm:$0xf]
        %v7338 = vld [vmem:[%s7333 + $0x10] sm:$0xf]
        %v7339 = vld [vmem:[%s7333 + $0x14] sm:$0xf]
        %v7340 = vld [vmem:[%s7333 + $0x18] sm:$0xf]
        %v7341 = vld [vmem:[%s7333 + $0x1c] sm:$0xf]
        %v7350 = vunpack.c.l.b16 %v7334
        %v7351 = vunpack.c.l.b16 %v7335
        %v7352 = vunpack.c.l.b16 %v7336
        %v7353 = vunpack.c.l.b16 %v7337
        %v7354 = vunpack.c.l.b16 %v7338
        %v7355 = vunpack.c.l.b16 %v7339
        %v7356 = vunpack.c.l.b16 %v7340
        %v7357 = vunpack.c.l.b16 %v7341
        %v7358 = vpack.c.b16 %v7351, %v7350
        %v7359 = vpack.c.b16 %v7353, %v7352
        %v7360 = vpack.c.b16 %v7355, %v7354
        %v7361 = vpack.c.b16 %v7357, %v7356
        %7362 = vrot.lane.b32.xlu0 %v6605, 104
        %v7363 = vpop.permute.xlu0 %7362
        %7364 = vrot.lane.b32.xlu0 %v6606, 104
        %v7365 = vpop.permute.xlu0 %7364
        %7366 = vrot.lane.b32.xlu0 %v6607, 104
        %v7367 = vpop.permute.xlu0 %7366
        %7368 = vrot.lane.b32.xlu0 %v6608, 104
        %v7369 = vpop.permute.xlu0 %7368
        %v7375 = vsel %vm6654, %v7358, 0
        %v7378 = vsel %vm6654, %v7359, 0
        %v7381 = vsel %vm6654, %v7360, 0
        %v7384 = vsel %vm6654, %v7361, 0
        %7386 = vmatprep.subr.bf16.mxu0 0
        %7387 = vmatpush1.bf16.msra.mxu0 %v7363
        %7388 = vmatprep.subr.bf16.mxu0 0
        %7389 = vmatpush1.bf16.msra.mxu0 %v7365
        %7390 = vmatprep.subr.bf16.mxu0 0
        %7391 = vmatpush1.bf16.msra.mxu0 %v7367
        %7392 = vmatprep.subr.bf16.mxu0 0
        %7393 = vmatpush1.bf16.msra.mxu0 %v7369
        %7394 = vmatprep.subr.bf16.mxu0 0
        %7395 = vmatpush1.bf16.msra.mxu0 0
        %7396 = vmatprep.subr.bf16.mxu0 0
        %7397 = vmatpush1.bf16.msra.mxu0 0
        %7398 = vmatprep.subr.bf16.mxu0 0
        %7399 = vmatpush1.bf16.msra.mxu0 0
        %7400 = vmatprep.subr.bf16.mxu0 0
        %7401 = vmatpush1.bf16.msra.mxu0 0
        %7402 = vmatprep.subr.bf16.mxu0 0
        %7403 = vmatpush1.bf16.msra.mxu0 0
        %7404 = vmatprep.subr.bf16.mxu0 0
        %7405 = vmatpush1.bf16.msra.mxu0 0
        %7406 = vmatprep.subr.bf16.mxu0 0
        %7407 = vmatpush1.bf16.msra.mxu0 0
        %7408 = vmatprep.subr.bf16.mxu0 0
        %7409 = vmatpush1.bf16.msra.mxu0 0
        %7410 = vmatprep.subr.bf16.mxu0 0
        %7411 = vmatpush1.bf16.msra.mxu0 0
        %7412 = vmatprep.subr.bf16.mxu0 0
        %7413 = vmatpush1.bf16.msra.mxu0 0
        %7414 = vmatprep.subr.bf16.mxu0 0
        %7415 = vmatpush1.bf16.msra.mxu0 0
        %7416 = vmatprep.subr.bf16.mxu0 0
        %7417 = vmatpush1.bf16.msra.mxu0 0
        %7418 = vmatprep.mubr.bf16.mxu0 0
        %7419 = vmatmul.mubr.bf16.gmra.mrb[0].mxu0 %v7375
        %v7420 = vpop.f32.mrb[0].mxu0
        %v7421 = vadd.f32 0.0, %v7420
        %v7422 = vpop.f32.mrb[0].mxu0
        %v7423 = vpop.f32.mrb[0].mxu0
        %v7424 = vadd.f32 0.0, %v7423
        %v7425 = vpop.f32.mrb[0].mxu0
        %7426 = vmatprep.mubr.bf16.mxu0 0
        %7427 = vmatmul.mubr.bf16.gmra.mrb[0].mxu0 %v7378
        %v7428 = vpop.f32.mrb[0].mxu0
        %v7429 = vadd.f32 0.0, %v7428
        %v7430 = vpop.f32.mrb[0].mxu0
        %v7431 = vpop.f32.mrb[0].mxu0
        %v7432 = vadd.f32 0.0, %v7431
        %v7433 = vpop.f32.mrb[0].mxu0
        %7434 = vmatprep.mubr.bf16.mxu0 0
        %7435 = vmatmul.mubr.bf16.gmra.mrb[0].mxu0 %v7381
        %v7436 = vpop.f32.mrb[0].mxu0
        %v7437 = vadd.f32 0.0, %v7436
        %v7438 = vpop.f32.mrb[0].mxu0
        %v7439 = vpop.f32.mrb[0].mxu0
        %v7440 = vadd.f32 0.0, %v7439
        %v7441 = vpop.f32.mrb[0].mxu0
        %7442 = vmatprep.mubr.bf16.mxu0 0
        %7443 = vmatmul.mubr.bf16.gmra.mrb[0].mxu0 %v7384
        %v7444 = vpop.f32.mrb[0].mxu0
        %v7445 = vadd.f32 0.0, %v7444
        %v7446 = vpop.f32.mrb[0].mxu0
        %v7447 = vpop.f32.mrb[0].mxu0
        %v7448 = vadd.f32 0.0, %v7447
        %v7449 = vpop.f32.mrb[0].mxu0
        %7450 = vdwg.mxu0
        %v7451 = vadd.f32 %v7325, %v7421
        %v7452 = vadd.f32 %v7326, %v7424
        %v7453 = vadd.f32 %v7327, %v7429
        %v7454 = vadd.f32 %v7328, %v7432
        %v7455 = vadd.f32 %v7329, %v7437
        %v7456 = vadd.f32 %v7330, %v7440
        %v7457 = vadd.f32 %v7331, %v7445
        %v7458 = vadd.f32 %v7332, %v7448
        %s7459 = scalar_lea.vmem [#allocation9], 224
        %v7460 = vld [vmem:[%s7459] sm:$0xf]
        %v7461 = vld [vmem:[%s7459 + $0x4] sm:$0xf]
        %v7462 = vld [vmem:[%s7459 + $0x8] sm:$0xf]
        %v7463 = vld [vmem:[%s7459 + $0xc] sm:$0xf]
        %v7464 = vld [vmem:[%s7459 + $0x10] sm:$0xf]
        %v7465 = vld [vmem:[%s7459 + $0x14] sm:$0xf]
        %v7466 = vld [vmem:[%s7459 + $0x18] sm:$0xf]
        %v7467 = vld [vmem:[%s7459 + $0x1c] sm:$0xf]
        %v7476 = vunpack.c.l.b16 %v7460
        %v7477 = vunpack.c.l.b16 %v7461
        %v7478 = vunpack.c.l.b16 %v7462
        %v7479 = vunpack.c.l.b16 %v7463
        %v7480 = vunpack.c.l.b16 %v7464
        %v7481 = vunpack.c.l.b16 %v7465
        %v7482 = vunpack.c.l.b16 %v7466
        %v7483 = vunpack.c.l.b16 %v7467
        %v7484 = vpack.c.b16 %v7477, %v7476
        %v7485 = vpack.c.b16 %v7479, %v7478
        %v7486 = vpack.c.b16 %v7481, %v7480
        %v7487 = vpack.c.b16 %v7483, %v7482
        %7488 = vrot.lane.b32.xlu0 %v6605, 103
        %v7489 = vpop.permute.xlu0 %7488
        %7490 = vrot.lane.b32.xlu0 %v6606, 103
        %v7491 = vpop.permute.xlu0 %7490
        %7492 = vrot.lane.b32.xlu0 %v6607, 103
        %v7493 = vpop.permute.xlu0 %7492
        %7494 = vrot.lane.b32.xlu0 %v6608, 103
        %v7495 = vpop.permute.xlu0 %7494
        %v7501 = vsel %vm6654, %v7484, 0
        %v7504 = vsel %vm6654, %v7485, 0
        %v7507 = vsel %vm6654, %v7486, 0
        %v7510 = vsel %vm6654, %v7487, 0
        %7512 = vmatprep.subr.bf16.mxu0 0
        %7513 = vmatpush1.bf16.msra.mxu0 %v7489
        %7514 = vmatprep.subr.bf16.mxu0 0
        %7515 = vmatpush1.bf16.msra.mxu0 %v7491
        %7516 = vmatprep.subr.bf16.mxu0 0
        %7517 = vmatpush1.bf16.msra.mxu0 %v7493
        %7518 = vmatprep.subr.bf16.mxu0 0
        %7519 = vmatpush1.bf16.msra.mxu0 %v7495
        %7520 = vmatprep.subr.bf16.mxu0 0
        %7521 = vmatpush1.bf16.msra.mxu0 0
        %7522 = vmatprep.subr.bf16.mxu0 0
        %7523 = vmatpush1.bf16.msra.mxu0 0
        %7524 = vmatprep.subr.bf16.mxu0 0
        %7525 = vmatpush1.bf16.msra.mxu0 0
        %7526 = vmatprep.subr.bf16.mxu0 0
        %7527 = vmatpush1.bf16.msra.mxu0 0
        %7528 = vmatprep.subr.bf16.mxu0 0
        %7529 = vmatpush1.bf16.msra.mxu0 0
        %7530 = vmatprep.subr.bf16.mxu0 0
        %7531 = vmatpush1.bf16.msra.mxu0 0
        %7532 = vmatprep.subr.bf16.mxu0 0
        %7533 = vmatpush1.bf16.msra.mxu0 0
        %7534 = vmatprep.subr.bf16.mxu0 0
        %7535 = vmatpush1.bf16.msra.mxu0 0
        %7536 = vmatprep.subr.bf16.mxu0 0
        %7537 = vmatpush1.bf16.msra.mxu0 0
        %7538 = vmatprep.subr.bf16.mxu0 0
        %7539 = vmatpush1.bf16.msra.mxu0 0
        %7540 = vmatprep.subr.bf16.mxu0 0
        %7541 = vmatpush1.bf16.msra.mxu0 0
        %7542 = vmatprep.subr.bf16.mxu0 0
        %7543 = vmatpush1.bf16.msra.mxu0 0
        %7544 = vmatprep.mubr.bf16.mxu0 0
        %7545 = vmatmul.mubr.bf16.gmra.mrb[0].mxu0 %v7501
        %v7546 = vpop.f32.mrb[0].mxu0
        %v7547 = vadd.f32 0.0, %v7546
        %v7548 = vpop.f32.mrb[0].mxu0
        %v7549 = vpop.f32.mrb[0].mxu0
        %v7550 = vadd.f32 0.0, %v7549
        %v7551 = vpop.f32.mrb[0].mxu0
        %7552 = vmatprep.mubr.bf16.mxu0 0
        %7553 = vmatmul.mubr.bf16.gmra.mrb[0].mxu0 %v7504
        %v7554 = vpop.f32.mrb[0].mxu0
        %v7555 = vadd.f32 0.0, %v7554
        %v7556 = vpop.f32.mrb[0].mxu0
        %v7557 = vpop.f32.mrb[0].mxu0
        %v7558 = vadd.f32 0.0, %v7557
        %v7559 = vpop.f32.mrb[0].mxu0
        %7560 = vmatprep.mubr.bf16.mxu0 0
        %7561 = vmatmul.mubr.bf16.gmra.mrb[0].mxu0 %v7507
        %v7562 = vpop.f32.mrb[0].mxu0
        %v7563 = vadd.f32 0.0, %v7562
        %v7564 = vpop.f32.mrb[0].mxu0
        %v7565 = vpop.f32.mrb[0].mxu0
        %v7566 = vadd.f32 0.0, %v7565
        %v7567 = vpop.f32.mrb[0].mxu0
        %7568 = vmatprep.mubr.bf16.mxu0 0
        %7569 = vmatmul.mubr.bf16.gmra.mrb[0].mxu0 %v7510
        %v7570 = vpop.f32.mrb[0].mxu0
        %v7571 = vadd.f32 0.0, %v7570
        %v7572 = vpop.f32.mrb[0].mxu0
        %v7573 = vpop.f32.mrb[0].mxu0
        %v7574 = vadd.f32 0.0, %v7573
        %v7575 = vpop.f32.mrb[0].mxu0
        %7576 = vdwg.mxu0
        %v7577 = vadd.f32 %v7451, %v7547
        %v7578 = vadd.f32 %v7452, %v7550
        %v7579 = vadd.f32 %v7453, %v7555
        %v7580 = vadd.f32 %v7454, %v7558
        %v7581 = vadd.f32 %v7455, %v7563
        %v7582 = vadd.f32 %v7456, %v7566
        %v7583 = vadd.f32 %v7457, %v7571
        %v7584 = vadd.f32 %v7458, %v7574
        %s7585 = scalar_lea.vmem [#allocation9], 256
        %v7586 = vld [vmem:[%s7585] sm:$0xf]
        %v7587 = vld [vmem:[%s7585 + $0x4] sm:$0xf]
        %v7588 = vld [vmem:[%s7585 + $0x8] sm:$0xf]
        %v7589 = vld [vmem:[%s7585 + $0xc] sm:$0xf]
        %v7590 = vld [vmem:[%s7585 + $0x10] sm:$0xf]
        %v7591 = vld [vmem:[%s7585 + $0x14] sm:$0xf]
        %v7592 = vld [vmem:[%s7585 + $0x18] sm:$0xf]
        %v7593 = vld [vmem:[%s7585 + $0x1c] sm:$0xf]
        %v7602 = vunpack.c.l.b16 %v7586
        %v7603 = vunpack.c.l.b16 %v7587
        %v7604 = vunpack.c.l.b16 %v7588
        %v7605 = vunpack.c.l.b16 %v7589
        %v7606 = vunpack.c.l.b16 %v7590
        %v7607 = vunpack.c.l.b16 %v7591
        %v7608 = vunpack.c.l.b16 %v7592
        %v7609 = vunpack.c.l.b16 %v7593
        %v7610 = vpack.c.b16 %v7603, %v7602
        %v7611 = vpack.c.b16 %v7605, %v7604
        %v7612 = vpack.c.b16 %v7607, %v7606
        %v7613 = vpack.c.b16 %v7609, %v7608
        %7614 = vrot.lane.b32.xlu0 %v6605, 102
        %v7615 = vpop.permute.xlu0 %7614
        %7616 = vrot.lane.b32.xlu0 %v6606, 102
        %v7617 = vpop.permute.xlu0 %7616
        %7618 = vrot.lane.b32.xlu0 %v6607, 102
        %v7619 = vpop.permute.xlu0 %7618
        %7620 = vrot.lane.b32.xlu0 %v6608, 102
        %v7621 = vpop.permute.xlu0 %7620
        %v7627 = vsel %vm6654, %v7610, 0
        %v7630 = vsel %vm6654, %v7611, 0
        %v7633 = vsel %vm6654, %v7612, 0
        %v7636 = vsel %vm6654, %v7613, 0
        %7638 = vmatprep.subr.bf16.mxu0 0
        %7639 = vmatpush1.bf16.msra.mxu0 %v7615
        %7640 = vmatprep.subr.bf16.mxu0 0
        %7641 = vmatpush1.bf16.msra.mxu0 %v7617
        %7642 = vmatprep.subr.bf16.mxu0 0
        %7643 = vmatpush1.bf16.msra.mxu0 %v7619
        %7644 = vmatprep.subr.bf16.mxu0 0
        %7645 = vmatpush1.bf16.msra.mxu0 %v7621
        %7646 = vmatprep.subr.bf16.mxu0 0
        %7647 = vmatpush1.bf16.msra.mxu0 0
        %7648 = vmatprep.subr.bf16.mxu0 0
        %7649 = vmatpush1.bf16.msra.mxu0 0
        %7650 = vmatprep.subr.bf16.mxu0 0
        %7651 = vmatpush1.bf16.msra.mxu0 0
        %7652 = vmatprep.subr.bf16.mxu0 0
        %7653 = vmatpush1.bf16.msra.mxu0 0
        %7654 = vmatprep.subr.bf16.mxu0 0
        %7655 = vmatpush1.bf16.msra.mxu0 0
        %7656 = vmatprep.subr.bf16.mxu0 0
        %7657 = vmatpush1.bf16.msra.mxu0 0
        %7658 = vmatprep.subr.bf16.mxu0 0
        %7659 = vmatpush1.bf16.msra.mxu0 0
        %7660 = vmatprep.subr.bf16.mxu0 0
        %7661 = vmatpush1.bf16.msra.mxu0 0
        %7662 = vmatprep.subr.bf16.mxu0 0
        %7663 = vmatpush1.bf16.msra.mxu0 0
        %7664 = vmatprep.subr.bf16.mxu0 0
        %7665 = vmatpush1.bf16.msra.mxu0 0
        %7666 = vmatprep.subr.bf16.mxu0 0
        %7667 = vmatpush1.bf16.msra.mxu0 0
        %7668 = vmatprep.subr.bf16.mxu0 0
        %7669 = vmatpush1.bf16.msra.mxu0 0
        %7670 = vmatprep.mubr.bf16.mxu0 0
        %7671 = vmatmul.mubr.bf16.gmra.mrb[0].mxu0 %v7627
        %v7672 = vpop.f32.mrb[0].mxu0
        %v7673 = vadd.f32 0.0, %v7672
        %v7674 = vpop.f32.mrb[0].mxu0
        %v7675 = vpop.f32.mrb[0].mxu0
        %v7676 = vadd.f32 0.0, %v7675
        %v7677 = vpop.f32.mrb[0].mxu0
        %7678 = vmatprep.mubr.bf16.mxu0 0
        %7679 = vmatmul.mubr.bf16.gmra.mrb[0].mxu0 %v7630
        %v7680 = vpop.f32.mrb[0].mxu0
        %v7681 = vadd.f32 0.0, %v7680
        %v7682 = vpop.f32.mrb[0].mxu0
        %v7683 = vpop.f32.mrb[0].mxu0
        %v7684 = vadd.f32 0.0, %v7683
        %v7685 = vpop.f32.mrb[0].mxu0
        %7686 = vmatprep.mubr.bf16.mxu0 0
        %7687 = vmatmul.mubr.bf16.gmra.mrb[0].mxu0 %v7633
        %v7688 = vpop.f32.mrb[0].mxu0
        %v7689 = vadd.f32 0.0, %v7688
        %v7690 = vpop.f32.mrb[0].mxu0
        %v7691 = vpop.f32.mrb[0].mxu0
        %v7692 = vadd.f32 0.0, %v7691
        %v7693 = vpop.f32.mrb[0].mxu0
        %7694 = vmatprep.mubr.bf16.mxu0 0
        %7695 = vmatmul.mubr.bf16.gmra.mrb[0].mxu0 %v7636
        %v7696 = vpop.f32.mrb[0].mxu0
        %v7697 = vadd.f32 0.0, %v7696
        %v7698 = vpop.f32.mrb[0].mxu0
        %v7699 = vpop.f32.mrb[0].mxu0
        %v7700 = vadd.f32 0.0, %v7699
        %v7701 = vpop.f32.mrb[0].mxu0
        %7702 = vdwg.mxu0
        %v7703 = vadd.f32 %v7577, %v7673
        %v7704 = vadd.f32 %v7578, %v7676
        %v7705 = vadd.f32 %v7579, %v7681
        %v7706 = vadd.f32 %v7580, %v7684
        %v7707 = vadd.f32 %v7581, %v7689
        %v7708 = vadd.f32 %v7582, %v7692
        %v7709 = vadd.f32 %v7583, %v7697
        %v7710 = vadd.f32 %v7584, %v7700
        %v7711 = vld [vmem:[%s8] sm:$0xff]
        %v7712 = vld [vmem:[%s8 + $0x8] sm:$0xff]
        %v7713 = vld [vmem:[%s8 + $0x10] sm:$0xff]
        %v7714 = vld [vmem:[%s8 + $0x18] sm:$0xff]
        %v7715 = vld [vmem:[%s8 + $0x20] sm:$0xff]
        %v7716 = vld [vmem:[%s8 + $0x28] sm:$0xff]
        %v7717 = vld [vmem:[%s8 + $0x30] sm:$0xff]
        %v7718 = vld [vmem:[%s8 + $0x38] sm:$0xff]
        %7720 = vset.pattern.permute.xlu0 0
        %7721 = vperm.xlu0 %7720, %v7711
        %v7722 = vpop.permute.xlu0 %7721
        %7725 = vset.pattern.permute.xlu0 0
        %7726 = vperm.xlu0 %7725, %v7712
        %v7727 = vpop.permute.xlu0 %7726
        %7730 = vset.pattern.permute.xlu0 0
        %7731 = vperm.xlu0 %7730, %v7713
        %v7732 = vpop.permute.xlu0 %7731
        %7735 = vset.pattern.permute.xlu0 0
        %7736 = vperm.xlu0 %7735, %v7714
        %v7737 = vpop.permute.xlu0 %7736
        %7740 = vset.pattern.permute.xlu0 0
        %7741 = vperm.xlu0 %7740, %v7715
        %v7742 = vpop.permute.xlu0 %7741
        %7745 = vset.pattern.permute.xlu0 0
        %7746 = vperm.xlu0 %7745, %v7716
        %v7747 = vpop.permute.xlu0 %7746
        %7750 = vset.pattern.permute.xlu0 0
        %7751 = vperm.xlu0 %7750, %v7717
        %v7752 = vpop.permute.xlu0 %7751
        %7755 = vset.pattern.permute.xlu0 0
        %7756 = vperm.xlu0 %7755, %v7718
        %v7757 = vpop.permute.xlu0 %7756
        %v7759 = vadd.f32 %v7703, %v7722
        %v7760 = vadd.f32 %v7704, %v7727
        %v7761 = vadd.f32 %v7705, %v7732
        %v7762 = vadd.f32 %v7706, %v7737
        %v7763 = vadd.f32 %v7707, %v7742
        %v7764 = vadd.f32 %v7708, %v7747
        %v7765 = vadd.f32 %v7709, %v7752
        %v7766 = vadd.f32 %v7710, %v7757
        %v7767 = vmax.f32 %v7759, 0.0
        %v7768 = vmax.f32 %v7760, 0.0
        %v7769 = vmax.f32 %v7761, 0.0
        %v7770 = vmax.f32 %v7762, 0.0
        %v7771 = vmax.f32 %v7763, 0.0
        %v7772 = vmax.f32 %v7764, 0.0
        %v7773 = vmax.f32 %v7765, 0.0
        %v7774 = vmax.f32 %v7766, 0.0
        %v7775 = vpack.c.bf16 %v7768, %v7767
        %v7776 = vpack.c.bf16 %v7770, %v7769
        %v7777 = vpack.c.bf16 %v7772, %v7771
        %v7778 = vpack.c.bf16 %v7774, %v7773
        %7779 = vst.msk [vmem:[#allocation6] sm:$0xff] %vm2319, %v7775
        %7780 = vst.msk [vmem:[#allocation6 + $0x8] sm:$0xff] %vm2319, %v7776
        %7781 = vst.msk [vmem:[#allocation6 + $0x10] sm:$0xff] %vm2319, %v7777
        %7782 = vst.msk [vmem:[#allocation6 + $0x18] sm:$0xff] %vm2319, %v7778
        %v7783 = vld [vmem:[#allocation6] sm:$0xff]
        %v7784 = vld [vmem:[#allocation6 + $0x8] sm:$0xff]
        %v7785 = vld [vmem:[#allocation6 + $0x10] sm:$0xff]
        %v7786 = vld [vmem:[#allocation6 + $0x18] sm:$0xff]
        %7791 = vrot.lane.b32.xlu0 %v7783, 127
        %v7792 = vpop.permute.xlu0 %7791
        %7793 = vrot.lane.b32.xlu0 %v7784, 127
        %v7794 = vpop.permute.xlu0 %7793
        %7795 = vrot.lane.b32.xlu0 %v7785, 127
        %v7796 = vpop.permute.xlu0 %7795
        %7797 = vrot.lane.b32.xlu0 %v7786, 127
        %v7798 = vpop.permute.xlu0 %7797
        %v7803 = vmax.bf16 %v7783, %v7792
        %v7804 = vmax.bf16 %v7784, %v7794
        %v7805 = vmax.bf16 %v7785, %v7796
        %v7806 = vmax.bf16 %v7786, %v7798
        %7811 = vrot.lane.b32.xlu0 %v7803, 116
        %v7812 = vpop.permute.xlu0 %7811
        %7813 = vrot.lane.b32.xlu0 %v7804, 116
        %v7814 = vpop.permute.xlu0 %7813
        %7815 = vrot.lane.b32.xlu0 %v7805, 116
        %v7816 = vpop.permute.xlu0 %7815
        %7817 = vrot.lane.b32.xlu0 %v7806, 116
        %v7818 = vpop.permute.xlu0 %7817
        %v7823 = vmax.bf16 %v7803, %v7812
        %v7824 = vmax.bf16 %v7804, %v7814
        %v7825 = vmax.bf16 %v7805, %v7816
        %v7826 = vmax.bf16 %v7806, %v7818
        %v7827 = vld [vmem:[%s10] sm:$0xf]
        %v7828 = vld [vmem:[%s10 + $0x4] sm:$0xf]
        %v7829 = vld [vmem:[%s10 + $0x8] sm:$0xf]
        %v7830 = vld [vmem:[%s10 + $0xc] sm:$0xf]
        %v7831 = vld [vmem:[%s10 + $0x10] sm:$0xf]
        %v7832 = vld [vmem:[%s10 + $0x14] sm:$0xf]
        %v7833 = vld [vmem:[%s10 + $0x18] sm:$0xf]
        %v7834 = vld [vmem:[%s10 + $0x1c] sm:$0xf]
        %v7835 = vld [vmem:[%s10 + $0x20] sm:$0xf]
        %v7836 = vld [vmem:[%s10 + $0x24] sm:$0xf]
        %v7847 = vunpack.c.l.b16 %v7827
        %v7848 = vunpack.c.l.b16 %v7828
        %v7849 = vunpack.c.l.b16 %v7829
        %v7850 = vunpack.c.l.b16 %v7830
        %v7851 = vunpack.c.l.b16 %v7831
        %v7852 = vunpack.c.l.b16 %v7832
        %v7853 = vunpack.c.l.b16 %v7833
        %v7854 = vunpack.c.l.b16 %v7834
        %v7855 = vunpack.c.l.b16 %v7835
        %v7856 = vunpack.c.l.b16 %v7836
        %v7857 = vpack.c.b16 %v7848, %v7847
        %v7858 = vpack.c.b16 %v7850, %v7849
        %v7859 = vpack.c.b16 %v7852, %v7851
        %v7860 = vpack.c.b16 %v7854, %v7853
        %v7861 = vpack.c.b16 %v7856, %v7855
        %vm7867 = vcmask 654336
        %v7869 = vsel %vm7867, %v7823, 0
        %v7872 = vsel %vm7867, %v7824, 0
        %v7875 = vsel %vm7867, %v7825, 0
        %v7878 = vsel %vm7867, %v7826, 0
        %7880 = vmatprep.subr.bf16.mxu0 0
        %7881 = vmatpush1.bf16.msra.mxu0 %v7857
        %7882 = vmatprep.subr.bf16.mxu0 0
        %7883 = vmatpush1.bf16.msra.mxu0 %v7858
        %7884 = vmatprep.subr.bf16.mxu0 0
        %7885 = vmatpush1.bf16.msra.mxu0 %v7859
        %7886 = vmatprep.subr.bf16.mxu0 0
        %7887 = vmatpush1.bf16.msra.mxu0 %v7860
        %7888 = vmatprep.subr.bf16.mxu0 0
        %7889 = vmatpush1.bf16.msra.mxu0 %v7861
        %7890 = vmatprep.subr.bf16.mxu0 0
        %7891 = vmatpush1.bf16.msra.mxu0 0
        %7892 = vmatprep.subr.bf16.mxu0 0
        %7893 = vmatpush1.bf16.msra.mxu0 0
        %7894 = vmatprep.subr.bf16.mxu0 0
        %7895 = vmatpush1.bf16.msra.mxu0 0
        %7896 = vmatprep.subr.bf16.mxu0 0
        %7897 = vmatpush1.bf16.msra.mxu0 0
        %7898 = vmatprep.subr.bf16.mxu0 0
        %7899 = vmatpush1.bf16.msra.mxu0 0
        %7900 = vmatprep.subr.bf16.mxu0 0
        %7901 = vmatpush1.bf16.msra.mxu0 0
        %7902 = vmatprep.subr.bf16.mxu0 0
        %7903 = vmatpush1.bf16.msra.mxu0 0
        %7904 = vmatprep.subr.bf16.mxu0 0
        %7905 = vmatpush1.bf16.msra.mxu0 0
        %7906 = vmatprep.subr.bf16.mxu0 0
        %7907 = vmatpush1.bf16.msra.mxu0 0
        %7908 = vmatprep.subr.bf16.mxu0 0
        %7909 = vmatpush1.bf16.msra.mxu0 0
        %7910 = vmatprep.subr.bf16.mxu0 0
        %7911 = vmatpush1.bf16.msra.mxu0 0
        %7912 = vmatprep.mubr.bf16.mxu0 0
        %7913 = vmatmul.mubr.bf16.gmra.mrb[0].mxu0 %v7869
        %v7914 = vpop.f32.mrb[0].mxu0
        %v7915 = vadd.f32 0.0, %v7914
        %v7916 = vpop.f32.mrb[0].mxu0
        %v7917 = vpop.f32.mrb[0].mxu0
        %v7918 = vadd.f32 0.0, %v7917
        %v7919 = vpop.f32.mrb[0].mxu0
        %7920 = vmatprep.mubr.bf16.mxu0 0
        %7921 = vmatmul.mubr.bf16.gmra.mrb[0].mxu0 %v7872
        %v7922 = vpop.f32.mrb[0].mxu0
        %v7923 = vadd.f32 0.0, %v7922
        %v7924 = vpop.f32.mrb[0].mxu0
        %v7925 = vpop.f32.mrb[0].mxu0
        %v7926 = vadd.f32 0.0, %v7925
        %v7927 = vpop.f32.mrb[0].mxu0
        %7928 = vmatprep.mubr.bf16.mxu0 0
        %7929 = vmatmul.mubr.bf16.gmra.mrb[0].mxu0 %v7875
        %v7930 = vpop.f32.mrb[0].mxu0
        %v7931 = vadd.f32 0.0, %v7930
        %v7932 = vpop.f32.mrb[0].mxu0
        %v7933 = vpop.f32.mrb[0].mxu0
        %v7934 = vadd.f32 0.0, %v7933
        %v7935 = vpop.f32.mrb[0].mxu0
        %7936 = vmatprep.mubr.bf16.mxu0 0
        %7937 = vmatmul.mubr.bf16.gmra.mrb[0].mxu0 %v7878
        %v7938 = vpop.f32.mrb[0].mxu0
        %v7939 = vadd.f32 0.0, %v7938
        %v7940 = vpop.f32.mrb[0].mxu0
        %v7941 = vpop.f32.mrb[0].mxu0
        %v7942 = vadd.f32 0.0, %v7941
        %v7943 = vpop.f32.mrb[0].mxu0
        %7944 = vdwg.mxu0
        %v7945 = vpack.c.bf16 %v7918, %v7915
        %v7946 = vpack.c.bf16 %v7926, %v7923
        %v7947 = vpack.c.bf16 %v7934, %v7931
        %v7948 = vpack.c.bf16 %v7942, %v7939
        %v7953 = vunpack.c.l.b16 %v7945
        %v7954 = vunpack.c.h.b16 %v7945
        %v7955 = vunpack.c.l.b16 %v7946
        %v7956 = vunpack.c.h.b16 %v7946
        %v7957 = vunpack.c.l.b16 %v7947
        %v7958 = vunpack.c.h.b16 %v7947
        %v7959 = vunpack.c.l.b16 %v7948
        %v7960 = vunpack.c.h.b16 %v7948
        %v7961 = vpack.c.b16 %v7953, %v7953
        %v7962 = vpack.c.b16 %v7954, %v7954
        %v7963 = vpack.c.b16 %v7955, %v7955
        %v7964 = vpack.c.b16 %v7956, %v7956
        %v7965 = vpack.c.b16 %v7957, %v7957
        %v7966 = vpack.c.b16 %v7958, %v7958
        %v7967 = vpack.c.b16 %v7959, %v7959
        %v7968 = vpack.c.b16 %v7960, %v7960
        %vm7977 = vcmask 125952
        %7978 = vst.msk [vmem:[%s413] sm:$0xf] %vm7977, %v7961
        %7979 = vst.msk [vmem:[%s413 + $0x4] sm:$0xf] %vm7977, %v7962
        %7980 = vst.msk [vmem:[%s413 + $0x8] sm:$0xf] %vm7977, %v7963
        %7981 = vst.msk [vmem:[%s413 + $0xc] sm:$0xf] %vm7977, %v7964
        %7982 = vst.msk [vmem:[%s413 + $0x10] sm:$0xf] %vm7977, %v7965
        %7983 = vst.msk [vmem:[%s413 + $0x14] sm:$0xf] %vm7977, %v7966
        %7984 = vst.msk [vmem:[%s413 + $0x18] sm:$0xf] %vm7977, %v7967
        %7985 = vst.msk [vmem:[%s413 + $0x1c] sm:$0xf] %vm7977, %v7968
        %p7986 = scmp.lt.s32.totalorder %s24, 1
        %s7987 = scalar_select %p7986, %s24, 1
        %s7988 = smul.addr %s7987, 8
        %s7989 = smul.addr %s7988, 4
        %s7990 = scalar_lea.vmem %s11, %s7989
        // Predicated region
        $region73: #{forward.2} parent=63 // pred_check
          %p7991 = pneg %p278
        $region74: #{forward.2} parent=63 // pred_check_branch
          %7993 = sbr.rel (%p7991) target = $region76
        $region75: #{forward.2} parent=63 // pred_region
          _
        $region76: #{forward.2} parent=63 // pred_fallthru
          _
      $region64: #{forward.2} parent=5 // pred_fallthru
        _
      %p7994 = scmp.le.s32.totalorder 2, %s19
      // Predicated region
      $region77: #{forward.2} parent=5 // pred_check
        %p7995 = pneg %p7994
      $region78: #{forward.2} parent=5 // pred_check_branch
        %7997 = sbr.rel (%p7995) target = $region80
      $region79: #{forward.2} parent=5 // pred_region
        %s7998 = ssub.s32 %s19, 2
        // Predicated region
        $region81: #{forward.2} parent=79 // pred_check
          %p7999 = pneg %p284
        $region82: #{forward.2} parent=79 // pred_check_branch
          %8001 = sbr.rel (%p7999) target = $region84
        $region83: #{forward.2} parent=79 // pred_region
          %p8002 = scmp.lt.s32.totalorder %s25, 1
          %s8003 = scalar_select %p8002, %s25, 1
          %s8004 = smul.addr %s8003, 8
          %s8005 = smul.addr %s8004, 4
          %s8006 = scalar_lea.vmem %s11, %s8005
        $region84: #{forward.2} parent=79 // pred_fallthru
          _
      $region80: #{forward.2} parent=5 // pred_fallthru
        _
    $region6: #{forward.2} parent=1 // loop_footer
      %s23 = sadd.s32 1, %s19
    $region7: #{forward.2} parent=1 // loop_footer_branch
      %18 = sbr.rel target = $region3
    $region8: #{forward.2} parent=1 // loop_exit
      _
    %8007 = vsyncpa [#allocation8], 1
    %s8008 = scalar_lea.sflag [#allocation8], 1
    %8009 = vsyncpa %s8008, 1
    %8010 = vsyncpa [#allocation10], 1

</llo_original>
